<compile_context>
chip_gen: v7x
topology: tpu7x:2x2x1
jax: 0.10.0
libtpu: 0.0.40
codegen_flags: <defaults>
</compile_context>

<pallas_src>
import jax
import jax.numpy as jnp
from jax import lax
from jax.experimental import pallas as pl
from jax.experimental.pallas import tpu as pltpu


def _round_up(x, m):
    return ((x + m - 1) // m) * m


# ---------------------------------------------------------------------------
# Kernel
# ---------------------------------------------------------------------------
def _bn_conv_bn_relu_conv_bn_kernel(
    x_ref,            # (1, H, W, Cin_p)        f32
    w1_ref,           # (3, 3*Cin_p,  Cout_p)   bf16  (BN1/BN2 scales folded)
    w2_ref,           # (3, 3*Cout_p, Cout_p)   bf16  (BN3 scale folded)
    b1_ref,           # (1, Cin_p)  f32         (bias on the conv1 input)
    b2_ref,           # (1, Cout_p) f32         (bias before ReLU)
    b3_ref,           # (1, Cout_p) f32         (bias at the end)
    o_ref,            # (1, H, W, Cout_p) f32
    pad1_ref,         # scratch (H+2, Wp2, Cin_p)   bf16
    slab1_ref,        # scratch (H+2, W, 3*Cin_p)   bf16
    pad2_ref,         # scratch (H+2, Wp2, Cout_p)  bf16
    slab2_ref,        # scratch (H+2, W, 3*Cout_p)  bf16
):
    H = x_ref.shape[1]
    W = x_ref.shape[2]
    Cin_p = x_ref.shape[3]
    Cout_p = o_ref.shape[3]

    def zero_halo(pad_ref):
        # Re-zero only the 1-pixel halo each step (the interior is fully
        # overwritten every step; the sublane-alignment columns beyond W+1
        # are never read, so they may stay stale).  Safe under "parallel"
        # batch sharding.
        zrow = jnp.zeros((1,) + pad_ref.shape[1:], pad_ref.dtype)
        zcol = jnp.zeros((pad_ref.shape[0], 1, pad_ref.shape[2]), pad_ref.dtype)
        pad_ref[0:1, :, :] = zrow
        pad_ref[H + 1:H + 2, :, :] = zrow
        pad_ref[:, 0:1, :] = zcol
        pad_ref[:, W + 1:W + 2, :] = zcol

    def conv3x3(pad_ref, slab_ref, w_ref, cin):
        # dx-only im2col: 3 lane-aligned copies (slice starts are static).
        for dx in range(3):
            slab_ref[:, :, dx * cin:(dx + 1) * cin] = pad_ref[:, dx:dx + W, :]
        # 3 accumulating MXU matmuls over dy, K = 3*cin, f32 accumulation.
        acc = None
        for dy in range(3):
            a = slab_ref[dy:dy + H, :, :].reshape(H * W, 3 * cin)
            p = jnp.dot(a, w_ref[dy], preferred_element_type=jnp.float32)
            acc = p if acc is None else acc + p
        return acc                                    # (H*W, Cout_p) f32

    zero_halo(pad1_ref)
    zero_halo(pad2_ref)

    # ---- input bias (BN1 scale is folded into w1) -> bf16 for the MXU ----
    x = x_ref[0] + b1_ref[0]
    pad1_ref[1:H + 1, 1:W + 1, :] = x.astype(pad1_ref.dtype)

    # ---- Conv1 (BN1 row-scale and BN2 column-scale folded into w1) ----
    y = conv3x3(pad1_ref, slab1_ref, w1_ref, Cin_p)

    # ---- BN2 bias + ReLU ----
    y = jnp.maximum(y + b2_ref[0], 0.0)
    pad2_ref[1:H + 1, 1:W + 1, :] = (
        y.reshape(H, W, Cout_p).astype(pad2_ref.dtype))

    # ---- Conv2 (BN3 column-scale folded into w2) ----
    z = conv3x3(pad2_ref, slab2_ref, w2_ref, Cout_p)

    # ---- BN3 bias ----
    z = z + b3_ref[0]
    o_ref[0] = z.reshape(H, W, Cout_p).astype(o_ref.dtype)


# ---------------------------------------------------------------------------
# Parameter preparation (one-time, off the per-call path)
# ---------------------------------------------------------------------------
def _fold_bn(gamma, beta, mean, var, eps=1e-5):
    scale = gamma / jnp.sqrt(var + eps)
    bias = beta - mean * scale
    return scale.astype(jnp.float32), bias.astype(jnp.float32)


def _pad_axis(a, axis, to):
    pad = [(0, 0)] * a.ndim
    pad[axis] = (0, to - a.shape[axis])
    return jnp.pad(a, pad)


def prepare_params(params, *, eps=1e-5):
    """Fold BN stats AND scales into the conv weights, pad channels to a
    lane-dense multiple of 128, lay weights out per-dy for the dx-only im2col
    matmuls, cast to bf16.  Call once at setup time."""
    w1 = jnp.asarray(params["w1"], jnp.float32)       # (Cout, Cin, 3, 3) OIHW
    w2 = jnp.asarray(params["w2"], jnp.float32)       # (Cout, Cout, 3, 3)
    Cout, Cin = int(w1.shape[0]), int(w1.shape[1])
    Cin_p = _round_up(Cin, 128)
    Cout_p = _round_up(Cout, 128)
    # TODO(synk): on v6e/v7x (2x256 MXU) prefer Cout tiles of 256 when the
    # model's real Cout allows it; 128 is ideal only on v5e's 128x128 MXU.

    s1, b1 = _fold_bn(*params["bn1"], eps=eps)
    s2, b2 = _fold_bn(*params["bn2"], eps=eps)
    s3, b3 = _fold_bn(*params["bn3"], eps=eps)

    # conv(x*s1 + b1, w1) == conv(x + b1/s1, w1*s1); the tiny clamp keeps the
    # rewrite exact in the (pathological) limit of a zero BN gamma.
    s1_safe = jnp.where(jnp.abs(s1) < 1e-12, 1e-12, s1)
    b1_in = b1 / s1_safe

    w1_hwio = jnp.transpose(w1, (2, 3, 1, 0))          # (3,3,Cin,Cout)
    w1_hwio = w1_hwio * s1_safe[None, None, :, None] * s2[None, None, None, :]
    w1_hwio = _pad_axis(_pad_axis(w1_hwio, 2, Cin_p), 3, Cout_p)
    w1_mat = w1_hwio.reshape(3, 3 * Cin_p, Cout_p).astype(jnp.bfloat16)

    w2_hwio = jnp.transpose(w2, (2, 3, 1, 0))          # (3,3,Cout,Cout)
    w2_hwio = w2_hwio * s3[None, None, None, :]
    w2_hwio = _pad_axis(_pad_axis(w2_hwio, 2, Cout_p), 3, Cout_p)
    w2_mat = w2_hwio.reshape(3, 3 * Cout_p, Cout_p).astype(jnp.bfloat16)
    # TODO(synk): optionally cast weights/activations to fp8 (e4m3) on v7x
    # (keeping f32 accumulation) if the model tolerates the precision.

    return dict(
        w1_mat=w1_mat, w2_mat=w2_mat,
        b1=_pad_axis(b1_in, 0, Cin_p).reshape(1, Cin_p),
        b2=_pad_axis(b2, 0, Cout_p).reshape(1, Cout_p),
        b3=_pad_axis(b3, 0, Cout_p).reshape(1, Cout_p),
        Cin=Cin, Cout=Cout, Cin_p=Cin_p, Cout_p=Cout_p)


# ---------------------------------------------------------------------------
# Wrappers
# ---------------------------------------------------------------------------
def _vmem_ceiling_bytes():
    # Per-generation physical VMEM (v5e/v6e: 128 MiB, v7x: 64 MiB per core),
    # capped at 7/8 of it so Mosaic keeps headroom for relayout temporaries.
    cap = 64 * 1024 * 1024
    try:
        info = pltpu.get_tpu_info()
        got = getattr(info, "vmem_capacity_bytes", None)
        if got:
            cap = int(got)
    except Exception:
        pass
    return (cap * 7) // 8


def bn_conv3_bn_relu_conv3_bn_nhwc(x_nhwc, prep):
    """Fast path: NHWC activations with channels already padded to prep['Cin_p'].
    Returns NHWC with channels padded to prep['Cout_p'] (f32).  Keep activations
    in this layout across layers to avoid per-layer transposes/pads."""
    N, H, W, Cin_p = x_nhwc.shape
    assert Cin_p == prep["Cin_p"], (Cin_p, prep["Cin_p"])
    Cout_p = prep["Cout_p"]
    Wp2 = _round_up(W + 2, 8)            # sublane-aligned padded-scratch width

    # Scoped-VMEM budget from the actual buffers: double-buffered activation
    # tiles + weights/biases, bf16 scratches, f32 matmul accumulators and
    # reshape/relayout headroom; capped below physical VMEM per generation.
    est = (
        2 * H * W * Cin_p * 4                       # input tile (x2 pipeline)
        + 2 * H * W * Cout_p * 4                    # output tile (x2 pipeline)
        + 2 * 9 * (Cin_p + Cout_p) * Cout_p * 2     # bf16 weights (x2 pipeline)
        + (H + 2) * Wp2 * (Cin_p + Cout_p) * 2      # padded scratches
        + (H + 2) * W * 3 * (Cin_p + Cout_p) * 2    # dx-only im2col slabs
        + 2 * H * W * Cout_p * 4                    # f32 matmul accumulators
        + 2 * H * W * max(Cin_p, Cout_p) * 4        # reshape/relayout headroom
        + (2 << 20)
    )
    vmem_limit = int(min(max(est * 5 // 4, 24 * 1024 * 1024),
                         _vmem_ceiling_bytes()))

    # TODO(synk): add spatial H-tiling (grid=(N, H//TH) with a 2-row input halo
    # per tile) for large images on v7x and to use both TensorCores when N=1.
    # TODO(synk): mark the grid-invariant weight/bias inputs with
    # pipeline_mode=pl.Buffered(1) (and re-check Buffered(3) on the activation
    # input after H-tiling) once single-buffered operands are safe everywhere.
    return pl.pallas_call(
        _bn_conv_bn_relu_conv_bn_kernel,
        out_shape=jax.ShapeDtypeStruct((N, H, W, Cout_p), jnp.float32),
        grid=(N,),
        in_specs=[
            pl.BlockSpec((1, H, W, Cin_p), lambda n: (n, 0, 0, 0)),
            pl.BlockSpec((3, 3 * Cin_p, Cout_p), lambda n: (0, 0, 0)),
            pl.BlockSpec((3, 3 * Cout_p, Cout_p), lambda n: (0, 0, 0)),
            pl.BlockSpec((1, Cin_p), lambda n: (0, 0)),
            pl.BlockSpec((1, Cout_p), lambda n: (0, 0)),
            pl.BlockSpec((1, Cout_p), lambda n: (0, 0)),
        ],
        out_specs=pl.BlockSpec((1, H, W, Cout_p), lambda n: (n, 0, 0, 0)),
        scratch_shapes=[
            pltpu.VMEM((H + 2, Wp2, Cin_p), jnp.bfloat16),
            pltpu.VMEM((H + 2, W, 3 * Cin_p), jnp.bfloat16),
            pltpu.VMEM((H + 2, Wp2, Cout_p), jnp.bfloat16),
            pltpu.VMEM((H + 2, W, 3 * Cout_p), jnp.bfloat16),
        ],
        compiler_params=pltpu.CompilerParams(
            dimension_semantics=("parallel",),
            vmem_limit_bytes=vmem_limit,
        ),
    )(x_nhwc, prep["w1_mat"], prep["w2_mat"],
      prep["b1"], prep["b2"], prep["b3"])


def bn_conv3_bn_relu_conv3_bn(x_nchw, prep):
    """NCHW interface matching the PyTorch module (inference-mode BN).

    x_nchw: (N, Cin, H, W) float32 ;  returns (N, Cout, H, W) float32.
    """
    # TODO(synk): only stride=1 / padding=1 (the module's defaults) is implemented.
    N, Cin, H, W = x_nchw.shape
    assert Cin == prep["Cin"]
    Cin_p, Cout = prep["Cin_p"], prep["Cout"]

    # TODO(synk): in a full network call bn_conv3_bn_relu_conv3_bn_nhwc directly
    # with NHWC / channel-padded activations so these layout passes happen once
    # at the model boundary instead of per layer.
    x_nhwc = jnp.transpose(x_nchw, (0, 2, 3, 1))
    x_nhwc = jnp.pad(x_nhwc, ((0, 0), (0, 0), (0, 0), (0, Cin_p - Cin)))
    out_nhwc = bn_conv3_bn_relu_conv3_bn_nhwc(x_nhwc, prep)
    out_nhwc = out_nhwc[:, :, :, :Cout]                 # drop channel padding
    return jnp.transpose(out_nhwc, (0, 3, 1, 2))        # NHWC -> NCHW


# ---------------------------------------------------------------------------
# Pure-JAX reference (same semantics) for a correctness check
# ---------------------------------------------------------------------------
def _reference(x_nchw, params, *, eps=1e-5):
    w1_hwio = jnp.transpose(params["w1"], (2, 3, 1, 0))
    w2_hwio = jnp.transpose(params["w2"], (2, 3, 1, 0))
    s1, b1 = _fold_bn(*params["bn1"], eps=eps)
    s2, b2 = _fold_bn(*params["bn2"], eps=eps)
    s3, b3 = _fold_bn(*params["bn3"], eps=eps)

    x = jnp.transpose(x_nchw, (0, 2, 3, 1))
    x = x * s1 + b1
    y = lax.conv_general_dilated(
        x, w1_hwio, (1, 1), "SAME",
        dimension_numbers=("NHWC", "HWIO", "NHWC"),
        precision=lax.Precision.HIGHEST)
    y = jnp.maximum(y * s2 + b2, 0.0)
    z = lax.conv_general_dilated(
        y, w2_hwio, (1, 1), "SAME",
        dimension_numbers=("NHWC", "HWIO", "NHWC"),
        precision=lax.Precision.HIGHEST)
    z = z * s3 + b3
    return jnp.transpose(z, (0, 3, 1, 2))


if __name__ == "__main__":
    N, Cin, Cout, H, W = 2, 4, 8, 16, 16

    key = jax.random.PRNGKey(0)
    ks = jax.random.split(key, 16)

    x = jax.random.normal(ks[0], (N, Cin, H, W), jnp.float32)

    params = {
        "w1": 0.1 * jax.random.normal(ks[1], (Cout, Cin, 3, 3), jnp.float32),
        "w2": 0.1 * jax.random.normal(ks[2], (Cout, Cout, 3, 3), jnp.float32),
        # (gamma, beta, running_mean, running_var) per BN layer
        "bn1": (jax.random.uniform(ks[3], (Cin,), minval=0.5, maxval=1.5),
                0.1 * jax.random.normal(ks[4], (Cin,)),
                0.1 * jax.random.normal(ks[5], (Cin,)),
                jax.random.uniform(ks[6], (Cin,), minval=0.5, maxval=1.5)),
        "bn2": (jax.random.uniform(ks[7], (Cout,), minval=0.5, maxval=1.5),
                0.1 * jax.random.normal(ks[8], (Cout,)),
                0.1 * jax.random.normal(ks[9], (Cout,)),
                jax.random.uniform(ks[10], (Cout,), minval=0.5, maxval=1.5)),
        "bn3": (jax.random.uniform(ks[11], (Cout,), minval=0.5, maxval=1.5),
                0.1 * jax.random.normal(ks[12], (Cout,)),
                0.1 * jax.random.normal(ks[13], (Cout,)),
                jax.random.uniform(ks[14], (Cout,), minval=0.5, maxval=1.5)),
    }

    prep = prepare_params(params)                       # one-time weight prep
    run = jax.jit(lambda xx: bn_conv3_bn_relu_conv3_bn(xx, prep))
    out = jax.block_until_ready(run(x))

    ref = jax.block_until_ready(_reference(x, params))
    assert out.shape == (N, Cout, H, W), out.shape
    if not jnp.allclose(out, ref, atol=2e-2, rtol=2e-2):
        raise AssertionError("Pallas kernel output does not match JAX reference")

    print("KERNEL_OK")
</pallas_src>

<mosaic_0001>
module attributes {stable_mosaic.version = 11 : i64} {
  func.func @_bn_conv_bn_relu_conv_bn_kernel(%arg0: i32, %arg1: memref<1x16x16x128xf32, #tpu.memory_space<vmem>>, %arg2: memref<3x384x128xbf16, #tpu.memory_space<vmem>>, %arg3: memref<3x384x128xbf16, #tpu.memory_space<vmem>>, %arg4: memref<1x128xf32, #tpu.memory_space<vmem>>, %arg5: memref<1x128xf32, #tpu.memory_space<vmem>>, %arg6: memref<1x128xf32, #tpu.memory_space<vmem>>, %arg7: memref<1x16x16x128xf32, #tpu.memory_space<vmem>>, %arg8: memref<18x24x128xbf16, #tpu.memory_space<vmem>>, %arg9: memref<18x16x384xbf16, #tpu.memory_space<vmem>>, %arg10: memref<18x24x128xbf16, #tpu.memory_space<vmem>>, %arg11: memref<18x16x384xbf16, #tpu.memory_space<vmem>>) attributes {dimension_semantics = [#tpu.dimension_semantics<parallel>], iteration_bounds = array<i64: 2>, scalar_prefetch = 0 : i64, scratch_operands = 4 : i64, tpu.core_type = #tpu.core_type<tc>, window_params = [{transform_indices = @transform_0, window_bounds = array<i64: 1, 16, 16, 128>}, {pipeline_mode = #tpu.pipeline_mode<synchronous>, transform_indices = @transform_1, window_bounds = array<i64: 3, 384, 128>}, {pipeline_mode = #tpu.pipeline_mode<synchronous>, transform_indices = @transform_2, window_bounds = array<i64: 3, 384, 128>}, {pipeline_mode = #tpu.pipeline_mode<synchronous>, transform_indices = @transform_3, window_bounds = array<i64: 1, 128>}, {pipeline_mode = #tpu.pipeline_mode<synchronous>, transform_indices = @transform_4, window_bounds = array<i64: 1, 128>}, {pipeline_mode = #tpu.pipeline_mode<synchronous>, transform_indices = @transform_5, window_bounds = array<i64: 1, 128>}, {transform_indices = @transform_6, window_bounds = array<i64: 1, 16, 16, 128>}]} {
    %cst = arith.constant 0.000000e+00 : bf16
    %0 = vector.broadcast %cst : bf16 to vector<1x24x128xbf16>
    %cst_0 = arith.constant 0.000000e+00 : bf16
    %1 = vector.broadcast %cst_0 : bf16 to vector<18x1x128xbf16>
    %c0 = arith.constant 0 : index
    %c0_1 = arith.constant 0 : index
    %c0_2 = arith.constant 0 : index
    %2 = vector.load %arg8[%c0, %c0_1, %c0_2] : memref<18x24x128xbf16, #tpu.memory_space<vmem>>, vector<1x24x128xbf16>
    tpu.vector_store %arg8[%c0, %c0_1, %c0_2], %0 {strides = array<i32>} : memref<18x24x128xbf16, #tpu.memory_space<vmem>>, vector<1x24x128xbf16>,
    %c17 = arith.constant 17 : index
    %c0_3 = arith.constant 0 : index
    %c0_4 = arith.constant 0 : index
    %3 = vector.load %arg8[%c17, %c0_3, %c0_4] : memref<18x24x128xbf16, #tpu.memory_space<vmem>>, vector<1x24x128xbf16>
    tpu.vector_store %arg8[%c17, %c0_3, %c0_4], %0 {strides = array<i32>} : memref<18x24x128xbf16, #tpu.memory_space<vmem>>, vector<1x24x128xbf16>,
    %c0_5 = arith.constant 0 : index
    %c0_6 = arith.constant 0 : index
    %c0_7 = arith.constant 0 : index
    %4 = vector.load %arg8[%c0_5, %c0_6, %c0_7] : memref<18x24x128xbf16, #tpu.memory_space<vmem>>, vector<18x1x128xbf16>
    tpu.vector_store %arg8[%c0_5, %c0_6, %c0_7], %1 {strides = array<i32>} : memref<18x24x128xbf16, #tpu.memory_space<vmem>>, vector<18x1x128xbf16>,
    %c0_8 = arith.constant 0 : index
    %c17_9 = arith.constant 17 : index
    %c0_10 = arith.constant 0 : index
    %5 = vector.load %arg8[%c0_8, %c17_9, %c0_10] : memref<18x24x128xbf16, #tpu.memory_space<vmem>>, vector<18x1x128xbf16>
    tpu.vector_store %arg8[%c0_8, %c17_9, %c0_10], %1 {strides = array<i32>} : memref<18x24x128xbf16, #tpu.memory_space<vmem>>, vector<18x1x128xbf16>,
    %cst_11 = arith.constant 0.000000e+00 : bf16
    %6 = vector.broadcast %cst_11 : bf16 to vector<1x24x128xbf16>
    %cst_12 = arith.constant 0.000000e+00 : bf16
    %7 = vector.broadcast %cst_12 : bf16 to vector<18x1x128xbf16>
    %c0_13 = arith.constant 0 : index
    %c0_14 = arith.constant 0 : index
    %c0_15 = arith.constant 0 : index
    %8 = vector.load %arg10[%c0_13, %c0_14, %c0_15] : memref<18x24x128xbf16, #tpu.memory_space<vmem>>, vector<1x24x128xbf16>
    tpu.vector_store %arg10[%c0_13, %c0_14, %c0_15], %6 {strides = array<i32>} : memref<18x24x128xbf16, #tpu.memory_space<vmem>>, vector<1x24x128xbf16>,
    %c17_16 = arith.constant 17 : index
    %c0_17 = arith.constant 0 : index
    %c0_18 = arith.constant 0 : index
    %9 = vector.load %arg10[%c17_16, %c0_17, %c0_18] : memref<18x24x128xbf16, #tpu.memory_space<vmem>>, vector<1x24x128xbf16>
    tpu.vector_store %arg10[%c17_16, %c0_17, %c0_18], %6 {strides = array<i32>} : memref<18x24x128xbf16, #tpu.memory_space<vmem>>, vector<1x24x128xbf16>,
    %c0_19 = arith.constant 0 : index
    %c0_20 = arith.constant 0 : index
    %c0_21 = arith.constant 0 : index
    %10 = vector.load %arg10[%c0_19, %c0_20, %c0_21] : memref<18x24x128xbf16, #tpu.memory_space<vmem>>, vector<18x1x128xbf16>
    tpu.vector_store %arg10[%c0_19, %c0_20, %c0_21], %7 {strides = array<i32>} : memref<18x24x128xbf16, #tpu.memory_space<vmem>>, vector<18x1x128xbf16>,
    %c0_22 = arith.constant 0 : index
    %c17_23 = arith.constant 17 : index
    %c0_24 = arith.constant 0 : index
    %11 = vector.load %arg10[%c0_22, %c17_23, %c0_24] : memref<18x24x128xbf16, #tpu.memory_space<vmem>>, vector<18x1x128xbf16>
    tpu.vector_store %arg10[%c0_22, %c17_23, %c0_24], %7 {strides = array<i32>} : memref<18x24x128xbf16, #tpu.memory_space<vmem>>, vector<18x1x128xbf16>,
    %c0_25 = arith.constant 0 : index
    %c0_26 = arith.constant 0 : index
    %c0_27 = arith.constant 0 : index
    %c0_28 = arith.constant 0 : index
    %12 = vector.load %arg1[%c0_25, %c0_26, %c0_27, %c0_28] : memref<1x16x16x128xf32, #tpu.memory_space<vmem>>, vector<1x16x16x128xf32>
    %13 = vector.shape_cast %12 : vector<1x16x16x128xf32> to vector<16x16x128xf32>
    %c0_29 = arith.constant 0 : index
    %c0_30 = arith.constant 0 : index
    %14 = vector.load %arg4[%c0_29, %c0_30] : memref<1x128xf32, #tpu.memory_space<vmem>>, vector<1x128xf32>
    %15 = vector.shape_cast %14 : vector<1x128xf32> to vector<128xf32>
    %16 = vector.shape_cast %15 : vector<128xf32> to vector<1x1x128xf32>
    %17 = vector.broadcast %16 : vector<1x1x128xf32> to vector<16x16x128xf32>
    %18 = arith.addf %13, %17 : vector<16x16x128xf32>
    %19 = arith.truncf %18 : vector<16x16x128xf32> to vector<16x16x128xbf16>
    %c1 = arith.constant 1 : index
    %c1_31 = arith.constant 1 : index
    %c0_32 = arith.constant 0 : index
    %20 = vector.load %arg8[%c1, %c1_31, %c0_32] : memref<18x24x128xbf16, #tpu.memory_space<vmem>>, vector<16x16x128xbf16>
    tpu.vector_store %arg8[%c1, %c1_31, %c0_32], %19 {strides = array<i32>} : memref<18x24x128xbf16, #tpu.memory_space<vmem>>, vector<16x16x128xbf16>,
    %c0_33 = arith.constant 0 : index
    %c0_34 = arith.constant 0 : index
    %c0_35 = arith.constant 0 : index
    %21 = vector.load %arg8[%c0_33, %c0_34, %c0_35] : memref<18x24x128xbf16, #tpu.memory_space<vmem>>, vector<18x16x128xbf16>
    %c0_36 = arith.constant 0 : index
    %c0_37 = arith.constant 0 : index
    %c0_38 = arith.constant 0 : index
    %22 = vector.load %arg9[%c0_36, %c0_37, %c0_38] : memref<18x16x384xbf16, #tpu.memory_space<vmem>>, vector<18x16x128xbf16>
    tpu.vector_store %arg9[%c0_36, %c0_37, %c0_38], %21 {strides = array<i32>} : memref<18x16x384xbf16, #tpu.memory_space<vmem>>, vector<18x16x128xbf16>,
    %c0_39 = arith.constant 0 : index
    %c1_40 = arith.constant 1 : index
    %c0_41 = arith.constant 0 : index
    %23 = vector.load %arg8[%c0_39, %c1_40, %c0_41] : memref<18x24x128xbf16, #tpu.memory_space<vmem>>, vector<18x16x128xbf16>
    %c0_42 = arith.constant 0 : index
    %c0_43 = arith.constant 0 : index
    %c128 = arith.constant 128 : index
    %24 = vector.load %arg9[%c0_42, %c0_43, %c128] : memref<18x16x384xbf16, #tpu.memory_space<vmem>>, vector<18x16x128xbf16>
    tpu.vector_store %arg9[%c0_42, %c0_43, %c128], %23 {strides = array<i32>} : memref<18x16x384xbf16, #tpu.memory_space<vmem>>, vector<18x16x128xbf16>,
    %c0_44 = arith.constant 0 : index
    %c2 = arith.constant 2 : index
    %c0_45 = arith.constant 0 : index
    %25 = vector.load %arg8[%c0_44, %c2, %c0_45] : memref<18x24x128xbf16, #tpu.memory_space<vmem>>, vector<18x16x128xbf16>
    %c0_46 = arith.constant 0 : index
    %c0_47 = arith.constant 0 : index
    %c256 = arith.constant 256 : index
    %26 = vector.load %arg9[%c0_46, %c0_47, %c256] : memref<18x16x384xbf16, #tpu.memory_space<vmem>>, vector<18x16x128xbf16>
    tpu.vector_store %arg9[%c0_46, %c0_47, %c256], %25 {strides = array<i32>} : memref<18x16x384xbf16, #tpu.memory_space<vmem>>, vector<18x16x128xbf16>,
    %c0_48 = arith.constant 0 : index
    %c0_49 = arith.constant 0 : index
    %c0_50 = arith.constant 0 : index
    %27 = vector.load %arg9[%c0_48, %c0_49, %c0_50] : memref<18x16x384xbf16, #tpu.memory_space<vmem>>, vector<16x16x384xbf16>
    %28 = vector.shape_cast %27 : vector<16x16x384xbf16> to vector<256x384xbf16>
    %c0_51 = arith.constant 0 : index
    %c0_52 = arith.constant 0 : index
    %c0_53 = arith.constant 0 : index
    %29 = vector.load %arg2[%c0_51, %c0_52, %c0_53] : memref<3x384x128xbf16, #tpu.memory_space<vmem>>, vector<1x384x128xbf16>
    %30 = vector.shape_cast %29 : vector<1x384x128xbf16> to vector<384x128xbf16>
    %cst_54 = arith.constant dense<0.000000e+00> : vector<256x128xf32>
    %31 = tpu.matmul %28, %30, %cst_54 {dimension_numbers = #tpu.dot_dimension_numbers<[1], [0], [0], [1], [0, 0, 1, 1], [], []>} : vector<256x384xbf16>, vector<384x128xbf16>, vector<256x128xf32> -> vector<256x128xf32>
    %c1_55 = arith.constant 1 : index
    %c0_56 = arith.constant 0 : index
    %c0_57 = arith.constant 0 : index
    %32 = vector.load %arg9[%c1_55, %c0_56, %c0_57] : memref<18x16x384xbf16, #tpu.memory_space<vmem>>, vector<16x16x384xbf16>
    %33 = vector.shape_cast %32 : vector<16x16x384xbf16> to vector<256x384xbf16>
    %c1_58 = arith.constant 1 : index
    %c0_59 = arith.constant 0 : index
    %c0_60 = arith.constant 0 : index
    %34 = vector.load %arg2[%c1_58, %c0_59, %c0_60] : memref<3x384x128xbf16, #tpu.memory_space<vmem>>, vector<1x384x128xbf16>
    %35 = vector.shape_cast %34 : vector<1x384x128xbf16> to vector<384x128xbf16>
    %cst_61 = arith.constant dense<0.000000e+00> : vector<256x128xf32>
    %36 = tpu.matmul %33, %35, %cst_61 {dimension_numbers = #tpu.dot_dimension_numbers<[1], [0], [0], [1], [0, 0, 1, 1], [], []>} : vector<256x384xbf16>, vector<384x128xbf16>, vector<256x128xf32> -> vector<256x128xf32>
    %37 = arith.addf %31, %36 : vector<256x128xf32>
    %c2_62 = arith.constant 2 : index
    %c0_63 = arith.constant 0 : index
    %c0_64 = arith.constant 0 : index
    %38 = vector.load %arg9[%c2_62, %c0_63, %c0_64] : memref<18x16x384xbf16, #tpu.memory_space<vmem>>, vector<16x16x384xbf16>
    %39 = vector.shape_cast %38 : vector<16x16x384xbf16> to vector<256x384xbf16>
    %c2_65 = arith.constant 2 : index
    %c0_66 = arith.constant 0 : index
    %c0_67 = arith.constant 0 : index
    %40 = vector.load %arg2[%c2_65, %c0_66, %c0_67] : memref<3x384x128xbf16, #tpu.memory_space<vmem>>, vector<1x384x128xbf16>
    %41 = vector.shape_cast %40 : vector<1x384x128xbf16> to vector<384x128xbf16>
    %cst_68 = arith.constant dense<0.000000e+00> : vector<256x128xf32>
    %42 = tpu.matmul %39, %41, %cst_68 {dimension_numbers = #tpu.dot_dimension_numbers<[1], [0], [0], [1], [0, 0, 1, 1], [], []>} : vector<256x384xbf16>, vector<384x128xbf16>, vector<256x128xf32> -> vector<256x128xf32>
    %43 = arith.addf %37, %42 : vector<256x128xf32>
    %c0_69 = arith.constant 0 : index
    %c0_70 = arith.constant 0 : index
    %44 = vector.load %arg5[%c0_69, %c0_70] : memref<1x128xf32, #tpu.memory_space<vmem>>, vector<1x128xf32>
    %45 = vector.shape_cast %44 : vector<1x128xf32> to vector<128xf32>
    %46 = vector.shape_cast %45 : vector<128xf32> to vector<1x128xf32>
    %47 = vector.broadcast %46 : vector<1x128xf32> to vector<256x128xf32>
    %48 = arith.addf %43, %47 : vector<256x128xf32>
    %cst_71 = arith.constant 0.000000e+00 : f32
    %49 = vector.broadcast %cst_71 : f32 to vector<256x128xf32>
    %50 = arith.maximumf %48, %49 : vector<256x128xf32>
    %51 = vector.shape_cast %50 : vector<256x128xf32> to vector<16x16x128xf32>
    %52 = arith.truncf %51 : vector<16x16x128xf32> to vector<16x16x128xbf16>
    %c1_72 = arith.constant 1 : index
    %c1_73 = arith.constant 1 : index
    %c0_74 = arith.constant 0 : index
    %53 = vector.load %arg10[%c1_72, %c1_73, %c0_74] : memref<18x24x128xbf16, #tpu.memory_space<vmem>>, vector<16x16x128xbf16>
    tpu.vector_store %arg10[%c1_72, %c1_73, %c0_74], %52 {strides = array<i32>} : memref<18x24x128xbf16, #tpu.memory_space<vmem>>, vector<16x16x128xbf16>,
    %c0_75 = arith.constant 0 : index
    %c0_76 = arith.constant 0 : index
    %c0_77 = arith.constant 0 : index
    %54 = vector.load %arg10[%c0_75, %c0_76, %c0_77] : memref<18x24x128xbf16, #tpu.memory_space<vmem>>, vector<18x16x128xbf16>
    %c0_78 = arith.constant 0 : index
    %c0_79 = arith.constant 0 : index
    %c0_80 = arith.constant 0 : index
    %55 = vector.load %arg11[%c0_78, %c0_79, %c0_80] : memref<18x16x384xbf16, #tpu.memory_space<vmem>>, vector<18x16x128xbf16>
    tpu.vector_store %arg11[%c0_78, %c0_79, %c0_80], %54 {strides = array<i32>} : memref<18x16x384xbf16, #tpu.memory_space<vmem>>, vector<18x16x128xbf16>,
    %c0_81 = arith.constant 0 : index
    %c1_82 = arith.constant 1 : index
    %c0_83 = arith.constant 0 : index
    %56 = vector.load %arg10[%c0_81, %c1_82, %c0_83] : memref<18x24x128xbf16, #tpu.memory_space<vmem>>, vector<18x16x128xbf16>
    %c0_84 = arith.constant 0 : index
    %c0_85 = arith.constant 0 : index
    %c128_86 = arith.constant 128 : index
    %57 = vector.load %arg11[%c0_84, %c0_85, %c128_86] : memref<18x16x384xbf16, #tpu.memory_space<vmem>>, vector<18x16x128xbf16>
    tpu.vector_store %arg11[%c0_84, %c0_85, %c128_86], %56 {strides = array<i32>} : memref<18x16x384xbf16, #tpu.memory_space<vmem>>, vector<18x16x128xbf16>,
    %c0_87 = arith.constant 0 : index
    %c2_88 = arith.constant 2 : index
    %c0_89 = arith.constant 0 : index
    %58 = vector.load %arg10[%c0_87, %c2_88, %c0_89] : memref<18x24x128xbf16, #tpu.memory_space<vmem>>, vector<18x16x128xbf16>
    %c0_90 = arith.constant 0 : index
    %c0_91 = arith.constant 0 : index
    %c256_92 = arith.constant 256 : index
    %59 = vector.load %arg11[%c0_90, %c0_91, %c256_92] : memref<18x16x384xbf16, #tpu.memory_space<vmem>>, vector<18x16x128xbf16>
    tpu.vector_store %arg11[%c0_90, %c0_91, %c256_92], %58 {strides = array<i32>} : memref<18x16x384xbf16, #tpu.memory_space<vmem>>, vector<18x16x128xbf16>,
    %c0_93 = arith.constant 0 : index
    %c0_94 = arith.constant 0 : index
    %c0_95 = arith.constant 0 : index
    %60 = vector.load %arg11[%c0_93, %c0_94, %c0_95] : memref<18x16x384xbf16, #tpu.memory_space<vmem>>, vector<16x16x384xbf16>
    %61 = vector.shape_cast %60 : vector<16x16x384xbf16> to vector<256x384xbf16>
    %c0_96 = arith.constant 0 : index
    %c0_97 = arith.constant 0 : index
    %c0_98 = arith.constant 0 : index
    %62 = vector.load %arg3[%c0_96, %c0_97, %c0_98] : memref<3x384x128xbf16, #tpu.memory_space<vmem>>, vector<1x384x128xbf16>
    %63 = vector.shape_cast %62 : vector<1x384x128xbf16> to vector<384x128xbf16>
    %cst_99 = arith.constant dense<0.000000e+00> : vector<256x128xf32>
    %64 = tpu.matmul %61, %63, %cst_99 {dimension_numbers = #tpu.dot_dimension_numbers<[1], [0], [0], [1], [0, 0, 1, 1], [], []>} : vector<256x384xbf16>, vector<384x128xbf16>, vector<256x128xf32> -> vector<256x128xf32>
    %c1_100 = arith.constant 1 : index
    %c0_101 = arith.constant 0 : index
    %c0_102 = arith.constant 0 : index
    %65 = vector.load %arg11[%c1_100, %c0_101, %c0_102] : memref<18x16x384xbf16, #tpu.memory_space<vmem>>, vector<16x16x384xbf16>
    %66 = vector.shape_cast %65 : vector<16x16x384xbf16> to vector<256x384xbf16>
    %c1_103 = arith.constant 1 : index
    %c0_104 = arith.constant 0 : index
    %c0_105 = arith.constant 0 : index
    %67 = vector.load %arg3[%c1_103, %c0_104, %c0_105] : memref<3x384x128xbf16, #tpu.memory_space<vmem>>, vector<1x384x128xbf16>
    %68 = vector.shape_cast %67 : vector<1x384x128xbf16> to vector<384x128xbf16>
    %cst_106 = arith.constant dense<0.000000e+00> : vector<256x128xf32>
    %69 = tpu.matmul %66, %68, %cst_106 {dimension_numbers = #tpu.dot_dimension_numbers<[1], [0], [0], [1], [0, 0, 1, 1], [], []>} : vector<256x384xbf16>, vector<384x128xbf16>, vector<256x128xf32> -> vector<256x128xf32>
    %70 = arith.addf %64, %69 : vector<256x128xf32>
    %c2_107 = arith.constant 2 : index
    %c0_108 = arith.constant 0 : index
    %c0_109 = arith.constant 0 : index
    %71 = vector.load %arg11[%c2_107, %c0_108, %c0_109] : memref<18x16x384xbf16, #tpu.memory_space<vmem>>, vector<16x16x384xbf16>
    %72 = vector.shape_cast %71 : vector<16x16x384xbf16> to vector<256x384xbf16>
    %c2_110 = arith.constant 2 : index
    %c0_111 = arith.constant 0 : index
    %c0_112 = arith.constant 0 : index
    %73 = vector.load %arg3[%c2_110, %c0_111, %c0_112] : memref<3x384x128xbf16, #tpu.memory_space<vmem>>, vector<1x384x128xbf16>
    %74 = vector.shape_cast %73 : vector<1x384x128xbf16> to vector<384x128xbf16>
    %cst_113 = arith.constant dense<0.000000e+00> : vector<256x128xf32>
    %75 = tpu.matmul %72, %74, %cst_113 {dimension_numbers = #tpu.dot_dimension_numbers<[1], [0], [0], [1], [0, 0, 1, 1], [], []>} : vector<256x384xbf16>, vector<384x128xbf16>, vector<256x128xf32> -> vector<256x128xf32>
    %76 = arith.addf %70, %75 : vector<256x128xf32>
    %c0_114 = arith.constant 0 : index
    %c0_115 = arith.constant 0 : index
    %77 = vector.load %arg6[%c0_114, %c0_115] : memref<1x128xf32, #tpu.memory_space<vmem>>, vector<1x128xf32>
    %78 = vector.shape_cast %77 : vector<1x128xf32> to vector<128xf32>
    %79 = vector.shape_cast %78 : vector<128xf32> to vector<1x128xf32>
    %80 = vector.broadcast %79 : vector<1x128xf32> to vector<256x128xf32>
    %81 = arith.addf %76, %80 : vector<256x128xf32>
    %82 = vector.shape_cast %81 : vector<256x128xf32> to vector<16x16x128xf32>
    %c0_116 = arith.constant 0 : index
    %c0_117 = arith.constant 0 : index
    %c0_118 = arith.constant 0 : index
    %c0_119 = arith.constant 0 : index
    %83 = vector.load %arg7[%c0_116, %c0_117, %c0_118, %c0_119] : memref<1x16x16x128xf32, #tpu.memory_space<vmem>>, vector<1x16x16x128xf32>
    %84 = vector.shape_cast %83 : vector<1x16x16x128xf32> to vector<16x16x128xf32>
    %85 = vector.shape_cast %82 : vector<16x16x128xf32> to vector<1x16x16x128xf32>
    tpu.vector_store %arg7[%c0_116, %c0_117, %c0_118, %c0_119], %85 {strides = array<i32>} : memref<1x16x16x128xf32, #tpu.memory_space<vmem>>, vector<1x16x16x128xf32>,
    return
  }
  func.func @transform_0(%arg0: i32) -> (i32, i32, i32, i32) {
    %c0_i32 = arith.constant 0 : i32
    %c0_i32_0 = arith.constant 0 : i32
    %c0_i32_1 = arith.constant 0 : i32
    %c0_i32_2 = arith.constant 0 : i32
    return %arg0, %c0_i32, %c0_i32_0, %c0_i32_1 : i32, i32, i32, i32
  }
  func.func @transform_1(%arg0: i32) -> (i32, i32, i32) {
    %c0_i32 = arith.constant 0 : i32
    %c0_i32_0 = arith.constant 0 : i32
    %c0_i32_1 = arith.constant 0 : i32
    %c0_i32_2 = arith.constant 0 : i32
    return %c0_i32, %c0_i32_0, %c0_i32_1 : i32, i32, i32
  }
  func.func @transform_2(%arg0: i32) -> (i32, i32, i32) {
    %c0_i32 = arith.constant 0 : i32
    %c0_i32_0 = arith.constant 0 : i32
    %c0_i32_1 = arith.constant 0 : i32
    %c0_i32_2 = arith.constant 0 : i32
    return %c0_i32, %c0_i32_0, %c0_i32_1 : i32, i32, i32
  }
  func.func @transform_3(%arg0: i32) -> (i32, i32) {
    %c0_i32 = arith.constant 0 : i32
    %c0_i32_0 = arith.constant 0 : i32
    %c0_i32_1 = arith.constant 0 : i32
    return %c0_i32, %c0_i32_0 : i32, i32
  }
  func.func @transform_4(%arg0: i32) -> (i32, i32) {
    %c0_i32 = arith.constant 0 : i32
    %c0_i32_0 = arith.constant 0 : i32
    %c0_i32_1 = arith.constant 0 : i32
    return %c0_i32, %c0_i32_0 : i32, i32
  }
  func.func @transform_5(%arg0: i32) -> (i32, i32) {
    %c0_i32 = arith.constant 0 : i32
    %c0_i32_0 = arith.constant 0 : i32
    %c0_i32_1 = arith.constant 0 : i32
    return %c0_i32, %c0_i32_0 : i32, i32
  }
  func.func @transform_6(%arg0: i32) -> (i32, i32, i32, i32) {
    %c0_i32 = arith.constant 0 : i32
    %c0_i32_0 = arith.constant 0 : i32
    %c0_i32_1 = arith.constant 0 : i32
    %c0_i32_2 = arith.constant 0 : i32
    return %arg0, %c0_i32, %c0_i32_0, %c0_i32_1 : i32, i32, i32, i32
  }
}

</mosaic_0001>

<llo_original>
// kernel: _lambda_.1
$region0: #{_lambda_.1}
  #allocation0 [shape = 'u32[]', space=smem, size = 0x4, offset = 0x4, fixed_abs, tag = 'smem constant byte address 0x4 - core index']
  #allocation1 [shape = 'u32[144,128]{1,0:T(1,128)}', space=vmem, size = 0x12000, scoped, tag = 'internal scratch']
  #allocation2 [shape = 'bf16[18,24,128]{2,1,0:T(8,128)(2,1)}', space=vmem, size = 0x1b000, scoped, tag = 'scratch operand']
  #allocation3 [shape = 'bf16[18,16,384]{2,1,0:T(16,128)(2,1)}', space=vmem, size = 0x36000, scoped, tag = 'scratch operand']
  #allocation4 [shape = 'bf16[18,24,128]{2,1,0:T(8,128)(2,1)}', space=vmem, size = 0x1b000, scoped, tag = 'scratch operand']
  #allocation5 [shape = 'bf16[18,16,384]{2,1,0:T(16,128)(2,1)}', space=vmem, size = 0x36000, scoped, tag = 'scratch operand']
  %s0 = inlined_call_operand.vmem [shape: f32[2,16,16,128], index: 0, kind: input, shape index: {}]
  %s1 = inlined_call_operand.vmem [shape: bf16[3,384,128], index: 1, kind: input, shape index: {}]
  %s2 = inlined_call_operand.vmem [shape: bf16[3,384,128], index: 2, kind: input, shape index: {}]
  %s3 = inlined_call_operand.vmem [shape: f32[1,128], index: 3, kind: input, shape index: {}]
  %s4 = inlined_call_operand.vmem [shape: f32[1,128], index: 4, kind: input, shape index: {}]
  %s5 = inlined_call_operand.vmem [shape: f32[1,128], index: 5, kind: input, shape index: {}]
  %s6 = inlined_call_operand.vmem [shape: f32[2,16,16,128], index: 6, kind: output, shape index: {}]
  %s7 = sld [smem:[#allocation0]]
  $region57: #{_lambda_.1} parent=0
    _
  %s9 = ssub.s32 1, %s7
  %s10 = scalar_select 0, %s9, %s7
  loop: start=0, step=1, limit=4
  $region2: #{_lambda_.1} parent=0 // loop_pre_header
    _
  $region3: #{_lambda_.1} parent=0 // loop_header
    %s12 = sphi 0, %s16
    %p13 = scmp.ge.s32.totalorder %s12, 4
    %s22 = sphi 0, %s24
    %s25 = sphi 0, %s22
    %s26 = sphi 0, %s25
    %s42 = sphi 0, %s26
    %s46 = sphi 0, %s46
    %s48 = sphi 0, %s46
    %s49 = sphi 0, %s48
    %s63 = sphi 0, %s49
    %s67 = sphi 0, %s67
    %s69 = sphi 0, %s67
    %s70 = sphi 0, %s69
    %s84 = sphi 0, %s70
    %s88 = sphi 0, %s88
    %s90 = sphi 0, %s88
    %s91 = sphi 0, %s90
    %s105 = sphi 0, %s91
    %s109 = sphi 0, %s109
    %s111 = sphi 0, %s109
    %s112 = sphi 0, %s111
    %s126 = sphi 0, %s112
    %s130 = sphi 0, %s130
    %s132 = sphi 0, %s130
    %s133 = sphi 0, %s132
    %s147 = sphi 0, %s133
    %s153 = sphi 0, %s155
    %s156 = sphi 0, %s153
    %s157 = sphi 0, %s156
    %s173 = sphi 0, %s157
  $region4: #{_lambda_.1} parent=0 // loop_header_branch
    %15 = sbr.rel (%p13) target = $region8
  $region5: #{_lambda_.1} parent=0 // loop_body
    %s17 = ssub.s32 %s12, 1
    %s18 = ssub.s32 %s12, 2
    %s19 = sadd.s32 %s12, 1
    %s20 = ssub.s32 %s12, %s19
    %p21 = scmp.eq.s32.totalorder %s20, 0
    %s23 = sadd.s32 %s22, 1
    %s24 = scalar_select %p21, %s22, %s23
    %p27 = pneg %p21
    %p28 = scmp.eq.s32.totalorder %s12, 1
    %p29 = por %p27, %p28
    %p30 = scmp.ne.s32.totalorder %s22, %s25
    %p31 = scmp.eq.s32.totalorder %s12, 0
    %p32 = por %p30, %p31
    %p33 = scmp.ne.s32.totalorder %s22, %s25
    %p34 = scmp.eq.s32.totalorder %s17, 1
    %p35 = por %p33, %p34
    %p36 = scmp.ne.s32.totalorder %s25, %s26
    %p37 = scmp.eq.s32.totalorder %s17, 0
    %p38 = por %p36, %p37
    %p39 = scmp.ne.s32.totalorder %s25, %s26
    %p40 = scmp.eq.s32.totalorder %s18, 1
    %p41 = por %p39, %p40
    %p43 = scmp.ne.s32.totalorder %s26, %s42
    %p44 = scmp.eq.s32.totalorder %s18, 0
    %p45 = por %p43, %p44
    %s47 = sadd.s32 %s46, 1
    %p50 = scmp.eq.s32.totalorder %s12, 1
    %p51 = scmp.ne.s32.totalorder %s46, %s48
    %p52 = scmp.eq.s32.totalorder %s12, 0
    %p53 = por %p51, %p52
    %p54 = scmp.ne.s32.totalorder %s46, %s48
    %p55 = scmp.eq.s32.totalorder %s17, 1
    %p56 = por %p54, %p55
    %p57 = scmp.ne.s32.totalorder %s48, %s49
    %p58 = scmp.eq.s32.totalorder %s17, 0
    %p59 = por %p57, %p58
    %p60 = scmp.ne.s32.totalorder %s48, %s49
    %p61 = scmp.eq.s32.totalorder %s18, 1
    %p62 = por %p60, %p61
    %p64 = scmp.ne.s32.totalorder %s49, %s63
    %p65 = scmp.eq.s32.totalorder %s18, 0
    %p66 = por %p64, %p65
    %s68 = sadd.s32 %s67, 1
    %p71 = scmp.eq.s32.totalorder %s12, 1
    %p72 = scmp.ne.s32.totalorder %s67, %s69
    %p73 = scmp.eq.s32.totalorder %s12, 0
    %p74 = por %p72, %p73
    %p75 = scmp.ne.s32.totalorder %s67, %s69
    %p76 = scmp.eq.s32.totalorder %s17, 1
    %p77 = por %p75, %p76
    %p78 = scmp.ne.s32.totalorder %s69, %s70
    %p79 = scmp.eq.s32.totalorder %s17, 0
    %p80 = por %p78, %p79
    %p81 = scmp.ne.s32.totalorder %s69, %s70
    %p82 = scmp.eq.s32.totalorder %s18, 1
    %p83 = por %p81, %p82
    %p85 = scmp.ne.s32.totalorder %s70, %s84
    %p86 = scmp.eq.s32.totalorder %s18, 0
    %p87 = por %p85, %p86
    %s89 = sadd.s32 %s88, 1
    %p92 = scmp.eq.s32.totalorder %s12, 1
    %p93 = scmp.ne.s32.totalorder %s88, %s90
    %p94 = scmp.eq.s32.totalorder %s12, 0
    %p95 = por %p93, %p94
    %p96 = scmp.ne.s32.totalorder %s88, %s90
    %p97 = scmp.eq.s32.totalorder %s17, 1
    %p98 = por %p96, %p97
    %p99 = scmp.ne.s32.totalorder %s90, %s91
    %p100 = scmp.eq.s32.totalorder %s17, 0
    %p101 = por %p99, %p100
    %p102 = scmp.ne.s32.totalorder %s90, %s91
    %p103 = scmp.eq.s32.totalorder %s18, 1
    %p104 = por %p102, %p103
    %p106 = scmp.ne.s32.totalorder %s91, %s105
    %p107 = scmp.eq.s32.totalorder %s18, 0
    %p108 = por %p106, %p107
    %s110 = sadd.s32 %s109, 1
    %p113 = scmp.eq.s32.totalorder %s12, 1
    %p114 = scmp.ne.s32.totalorder %s109, %s111
    %p115 = scmp.eq.s32.totalorder %s12, 0
    %p116 = por %p114, %p115
    %p117 = scmp.ne.s32.totalorder %s109, %s111
    %p118 = scmp.eq.s32.totalorder %s17, 1
    %p119 = por %p117, %p118
    %p120 = scmp.ne.s32.totalorder %s111, %s112
    %p121 = scmp.eq.s32.totalorder %s17, 0
    %p122 = por %p120, %p121
    %p123 = scmp.ne.s32.totalorder %s111, %s112
    %p124 = scmp.eq.s32.totalorder %s18, 1
    %p125 = por %p123, %p124
    %p127 = scmp.ne.s32.totalorder %s112, %s126
    %p128 = scmp.eq.s32.totalorder %s18, 0
    %p129 = por %p127, %p128
    %s131 = sadd.s32 %s130, 1
    %p134 = scmp.eq.s32.totalorder %s12, 1
    %p135 = scmp.ne.s32.totalorder %s130, %s132
    %p136 = scmp.eq.s32.totalorder %s12, 0
    %p137 = por %p135, %p136
    %p138 = scmp.ne.s32.totalorder %s130, %s132
    %p139 = scmp.eq.s32.totalorder %s17, 1
    %p140 = por %p138, %p139
    %p141 = scmp.ne.s32.totalorder %s132, %s133
    %p142 = scmp.eq.s32.totalorder %s17, 0
    %p143 = por %p141, %p142
    %p144 = scmp.ne.s32.totalorder %s132, %s133
    %p145 = scmp.eq.s32.totalorder %s18, 1
    %p146 = por %p144, %p145
    %p148 = scmp.ne.s32.totalorder %s133, %s147
    %p149 = scmp.eq.s32.totalorder %s18, 0
    %p150 = por %p148, %p149
    %s151 = ssub.s32 %s12, %s19
    %p152 = scmp.eq.s32.totalorder %s151, 0
    %s154 = sadd.s32 %s153, 1
    %s155 = scalar_select %p152, %s153, %s154
    %p158 = pneg %p152
    %p159 = scmp.eq.s32.totalorder %s12, 1
    %p160 = por %p158, %p159
    %p161 = scmp.ne.s32.totalorder %s153, %s156
    %p162 = scmp.eq.s32.totalorder %s12, 0
    %p163 = por %p161, %p162
    %p164 = scmp.ne.s32.totalorder %s153, %s156
    %p165 = scmp.eq.s32.totalorder %s17, 1
    %p166 = por %p164, %p165
    %p167 = scmp.ne.s32.totalorder %s156, %s157
    %p168 = scmp.eq.s32.totalorder %s17, 0
    %p169 = por %p167, %p168
    %p170 = scmp.ne.s32.totalorder %s156, %s157
    %p171 = scmp.eq.s32.totalorder %s18, 1
    %p172 = por %p170, %p171
    %p174 = scmp.ne.s32.totalorder %s157, %s173
    %p175 = scmp.eq.s32.totalorder %s18, 0
    %p176 = por %p174, %p175
    %p177 = scmp.le.s32.totalorder 1, %s12
    %p178 = scmp.lt.s32.totalorder %s12, 3
    %p179 = pnand %p177, %p178
    %p180 = pneg %p179
    // Predicated region
    $region9: #{_lambda_.1} parent=5 // pred_check
      _
    $region10: #{_lambda_.1} parent=5 // pred_check_branch
      %182 = sbr.rel (%p179) target = $region12
    $region11: #{_lambda_.1} parent=5 // pred_region
      %s183 = ssub.s32 %s12, 1
      // Predicated region
      $region13: #{_lambda_.1} parent=11 // pred_check
        %p184 = pneg %p59
      $region14: #{_lambda_.1} parent=11 // pred_check_branch
        %186 = sbr.rel (%p184) target = $region16
      $region15: #{_lambda_.1} parent=11 // pred_region
        _
      $region16: #{_lambda_.1} parent=11 // pred_fallthru
        _
      // Predicated region
      $region17: #{_lambda_.1} parent=11 // pred_check
        %p187 = pneg %p80
      $region18: #{_lambda_.1} parent=11 // pred_check_branch
        %189 = sbr.rel (%p187) target = $region20
      $region19: #{_lambda_.1} parent=11 // pred_region
        _
      $region20: #{_lambda_.1} parent=11 // pred_fallthru
        _
      // Predicated region
      $region21: #{_lambda_.1} parent=11 // pred_check
        %p190 = pneg %p101
      $region22: #{_lambda_.1} parent=11 // pred_check_branch
        %192 = sbr.rel (%p190) target = $region24
      $region23: #{_lambda_.1} parent=11 // pred_region
        _
      $region24: #{_lambda_.1} parent=11 // pred_fallthru
        _
      // Predicated region
      $region25: #{_lambda_.1} parent=11 // pred_check
        %p193 = pneg %p122
      $region26: #{_lambda_.1} parent=11 // pred_check_branch
        %195 = sbr.rel (%p193) target = $region28
      $region27: #{_lambda_.1} parent=11 // pred_region
        _
      $region28: #{_lambda_.1} parent=11 // pred_fallthru
        _
      // Predicated region
      $region29: #{_lambda_.1} parent=11 // pred_check
        %p196 = pneg %p143
      $region30: #{_lambda_.1} parent=11 // pred_check_branch
        %198 = sbr.rel (%p196) target = $region32
      $region31: #{_lambda_.1} parent=11 // pred_region
        _
      $region32: #{_lambda_.1} parent=11 // pred_fallthru
        _
    $region12: #{_lambda_.1} parent=5 // pred_fallthru
      _
    %p199 = scmp.lt.s32.totalorder %s12, 2
    // Predicated region
    $region33: #{_lambda_.1} parent=5 // pred_check
      %p200 = pneg %p199
    $region34: #{_lambda_.1} parent=5 // pred_check_branch
      %202 = sbr.rel (%p200) target = $region36
    $region35: #{_lambda_.1} parent=5 // pred_region
      // Predicated region
      $region37: #{_lambda_.1} parent=35 // pred_check
        %p203 = pneg %p32
      $region38: #{_lambda_.1} parent=35 // pred_check_branch
        %205 = sbr.rel (%p203) target = $region40
      $region39: #{_lambda_.1} parent=35 // pred_region
        %p206 = scmp.lt.s32.totalorder %s12, 1
        %s207 = scalar_select %p206, %s12, 1
        %s208 = smul.addr %s207, 32
        %s209 = smul.addr %s208, 8
        %s210 = scalar_lea.vmem %s0, %s209
      $region40: #{_lambda_.1} parent=35 // pred_fallthru
        _
    $region36: #{_lambda_.1} parent=5 // pred_fallthru
      _
    %p211 = scmp.le.s32.totalorder 1, %s12
    %p212 = scmp.lt.s32.totalorder %s12, 3
    %p213 = pnand %p211, %p212
    %p214 = pneg %p213
    // Predicated region
    $region41: #{_lambda_.1} parent=5 // pred_check
      _
    $region42: #{_lambda_.1} parent=5 // pred_check_branch
      %216 = sbr.rel (%p213) target = $region44
    $region43: #{_lambda_.1} parent=5 // pred_region
      %s217 = ssub.s32 %s12, 1
      %p218 = scmp.lt.s32.totalorder %s17, 1
      %s219 = scalar_select %p218, %s17, 1
      %s220 = smul.addr %s219, 32
      %s221 = smul.addr %s220, 8
      %s222 = scalar_lea.vmem %s0, %s221
      %p223 = pneg %p38
      %p224 = pneg %p35
      %p225 = pneg %p59
      %p226 = pneg %p56
      %p227 = pneg %p80
      %p228 = pneg %p77
      %p229 = pneg %p101
      %p230 = pneg %p98
      %p231 = pneg %p122
      %p232 = pneg %p119
      %p233 = pneg %p143
      %p234 = pneg %p140
      %p235 = pneg %p169
      %p236 = pneg %p166
      %p237 = scmp.lt.s32.totalorder %s17, 1
      %s238 = scalar_select %p237, %s17, 1
      %s239 = smul.addr %s238, 32
      %s240 = smul.addr %s239, 8
      %s241 = scalar_lea.vmem %s6, %s240
      %p242 = scmp.lt.s32.totalorder %s17, 1
      %s243 = scalar_select %p242, %s17, 1
      %s244 = smul.addr %s243, 32
      %s245 = smul.addr %s244, 8
      %s246 = scalar_lea.vmem %s0, %s245
      %p247 = scmp.lt.s32.totalorder %s17, 1
      %s248 = scalar_select %p247, %s17, 1
      %s249 = smul.addr %s248, 32
      %s250 = smul.addr %s249, 8
      %s251 = scalar_lea.vmem %s6, %s250
      %253 = vst [vmem:[#allocation2] sm:$0xf] 0
      %254 = vst [vmem:[#allocation2 + $0x4] sm:$0xf] 0
      %255 = vst [vmem:[#allocation2 + $0x8] sm:$0xf] 0
      %s256 = scalar_lea.vmem [#allocation2], 204
      %257 = vst [vmem:[%s256] sm:$0xf] 0
      %258 = vst [vmem:[%s256 + $0x4] sm:$0xf] 0
      %259 = vst [vmem:[%s256 + $0x8] sm:$0xf] 0
      %vm260 = vcmask 1040384
      %vm261 = vsmask.f32 256
      %vm262 = vmand %vm260, %vm261
      %v263 = vld [vmem:[#allocation2] sm:$0x1]
      %v264 = vsel %vm262, 0, %v263
      %265 = vst [vmem:[#allocation2] sm:$0x1] %v264
      %v266 = vld [vmem:[#allocation2 + $0xc] sm:$0x1]
      %v267 = vsel %vm262, 0, %v266
      %268 = vst [vmem:[#allocation2 + $0xc] sm:$0x1] %v267
      %v269 = vld [vmem:[#allocation2 + $0x18] sm:$0x1]
      %v270 = vsel %vm262, 0, %v269
      %271 = vst [vmem:[#allocation2 + $0x18] sm:$0x1] %v270
      %v272 = vld [vmem:[#allocation2 + $0x24] sm:$0x1]
      %v273 = vsel %vm262, 0, %v272
      %274 = vst [vmem:[#allocation2 + $0x24] sm:$0x1] %v273
      %v275 = vld [vmem:[#allocation2 + $0x30] sm:$0x1]
      %v276 = vsel %vm262, 0, %v275
      %277 = vst [vmem:[#allocation2 + $0x30] sm:$0x1] %v276
      %v278 = vld [vmem:[#allocation2 + $0x3c] sm:$0x1]
      %v279 = vsel %vm262, 0, %v278
      %280 = vst [vmem:[#allocation2 + $0x3c] sm:$0x1] %v279
      %v281 = vld [vmem:[#allocation2 + $0x48] sm:$0x1]
      %v282 = vsel %vm262, 0, %v281
      %283 = vst [vmem:[#allocation2 + $0x48] sm:$0x1] %v282
      %v284 = vld [vmem:[#allocation2 + $0x54] sm:$0x1]
      %v285 = vsel %vm262, 0, %v284
      %286 = vst [vmem:[#allocation2 + $0x54] sm:$0x1] %v285
      %v287 = vld [vmem:[#allocation2 + $0x60] sm:$0x1]
      %v288 = vsel %vm262, 0, %v287
      %289 = vst [vmem:[#allocation2 + $0x60] sm:$0x1] %v288
      %v290 = vld [vmem:[#allocation2 + $0x6c] sm:$0x1]
      %v291 = vsel %vm262, 0, %v290
      %292 = vst [vmem:[#allocation2 + $0x6c] sm:$0x1] %v291
      %v293 = vld [vmem:[#allocation2 + $0x78] sm:$0x1]
      %v294 = vsel %vm262, 0, %v293
      %295 = vst [vmem:[#allocation2 + $0x78] sm:$0x1] %v294
      %v296 = vld [vmem:[#allocation2 + $0x84] sm:$0x1]
      %v297 = vsel %vm262, 0, %v296
      %298 = vst [vmem:[#allocation2 + $0x84] sm:$0x1] %v297
      %v299 = vld [vmem:[#allocation2 + $0x90] sm:$0x1]
      %v300 = vsel %vm262, 0, %v299
      %301 = vst [vmem:[#allocation2 + $0x90] sm:$0x1] %v300
      %v302 = vld [vmem:[#allocation2 + $0x9c] sm:$0x1]
      %v303 = vsel %vm262, 0, %v302
      %304 = vst [vmem:[#allocation2 + $0x9c] sm:$0x1] %v303
      %v305 = vld [vmem:[#allocation2 + $0xa8] sm:$0x1]
      %v306 = vsel %vm262, 0, %v305
      %307 = vst [vmem:[#allocation2 + $0xa8] sm:$0x1] %v306
      %v308 = vld [vmem:[#allocation2 + $0xb4] sm:$0x1]
      %v309 = vsel %vm262, 0, %v308
      %310 = vst [vmem:[#allocation2 + $0xb4] sm:$0x1] %v309
      %v311 = vld [vmem:[#allocation2 + $0xc0] sm:$0x1]
      %v312 = vsel %vm262, 0, %v311
      %313 = vst [vmem:[#allocation2 + $0xc0] sm:$0x1] %v312
      %v314 = vld [vmem:[#allocation2 + $0xcc] sm:$0x1]
      %v315 = vsel %vm262, 0, %v314
      %316 = vst [vmem:[#allocation2 + $0xcc] sm:$0x1] %v315
      %vm317 = vsmask.f32 7938
      %vm318 = vmand %vm260, %vm317
      %v319 = vld [vmem:[#allocation2 + $0x8] sm:$0x1]
      %v320 = vsel %vm318, 0, %v319
      %321 = vst [vmem:[#allocation2 + $0x8] sm:$0x1] %v320
      %v322 = vld [vmem:[#allocation2 + $0x14] sm:$0x1]
      %v323 = vsel %vm318, 0, %v322
      %324 = vst [vmem:[#allocation2 + $0x14] sm:$0x1] %v323
      %v325 = vld [vmem:[#allocation2 + $0x20] sm:$0x1]
      %v326 = vsel %vm318, 0, %v325
      %327 = vst [vmem:[#allocation2 + $0x20] sm:$0x1] %v326
      %v328 = vld [vmem:[#allocation2 + $0x2c] sm:$0x1]
      %v329 = vsel %vm318, 0, %v328
      %330 = vst [vmem:[#allocation2 + $0x2c] sm:$0x1] %v329
      %v331 = vld [vmem:[#allocation2 + $0x38] sm:$0x1]
      %v332 = vsel %vm318, 0, %v331
      %333 = vst [vmem:[#allocation2 + $0x38] sm:$0x1] %v332
      %v334 = vld [vmem:[#allocation2 + $0x44] sm:$0x1]
      %v335 = vsel %vm318, 0, %v334
      %336 = vst [vmem:[#allocation2 + $0x44] sm:$0x1] %v335
      %v337 = vld [vmem:[#allocation2 + $0x50] sm:$0x1]
      %v338 = vsel %vm318, 0, %v337
      %339 = vst [vmem:[#allocation2 + $0x50] sm:$0x1] %v338
      %v340 = vld [vmem:[#allocation2 + $0x5c] sm:$0x1]
      %v341 = vsel %vm318, 0, %v340
      %342 = vst [vmem:[#allocation2 + $0x5c] sm:$0x1] %v341
      %v343 = vld [vmem:[#allocation2 + $0x68] sm:$0x1]
      %v344 = vsel %vm318, 0, %v343
      %345 = vst [vmem:[#allocation2 + $0x68] sm:$0x1] %v344
      %v346 = vld [vmem:[#allocation2 + $0x74] sm:$0x1]
      %v347 = vsel %vm318, 0, %v346
      %348 = vst [vmem:[#allocation2 + $0x74] sm:$0x1] %v347
      %v349 = vld [vmem:[#allocation2 + $0x80] sm:$0x1]
      %v350 = vsel %vm318, 0, %v349
      %351 = vst [vmem:[#allocation2 + $0x80] sm:$0x1] %v350
      %v352 = vld [vmem:[#allocation2 + $0x8c] sm:$0x1]
      %v353 = vsel %vm318, 0, %v352
      %354 = vst [vmem:[#allocation2 + $0x8c] sm:$0x1] %v353
      %v355 = vld [vmem:[#allocation2 + $0x98] sm:$0x1]
      %v356 = vsel %vm318, 0, %v355
      %357 = vst [vmem:[#allocation2 + $0x98] sm:$0x1] %v356
      %v358 = vld [vmem:[#allocation2 + $0xa4] sm:$0x1]
      %v359 = vsel %vm318, 0, %v358
      %360 = vst [vmem:[#allocation2 + $0xa4] sm:$0x1] %v359
      %v361 = vld [vmem:[#allocation2 + $0xb0] sm:$0x1]
      %v362 = vsel %vm318, 0, %v361
      %363 = vst [vmem:[#allocation2 + $0xb0] sm:$0x1] %v362
      %v364 = vld [vmem:[#allocation2 + $0xbc] sm:$0x1]
      %v365 = vsel %vm318, 0, %v364
      %366 = vst [vmem:[#allocation2 + $0xbc] sm:$0x1] %v365
      %v367 = vld [vmem:[#allocation2 + $0xc8] sm:$0x1]
      %v368 = vsel %vm318, 0, %v367
      %369 = vst [vmem:[#allocation2 + $0xc8] sm:$0x1] %v368
      %v370 = vld [vmem:[#allocation2 + $0xd4] sm:$0x1]
      %v371 = vsel %vm318, 0, %v370
      %372 = vst [vmem:[#allocation2 + $0xd4] sm:$0x1] %v371
      %373 = vst [vmem:[#allocation4] sm:$0xf] 0
      %374 = vst [vmem:[#allocation4 + $0x4] sm:$0xf] 0
      %375 = vst [vmem:[#allocation4 + $0x8] sm:$0xf] 0
      %s376 = scalar_lea.vmem [#allocation4], 204
      %377 = vst [vmem:[%s376] sm:$0xf] 0
      %378 = vst [vmem:[%s376 + $0x4] sm:$0xf] 0
      %379 = vst [vmem:[%s376 + $0x8] sm:$0xf] 0
      %v380 = vld [vmem:[#allocation4] sm:$0x1]
      %v381 = vsel %vm262, 0, %v380
      %382 = vst [vmem:[#allocation4] sm:$0x1] %v381
      %v383 = vld [vmem:[#allocation4 + $0xc] sm:$0x1]
      %v384 = vsel %vm262, 0, %v383
      %385 = vst [vmem:[#allocation4 + $0xc] sm:$0x1] %v384
      %v386 = vld [vmem:[#allocation4 + $0x18] sm:$0x1]
      %v387 = vsel %vm262, 0, %v386
      %388 = vst [vmem:[#allocation4 + $0x18] sm:$0x1] %v387
      %v389 = vld [vmem:[#allocation4 + $0x24] sm:$0x1]
      %v390 = vsel %vm262, 0, %v389
      %391 = vst [vmem:[#allocation4 + $0x24] sm:$0x1] %v390
      %v392 = vld [vmem:[#allocation4 + $0x30] sm:$0x1]
      %v393 = vsel %vm262, 0, %v392
      %394 = vst [vmem:[#allocation4 + $0x30] sm:$0x1] %v393
      %v395 = vld [vmem:[#allocation4 + $0x3c] sm:$0x1]
      %v396 = vsel %vm262, 0, %v395
      %397 = vst [vmem:[#allocation4 + $0x3c] sm:$0x1] %v396
      %v398 = vld [vmem:[#allocation4 + $0x48] sm:$0x1]
      %v399 = vsel %vm262, 0, %v398
      %400 = vst [vmem:[#allocation4 + $0x48] sm:$0x1] %v399
      %v401 = vld [vmem:[#allocation4 + $0x54] sm:$0x1]
      %v402 = vsel %vm262, 0, %v401
      %403 = vst [vmem:[#allocation4 + $0x54] sm:$0x1] %v402
      %v404 = vld [vmem:[#allocation4 + $0x60] sm:$0x1]
      %v405 = vsel %vm262, 0, %v404
      %406 = vst [vmem:[#allocation4 + $0x60] sm:$0x1] %v405
      %v407 = vld [vmem:[#allocation4 + $0x6c] sm:$0x1]
      %v408 = vsel %vm262, 0, %v407
      %409 = vst [vmem:[#allocation4 + $0x6c] sm:$0x1] %v408
      %v410 = vld [vmem:[#allocation4 + $0x78] sm:$0x1]
      %v411 = vsel %vm262, 0, %v410
      %412 = vst [vmem:[#allocation4 + $0x78] sm:$0x1] %v411
      %v413 = vld [vmem:[#allocation4 + $0x84] sm:$0x1]
      %v414 = vsel %vm262, 0, %v413
      %415 = vst [vmem:[#allocation4 + $0x84] sm:$0x1] %v414
      %v416 = vld [vmem:[#allocation4 + $0x90] sm:$0x1]
      %v417 = vsel %vm262, 0, %v416
      %418 = vst [vmem:[#allocation4 + $0x90] sm:$0x1] %v417
      %v419 = vld [vmem:[#allocation4 + $0x9c] sm:$0x1]
      %v420 = vsel %vm262, 0, %v419
      %421 = vst [vmem:[#allocation4 + $0x9c] sm:$0x1] %v420
      %v422 = vld [vmem:[#allocation4 + $0xa8] sm:$0x1]
      %v423 = vsel %vm262, 0, %v422
      %424 = vst [vmem:[#allocation4 + $0xa8] sm:$0x1] %v423
      %v425 = vld [vmem:[#allocation4 + $0xb4] sm:$0x1]
      %v426 = vsel %vm262, 0, %v425
      %427 = vst [vmem:[#allocation4 + $0xb4] sm:$0x1] %v426
      %v428 = vld [vmem:[#allocation4 + $0xc0] sm:$0x1]
      %v429 = vsel %vm262, 0, %v428
      %430 = vst [vmem:[#allocation4 + $0xc0] sm:$0x1] %v429
      %v431 = vld [vmem:[#allocation4 + $0xcc] sm:$0x1]
      %v432 = vsel %vm262, 0, %v431
      %433 = vst [vmem:[#allocation4 + $0xcc] sm:$0x1] %v432
      %v434 = vld [vmem:[#allocation4 + $0x8] sm:$0x1]
      %v435 = vsel %vm318, 0, %v434
      %436 = vst [vmem:[#allocation4 + $0x8] sm:$0x1] %v435
      %v437 = vld [vmem:[#allocation4 + $0x14] sm:$0x1]
      %v438 = vsel %vm318, 0, %v437
      %439 = vst [vmem:[#allocation4 + $0x14] sm:$0x1] %v438
      %v440 = vld [vmem:[#allocation4 + $0x20] sm:$0x1]
      %v441 = vsel %vm318, 0, %v440
      %442 = vst [vmem:[#allocation4 + $0x20] sm:$0x1] %v441
      %v443 = vld [vmem:[#allocation4 + $0x2c] sm:$0x1]
      %v444 = vsel %vm318, 0, %v443
      %445 = vst [vmem:[#allocation4 + $0x2c] sm:$0x1] %v444
      %v446 = vld [vmem:[#allocation4 + $0x38] sm:$0x1]
      %v447 = vsel %vm318, 0, %v446
      %448 = vst [vmem:[#allocation4 + $0x38] sm:$0x1] %v447
      %v449 = vld [vmem:[#allocation4 + $0x44] sm:$0x1]
      %v450 = vsel %vm318, 0, %v449
      %451 = vst [vmem:[#allocation4 + $0x44] sm:$0x1] %v450
      %v452 = vld [vmem:[#allocation4 + $0x50] sm:$0x1]
      %v453 = vsel %vm318, 0, %v452
      %454 = vst [vmem:[#allocation4 + $0x50] sm:$0x1] %v453
      %v455 = vld [vmem:[#allocation4 + $0x5c] sm:$0x1]
      %v456 = vsel %vm318, 0, %v455
      %457 = vst [vmem:[#allocation4 + $0x5c] sm:$0x1] %v456
      %v458 = vld [vmem:[#allocation4 + $0x68] sm:$0x1]
      %v459 = vsel %vm318, 0, %v458
      %460 = vst [vmem:[#allocation4 + $0x68] sm:$0x1] %v459
      %v461 = vld [vmem:[#allocation4 + $0x74] sm:$0x1]
      %v462 = vsel %vm318, 0, %v461
      %463 = vst [vmem:[#allocation4 + $0x74] sm:$0x1] %v462
      %v464 = vld [vmem:[#allocation4 + $0x80] sm:$0x1]
      %v465 = vsel %vm318, 0, %v464
      %466 = vst [vmem:[#allocation4 + $0x80] sm:$0x1] %v465
      %v467 = vld [vmem:[#allocation4 + $0x8c] sm:$0x1]
      %v468 = vsel %vm318, 0, %v467
      %469 = vst [vmem:[#allocation4 + $0x8c] sm:$0x1] %v468
      %v470 = vld [vmem:[#allocation4 + $0x98] sm:$0x1]
      %v471 = vsel %vm318, 0, %v470
      %472 = vst [vmem:[#allocation4 + $0x98] sm:$0x1] %v471
      %v473 = vld [vmem:[#allocation4 + $0xa4] sm:$0x1]
      %v474 = vsel %vm318, 0, %v473
      %475 = vst [vmem:[#allocation4 + $0xa4] sm:$0x1] %v474
      %v476 = vld [vmem:[#allocation4 + $0xb0] sm:$0x1]
      %v477 = vsel %vm318, 0, %v476
      %478 = vst [vmem:[#allocation4 + $0xb0] sm:$0x1] %v477
      %v479 = vld [vmem:[#allocation4 + $0xbc] sm:$0x1]
      %v480 = vsel %vm318, 0, %v479
      %481 = vst [vmem:[#allocation4 + $0xbc] sm:$0x1] %v480
      %v482 = vld [vmem:[#allocation4 + $0xc8] sm:$0x1]
      %v483 = vsel %vm318, 0, %v482
      %484 = vst [vmem:[#allocation4 + $0xc8] sm:$0x1] %v483
      %v485 = vld [vmem:[#allocation4 + $0xd4] sm:$0x1]
      %v486 = vsel %vm318, 0, %v485
      %487 = vst [vmem:[#allocation4 + $0xd4] sm:$0x1] %v486
      %v488 = vld [vmem:[%s246] sm:$0xff]
      %v489 = vld [vmem:[%s246 + $0x8] sm:$0xff]
      %v490 = vld [vmem:[%s246 + $0x10] sm:$0xff]
      %v491 = vld [vmem:[%s246 + $0x18] sm:$0xff]
      %v492 = vld [vmem:[%s246 + $0x20] sm:$0xff]
      %v493 = vld [vmem:[%s246 + $0x28] sm:$0xff]
      %v494 = vld [vmem:[%s246 + $0x30] sm:$0xff]
      %v495 = vld [vmem:[%s246 + $0x38] sm:$0xff]
      %v496 = vld [vmem:[%s246 + $0x40] sm:$0xff]
      %v497 = vld [vmem:[%s246 + $0x48] sm:$0xff]
      %v498 = vld [vmem:[%s246 + $0x50] sm:$0xff]
      %v499 = vld [vmem:[%s246 + $0x58] sm:$0xff]
      %v500 = vld [vmem:[%s246 + $0x60] sm:$0xff]
      %v501 = vld [vmem:[%s246 + $0x68] sm:$0xff]
      %v502 = vld [vmem:[%s246 + $0x70] sm:$0xff]
      %v503 = vld [vmem:[%s246 + $0x78] sm:$0xff]
      %v504 = vld [vmem:[%s246 + $0x80] sm:$0xff]
      %v505 = vld [vmem:[%s246 + $0x88] sm:$0xff]
      %v506 = vld [vmem:[%s246 + $0x90] sm:$0xff]
      %v507 = vld [vmem:[%s246 + $0x98] sm:$0xff]
      %v508 = vld [vmem:[%s246 + $0xa0] sm:$0xff]
      %v509 = vld [vmem:[%s246 + $0xa8] sm:$0xff]
      %v510 = vld [vmem:[%s246 + $0xb0] sm:$0xff]
      %v511 = vld [vmem:[%s246 + $0xb8] sm:$0xff]
      %v512 = vld [vmem:[%s246 + $0xc0] sm:$0xff]
      %v513 = vld [vmem:[%s246 + $0xc8] sm:$0xff]
      %v514 = vld [vmem:[%s246 + $0xd0] sm:$0xff]
      %v515 = vld [vmem:[%s246 + $0xd8] sm:$0xff]
      %v516 = vld [vmem:[%s246 + $0xe0] sm:$0xff]
      %v517 = vld [vmem:[%s246 + $0xe8] sm:$0xff]
      %v518 = vld [vmem:[%s246 + $0xf0] sm:$0xff]
      %v519 = vld [vmem:[%s246 + $0xf8] sm:$0xff]
      %v520 = vld [vmem:[%s3] sm:$0x1]
      %v522 = vlaneseq
      %v523 = vshrl.u32 %v522, 7
      %v524 = vsub.s32 0, %v523
      %v525 = vrot.slane %v520, %v524
      %v527 = vadd.f32 %v488, %v525
      %v528 = vadd.f32 %v489, %v525
      %v529 = vadd.f32 %v490, %v525
      %v530 = vadd.f32 %v491, %v525
      %v531 = vadd.f32 %v492, %v525
      %v532 = vadd.f32 %v493, %v525
      %v533 = vadd.f32 %v494, %v525
      %v534 = vadd.f32 %v495, %v525
      %v535 = vadd.f32 %v496, %v525
      %v536 = vadd.f32 %v497, %v525
      %v537 = vadd.f32 %v498, %v525
      %v538 = vadd.f32 %v499, %v525
      %v539 = vadd.f32 %v500, %v525
      %v540 = vadd.f32 %v501, %v525
      %v541 = vadd.f32 %v502, %v525
      %v542 = vadd.f32 %v503, %v525
      %v543 = vadd.f32 %v504, %v525
      %v544 = vadd.f32 %v505, %v525
      %v545 = vadd.f32 %v506, %v525
      %v546 = vadd.f32 %v507, %v525
      %v547 = vadd.f32 %v508, %v525
      %v548 = vadd.f32 %v509, %v525
      %v549 = vadd.f32 %v510, %v525
      %v550 = vadd.f32 %v511, %v525
      %v551 = vadd.f32 %v512, %v525
      %v552 = vadd.f32 %v513, %v525
      %v553 = vadd.f32 %v514, %v525
      %v554 = vadd.f32 %v515, %v525
      %v555 = vadd.f32 %v516, %v525
      %v556 = vadd.f32 %v517, %v525
      %v557 = vadd.f32 %v518, %v525
      %v558 = vadd.f32 %v519, %v525
      %v559 = vpack.c.bf16 %v528, %v527
      %v560 = vpack.c.bf16 %v530, %v529
      %v561 = vpack.c.bf16 %v532, %v531
      %v562 = vpack.c.bf16 %v534, %v533
      %v563 = vpack.c.bf16 %v536, %v535
      %v564 = vpack.c.bf16 %v538, %v537
      %v565 = vpack.c.bf16 %v540, %v539
      %v566 = vpack.c.bf16 %v542, %v541
      %v567 = vpack.c.bf16 %v544, %v543
      %v568 = vpack.c.bf16 %v546, %v545
      %v569 = vpack.c.bf16 %v548, %v547
      %v570 = vpack.c.bf16 %v550, %v549
      %v571 = vpack.c.bf16 %v552, %v551
      %v572 = vpack.c.bf16 %v554, %v553
      %v573 = vpack.c.bf16 %v556, %v555
      %v574 = vpack.c.bf16 %v558, %v557
      %v591 = vunpack.c.l.b16 %v559
      %v592 = vunpack.c.h.b16 %v559
      %v593 = vunpack.c.l.b16 %v560
      %v594 = vunpack.c.h.b16 %v560
      %v595 = vunpack.c.l.b16 %v561
      %v596 = vunpack.c.h.b16 %v561
      %v597 = vunpack.c.l.b16 %v562
      %v598 = vunpack.c.h.b16 %v562
      %v599 = vunpack.c.l.b16 %v563
      %v600 = vunpack.c.h.b16 %v563
      %v601 = vunpack.c.l.b16 %v564
      %v602 = vunpack.c.h.b16 %v564
      %v603 = vunpack.c.l.b16 %v565
      %v604 = vunpack.c.h.b16 %v565
      %v605 = vunpack.c.l.b16 %v566
      %v606 = vunpack.c.h.b16 %v566
      %v607 = vunpack.c.l.b16 %v567
      %v608 = vunpack.c.h.b16 %v567
      %v609 = vunpack.c.l.b16 %v568
      %v610 = vunpack.c.h.b16 %v568
      %v611 = vunpack.c.l.b16 %v569
      %v612 = vunpack.c.h.b16 %v569
      %v613 = vunpack.c.l.b16 %v570
      %v614 = vunpack.c.h.b16 %v570
      %v615 = vunpack.c.l.b16 %v571
      %v616 = vunpack.c.h.b16 %v571
      %v617 = vunpack.c.l.b16 %v572
      %v618 = vunpack.c.h.b16 %v572
      %v619 = vunpack.c.l.b16 %v573
      %v620 = vunpack.c.h.b16 %v573
      %v621 = vunpack.c.l.b16 %v574
      %v622 = vunpack.c.h.b16 %v574
      %v623 = vpack.c.b16 %v591, %v591
      %v624 = vpack.c.b16 %v592, %v592
      %v625 = vpack.c.b16 %v593, %v593
      %v626 = vpack.c.b16 %v594, %v594
      %v627 = vpack.c.b16 %v595, %v595
      %v628 = vpack.c.b16 %v596, %v596
      %v629 = vpack.c.b16 %v597, %v597
      %v630 = vpack.c.b16 %v598, %v598
      %v631 = vpack.c.b16 %v599, %v599
      %v632 = vpack.c.b16 %v600, %v600
      %v633 = vpack.c.b16 %v601, %v601
      %v634 = vpack.c.b16 %v602, %v602
      %v635 = vpack.c.b16 %v603, %v603
      %v636 = vpack.c.b16 %v604, %v604
      %v637 = vpack.c.b16 %v605, %v605
      %v638 = vpack.c.b16 %v606, %v606
      %v639 = vpack.c.b16 %v607, %v607
      %v640 = vpack.c.b16 %v608, %v608
      %v641 = vpack.c.b16 %v609, %v609
      %v642 = vpack.c.b16 %v610, %v610
      %v643 = vpack.c.b16 %v611, %v611
      %v644 = vpack.c.b16 %v612, %v612
      %v645 = vpack.c.b16 %v613, %v613
      %v646 = vpack.c.b16 %v614, %v614
      %v647 = vpack.c.b16 %v615, %v615
      %v648 = vpack.c.b16 %v616, %v616
      %v649 = vpack.c.b16 %v617, %v617
      %v650 = vpack.c.b16 %v618, %v618
      %v651 = vpack.c.b16 %v619, %v619
      %v652 = vpack.c.b16 %v620, %v620
      %v653 = vpack.c.b16 %v621, %v621
      %v654 = vpack.c.b16 %v622, %v622
      %vm655 = vsmask.f32 4368
      %vm656 = vmor %vm261, %vm655
      %v658 = vshrl.u32 %v623, 16
      %v660 = vrot.slane %v658, 7
      %v661 = vshll.u32 %v623, 16
      %v663 = vor.u32 %v660, %v661
      %v664 = vrot.slane %v660, 4
      %v666 = vshrl.u32 %v624, 16
      %v668 = vrot.slane %v666, 7
      %v669 = vshll.u32 %v624, 16
      %v671 = vor.u32 %v668, %v669
      %v672 = vsel %vm656, %v664, %v671
      %v673 = vrot.slane %v668, 4
      %v675 = vshrl.u32 %v625, 16
      %v677 = vrot.slane %v675, 7
      %v678 = vshll.u32 %v625, 16
      %v680 = vor.u32 %v677, %v678
      %v681 = vrot.slane %v677, 4
      %v683 = vshrl.u32 %v626, 16
      %v685 = vrot.slane %v683, 7
      %v686 = vshll.u32 %v626, 16
      %v688 = vor.u32 %v685, %v686
      %v689 = vsel %vm656, %v681, %v688
      %v690 = vrot.slane %v685, 4
      %v692 = vshrl.u32 %v627, 16
      %v694 = vrot.slane %v692, 7
      %v695 = vshll.u32 %v627, 16
      %v697 = vor.u32 %v694, %v695
      %v698 = vrot.slane %v694, 4
      %v700 = vshrl.u32 %v628, 16
      %v702 = vrot.slane %v700, 7
      %v703 = vshll.u32 %v628, 16
      %v705 = vor.u32 %v702, %v703
      %v706 = vsel %vm656, %v698, %v705
      %v707 = vrot.slane %v702, 4
      %v709 = vshrl.u32 %v629, 16
      %v711 = vrot.slane %v709, 7
      %v712 = vshll.u32 %v629, 16
      %v714 = vor.u32 %v711, %v712
      %v715 = vrot.slane %v711, 4
      %v717 = vshrl.u32 %v630, 16
      %v719 = vrot.slane %v717, 7
      %v720 = vshll.u32 %v630, 16
      %v722 = vor.u32 %v719, %v720
      %v723 = vsel %vm656, %v715, %v722
      %v724 = vrot.slane %v719, 4
      %v726 = vshrl.u32 %v631, 16
      %v728 = vrot.slane %v726, 7
      %v729 = vshll.u32 %v631, 16
      %v731 = vor.u32 %v728, %v729
      %v732 = vrot.slane %v728, 4
      %v734 = vshrl.u32 %v632, 16
      %v736 = vrot.slane %v734, 7
      %v737 = vshll.u32 %v632, 16
      %v739 = vor.u32 %v736, %v737
      %v740 = vsel %vm656, %v732, %v739
      %v741 = vrot.slane %v736, 4
      %v743 = vshrl.u32 %v633, 16
      %v745 = vrot.slane %v743, 7
      %v746 = vshll.u32 %v633, 16
      %v748 = vor.u32 %v745, %v746
      %v749 = vrot.slane %v745, 4
      %v751 = vshrl.u32 %v634, 16
      %v753 = vrot.slane %v751, 7
      %v754 = vshll.u32 %v634, 16
      %v756 = vor.u32 %v753, %v754
      %v757 = vsel %vm656, %v749, %v756
      %v758 = vrot.slane %v753, 4
      %v760 = vshrl.u32 %v635, 16
      %v762 = vrot.slane %v760, 7
      %v763 = vshll.u32 %v635, 16
      %v765 = vor.u32 %v762, %v763
      %v766 = vrot.slane %v762, 4
      %v768 = vshrl.u32 %v636, 16
      %v770 = vrot.slane %v768, 7
      %v771 = vshll.u32 %v636, 16
      %v773 = vor.u32 %v770, %v771
      %v774 = vsel %vm656, %v766, %v773
      %v775 = vrot.slane %v770, 4
      %v777 = vshrl.u32 %v637, 16
      %v779 = vrot.slane %v777, 7
      %v780 = vshll.u32 %v637, 16
      %v782 = vor.u32 %v779, %v780
      %v783 = vrot.slane %v779, 4
      %v785 = vshrl.u32 %v638, 16
      %v787 = vrot.slane %v785, 7
      %v788 = vshll.u32 %v638, 16
      %v790 = vor.u32 %v787, %v788
      %v791 = vsel %vm656, %v783, %v790
      %v792 = vrot.slane %v787, 4
      %v794 = vshrl.u32 %v639, 16
      %v796 = vrot.slane %v794, 7
      %v797 = vshll.u32 %v639, 16
      %v799 = vor.u32 %v796, %v797
      %v800 = vrot.slane %v796, 4
      %v802 = vshrl.u32 %v640, 16
      %v804 = vrot.slane %v802, 7
      %v805 = vshll.u32 %v640, 16
      %v807 = vor.u32 %v804, %v805
      %v808 = vsel %vm656, %v800, %v807
      %v809 = vrot.slane %v804, 4
      %v811 = vshrl.u32 %v641, 16
      %v813 = vrot.slane %v811, 7
      %v814 = vshll.u32 %v641, 16
      %v816 = vor.u32 %v813, %v814
      %v817 = vrot.slane %v813, 4
      %v819 = vshrl.u32 %v642, 16
      %v821 = vrot.slane %v819, 7
      %v822 = vshll.u32 %v642, 16
      %v824 = vor.u32 %v821, %v822
      %v825 = vsel %vm656, %v817, %v824
      %v826 = vrot.slane %v821, 4
      %v828 = vshrl.u32 %v643, 16
      %v830 = vrot.slane %v828, 7
      %v831 = vshll.u32 %v643, 16
      %v833 = vor.u32 %v830, %v831
      %v834 = vrot.slane %v830, 4
      %v836 = vshrl.u32 %v644, 16
      %v838 = vrot.slane %v836, 7
      %v839 = vshll.u32 %v644, 16
      %v841 = vor.u32 %v838, %v839
      %v842 = vsel %vm656, %v834, %v841
      %v843 = vrot.slane %v838, 4
      %v845 = vshrl.u32 %v645, 16
      %v847 = vrot.slane %v845, 7
      %v848 = vshll.u32 %v645, 16
      %v850 = vor.u32 %v847, %v848
      %v851 = vrot.slane %v847, 4
      %v853 = vshrl.u32 %v646, 16
      %v855 = vrot.slane %v853, 7
      %v856 = vshll.u32 %v646, 16
      %v858 = vor.u32 %v855, %v856
      %v859 = vsel %vm656, %v851, %v858
      %v860 = vrot.slane %v855, 4
      %v862 = vshrl.u32 %v647, 16
      %v864 = vrot.slane %v862, 7
      %v865 = vshll.u32 %v647, 16
      %v867 = vor.u32 %v864, %v865
      %v868 = vrot.slane %v864, 4
      %v870 = vshrl.u32 %v648, 16
      %v872 = vrot.slane %v870, 7
      %v873 = vshll.u32 %v648, 16
      %v875 = vor.u32 %v872, %v873
      %v876 = vsel %vm656, %v868, %v875
      %v877 = vrot.slane %v872, 4
      %v879 = vshrl.u32 %v649, 16
      %v881 = vrot.slane %v879, 7
      %v882 = vshll.u32 %v649, 16
      %v884 = vor.u32 %v881, %v882
      %v885 = vrot.slane %v881, 4
      %v887 = vshrl.u32 %v650, 16
      %v889 = vrot.slane %v887, 7
      %v890 = vshll.u32 %v650, 16
      %v892 = vor.u32 %v889, %v890
      %v893 = vsel %vm656, %v885, %v892
      %v894 = vrot.slane %v889, 4
      %v896 = vshrl.u32 %v651, 16
      %v898 = vrot.slane %v896, 7
      %v899 = vshll.u32 %v651, 16
      %v901 = vor.u32 %v898, %v899
      %v902 = vrot.slane %v898, 4
      %v904 = vshrl.u32 %v652, 16
      %v906 = vrot.slane %v904, 7
      %v907 = vshll.u32 %v652, 16
      %v909 = vor.u32 %v906, %v907
      %v910 = vsel %vm656, %v902, %v909
      %v911 = vrot.slane %v906, 4
      %v913 = vshrl.u32 %v653, 16
      %v915 = vrot.slane %v913, 7
      %v916 = vshll.u32 %v653, 16
      %v918 = vor.u32 %v915, %v916
      %v919 = vrot.slane %v915, 4
      %v921 = vshrl.u32 %v654, 16
      %v923 = vrot.slane %v921, 7
      %v924 = vshll.u32 %v654, 16
      %v926 = vor.u32 %v923, %v924
      %v927 = vsel %vm656, %v919, %v926
      %v928 = vrot.slane %v923, 4
      %s977 = scalar_lea.vmem [#allocation2], 12
      %vm978 = vcmask 1043456
      %vm979 = vmand %vm978, %vm317
      %v980 = vld [vmem:[%s977] sm:$0xf]
      %v981 = vsel %vm979, %v663, %v980
      %982 = vst [vmem:[%s977] sm:$0xf] %v981
      %983 = vst [vmem:[%s977 + $0x4] sm:$0xf] %v672
      %v984 = vld [vmem:[%s977 + $0x8] sm:$0x1]
      %v985 = vsel %vm262, %v673, %v984
      %986 = vst [vmem:[%s977 + $0x8] sm:$0x1] %v985
      %v987 = vld [vmem:[%s977 + $0xc] sm:$0xf]
      %v988 = vsel %vm979, %v680, %v987
      %989 = vst [vmem:[%s977 + $0xc] sm:$0xf] %v988
      %990 = vst [vmem:[%s977 + $0x10] sm:$0xf] %v689
      %v991 = vld [vmem:[%s977 + $0x14] sm:$0x1]
      %v992 = vsel %vm262, %v690, %v991
      %993 = vst [vmem:[%s977 + $0x14] sm:$0x1] %v992
      %v994 = vld [vmem:[%s977 + $0x18] sm:$0xf]
      %v995 = vsel %vm979, %v697, %v994
      %996 = vst [vmem:[%s977 + $0x18] sm:$0xf] %v995
      %997 = vst [vmem:[%s977 + $0x1c] sm:$0xf] %v706
      %v998 = vld [vmem:[%s977 + $0x20] sm:$0x1]
      %v999 = vsel %vm262, %v707, %v998
      %1000 = vst [vmem:[%s977 + $0x20] sm:$0x1] %v999
      %v1001 = vld [vmem:[%s977 + $0x24] sm:$0xf]
      %v1002 = vsel %vm979, %v714, %v1001
      %1003 = vst [vmem:[%s977 + $0x24] sm:$0xf] %v1002
      %1004 = vst [vmem:[%s977 + $0x28] sm:$0xf] %v723
      %v1005 = vld [vmem:[%s977 + $0x2c] sm:$0x1]
      %v1006 = vsel %vm262, %v724, %v1005
      %1007 = vst [vmem:[%s977 + $0x2c] sm:$0x1] %v1006
      %v1008 = vld [vmem:[%s977 + $0x30] sm:$0xf]
      %v1009 = vsel %vm979, %v731, %v1008
      %1010 = vst [vmem:[%s977 + $0x30] sm:$0xf] %v1009
      %1011 = vst [vmem:[%s977 + $0x34] sm:$0xf] %v740
      %v1012 = vld [vmem:[%s977 + $0x38] sm:$0x1]
      %v1013 = vsel %vm262, %v741, %v1012
      %1014 = vst [vmem:[%s977 + $0x38] sm:$0x1] %v1013
      %v1015 = vld [vmem:[%s977 + $0x3c] sm:$0xf]
      %v1016 = vsel %vm979, %v748, %v1015
      %1017 = vst [vmem:[%s977 + $0x3c] sm:$0xf] %v1016
      %1018 = vst [vmem:[%s977 + $0x40] sm:$0xf] %v757
      %v1019 = vld [vmem:[%s977 + $0x44] sm:$0x1]
      %v1020 = vsel %vm262, %v758, %v1019
      %1021 = vst [vmem:[%s977 + $0x44] sm:$0x1] %v1020
      %v1022 = vld [vmem:[%s977 + $0x48] sm:$0xf]
      %v1023 = vsel %vm979, %v765, %v1022
      %1024 = vst [vmem:[%s977 + $0x48] sm:$0xf] %v1023
      %1025 = vst [vmem:[%s977 + $0x4c] sm:$0xf] %v774
      %v1026 = vld [vmem:[%s977 + $0x50] sm:$0x1]
      %v1027 = vsel %vm262, %v775, %v1026
      %1028 = vst [vmem:[%s977 + $0x50] sm:$0x1] %v1027
      %v1029 = vld [vmem:[%s977 + $0x54] sm:$0xf]
      %v1030 = vsel %vm979, %v782, %v1029
      %1031 = vst [vmem:[%s977 + $0x54] sm:$0xf] %v1030
      %1032 = vst [vmem:[%s977 + $0x58] sm:$0xf] %v791
      %v1033 = vld [vmem:[%s977 + $0x5c] sm:$0x1]
      %v1034 = vsel %vm262, %v792, %v1033
      %1035 = vst [vmem:[%s977 + $0x5c] sm:$0x1] %v1034
      %v1036 = vld [vmem:[%s977 + $0x60] sm:$0xf]
      %v1037 = vsel %vm979, %v799, %v1036
      %1038 = vst [vmem:[%s977 + $0x60] sm:$0xf] %v1037
      %1039 = vst [vmem:[%s977 + $0x64] sm:$0xf] %v808
      %v1040 = vld [vmem:[%s977 + $0x68] sm:$0x1]
      %v1041 = vsel %vm262, %v809, %v1040
      %1042 = vst [vmem:[%s977 + $0x68] sm:$0x1] %v1041
      %v1043 = vld [vmem:[%s977 + $0x6c] sm:$0xf]
      %v1044 = vsel %vm979, %v816, %v1043
      %1045 = vst [vmem:[%s977 + $0x6c] sm:$0xf] %v1044
      %1046 = vst [vmem:[%s977 + $0x70] sm:$0xf] %v825
      %v1047 = vld [vmem:[%s977 + $0x74] sm:$0x1]
      %v1048 = vsel %vm262, %v826, %v1047
      %1049 = vst [vmem:[%s977 + $0x74] sm:$0x1] %v1048
      %v1050 = vld [vmem:[%s977 + $0x78] sm:$0xf]
      %v1051 = vsel %vm979, %v833, %v1050
      %1052 = vst [vmem:[%s977 + $0x78] sm:$0xf] %v1051
      %1053 = vst [vmem:[%s977 + $0x7c] sm:$0xf] %v842
      %v1054 = vld [vmem:[%s977 + $0x80] sm:$0x1]
      %v1055 = vsel %vm262, %v843, %v1054
      %1056 = vst [vmem:[%s977 + $0x80] sm:$0x1] %v1055
      %v1057 = vld [vmem:[%s977 + $0x84] sm:$0xf]
      %v1058 = vsel %vm979, %v850, %v1057
      %1059 = vst [vmem:[%s977 + $0x84] sm:$0xf] %v1058
      %1060 = vst [vmem:[%s977 + $0x88] sm:$0xf] %v859
      %v1061 = vld [vmem:[%s977 + $0x8c] sm:$0x1]
      %v1062 = vsel %vm262, %v860, %v1061
      %1063 = vst [vmem:[%s977 + $0x8c] sm:$0x1] %v1062
      %v1064 = vld [vmem:[%s977 + $0x90] sm:$0xf]
      %v1065 = vsel %vm979, %v867, %v1064
      %1066 = vst [vmem:[%s977 + $0x90] sm:$0xf] %v1065
      %1067 = vst [vmem:[%s977 + $0x94] sm:$0xf] %v876
      %v1068 = vld [vmem:[%s977 + $0x98] sm:$0x1]
      %v1069 = vsel %vm262, %v877, %v1068
      %1070 = vst [vmem:[%s977 + $0x98] sm:$0x1] %v1069
      %v1071 = vld [vmem:[%s977 + $0x9c] sm:$0xf]
      %v1072 = vsel %vm979, %v884, %v1071
      %1073 = vst [vmem:[%s977 + $0x9c] sm:$0xf] %v1072
      %1074 = vst [vmem:[%s977 + $0xa0] sm:$0xf] %v893
      %v1075 = vld [vmem:[%s977 + $0xa4] sm:$0x1]
      %v1076 = vsel %vm262, %v894, %v1075
      %1077 = vst [vmem:[%s977 + $0xa4] sm:$0x1] %v1076
      %v1078 = vld [vmem:[%s977 + $0xa8] sm:$0xf]
      %v1079 = vsel %vm979, %v901, %v1078
      %1080 = vst [vmem:[%s977 + $0xa8] sm:$0xf] %v1079
      %1081 = vst [vmem:[%s977 + $0xac] sm:$0xf] %v910
      %v1082 = vld [vmem:[%s977 + $0xb0] sm:$0x1]
      %v1083 = vsel %vm262, %v911, %v1082
      %1084 = vst [vmem:[%s977 + $0xb0] sm:$0x1] %v1083
      %v1085 = vld [vmem:[%s977 + $0xb4] sm:$0xf]
      %v1086 = vsel %vm979, %v918, %v1085
      %1087 = vst [vmem:[%s977 + $0xb4] sm:$0xf] %v1086
      %1088 = vst [vmem:[%s977 + $0xb8] sm:$0xf] %v927
      %v1089 = vld [vmem:[%s977 + $0xbc] sm:$0x1]
      %v1090 = vsel %vm262, %v928, %v1089
      %1091 = vst [vmem:[%s977 + $0xbc] sm:$0x1] %v1090
      %v1092 = vld [vmem:[#allocation2] sm:$0xf]
      %v1093 = vld [vmem:[#allocation2 + $0x4] sm:$0xf]
      %v1094 = vld [vmem:[#allocation2 + $0xc] sm:$0xf]
      %v1095 = vld [vmem:[#allocation2 + $0x10] sm:$0xf]
      %v1096 = vld [vmem:[#allocation2 + $0x18] sm:$0xf]
      %v1097 = vld [vmem:[#allocation2 + $0x1c] sm:$0xf]
      %v1098 = vld [vmem:[#allocation2 + $0x24] sm:$0xf]
      %v1099 = vld [vmem:[#allocation2 + $0x28] sm:$0xf]
      %v1100 = vld [vmem:[#allocation2 + $0x30] sm:$0xf]
      %v1101 = vld [vmem:[#allocation2 + $0x34] sm:$0xf]
      %v1102 = vld [vmem:[#allocation2 + $0x3c] sm:$0xf]
      %v1103 = vld [vmem:[#allocation2 + $0x40] sm:$0xf]
      %v1104 = vld [vmem:[#allocation2 + $0x48] sm:$0xf]
      %v1105 = vld [vmem:[#allocation2 + $0x4c] sm:$0xf]
      %v1106 = vld [vmem:[#allocation2 + $0x54] sm:$0xf]
      %v1107 = vld [vmem:[#allocation2 + $0x58] sm:$0xf]
      %v1108 = vld [vmem:[#allocation2 + $0x60] sm:$0xf]
      %v1109 = vld [vmem:[#allocation2 + $0x64] sm:$0xf]
      %v1110 = vld [vmem:[#allocation2 + $0x6c] sm:$0xf]
      %v1111 = vld [vmem:[#allocation2 + $0x70] sm:$0xf]
      %v1112 = vld [vmem:[#allocation2 + $0x78] sm:$0xf]
      %v1113 = vld [vmem:[#allocation2 + $0x7c] sm:$0xf]
      %v1114 = vld [vmem:[#allocation2 + $0x84] sm:$0xf]
      %v1115 = vld [vmem:[#allocation2 + $0x88] sm:$0xf]
      %v1116 = vld [vmem:[#allocation2 + $0x90] sm:$0xf]
      %v1117 = vld [vmem:[#allocation2 + $0x94] sm:$0xf]
      %v1118 = vld [vmem:[#allocation2 + $0x9c] sm:$0xf]
      %v1119 = vld [vmem:[#allocation2 + $0xa0] sm:$0xf]
      %v1120 = vld [vmem:[#allocation2 + $0xa8] sm:$0xf]
      %v1121 = vld [vmem:[#allocation2 + $0xac] sm:$0xf]
      %v1122 = vld [vmem:[#allocation2 + $0xb4] sm:$0xf]
      %v1123 = vld [vmem:[#allocation2 + $0xb8] sm:$0xf]
      %v1124 = vld [vmem:[#allocation2 + $0xc0] sm:$0xf]
      %v1125 = vld [vmem:[#allocation2 + $0xc4] sm:$0xf]
      %v1126 = vld [vmem:[#allocation2 + $0xcc] sm:$0xf]
      %v1127 = vld [vmem:[#allocation2 + $0xd0] sm:$0xf]
      %v1164 = vunpack.c.l.b16 %v1092
      %v1165 = vunpack.c.l.b16 %v1093
      %v1166 = vunpack.c.l.b16 %v1094
      %v1167 = vunpack.c.l.b16 %v1095
      %v1168 = vunpack.c.l.b16 %v1096
      %v1169 = vunpack.c.l.b16 %v1097
      %v1170 = vunpack.c.l.b16 %v1098
      %v1171 = vunpack.c.l.b16 %v1099
      %v1172 = vunpack.c.l.b16 %v1100
      %v1173 = vunpack.c.l.b16 %v1101
      %v1174 = vunpack.c.l.b16 %v1102
      %v1175 = vunpack.c.l.b16 %v1103
      %v1176 = vunpack.c.l.b16 %v1104
      %v1177 = vunpack.c.l.b16 %v1105
      %v1178 = vunpack.c.l.b16 %v1106
      %v1179 = vunpack.c.l.b16 %v1107
      %v1180 = vunpack.c.l.b16 %v1108
      %v1181 = vunpack.c.l.b16 %v1109
      %v1182 = vunpack.c.l.b16 %v1110
      %v1183 = vunpack.c.l.b16 %v1111
      %v1184 = vunpack.c.l.b16 %v1112
      %v1185 = vunpack.c.l.b16 %v1113
      %v1186 = vunpack.c.l.b16 %v1114
      %v1187 = vunpack.c.l.b16 %v1115
      %v1188 = vunpack.c.l.b16 %v1116
      %v1189 = vunpack.c.l.b16 %v1117
      %v1190 = vunpack.c.l.b16 %v1118
      %v1191 = vunpack.c.l.b16 %v1119
      %v1192 = vunpack.c.l.b16 %v1120
      %v1193 = vunpack.c.l.b16 %v1121
      %v1194 = vunpack.c.l.b16 %v1122
      %v1195 = vunpack.c.l.b16 %v1123
      %v1196 = vunpack.c.l.b16 %v1124
      %v1197 = vunpack.c.l.b16 %v1125
      %v1198 = vunpack.c.l.b16 %v1126
      %v1199 = vunpack.c.l.b16 %v1127
      %v1200 = vpack.c.b16 %v1165, %v1164
      %v1201 = vpack.c.b16 %v1167, %v1166
      %v1202 = vpack.c.b16 %v1169, %v1168
      %v1203 = vpack.c.b16 %v1171, %v1170
      %v1204 = vpack.c.b16 %v1173, %v1172
      %v1205 = vpack.c.b16 %v1175, %v1174
      %v1206 = vpack.c.b16 %v1177, %v1176
      %v1207 = vpack.c.b16 %v1179, %v1178
      %v1208 = vpack.c.b16 %v1181, %v1180
      %v1209 = vpack.c.b16 %v1183, %v1182
      %v1210 = vpack.c.b16 %v1185, %v1184
      %v1211 = vpack.c.b16 %v1187, %v1186
      %v1212 = vpack.c.b16 %v1189, %v1188
      %v1213 = vpack.c.b16 %v1191, %v1190
      %v1214 = vpack.c.b16 %v1193, %v1192
      %v1215 = vpack.c.b16 %v1195, %v1194
      %v1216 = vpack.c.b16 %v1197, %v1196
      %v1217 = vpack.c.b16 %v1199, %v1198
      %1236 = vst [vmem:[#allocation3] sm:$0xff] %v1200
      %1237 = vst [vmem:[#allocation3 + $0x18] sm:$0xff] %v1201
      %1238 = vst [vmem:[#allocation3 + $0x30] sm:$0xff] %v1202
      %1239 = vst [vmem:[#allocation3 + $0x48] sm:$0xff] %v1203
      %1240 = vst [vmem:[#allocation3 + $0x60] sm:$0xff] %v1204
      %1241 = vst [vmem:[#allocation3 + $0x78] sm:$0xff] %v1205
      %1242 = vst [vmem:[#allocation3 + $0x90] sm:$0xff] %v1206
      %1243 = vst [vmem:[#allocation3 + $0xa8] sm:$0xff] %v1207
      %1244 = vst [vmem:[#allocation3 + $0xc0] sm:$0xff] %v1208
      %1245 = vst [vmem:[#allocation3 + $0xd8] sm:$0xff] %v1209
      %1246 = vst [vmem:[#allocation3 + $0xf0] sm:$0xff] %v1210
      %1247 = vst [vmem:[#allocation3 + $0x108] sm:$0xff] %v1211
      %1248 = vst [vmem:[#allocation3 + $0x120] sm:$0xff] %v1212
      %1249 = vst [vmem:[#allocation3 + $0x138] sm:$0xff] %v1213
      %1250 = vst [vmem:[#allocation3 + $0x150] sm:$0xff] %v1214
      %1251 = vst [vmem:[#allocation3 + $0x168] sm:$0xff] %v1215
      %1252 = vst [vmem:[#allocation3 + $0x180] sm:$0xff] %v1216
      %1253 = vst [vmem:[#allocation3 + $0x198] sm:$0xff] %v1217
      %v1254 = vld [vmem:[#allocation2] sm:$0xf]
      %v1255 = vld [vmem:[#allocation2 + $0x4] sm:$0xf]
      %v1256 = vld [vmem:[#allocation2 + $0x8] sm:$0x1]
      %v1257 = vld [vmem:[#allocation2 + $0xc] sm:$0xf]
      %v1258 = vld [vmem:[#allocation2 + $0x10] sm:$0xf]
      %v1259 = vld [vmem:[#allocation2 + $0x14] sm:$0x1]
      %v1260 = vld [vmem:[#allocation2 + $0x18] sm:$0xf]
      %v1261 = vld [vmem:[#allocation2 + $0x1c] sm:$0xf]
      %v1262 = vld [vmem:[#allocation2 + $0x20] sm:$0x1]
      %v1263 = vld [vmem:[#allocation2 + $0x24] sm:$0xf]
      %v1264 = vld [vmem:[#allocation2 + $0x28] sm:$0xf]
      %v1265 = vld [vmem:[#allocation2 + $0x2c] sm:$0x1]
      %v1266 = vld [vmem:[#allocation2 + $0x30] sm:$0xf]
      %v1267 = vld [vmem:[#allocation2 + $0x34] sm:$0xf]
      %v1268 = vld [vmem:[#allocation2 + $0x38] sm:$0x1]
      %v1269 = vld [vmem:[#allocation2 + $0x3c] sm:$0xf]
      %v1270 = vld [vmem:[#allocation2 + $0x40] sm:$0xf]
      %v1271 = vld [vmem:[#allocation2 + $0x44] sm:$0x1]
      %v1272 = vld [vmem:[#allocation2 + $0x48] sm:$0xf]
      %v1273 = vld [vmem:[#allocation2 + $0x4c] sm:$0xf]
      %v1274 = vld [vmem:[#allocation2 + $0x50] sm:$0x1]
      %v1275 = vld [vmem:[#allocation2 + $0x54] sm:$0xf]
      %v1276 = vld [vmem:[#allocation2 + $0x58] sm:$0xf]
      %v1277 = vld [vmem:[#allocation2 + $0x5c] sm:$0x1]
      %v1278 = vld [vmem:[#allocation2 + $0x60] sm:$0xf]
      %v1279 = vld [vmem:[#allocation2 + $0x64] sm:$0xf]
      %v1280 = vld [vmem:[#allocation2 + $0x68] sm:$0x1]
      %v1281 = vld [vmem:[#allocation2 + $0x6c] sm:$0xf]
      %v1282 = vld [vmem:[#allocation2 + $0x70] sm:$0xf]
      %v1283 = vld [vmem:[#allocation2 + $0x74] sm:$0x1]
      %v1284 = vld [vmem:[#allocation2 + $0x78] sm:$0xf]
      %v1285 = vld [vmem:[#allocation2 + $0x7c] sm:$0xf]
      %v1286 = vld [vmem:[#allocation2 + $0x80] sm:$0x1]
      %v1287 = vld [vmem:[#allocation2 + $0x84] sm:$0xf]
      %v1288 = vld [vmem:[#allocation2 + $0x88] sm:$0xf]
      %v1289 = vld [vmem:[#allocation2 + $0x8c] sm:$0x1]
      %v1290 = vld [vmem:[#allocation2 + $0x90] sm:$0xf]
      %v1291 = vld [vmem:[#allocation2 + $0x94] sm:$0xf]
      %v1292 = vld [vmem:[#allocation2 + $0x98] sm:$0x1]
      %v1293 = vld [vmem:[#allocation2 + $0x9c] sm:$0xf]
      %v1294 = vld [vmem:[#allocation2 + $0xa0] sm:$0xf]
      %v1295 = vld [vmem:[#allocation2 + $0xa4] sm:$0x1]
      %v1296 = vld [vmem:[#allocation2 + $0xa8] sm:$0xf]
      %v1297 = vld [vmem:[#allocation2 + $0xac] sm:$0xf]
      %v1298 = vld [vmem:[#allocation2 + $0xb0] sm:$0x1]
      %v1299 = vld [vmem:[#allocation2 + $0xb4] sm:$0xf]
      %v1300 = vld [vmem:[#allocation2 + $0xb8] sm:$0xf]
      %v1301 = vld [vmem:[#allocation2 + $0xbc] sm:$0x1]
      %v1302 = vld [vmem:[#allocation2 + $0xc0] sm:$0xf]
      %v1303 = vld [vmem:[#allocation2 + $0xc4] sm:$0xf]
      %v1304 = vld [vmem:[#allocation2 + $0xc8] sm:$0x1]
      %v1305 = vld [vmem:[#allocation2 + $0xcc] sm:$0xf]
      %v1306 = vld [vmem:[#allocation2 + $0xd0] sm:$0xf]
      %v1307 = vld [vmem:[#allocation2 + $0xd4] sm:$0x1]
      %v1362 = vunpack.c.l.b16 %v1254
      %v1363 = vunpack.c.l.b16 %v1255
      %v1364 = vunpack.c.l.b16 %v1256
      %v1365 = vunpack.c.l.b16 %v1257
      %v1366 = vunpack.c.l.b16 %v1258
      %v1367 = vunpack.c.l.b16 %v1259
      %v1368 = vunpack.c.l.b16 %v1260
      %v1369 = vunpack.c.l.b16 %v1261
      %v1370 = vunpack.c.l.b16 %v1262
      %v1371 = vunpack.c.l.b16 %v1263
      %v1372 = vunpack.c.l.b16 %v1264
      %v1373 = vunpack.c.l.b16 %v1265
      %v1374 = vunpack.c.l.b16 %v1266
      %v1375 = vunpack.c.l.b16 %v1267
      %v1376 = vunpack.c.l.b16 %v1268
      %v1377 = vunpack.c.l.b16 %v1269
      %v1378 = vunpack.c.l.b16 %v1270
      %v1379 = vunpack.c.l.b16 %v1271
      %v1380 = vunpack.c.l.b16 %v1272
      %v1381 = vunpack.c.l.b16 %v1273
      %v1382 = vunpack.c.l.b16 %v1274
      %v1383 = vunpack.c.l.b16 %v1275
      %v1384 = vunpack.c.l.b16 %v1276
      %v1385 = vunpack.c.l.b16 %v1277
      %v1386 = vunpack.c.l.b16 %v1278
      %v1387 = vunpack.c.l.b16 %v1279
      %v1388 = vunpack.c.l.b16 %v1280
      %v1389 = vunpack.c.l.b16 %v1281
      %v1390 = vunpack.c.l.b16 %v1282
      %v1391 = vunpack.c.l.b16 %v1283
      %v1392 = vunpack.c.l.b16 %v1284
      %v1393 = vunpack.c.l.b16 %v1285
      %v1394 = vunpack.c.l.b16 %v1286
      %v1395 = vunpack.c.l.b16 %v1287
      %v1396 = vunpack.c.l.b16 %v1288
      %v1397 = vunpack.c.l.b16 %v1289
      %v1398 = vunpack.c.l.b16 %v1290
      %v1399 = vunpack.c.l.b16 %v1291
      %v1400 = vunpack.c.l.b16 %v1292
      %v1401 = vunpack.c.l.b16 %v1293
      %v1402 = vunpack.c.l.b16 %v1294
      %v1403 = vunpack.c.l.b16 %v1295
      %v1404 = vunpack.c.l.b16 %v1296
      %v1405 = vunpack.c.l.b16 %v1297
      %v1406 = vunpack.c.l.b16 %v1298
      %v1407 = vunpack.c.l.b16 %v1299
      %v1408 = vunpack.c.l.b16 %v1300
      %v1409 = vunpack.c.l.b16 %v1301
      %v1410 = vunpack.c.l.b16 %v1302
      %v1411 = vunpack.c.l.b16 %v1303
      %v1412 = vunpack.c.l.b16 %v1304
      %v1413 = vunpack.c.l.b16 %v1305
      %v1414 = vunpack.c.l.b16 %v1306
      %v1415 = vunpack.c.l.b16 %v1307
      %v1416 = vpack.c.b16 %v1363, %v1362
      %v1417 = vpack.c.b16 %v1364, %v1364
      %v1418 = vpack.c.b16 %v1366, %v1365
      %v1419 = vpack.c.b16 %v1367, %v1367
      %v1420 = vpack.c.b16 %v1369, %v1368
      %v1421 = vpack.c.b16 %v1370, %v1370
      %v1422 = vpack.c.b16 %v1372, %v1371
      %v1423 = vpack.c.b16 %v1373, %v1373
      %v1424 = vpack.c.b16 %v1375, %v1374
      %v1425 = vpack.c.b16 %v1376, %v1376
      %v1426 = vpack.c.b16 %v1378, %v1377
      %v1427 = vpack.c.b16 %v1379, %v1379
      %v1428 = vpack.c.b16 %v1381, %v1380
      %v1429 = vpack.c.b16 %v1382, %v1382
      %v1430 = vpack.c.b16 %v1384, %v1383
      %v1431 = vpack.c.b16 %v1385, %v1385
      %v1432 = vpack.c.b16 %v1387, %v1386
      %v1433 = vpack.c.b16 %v1388, %v1388
      %v1434 = vpack.c.b16 %v1390, %v1389
      %v1435 = vpack.c.b16 %v1391, %v1391
      %v1436 = vpack.c.b16 %v1393, %v1392
      %v1437 = vpack.c.b16 %v1394, %v1394
      %v1438 = vpack.c.b16 %v1396, %v1395
      %v1439 = vpack.c.b16 %v1397, %v1397
      %v1440 = vpack.c.b16 %v1399, %v1398
      %v1441 = vpack.c.b16 %v1400, %v1400
      %v1442 = vpack.c.b16 %v1402, %v1401
      %v1443 = vpack.c.b16 %v1403, %v1403
      %v1444 = vpack.c.b16 %v1405, %v1404
      %v1445 = vpack.c.b16 %v1406, %v1406
      %v1446 = vpack.c.b16 %v1408, %v1407
      %v1447 = vpack.c.b16 %v1409, %v1409
      %v1448 = vpack.c.b16 %v1411, %v1410
      %v1449 = vpack.c.b16 %v1412, %v1412
      %v1450 = vpack.c.b16 %v1414, %v1413
      %v1451 = vpack.c.b16 %v1415, %v1415
      %vm1452 = vsmask.f32 7424
      %v1454 = vshrl.u32 %v1416, 16
      %v1456 = vshll.u32 %v1416, 16
      %v1458 = vrot.slane %v1456, 1
      %v1459 = vor.u32 %v1454, %v1458
      %v1461 = vshll.u32 %v1417, 16
      %v1463 = vrot.slane %v1461, 1
      %v1464 = vsel %vm1452, %v1459, %v1463
      %v1466 = vshrl.u32 %v1418, 16
      %v1468 = vshll.u32 %v1418, 16
      %v1470 = vrot.slane %v1468, 1
      %v1471 = vor.u32 %v1466, %v1470
      %v1473 = vshll.u32 %v1419, 16
      %v1475 = vrot.slane %v1473, 1
      %v1476 = vsel %vm1452, %v1471, %v1475
      %v1478 = vshrl.u32 %v1420, 16
      %v1480 = vshll.u32 %v1420, 16
      %v1482 = vrot.slane %v1480, 1
      %v1483 = vor.u32 %v1478, %v1482
      %v1485 = vshll.u32 %v1421, 16
      %v1487 = vrot.slane %v1485, 1
      %v1488 = vsel %vm1452, %v1483, %v1487
      %v1490 = vshrl.u32 %v1422, 16
      %v1492 = vshll.u32 %v1422, 16
      %v1494 = vrot.slane %v1492, 1
      %v1495 = vor.u32 %v1490, %v1494
      %v1497 = vshll.u32 %v1423, 16
      %v1499 = vrot.slane %v1497, 1
      %v1500 = vsel %vm1452, %v1495, %v1499
      %v1502 = vshrl.u32 %v1424, 16
      %v1504 = vshll.u32 %v1424, 16
      %v1506 = vrot.slane %v1504, 1
      %v1507 = vor.u32 %v1502, %v1506
      %v1509 = vshll.u32 %v1425, 16
      %v1511 = vrot.slane %v1509, 1
      %v1512 = vsel %vm1452, %v1507, %v1511
      %v1514 = vshrl.u32 %v1426, 16
      %v1516 = vshll.u32 %v1426, 16
      %v1518 = vrot.slane %v1516, 1
      %v1519 = vor.u32 %v1514, %v1518
      %v1521 = vshll.u32 %v1427, 16
      %v1523 = vrot.slane %v1521, 1
      %v1524 = vsel %vm1452, %v1519, %v1523
      %v1526 = vshrl.u32 %v1428, 16
      %v1528 = vshll.u32 %v1428, 16
      %v1530 = vrot.slane %v1528, 1
      %v1531 = vor.u32 %v1526, %v1530
      %v1533 = vshll.u32 %v1429, 16
      %v1535 = vrot.slane %v1533, 1
      %v1536 = vsel %vm1452, %v1531, %v1535
      %v1538 = vshrl.u32 %v1430, 16
      %v1540 = vshll.u32 %v1430, 16
      %v1542 = vrot.slane %v1540, 1
      %v1543 = vor.u32 %v1538, %v1542
      %v1545 = vshll.u32 %v1431, 16
      %v1547 = vrot.slane %v1545, 1
      %v1548 = vsel %vm1452, %v1543, %v1547
      %v1550 = vshrl.u32 %v1432, 16
      %v1552 = vshll.u32 %v1432, 16
      %v1554 = vrot.slane %v1552, 1
      %v1555 = vor.u32 %v1550, %v1554
      %v1557 = vshll.u32 %v1433, 16
      %v1559 = vrot.slane %v1557, 1
      %v1560 = vsel %vm1452, %v1555, %v1559
      %v1562 = vshrl.u32 %v1434, 16
      %v1564 = vshll.u32 %v1434, 16
      %v1566 = vrot.slane %v1564, 1
      %v1567 = vor.u32 %v1562, %v1566
      %v1569 = vshll.u32 %v1435, 16
      %v1571 = vrot.slane %v1569, 1
      %v1572 = vsel %vm1452, %v1567, %v1571
      %v1574 = vshrl.u32 %v1436, 16
      %v1576 = vshll.u32 %v1436, 16
      %v1578 = vrot.slane %v1576, 1
      %v1579 = vor.u32 %v1574, %v1578
      %v1581 = vshll.u32 %v1437, 16
      %v1583 = vrot.slane %v1581, 1
      %v1584 = vsel %vm1452, %v1579, %v1583
      %v1586 = vshrl.u32 %v1438, 16
      %v1588 = vshll.u32 %v1438, 16
      %v1590 = vrot.slane %v1588, 1
      %v1591 = vor.u32 %v1586, %v1590
      %v1593 = vshll.u32 %v1439, 16
      %v1595 = vrot.slane %v1593, 1
      %v1596 = vsel %vm1452, %v1591, %v1595
      %v1598 = vshrl.u32 %v1440, 16
      %v1600 = vshll.u32 %v1440, 16
      %v1602 = vrot.slane %v1600, 1
      %v1603 = vor.u32 %v1598, %v1602
      %v1605 = vshll.u32 %v1441, 16
      %v1607 = vrot.slane %v1605, 1
      %v1608 = vsel %vm1452, %v1603, %v1607
      %v1610 = vshrl.u32 %v1442, 16
      %v1612 = vshll.u32 %v1442, 16
      %v1614 = vrot.slane %v1612, 1
      %v1615 = vor.u32 %v1610, %v1614
      %v1617 = vshll.u32 %v1443, 16
      %v1619 = vrot.slane %v1617, 1
      %v1620 = vsel %vm1452, %v1615, %v1619
      %v1622 = vshrl.u32 %v1444, 16
      %v1624 = vshll.u32 %v1444, 16
      %v1626 = vrot.slane %v1624, 1
      %v1627 = vor.u32 %v1622, %v1626
      %v1629 = vshll.u32 %v1445, 16
      %v1631 = vrot.slane %v1629, 1
      %v1632 = vsel %vm1452, %v1627, %v1631
      %v1634 = vshrl.u32 %v1446, 16
      %v1636 = vshll.u32 %v1446, 16
      %v1638 = vrot.slane %v1636, 1
      %v1639 = vor.u32 %v1634, %v1638
      %v1641 = vshll.u32 %v1447, 16
      %v1643 = vrot.slane %v1641, 1
      %v1644 = vsel %vm1452, %v1639, %v1643
      %v1646 = vshrl.u32 %v1448, 16
      %v1648 = vshll.u32 %v1448, 16
      %v1650 = vrot.slane %v1648, 1
      %v1651 = vor.u32 %v1646, %v1650
      %v1653 = vshll.u32 %v1449, 16
      %v1655 = vrot.slane %v1653, 1
      %v1656 = vsel %vm1452, %v1651, %v1655
      %v1658 = vshrl.u32 %v1450, 16
      %v1660 = vshll.u32 %v1450, 16
      %v1662 = vrot.slane %v1660, 1
      %v1663 = vor.u32 %v1658, %v1662
      %v1665 = vshll.u32 %v1451, 16
      %v1667 = vrot.slane %v1665, 1
      %v1668 = vsel %vm1452, %v1663, %v1667
      %1687 = vst [vmem:[#allocation3 + $0x8] sm:$0xff] %v1464
      %1688 = vst [vmem:[#allocation3 + $0x20] sm:$0xff] %v1476
      %1689 = vst [vmem:[#allocation3 + $0x38] sm:$0xff] %v1488
      %1690 = vst [vmem:[#allocation3 + $0x50] sm:$0xff] %v1500
      %1691 = vst [vmem:[#allocation3 + $0x68] sm:$0xff] %v1512
      %1692 = vst [vmem:[#allocation3 + $0x80] sm:$0xff] %v1524
      %1693 = vst [vmem:[#allocation3 + $0x98] sm:$0xff] %v1536
      %1694 = vst [vmem:[#allocation3 + $0xb0] sm:$0xff] %v1548
      %1695 = vst [vmem:[#allocation3 + $0xc8] sm:$0xff] %v1560
      %1696 = vst [vmem:[#allocation3 + $0xe0] sm:$0xff] %v1572
      %1697 = vst [vmem:[#allocation3 + $0xf8] sm:$0xff] %v1584
      %1698 = vst [vmem:[#allocation3 + $0x110] sm:$0xff] %v1596
      %1699 = vst [vmem:[#allocation3 + $0x128] sm:$0xff] %v1608
      %1700 = vst [vmem:[#allocation3 + $0x140] sm:$0xff] %v1620
      %1701 = vst [vmem:[#allocation3 + $0x158] sm:$0xff] %v1632
      %1702 = vst [vmem:[#allocation3 + $0x170] sm:$0xff] %v1644
      %1703 = vst [vmem:[#allocation3 + $0x188] sm:$0xff] %v1656
      %1704 = vst [vmem:[#allocation3 + $0x1a0] sm:$0xff] %v1668
      %v1705 = vld [vmem:[#allocation2] sm:$0xe]
      %v1706 = vld [vmem:[#allocation2 + $0x4] sm:$0xf]
      %v1707 = vld [vmem:[#allocation2 + $0x8] sm:$0x1]
      %v1708 = vld [vmem:[#allocation2 + $0xc] sm:$0xe]
      %v1709 = vld [vmem:[#allocation2 + $0x10] sm:$0xf]
      %v1710 = vld [vmem:[#allocation2 + $0x14] sm:$0x1]
      %v1711 = vld [vmem:[#allocation2 + $0x18] sm:$0xe]
      %v1712 = vld [vmem:[#allocation2 + $0x1c] sm:$0xf]
      %v1713 = vld [vmem:[#allocation2 + $0x20] sm:$0x1]
      %v1714 = vld [vmem:[#allocation2 + $0x24] sm:$0xe]
      %v1715 = vld [vmem:[#allocation2 + $0x28] sm:$0xf]
      %v1716 = vld [vmem:[#allocation2 + $0x2c] sm:$0x1]
      %v1717 = vld [vmem:[#allocation2 + $0x30] sm:$0xe]
      %v1718 = vld [vmem:[#allocation2 + $0x34] sm:$0xf]
      %v1719 = vld [vmem:[#allocation2 + $0x38] sm:$0x1]
      %v1720 = vld [vmem:[#allocation2 + $0x3c] sm:$0xe]
      %v1721 = vld [vmem:[#allocation2 + $0x40] sm:$0xf]
      %v1722 = vld [vmem:[#allocation2 + $0x44] sm:$0x1]
      %v1723 = vld [vmem:[#allocation2 + $0x48] sm:$0xe]
      %v1724 = vld [vmem:[#allocation2 + $0x4c] sm:$0xf]
      %v1725 = vld [vmem:[#allocation2 + $0x50] sm:$0x1]
      %v1726 = vld [vmem:[#allocation2 + $0x54] sm:$0xe]
      %v1727 = vld [vmem:[#allocation2 + $0x58] sm:$0xf]
      %v1728 = vld [vmem:[#allocation2 + $0x5c] sm:$0x1]
      %v1729 = vld [vmem:[#allocation2 + $0x60] sm:$0xe]
      %v1730 = vld [vmem:[#allocation2 + $0x64] sm:$0xf]
      %v1731 = vld [vmem:[#allocation2 + $0x68] sm:$0x1]
      %v1732 = vld [vmem:[#allocation2 + $0x6c] sm:$0xe]
      %v1733 = vld [vmem:[#allocation2 + $0x70] sm:$0xf]
      %v1734 = vld [vmem:[#allocation2 + $0x74] sm:$0x1]
      %v1735 = vld [vmem:[#allocation2 + $0x78] sm:$0xe]
      %v1736 = vld [vmem:[#allocation2 + $0x7c] sm:$0xf]
      %v1737 = vld [vmem:[#allocation2 + $0x80] sm:$0x1]
      %v1738 = vld [vmem:[#allocation2 + $0x84] sm:$0xe]
      %v1739 = vld [vmem:[#allocation2 + $0x88] sm:$0xf]
      %v1740 = vld [vmem:[#allocation2 + $0x8c] sm:$0x1]
      %v1741 = vld [vmem:[#allocation2 + $0x90] sm:$0xe]
      %v1742 = vld [vmem:[#allocation2 + $0x94] sm:$0xf]
      %v1743 = vld [vmem:[#allocation2 + $0x98] sm:$0x1]
      %v1744 = vld [vmem:[#allocation2 + $0x9c] sm:$0xe]
      %v1745 = vld [vmem:[#allocation2 + $0xa0] sm:$0xf]
      %v1746 = vld [vmem:[#allocation2 + $0xa4] sm:$0x1]
      %v1747 = vld [vmem:[#allocation2 + $0xa8] sm:$0xe]
      %v1748 = vld [vmem:[#allocation2 + $0xac] sm:$0xf]
      %v1749 = vld [vmem:[#allocation2 + $0xb0] sm:$0x1]
      %v1750 = vld [vmem:[#allocation2 + $0xb4] sm:$0xe]
      %v1751 = vld [vmem:[#allocation2 + $0xb8] sm:$0xf]
      %v1752 = vld [vmem:[#allocation2 + $0xbc] sm:$0x1]
      %v1753 = vld [vmem:[#allocation2 + $0xc0] sm:$0xe]
      %v1754 = vld [vmem:[#allocation2 + $0xc4] sm:$0xf]
      %v1755 = vld [vmem:[#allocation2 + $0xc8] sm:$0x1]
      %v1756 = vld [vmem:[#allocation2 + $0xcc] sm:$0xe]
      %v1757 = vld [vmem:[#allocation2 + $0xd0] sm:$0xf]
      %v1758 = vld [vmem:[#allocation2 + $0xd4] sm:$0x1]
      %v1813 = vunpack.c.l.b16 %v1705
      %v1814 = vunpack.c.l.b16 %v1706
      %v1815 = vunpack.c.l.b16 %v1707
      %v1816 = vunpack.c.l.b16 %v1708
      %v1817 = vunpack.c.l.b16 %v1709
      %v1818 = vunpack.c.l.b16 %v1710
      %v1819 = vunpack.c.l.b16 %v1711
      %v1820 = vunpack.c.l.b16 %v1712
      %v1821 = vunpack.c.l.b16 %v1713
      %v1822 = vunpack.c.l.b16 %v1714
      %v1823 = vunpack.c.l.b16 %v1715
      %v1824 = vunpack.c.l.b16 %v1716
      %v1825 = vunpack.c.l.b16 %v1717
      %v1826 = vunpack.c.l.b16 %v1718
      %v1827 = vunpack.c.l.b16 %v1719
      %v1828 = vunpack.c.l.b16 %v1720
      %v1829 = vunpack.c.l.b16 %v1721
      %v1830 = vunpack.c.l.b16 %v1722
      %v1831 = vunpack.c.l.b16 %v1723
      %v1832 = vunpack.c.l.b16 %v1724
      %v1833 = vunpack.c.l.b16 %v1725
      %v1834 = vunpack.c.l.b16 %v1726
      %v1835 = vunpack.c.l.b16 %v1727
      %v1836 = vunpack.c.l.b16 %v1728
      %v1837 = vunpack.c.l.b16 %v1729
      %v1838 = vunpack.c.l.b16 %v1730
      %v1839 = vunpack.c.l.b16 %v1731
      %v1840 = vunpack.c.l.b16 %v1732
      %v1841 = vunpack.c.l.b16 %v1733
      %v1842 = vunpack.c.l.b16 %v1734
      %v1843 = vunpack.c.l.b16 %v1735
      %v1844 = vunpack.c.l.b16 %v1736
      %v1845 = vunpack.c.l.b16 %v1737
      %v1846 = vunpack.c.l.b16 %v1738
      %v1847 = vunpack.c.l.b16 %v1739
      %v1848 = vunpack.c.l.b16 %v1740
      %v1849 = vunpack.c.l.b16 %v1741
      %v1850 = vunpack.c.l.b16 %v1742
      %v1851 = vunpack.c.l.b16 %v1743
      %v1852 = vunpack.c.l.b16 %v1744
      %v1853 = vunpack.c.l.b16 %v1745
      %v1854 = vunpack.c.l.b16 %v1746
      %v1855 = vunpack.c.l.b16 %v1747
      %v1856 = vunpack.c.l.b16 %v1748
      %v1857 = vunpack.c.l.b16 %v1749
      %v1858 = vunpack.c.l.b16 %v1750
      %v1859 = vunpack.c.l.b16 %v1751
      %v1860 = vunpack.c.l.b16 %v1752
      %v1861 = vunpack.c.l.b16 %v1753
      %v1862 = vunpack.c.l.b16 %v1754
      %v1863 = vunpack.c.l.b16 %v1755
      %v1864 = vunpack.c.l.b16 %v1756
      %v1865 = vunpack.c.l.b16 %v1757
      %v1866 = vunpack.c.l.b16 %v1758
      %v1867 = vpack.c.b16 %v1814, %v1813
      %v1868 = vpack.c.b16 %v1815, %v1815
      %v1869 = vpack.c.b16 %v1817, %v1816
      %v1870 = vpack.c.b16 %v1818, %v1818
      %v1871 = vpack.c.b16 %v1820, %v1819
      %v1872 = vpack.c.b16 %v1821, %v1821
      %v1873 = vpack.c.b16 %v1823, %v1822
      %v1874 = vpack.c.b16 %v1824, %v1824
      %v1875 = vpack.c.b16 %v1826, %v1825
      %v1876 = vpack.c.b16 %v1827, %v1827
      %v1877 = vpack.c.b16 %v1829, %v1828
      %v1878 = vpack.c.b16 %v1830, %v1830
      %v1879 = vpack.c.b16 %v1832, %v1831
      %v1880 = vpack.c.b16 %v1833, %v1833
      %v1881 = vpack.c.b16 %v1835, %v1834
      %v1882 = vpack.c.b16 %v1836, %v1836
      %v1883 = vpack.c.b16 %v1838, %v1837
      %v1884 = vpack.c.b16 %v1839, %v1839
      %v1885 = vpack.c.b16 %v1841, %v1840
      %v1886 = vpack.c.b16 %v1842, %v1842
      %v1887 = vpack.c.b16 %v1844, %v1843
      %v1888 = vpack.c.b16 %v1845, %v1845
      %v1889 = vpack.c.b16 %v1847, %v1846
      %v1890 = vpack.c.b16 %v1848, %v1848
      %v1891 = vpack.c.b16 %v1850, %v1849
      %v1892 = vpack.c.b16 %v1851, %v1851
      %v1893 = vpack.c.b16 %v1853, %v1852
      %v1894 = vpack.c.b16 %v1854, %v1854
      %v1895 = vpack.c.b16 %v1856, %v1855
      %v1896 = vpack.c.b16 %v1857, %v1857
      %v1897 = vpack.c.b16 %v1859, %v1858
      %v1898 = vpack.c.b16 %v1860, %v1860
      %v1899 = vpack.c.b16 %v1862, %v1861
      %v1900 = vpack.c.b16 %v1863, %v1863
      %v1901 = vpack.c.b16 %v1865, %v1864
      %v1902 = vpack.c.b16 %v1866, %v1866
      %vm1903 = vcmask 1046528
      %v1904 = vrot.slane %v1867, 1
      %v1905 = vrot.slane %v1868, 1
      %v1906 = vsel %vm1903, %v1904, %v1905
      %v1907 = vrot.slane %v1869, 1
      %v1908 = vrot.slane %v1870, 1
      %v1909 = vsel %vm1903, %v1907, %v1908
      %v1910 = vrot.slane %v1871, 1
      %v1911 = vrot.slane %v1872, 1
      %v1912 = vsel %vm1903, %v1910, %v1911
      %v1913 = vrot.slane %v1873, 1
      %v1914 = vrot.slane %v1874, 1
      %v1915 = vsel %vm1903, %v1913, %v1914
      %v1916 = vrot.slane %v1875, 1
      %v1917 = vrot.slane %v1876, 1
      %v1918 = vsel %vm1903, %v1916, %v1917
      %v1919 = vrot.slane %v1877, 1
      %v1920 = vrot.slane %v1878, 1
      %v1921 = vsel %vm1903, %v1919, %v1920
      %v1922 = vrot.slane %v1879, 1
      %v1923 = vrot.slane %v1880, 1
      %v1924 = vsel %vm1903, %v1922, %v1923
      %v1925 = vrot.slane %v1881, 1
      %v1926 = vrot.slane %v1882, 1
      %v1927 = vsel %vm1903, %v1925, %v1926
      %v1928 = vrot.slane %v1883, 1
      %v1929 = vrot.slane %v1884, 1
      %v1930 = vsel %vm1903, %v1928, %v1929
      %v1931 = vrot.slane %v1885, 1
      %v1932 = vrot.slane %v1886, 1
      %v1933 = vsel %vm1903, %v1931, %v1932
      %v1934 = vrot.slane %v1887, 1
      %v1935 = vrot.slane %v1888, 1
      %v1936 = vsel %vm1903, %v1934, %v1935
      %v1937 = vrot.slane %v1889, 1
      %v1938 = vrot.slane %v1890, 1
      %v1939 = vsel %vm1903, %v1937, %v1938
      %v1940 = vrot.slane %v1891, 1
      %v1941 = vrot.slane %v1892, 1
      %v1942 = vsel %vm1903, %v1940, %v1941
      %v1943 = vrot.slane %v1893, 1
      %v1944 = vrot.slane %v1894, 1
      %v1945 = vsel %vm1903, %v1943, %v1944
      %v1946 = vrot.slane %v1895, 1
      %v1947 = vrot.slane %v1896, 1
      %v1948 = vsel %vm1903, %v1946, %v1947
      %v1949 = vrot.slane %v1897, 1
      %v1950 = vrot.slane %v1898, 1
      %v1951 = vsel %vm1903, %v1949, %v1950
      %v1952 = vrot.slane %v1899, 1
      %v1953 = vrot.slane %v1900, 1
      %v1954 = vsel %vm1903, %v1952, %v1953
      %v1955 = vrot.slane %v1901, 1
      %v1956 = vrot.slane %v1902, 1
      %v1957 = vsel %vm1903, %v1955, %v1956
      %1976 = vst [vmem:[#allocation3 + $0x10] sm:$0xff] %v1906
      %1977 = vst [vmem:[#allocation3 + $0x28] sm:$0xff] %v1909
      %1978 = vst [vmem:[#allocation3 + $0x40] sm:$0xff] %v1912
      %1979 = vst [vmem:[#allocation3 + $0x58] sm:$0xff] %v1915
      %1980 = vst [vmem:[#allocation3 + $0x70] sm:$0xff] %v1918
      %1981 = vst [vmem:[#allocation3 + $0x88] sm:$0xff] %v1921
      %1982 = vst [vmem:[#allocation3 + $0xa0] sm:$0xff] %v1924
      %1983 = vst [vmem:[#allocation3 + $0xb8] sm:$0xff] %v1927
      %1984 = vst [vmem:[#allocation3 + $0xd0] sm:$0xff] %v1930
      %1985 = vst [vmem:[#allocation3 + $0xe8] sm:$0xff] %v1933
      %1986 = vst [vmem:[#allocation3 + $0x100] sm:$0xff] %v1936
      %1987 = vst [vmem:[#allocation3 + $0x118] sm:$0xff] %v1939
      %1988 = vst [vmem:[#allocation3 + $0x130] sm:$0xff] %v1942
      %1989 = vst [vmem:[#allocation3 + $0x148] sm:$0xff] %v1945
      %1990 = vst [vmem:[#allocation3 + $0x160] sm:$0xff] %v1948
      %1991 = vst [vmem:[#allocation3 + $0x178] sm:$0xff] %v1951
      %1992 = vst [vmem:[#allocation3 + $0x190] sm:$0xff] %v1954
      %1993 = vst [vmem:[#allocation3 + $0x1a8] sm:$0xff] %v1957
      %v1994 = vld [vmem:[#allocation3] sm:$0xff]
      %v1995 = vld [vmem:[#allocation3 + $0x8] sm:$0xff]
      %v1996 = vld [vmem:[#allocation3 + $0x10] sm:$0xff]
      %v1997 = vld [vmem:[#allocation3 + $0x18] sm:$0xff]
      %v1998 = vld [vmem:[#allocation3 + $0x20] sm:$0xff]
      %v1999 = vld [vmem:[#allocation3 + $0x28] sm:$0xff]
      %v2000 = vld [vmem:[#allocation3 + $0x30] sm:$0xff]
      %v2001 = vld [vmem:[#allocation3 + $0x38] sm:$0xff]
      %v2002 = vld [vmem:[#allocation3 + $0x40] sm:$0xff]
      %v2003 = vld [vmem:[#allocation3 + $0x48] sm:$0xff]
      %v2004 = vld [vmem:[#allocation3 + $0x50] sm:$0xff]
      %v2005 = vld [vmem:[#allocation3 + $0x58] sm:$0xff]
      %v2006 = vld [vmem:[#allocation3 + $0x60] sm:$0xff]
      %v2007 = vld [vmem:[#allocation3 + $0x68] sm:$0xff]
      %v2008 = vld [vmem:[#allocation3 + $0x70] sm:$0xff]
      %v2009 = vld [vmem:[#allocation3 + $0x78] sm:$0xff]
      %v2010 = vld [vmem:[#allocation3 + $0x80] sm:$0xff]
      %v2011 = vld [vmem:[#allocation3 + $0x88] sm:$0xff]
      %v2012 = vld [vmem:[#allocation3 + $0x90] sm:$0xff]
      %v2013 = vld [vmem:[#allocation3 + $0x98] sm:$0xff]
      %v2014 = vld [vmem:[#allocation3 + $0xa0] sm:$0xff]
      %v2015 = vld [vmem:[#allocation3 + $0xa8] sm:$0xff]
      %v2016 = vld [vmem:[#allocation3 + $0xb0] sm:$0xff]
      %v2017 = vld [vmem:[#allocation3 + $0xb8] sm:$0xff]
      %v2018 = vld [vmem:[#allocation3 + $0xc0] sm:$0xff]
      %v2019 = vld [vmem:[#allocation3 + $0xc8] sm:$0xff]
      %v2020 = vld [vmem:[#allocation3 + $0xd0] sm:$0xff]
      %v2021 = vld [vmem:[#allocation3 + $0xd8] sm:$0xff]
      %v2022 = vld [vmem:[#allocation3 + $0xe0] sm:$0xff]
      %v2023 = vld [vmem:[#allocation3 + $0xe8] sm:$0xff]
      %v2024 = vld [vmem:[#allocation3 + $0xf0] sm:$0xff]
      %v2025 = vld [vmem:[#allocation3 + $0xf8] sm:$0xff]
      %v2026 = vld [vmem:[#allocation3 + $0x100] sm:$0xff]
      %v2027 = vld [vmem:[#allocation3 + $0x108] sm:$0xff]
      %v2028 = vld [vmem:[#allocation3 + $0x110] sm:$0xff]
      %v2029 = vld [vmem:[#allocation3 + $0x118] sm:$0xff]
      %v2030 = vld [vmem:[#allocation3 + $0x120] sm:$0xff]
      %v2031 = vld [vmem:[#allocation3 + $0x128] sm:$0xff]
      %v2032 = vld [vmem:[#allocation3 + $0x130] sm:$0xff]
      %v2033 = vld [vmem:[#allocation3 + $0x138] sm:$0xff]
      %v2034 = vld [vmem:[#allocation3 + $0x140] sm:$0xff]
      %v2035 = vld [vmem:[#allocation3 + $0x148] sm:$0xff]
      %v2036 = vld [vmem:[#allocation3 + $0x150] sm:$0xff]
      %v2037 = vld [vmem:[#allocation3 + $0x158] sm:$0xff]
      %v2038 = vld [vmem:[#allocation3 + $0x160] sm:$0xff]
      %v2039 = vld [vmem:[#allocation3 + $0x168] sm:$0xff]
      %v2040 = vld [vmem:[#allocation3 + $0x170] sm:$0xff]
      %v2041 = vld [vmem:[#allocation3 + $0x178] sm:$0xff]
      %v2042 = vld [vmem:[%s1] sm:$0xf]
      %v2043 = vld [vmem:[%s1 + $0x4] sm:$0xf]
      %v2044 = vld [vmem:[%s1 + $0x8] sm:$0xf]
      %v2045 = vld [vmem:[%s1 + $0xc] sm:$0xf]
      %v2046 = vld [vmem:[%s1 + $0x10] sm:$0xf]
      %v2047 = vld [vmem:[%s1 + $0x14] sm:$0xf]
      %v2048 = vld [vmem:[%s1 + $0x18] sm:$0xf]
      %v2049 = vld [vmem:[%s1 + $0x1c] sm:$0xf]
      %v2050 = vld [vmem:[%s1 + $0x20] sm:$0xf]
      %v2051 = vld [vmem:[%s1 + $0x24] sm:$0xf]
      %v2052 = vld [vmem:[%s1 + $0x28] sm:$0xf]
      %v2053 = vld [vmem:[%s1 + $0x2c] sm:$0xf]
      %v2054 = vld [vmem:[%s1 + $0x30] sm:$0xf]
      %v2055 = vld [vmem:[%s1 + $0x34] sm:$0xf]
      %v2056 = vld [vmem:[%s1 + $0x38] sm:$0xf]
      %v2057 = vld [vmem:[%s1 + $0x3c] sm:$0xf]
      %v2058 = vld [vmem:[%s1 + $0x40] sm:$0xf]
      %v2059 = vld [vmem:[%s1 + $0x44] sm:$0xf]
      %v2060 = vld [vmem:[%s1 + $0x48] sm:$0xf]
      %v2061 = vld [vmem:[%s1 + $0x4c] sm:$0xf]
      %v2062 = vld [vmem:[%s1 + $0x50] sm:$0xf]
      %v2063 = vld [vmem:[%s1 + $0x54] sm:$0xf]
      %v2064 = vld [vmem:[%s1 + $0x58] sm:$0xf]
      %v2065 = vld [vmem:[%s1 + $0x5c] sm:$0xf]
      %v2066 = vld [vmem:[%s1 + $0x60] sm:$0xf]
      %v2067 = vld [vmem:[%s1 + $0x64] sm:$0xf]
      %v2068 = vld [vmem:[%s1 + $0x68] sm:$0xf]
      %v2069 = vld [vmem:[%s1 + $0x6c] sm:$0xf]
      %v2070 = vld [vmem:[%s1 + $0x70] sm:$0xf]
      %v2071 = vld [vmem:[%s1 + $0x74] sm:$0xf]
      %v2072 = vld [vmem:[%s1 + $0x78] sm:$0xf]
      %v2073 = vld [vmem:[%s1 + $0x7c] sm:$0xf]
      %v2074 = vld [vmem:[%s1 + $0x80] sm:$0xf]
      %v2075 = vld [vmem:[%s1 + $0x84] sm:$0xf]
      %v2076 = vld [vmem:[%s1 + $0x88] sm:$0xf]
      %v2077 = vld [vmem:[%s1 + $0x8c] sm:$0xf]
      %v2078 = vld [vmem:[%s1 + $0x90] sm:$0xf]
      %v2079 = vld [vmem:[%s1 + $0x94] sm:$0xf]
      %v2080 = vld [vmem:[%s1 + $0x98] sm:$0xf]
      %v2081 = vld [vmem:[%s1 + $0x9c] sm:$0xf]
      %v2082 = vld [vmem:[%s1 + $0xa0] sm:$0xf]
      %v2083 = vld [vmem:[%s1 + $0xa4] sm:$0xf]
      %v2084 = vld [vmem:[%s1 + $0xa8] sm:$0xf]
      %v2085 = vld [vmem:[%s1 + $0xac] sm:$0xf]
      %v2086 = vld [vmem:[%s1 + $0xb0] sm:$0xf]
      %v2087 = vld [vmem:[%s1 + $0xb4] sm:$0xf]
      %v2088 = vld [vmem:[%s1 + $0xb8] sm:$0xf]
      %v2089 = vld [vmem:[%s1 + $0xbc] sm:$0xf]
      %s2090 = scalar_lea.vmem [#allocation3], 24
      %v2091 = vld [vmem:[%s2090] sm:$0xff]
      %v2092 = vld [vmem:[%s2090 + $0x8] sm:$0xff]
      %v2093 = vld [vmem:[%s2090 + $0x10] sm:$0xff]
      %v2094 = vld [vmem:[%s2090 + $0x18] sm:$0xff]
      %v2095 = vld [vmem:[%s2090 + $0x20] sm:$0xff]
      %v2096 = vld [vmem:[%s2090 + $0x28] sm:$0xff]
      %v2097 = vld [vmem:[%s2090 + $0x30] sm:$0xff]
      %v2098 = vld [vmem:[%s2090 + $0x38] sm:$0xff]
      %v2099 = vld [vmem:[%s2090 + $0x40] sm:$0xff]
      %v2100 = vld [vmem:[%s2090 + $0x48] sm:$0xff]
      %v2101 = vld [vmem:[%s2090 + $0x50] sm:$0xff]
      %v2102 = vld [vmem:[%s2090 + $0x58] sm:$0xff]
      %v2103 = vld [vmem:[%s2090 + $0x60] sm:$0xff]
      %v2104 = vld [vmem:[%s2090 + $0x68] sm:$0xff]
      %v2105 = vld [vmem:[%s2090 + $0x70] sm:$0xff]
      %v2106 = vld [vmem:[%s2090 + $0x78] sm:$0xff]
      %v2107 = vld [vmem:[%s2090 + $0x80] sm:$0xff]
      %v2108 = vld [vmem:[%s2090 + $0x88] sm:$0xff]
      %v2109 = vld [vmem:[%s2090 + $0x90] sm:$0xff]
      %v2110 = vld [vmem:[%s2090 + $0x98] sm:$0xff]
      %v2111 = vld [vmem:[%s2090 + $0xa0] sm:$0xff]
      %v2112 = vld [vmem:[%s2090 + $0xa8] sm:$0xff]
      %v2113 = vld [vmem:[%s2090 + $0xb0] sm:$0xff]
      %v2114 = vld [vmem:[%s2090 + $0xb8] sm:$0xff]
      %v2115 = vld [vmem:[%s2090 + $0xc0] sm:$0xff]
      %v2116 = vld [vmem:[%s2090 + $0xc8] sm:$0xff]
      %v2117 = vld [vmem:[%s2090 + $0xd0] sm:$0xff]
      %v2118 = vld [vmem:[%s2090 + $0xd8] sm:$0xff]
      %v2119 = vld [vmem:[%s2090 + $0xe0] sm:$0xff]
      %v2120 = vld [vmem:[%s2090 + $0xe8] sm:$0xff]
      %v2121 = vld [vmem:[%s2090 + $0xf0] sm:$0xff]
      %v2122 = vld [vmem:[%s2090 + $0xf8] sm:$0xff]
      %v2123 = vld [vmem:[%s2090 + $0x100] sm:$0xff]
      %v2124 = vld [vmem:[%s2090 + $0x108] sm:$0xff]
      %v2125 = vld [vmem:[%s2090 + $0x110] sm:$0xff]
      %v2126 = vld [vmem:[%s2090 + $0x118] sm:$0xff]
      %v2127 = vld [vmem:[%s2090 + $0x120] sm:$0xff]
      %v2128 = vld [vmem:[%s2090 + $0x128] sm:$0xff]
      %v2129 = vld [vmem:[%s2090 + $0x130] sm:$0xff]
      %v2130 = vld [vmem:[%s2090 + $0x138] sm:$0xff]
      %v2131 = vld [vmem:[%s2090 + $0x140] sm:$0xff]
      %v2132 = vld [vmem:[%s2090 + $0x148] sm:$0xff]
      %v2133 = vld [vmem:[%s2090 + $0x150] sm:$0xff]
      %v2134 = vld [vmem:[%s2090 + $0x158] sm:$0xff]
      %v2135 = vld [vmem:[%s2090 + $0x160] sm:$0xff]
      %v2136 = vld [vmem:[%s2090 + $0x168] sm:$0xff]
      %v2137 = vld [vmem:[%s2090 + $0x170] sm:$0xff]
      %v2138 = vld [vmem:[%s2090 + $0x178] sm:$0xff]
      %s2139 = scalar_lea.vmem %s1, 192
      %v2140 = vld [vmem:[%s2139] sm:$0xf]
      %v2141 = vld [vmem:[%s2139 + $0x4] sm:$0xf]
      %v2142 = vld [vmem:[%s2139 + $0x8] sm:$0xf]
      %v2143 = vld [vmem:[%s2139 + $0xc] sm:$0xf]
      %v2144 = vld [vmem:[%s2139 + $0x10] sm:$0xf]
      %v2145 = vld [vmem:[%s2139 + $0x14] sm:$0xf]
      %v2146 = vld [vmem:[%s2139 + $0x18] sm:$0xf]
      %v2147 = vld [vmem:[%s2139 + $0x1c] sm:$0xf]
      %v2148 = vld [vmem:[%s2139 + $0x20] sm:$0xf]
      %v2149 = vld [vmem:[%s2139 + $0x24] sm:$0xf]
      %v2150 = vld [vmem:[%s2139 + $0x28] sm:$0xf]
      %v2151 = vld [vmem:[%s2139 + $0x2c] sm:$0xf]
      %v2152 = vld [vmem:[%s2139 + $0x30] sm:$0xf]
      %v2153 = vld [vmem:[%s2139 + $0x34] sm:$0xf]
      %v2154 = vld [vmem:[%s2139 + $0x38] sm:$0xf]
      %v2155 = vld [vmem:[%s2139 + $0x3c] sm:$0xf]
      %v2156 = vld [vmem:[%s2139 + $0x40] sm:$0xf]
      %v2157 = vld [vmem:[%s2139 + $0x44] sm:$0xf]
      %v2158 = vld [vmem:[%s2139 + $0x48] sm:$0xf]
      %v2159 = vld [vmem:[%s2139 + $0x4c] sm:$0xf]
      %v2160 = vld [vmem:[%s2139 + $0x50] sm:$0xf]
      %v2161 = vld [vmem:[%s2139 + $0x54] sm:$0xf]
      %v2162 = vld [vmem:[%s2139 + $0x58] sm:$0xf]
      %v2163 = vld [vmem:[%s2139 + $0x5c] sm:$0xf]
      %v2164 = vld [vmem:[%s2139 + $0x60] sm:$0xf]
      %v2165 = vld [vmem:[%s2139 + $0x64] sm:$0xf]
      %v2166 = vld [vmem:[%s2139 + $0x68] sm:$0xf]
      %v2167 = vld [vmem:[%s2139 + $0x6c] sm:$0xf]
      %v2168 = vld [vmem:[%s2139 + $0x70] sm:$0xf]
      %v2169 = vld [vmem:[%s2139 + $0x74] sm:$0xf]
      %v2170 = vld [vmem:[%s2139 + $0x78] sm:$0xf]
      %v2171 = vld [vmem:[%s2139 + $0x7c] sm:$0xf]
      %v2172 = vld [vmem:[%s2139 + $0x80] sm:$0xf]
      %v2173 = vld [vmem:[%s2139 + $0x84] sm:$0xf]
      %v2174 = vld [vmem:[%s2139 + $0x88] sm:$0xf]
      %v2175 = vld [vmem:[%s2139 + $0x8c] sm:$0xf]
      %v2176 = vld [vmem:[%s2139 + $0x90] sm:$0xf]
      %v2177 = vld [vmem:[%s2139 + $0x94] sm:$0xf]
      %v2178 = vld [vmem:[%s2139 + $0x98] sm:$0xf]
      %v2179 = vld [vmem:[%s2139 + $0x9c] sm:$0xf]
      %v2180 = vld [vmem:[%s2139 + $0xa0] sm:$0xf]
      %v2181 = vld [vmem:[%s2139 + $0xa4] sm:$0xf]
      %v2182 = vld [vmem:[%s2139 + $0xa8] sm:$0xf]
      %v2183 = vld [vmem:[%s2139 + $0xac] sm:$0xf]
      %v2184 = vld [vmem:[%s2139 + $0xb0] sm:$0xf]
      %v2185 = vld [vmem:[%s2139 + $0xb4] sm:$0xf]
      %v2186 = vld [vmem:[%s2139 + $0xb8] sm:$0xf]
      %v2187 = vld [vmem:[%s2139 + $0xbc] sm:$0xf]
      %v2236 = vunpack.c.l.b16 %v2140
      %v2237 = vunpack.c.l.b16 %v2141
      %v2238 = vunpack.c.l.b16 %v2142
      %v2239 = vunpack.c.l.b16 %v2143
      %v2240 = vunpack.c.l.b16 %v2144
      %v2241 = vunpack.c.l.b16 %v2145
      %v2242 = vunpack.c.l.b16 %v2146
      %v2243 = vunpack.c.l.b16 %v2147
      %v2244 = vunpack.c.l.b16 %v2148
      %v2245 = vunpack.c.l.b16 %v2149
      %v2246 = vunpack.c.l.b16 %v2150
      %v2247 = vunpack.c.l.b16 %v2151
      %v2248 = vunpack.c.l.b16 %v2152
      %v2249 = vunpack.c.l.b16 %v2153
      %v2250 = vunpack.c.l.b16 %v2154
      %v2251 = vunpack.c.l.b16 %v2155
      %v2252 = vunpack.c.l.b16 %v2156
      %v2253 = vunpack.c.l.b16 %v2157
      %v2254 = vunpack.c.l.b16 %v2158
      %v2255 = vunpack.c.l.b16 %v2159
      %v2256 = vunpack.c.l.b16 %v2160
      %v2257 = vunpack.c.l.b16 %v2161
      %v2258 = vunpack.c.l.b16 %v2162
      %v2259 = vunpack.c.l.b16 %v2163
      %v2260 = vunpack.c.l.b16 %v2164
      %v2261 = vunpack.c.l.b16 %v2165
      %v2262 = vunpack.c.l.b16 %v2166
      %v2263 = vunpack.c.l.b16 %v2167
      %v2264 = vunpack.c.l.b16 %v2168
      %v2265 = vunpack.c.l.b16 %v2169
      %v2266 = vunpack.c.l.b16 %v2170
      %v2267 = vunpack.c.l.b16 %v2171
      %v2268 = vunpack.c.l.b16 %v2172
      %v2269 = vunpack.c.l.b16 %v2173
      %v2270 = vunpack.c.l.b16 %v2174
      %v2271 = vunpack.c.l.b16 %v2175
      %v2272 = vunpack.c.l.b16 %v2176
      %v2273 = vunpack.c.l.b16 %v2177
      %v2274 = vunpack.c.l.b16 %v2178
      %v2275 = vunpack.c.l.b16 %v2179
      %v2276 = vunpack.c.l.b16 %v2180
      %v2277 = vunpack.c.l.b16 %v2181
      %v2278 = vunpack.c.l.b16 %v2182
      %v2279 = vunpack.c.l.b16 %v2183
      %v2280 = vunpack.c.l.b16 %v2184
      %v2281 = vunpack.c.l.b16 %v2185
      %v2282 = vunpack.c.l.b16 %v2186
      %v2283 = vunpack.c.l.b16 %v2187
      %v2284 = vpack.c.b16 %v2237, %v2236
      %v2285 = vpack.c.b16 %v2239, %v2238
      %v2286 = vpack.c.b16 %v2241, %v2240
      %v2287 = vpack.c.b16 %v2243, %v2242
      %v2288 = vpack.c.b16 %v2245, %v2244
      %v2289 = vpack.c.b16 %v2247, %v2246
      %v2290 = vpack.c.b16 %v2249, %v2248
      %v2291 = vpack.c.b16 %v2251, %v2250
      %v2292 = vpack.c.b16 %v2253, %v2252
      %v2293 = vpack.c.b16 %v2255, %v2254
      %v2294 = vpack.c.b16 %v2257, %v2256
      %v2295 = vpack.c.b16 %v2259, %v2258
      %v2296 = vpack.c.b16 %v2261, %v2260
      %v2297 = vpack.c.b16 %v2263, %v2262
      %v2298 = vpack.c.b16 %v2265, %v2264
      %v2299 = vpack.c.b16 %v2267, %v2266
      %v2300 = vpack.c.b16 %v2269, %v2268
      %v2301 = vpack.c.b16 %v2271, %v2270
      %v2302 = vpack.c.b16 %v2273, %v2272
      %v2303 = vpack.c.b16 %v2275, %v2274
      %v2304 = vpack.c.b16 %v2277, %v2276
      %v2305 = vpack.c.b16 %v2279, %v2278
      %v2306 = vpack.c.b16 %v2281, %v2280
      %v2307 = vpack.c.b16 %v2283, %v2282
      %2332 = vmatprep.subr.bf16.mxu0 0
      %2333 = vmatpush1.bf16.msra.mxu0 %v2284
      %2334 = vmatprep.subr.bf16.mxu0 0
      %2335 = vmatpush1.bf16.msra.mxu0 %v2285
      %2336 = vmatprep.subr.bf16.mxu0 0
      %2337 = vmatpush1.bf16.msra.mxu0 %v2286
      %2338 = vmatprep.subr.bf16.mxu0 0
      %2339 = vmatpush1.bf16.msra.mxu0 %v2287
      %2340 = vmatprep.subr.bf16.mxu0 0
      %2341 = vmatpush1.bf16.msra.mxu0 %v2288
      %2342 = vmatprep.subr.bf16.mxu0 0
      %2343 = vmatpush1.bf16.msra.mxu0 %v2289
      %2344 = vmatprep.subr.bf16.mxu0 0
      %2345 = vmatpush1.bf16.msra.mxu0 %v2290
      %2346 = vmatprep.subr.bf16.mxu0 0
      %2347 = vmatpush1.bf16.msra.mxu0 %v2291
      %2348 = vmatprep.subr.bf16.mxu0 0
      %2349 = vmatpush1.bf16.msra.mxu0 %v2292
      %2350 = vmatprep.subr.bf16.mxu0 0
      %2351 = vmatpush1.bf16.msra.mxu0 %v2293
      %2352 = vmatprep.subr.bf16.mxu0 0
      %2353 = vmatpush1.bf16.msra.mxu0 %v2294
      %2354 = vmatprep.subr.bf16.mxu0 0
      %2355 = vmatpush1.bf16.msra.mxu0 %v2295
      %2356 = vmatprep.subr.bf16.mxu0 0
      %2357 = vmatpush1.bf16.msra.mxu0 %v2296
      %2358 = vmatprep.subr.bf16.mxu0 0
      %2359 = vmatpush1.bf16.msra.mxu0 %v2297
      %2360 = vmatprep.subr.bf16.mxu0 0
      %2361 = vmatpush1.bf16.msra.mxu0 %v2298
      %2362 = vmatprep.subr.bf16.mxu0 0
      %2363 = vmatpush1.bf16.msra.mxu0 %v2299
      %2364 = vmatprep.mubr.bf16.mxu0 %v2092
      %2365 = vmatmul.mubr.bf16.gmra.mrb[0].mxu0 %v2091
      %v2366 = vpop.f32.mrb[0].mxu0
      %v2367 = vadd.f32 0.0, %v2366
      %v2368 = vpop.f32.mrb[0].mxu0
      %v2369 = vpop.f32.mrb[0].mxu0
      %v2370 = vadd.f32 0.0, %v2369
      %v2371 = vpop.f32.mrb[0].mxu0
      %2372 = vmatprep.mubr.bf16.mxu0 %v2095
      %2373 = vmatmul.mubr.bf16.gmra.mrb[0].mxu0 %v2094
      %v2374 = vpop.f32.mrb[0].mxu0
      %v2375 = vadd.f32 0.0, %v2374
      %v2376 = vpop.f32.mrb[0].mxu0
      %v2377 = vpop.f32.mrb[0].mxu0
      %v2378 = vadd.f32 0.0, %v2377
      %v2379 = vpop.f32.mrb[0].mxu0
      %2380 = vmatprep.mubr.bf16.mxu0 %v2098
      %2381 = vmatmul.mubr.bf16.gmra.mrb[0].mxu0 %v2097
      %v2382 = vpop.f32.mrb[0].mxu0
      %v2383 = vadd.f32 0.0, %v2382
      %v2384 = vpop.f32.mrb[0].mxu0
      %v2385 = vpop.f32.mrb[0].mxu0
      %v2386 = vadd.f32 0.0, %v2385
      %v2387 = vpop.f32.mrb[0].mxu0
      %2388 = vmatprep.mubr.bf16.mxu0 %v2101
      %2389 = vmatmul.mubr.bf16.gmra.mrb[0].mxu0 %v2100
      %v2390 = vpop.f32.mrb[0].mxu0
      %v2391 = vadd.f32 0.0, %v2390
      %v2392 = vpop.f32.mrb[0].mxu0
      %v2393 = vpop.f32.mrb[0].mxu0
      %v2394 = vadd.f32 0.0, %v2393
      %v2395 = vpop.f32.mrb[0].mxu0
      %2396 = vmatprep.mubr.bf16.mxu0 %v2104
      %2397 = vmatmul.mubr.bf16.gmra.mrb[0].mxu0 %v2103
      %v2398 = vpop.f32.mrb[0].mxu0
      %v2399 = vadd.f32 0.0, %v2398
      %v2400 = vpop.f32.mrb[0].mxu0
      %v2401 = vpop.f32.mrb[0].mxu0
      %v2402 = vadd.f32 0.0, %v2401
      %v2403 = vpop.f32.mrb[0].mxu0
      %2404 = vmatprep.mubr.bf16.mxu0 %v2107
      %2405 = vmatmul.mubr.bf16.gmra.mrb[0].mxu0 %v2106
      %v2406 = vpop.f32.mrb[0].mxu0
      %v2407 = vadd.f32 0.0, %v2406
      %v2408 = vpop.f32.mrb[0].mxu0
      %v2409 = vpop.f32.mrb[0].mxu0
      %v2410 = vadd.f32 0.0, %v2409
      %v2411 = vpop.f32.mrb[0].mxu0
      %2412 = vmatprep.mubr.bf16.mxu0 %v2110
      %2413 = vmatmul.mubr.bf16.gmra.mrb[0].mxu0 %v2109
      %v2414 = vpop.f32.mrb[0].mxu0
      %v2415 = vadd.f32 0.0, %v2414
      %v2416 = vpop.f32.mrb[0].mxu0
      %v2417 = vpop.f32.mrb[0].mxu0
      %v2418 = vadd.f32 0.0, %v2417
      %v2419 = vpop.f32.mrb[0].mxu0
      %2420 = vmatprep.mubr.bf16.mxu0 %v2113
      %2421 = vmatmul.mubr.bf16.gmra.mrb[0].mxu0 %v2112
      %v2422 = vpop.f32.mrb[0].mxu0
      %v2423 = vadd.f32 0.0, %v2422
      %v2424 = vpop.f32.mrb[0].mxu0
      %v2425 = vpop.f32.mrb[0].mxu0
      %v2426 = vadd.f32 0.0, %v2425
      %v2427 = vpop.f32.mrb[0].mxu0
      %2428 = vmatprep.mubr.bf16.mxu0 %v2116
      %2429 = vmatmul.mubr.bf16.gmra.mrb[0].mxu0 %v2115
      %v2430 = vpop.f32.mrb[0].mxu0
      %v2431 = vadd.f32 0.0, %v2430
      %v2432 = vpop.f32.mrb[0].mxu0
      %v2433 = vpop.f32.mrb[0].mxu0
      %v2434 = vadd.f32 0.0, %v2433
      %v2435 = vpop.f32.mrb[0].mxu0
      %2436 = vmatprep.mubr.bf16.mxu0 %v2119
      %2437 = vmatmul.mubr.bf16.gmra.mrb[0].mxu0 %v2118
      %v2438 = vpop.f32.mrb[0].mxu0
      %v2439 = vadd.f32 0.0, %v2438
      %v2440 = vpop.f32.mrb[0].mxu0
      %v2441 = vpop.f32.mrb[0].mxu0
      %v2442 = vadd.f32 0.0, %v2441
      %v2443 = vpop.f32.mrb[0].mxu0
      %2444 = vmatprep.mubr.bf16.mxu0 %v2122
      %2445 = vmatmul.mubr.bf16.gmra.mrb[0].mxu0 %v2121
      %v2446 = vpop.f32.mrb[0].mxu0
      %v2447 = vadd.f32 0.0, %v2446
      %v2448 = vpop.f32.mrb[0].mxu0
      %v2449 = vpop.f32.mrb[0].mxu0
      %v2450 = vadd.f32 0.0, %v2449
      %v2451 = vpop.f32.mrb[0].mxu0
      %2452 = vmatprep.mubr.bf16.mxu0 %v2125
      %2453 = vmatmul.mubr.bf16.gmra.mrb[0].mxu0 %v2124
      %v2454 = vpop.f32.mrb[0].mxu0
      %v2455 = vadd.f32 0.0, %v2454
      %v2456 = vpop.f32.mrb[0].mxu0
      %v2457 = vpop.f32.mrb[0].mxu0
      %v2458 = vadd.f32 0.0, %v2457
      %v2459 = vpop.f32.mrb[0].mxu0
      %2460 = vmatprep.mubr.bf16.mxu0 %v2128
      %2461 = vmatmul.mubr.bf16.gmra.mrb[0].mxu0 %v2127
      %v2462 = vpop.f32.mrb[0].mxu0
      %v2463 = vadd.f32 0.0, %v2462
      %v2464 = vpop.f32.mrb[0].mxu0
      %v2465 = vpop.f32.mrb[0].mxu0
      %v2466 = vadd.f32 0.0, %v2465
      %v2467 = vpop.f32.mrb[0].mxu0
      %2468 = vmatprep.mubr.bf16.mxu0 %v2131
      %2469 = vmatmul.mubr.bf16.gmra.mrb[0].mxu0 %v2130
      %v2470 = vpop.f32.mrb[0].mxu0
      %v2471 = vadd.f32 0.0, %v2470
      %v2472 = vpop.f32.mrb[0].mxu0
      %v2473 = vpop.f32.mrb[0].mxu0
      %v2474 = vadd.f32 0.0, %v2473
      %v2475 = vpop.f32.mrb[0].mxu0
      %2476 = vmatprep.mubr.bf16.mxu0 %v2134
      %2477 = vmatmul.mubr.bf16.gmra.mrb[0].mxu0 %v2133
      %v2478 = vpop.f32.mrb[0].mxu0
      %v2479 = vadd.f32 0.0, %v2478
      %v2480 = vpop.f32.mrb[0].mxu0
      %v2481 = vpop.f32.mrb[0].mxu0
      %v2482 = vadd.f32 0.0, %v2481
      %v2483 = vpop.f32.mrb[0].mxu0
      %2484 = vmatprep.mubr.bf16.mxu0 %v2137
      %2485 = vmatmul.mubr.bf16.gmra.mrb[0].mxu0 %v2136
      %v2486 = vpop.f32.mrb[0].mxu0
      %v2487 = vadd.f32 0.0, %v2486
      %v2488 = vpop.f32.mrb[0].mxu0
      %v2489 = vpop.f32.mrb[0].mxu0
      %v2490 = vadd.f32 0.0, %v2489
      %v2491 = vpop.f32.mrb[0].mxu0
      %2492 = vdwg.mxu0
      %2493 = vmatprep.subr.bf16.mxu0 0
      %2494 = vmatpush1.bf16.msra.mxu0 %v2300
      %2495 = vmatprep.subr.bf16.mxu0 0
      %2496 = vmatpush1.bf16.msra.mxu0 %v2301
      %2497 = vmatprep.subr.bf16.mxu0 0
      %2498 = vmatpush1.bf16.msra.mxu0 %v2302
      %2499 = vmatprep.subr.bf16.mxu0 0
      %2500 = vmatpush1.bf16.msra.mxu0 %v2303
      %2501 = vmatprep.subr.bf16.mxu0 0
      %2502 = vmatpush1.bf16.msra.mxu0 %v2304
      %2503 = vmatprep.subr.bf16.mxu0 0
      %2504 = vmatpush1.bf16.msra.mxu0 %v2305
      %2505 = vmatprep.subr.bf16.mxu0 0
      %2506 = vmatpush1.bf16.msra.mxu0 %v2306
      %2507 = vmatprep.subr.bf16.mxu0 0
      %2508 = vmatpush1.bf16.msra.mxu0 %v2307
      %2509 = vmatprep.subr.bf16.mxu0 0
      %2510 = vmatpush1.bf16.msra.mxu0 0
      %2511 = vmatprep.subr.bf16.mxu0 0
      %2512 = vmatpush1.bf16.msra.mxu0 0
      %2513 = vmatprep.subr.bf16.mxu0 0
      %2514 = vmatpush1.bf16.msra.mxu0 0
      %2515 = vmatprep.subr.bf16.mxu0 0
      %2516 = vmatpush1.bf16.msra.mxu0 0
      %2517 = vmatprep.subr.bf16.mxu0 0
      %2518 = vmatpush1.bf16.msra.mxu0 0
      %2519 = vmatprep.subr.bf16.mxu0 0
      %2520 = vmatpush1.bf16.msra.mxu0 0
      %2521 = vmatprep.subr.bf16.mxu0 0
      %2522 = vmatpush1.bf16.msra.mxu0 0
      %2523 = vmatprep.subr.bf16.mxu0 0
      %2524 = vmatpush1.bf16.msra.mxu0 0
      %2525 = vmatprep.mubr.bf16.mxu0 0
      %2526 = vmatmul.mubr.bf16.gmra.mrb[0].mxu0 %v2093
      %v2527 = vpop.f32.mrb[0].mxu0
      %v2528 = vadd.f32 %v2367, %v2527
      %v2529 = vpop.f32.mrb[0].mxu0
      %v2530 = vpop.f32.mrb[0].mxu0
      %v2531 = vadd.f32 %v2370, %v2530
      %v2532 = vpop.f32.mrb[0].mxu0
      %2533 = vmatprep.mubr.bf16.mxu0 0
      %2534 = vmatmul.mubr.bf16.gmra.mrb[0].mxu0 %v2096
      %v2535 = vpop.f32.mrb[0].mxu0
      %v2536 = vadd.f32 %v2375, %v2535
      %v2537 = vpop.f32.mrb[0].mxu0
      %v2538 = vpop.f32.mrb[0].mxu0
      %v2539 = vadd.f32 %v2378, %v2538
      %v2540 = vpop.f32.mrb[0].mxu0
      %2541 = vmatprep.mubr.bf16.mxu0 0
      %2542 = vmatmul.mubr.bf16.gmra.mrb[0].mxu0 %v2099
      %v2543 = vpop.f32.mrb[0].mxu0
      %v2544 = vadd.f32 %v2383, %v2543
      %v2545 = vpop.f32.mrb[0].mxu0
      %v2546 = vpop.f32.mrb[0].mxu0
      %v2547 = vadd.f32 %v2386, %v2546
      %v2548 = vpop.f32.mrb[0].mxu0
      %2549 = vmatprep.mubr.bf16.mxu0 0
      %2550 = vmatmul.mubr.bf16.gmra.mrb[0].mxu0 %v2102
      %v2551 = vpop.f32.mrb[0].mxu0
      %v2552 = vadd.f32 %v2391, %v2551
      %v2553 = vpop.f32.mrb[0].mxu0
      %v2554 = vpop.f32.mrb[0].mxu0
      %v2555 = vadd.f32 %v2394, %v2554
      %v2556 = vpop.f32.mrb[0].mxu0
      %2557 = vmatprep.mubr.bf16.mxu0 0
      %2558 = vmatmul.mubr.bf16.gmra.mrb[0].mxu0 %v2105
      %v2559 = vpop.f32.mrb[0].mxu0
      %v2560 = vadd.f32 %v2399, %v2559
      %v2561 = vpop.f32.mrb[0].mxu0
      %v2562 = vpop.f32.mrb[0].mxu0
      %v2563 = vadd.f32 %v2402, %v2562
      %v2564 = vpop.f32.mrb[0].mxu0
      %2565 = vmatprep.mubr.bf16.mxu0 0
      %2566 = vmatmul.mubr.bf16.gmra.mrb[0].mxu0 %v2108
      %v2567 = vpop.f32.mrb[0].mxu0
      %v2568 = vadd.f32 %v2407, %v2567
      %v2569 = vpop.f32.mrb[0].mxu0
      %v2570 = vpop.f32.mrb[0].mxu0
      %v2571 = vadd.f32 %v2410, %v2570
      %v2572 = vpop.f32.mrb[0].mxu0
      %2573 = vmatprep.mubr.bf16.mxu0 0
      %2574 = vmatmul.mubr.bf16.gmra.mrb[0].mxu0 %v2111
      %v2575 = vpop.f32.mrb[0].mxu0
      %v2576 = vadd.f32 %v2415, %v2575
      %v2577 = vpop.f32.mrb[0].mxu0
      %v2578 = vpop.f32.mrb[0].mxu0
      %v2579 = vadd.f32 %v2418, %v2578
      %v2580 = vpop.f32.mrb[0].mxu0
      %2581 = vmatprep.mubr.bf16.mxu0 0
      %2582 = vmatmul.mubr.bf16.gmra.mrb[0].mxu0 %v2114
      %v2583 = vpop.f32.mrb[0].mxu0
      %v2584 = vadd.f32 %v2423, %v2583
      %v2585 = vpop.f32.mrb[0].mxu0
      %v2586 = vpop.f32.mrb[0].mxu0
      %v2587 = vadd.f32 %v2426, %v2586
      %v2588 = vpop.f32.mrb[0].mxu0
      %2589 = vmatprep.mubr.bf16.mxu0 0
      %2590 = vmatmul.mubr.bf16.gmra.mrb[0].mxu0 %v2117
      %v2591 = vpop.f32.mrb[0].mxu0
      %v2592 = vadd.f32 %v2431, %v2591
      %v2593 = vpop.f32.mrb[0].mxu0
      %v2594 = vpop.f32.mrb[0].mxu0
      %v2595 = vadd.f32 %v2434, %v2594
      %v2596 = vpop.f32.mrb[0].mxu0
      %2597 = vmatprep.mubr.bf16.mxu0 0
      %2598 = vmatmul.mubr.bf16.gmra.mrb[0].mxu0 %v2120
      %v2599 = vpop.f32.mrb[0].mxu0
      %v2600 = vadd.f32 %v2439, %v2599
      %v2601 = vpop.f32.mrb[0].mxu0
      %v2602 = vpop.f32.mrb[0].mxu0
      %v2603 = vadd.f32 %v2442, %v2602
      %v2604 = vpop.f32.mrb[0].mxu0
      %2605 = vmatprep.mubr.bf16.mxu0 0
      %2606 = vmatmul.mubr.bf16.gmra.mrb[0].mxu0 %v2123
      %v2607 = vpop.f32.mrb[0].mxu0
      %v2608 = vadd.f32 %v2447, %v2607
      %v2609 = vpop.f32.mrb[0].mxu0
      %v2610 = vpop.f32.mrb[0].mxu0
      %v2611 = vadd.f32 %v2450, %v2610
      %v2612 = vpop.f32.mrb[0].mxu0
      %2613 = vmatprep.mubr.bf16.mxu0 0
      %2614 = vmatmul.mubr.bf16.gmra.mrb[0].mxu0 %v2126
      %v2615 = vpop.f32.mrb[0].mxu0
      %v2616 = vadd.f32 %v2455, %v2615
      %v2617 = vpop.f32.mrb[0].mxu0
      %v2618 = vpop.f32.mrb[0].mxu0
      %v2619 = vadd.f32 %v2458, %v2618
      %v2620 = vpop.f32.mrb[0].mxu0
      %2621 = vmatprep.mubr.bf16.mxu0 0
      %2622 = vmatmul.mubr.bf16.gmra.mrb[0].mxu0 %v2129
      %v2623 = vpop.f32.mrb[0].mxu0
      %v2624 = vadd.f32 %v2463, %v2623
      %v2625 = vpop.f32.mrb[0].mxu0
      %v2626 = vpop.f32.mrb[0].mxu0
      %v2627 = vadd.f32 %v2466, %v2626
      %v2628 = vpop.f32.mrb[0].mxu0
      %2629 = vmatprep.mubr.bf16.mxu0 0
      %2630 = vmatmul.mubr.bf16.gmra.mrb[0].mxu0 %v2132
      %v2631 = vpop.f32.mrb[0].mxu0
      %v2632 = vadd.f32 %v2471, %v2631
      %v2633 = vpop.f32.mrb[0].mxu0
      %v2634 = vpop.f32.mrb[0].mxu0
      %v2635 = vadd.f32 %v2474, %v2634
      %v2636 = vpop.f32.mrb[0].mxu0
      %2637 = vmatprep.mubr.bf16.mxu0 0
      %2638 = vmatmul.mubr.bf16.gmra.mrb[0].mxu0 %v2135
      %v2639 = vpop.f32.mrb[0].mxu0
      %v2640 = vadd.f32 %v2479, %v2639
      %v2641 = vpop.f32.mrb[0].mxu0
      %v2642 = vpop.f32.mrb[0].mxu0
      %v2643 = vadd.f32 %v2482, %v2642
      %v2644 = vpop.f32.mrb[0].mxu0
      %2645 = vmatprep.mubr.bf16.mxu0 0
      %2646 = vmatmul.mubr.bf16.gmra.mrb[0].mxu0 %v2138
      %v2647 = vpop.f32.mrb[0].mxu0
      %v2648 = vadd.f32 %v2487, %v2647
      %v2649 = vpop.f32.mrb[0].mxu0
      %v2650 = vpop.f32.mrb[0].mxu0
      %v2651 = vadd.f32 %v2490, %v2650
      %v2652 = vpop.f32.mrb[0].mxu0
      %2653 = vdwg.mxu0
      %v2702 = vunpack.c.l.b16 %v2042
      %v2703 = vunpack.c.l.b16 %v2043
      %v2704 = vunpack.c.l.b16 %v2044
      %v2705 = vunpack.c.l.b16 %v2045
      %v2706 = vunpack.c.l.b16 %v2046
      %v2707 = vunpack.c.l.b16 %v2047
      %v2708 = vunpack.c.l.b16 %v2048
      %v2709 = vunpack.c.l.b16 %v2049
      %v2710 = vunpack.c.l.b16 %v2050
      %v2711 = vunpack.c.l.b16 %v2051
      %v2712 = vunpack.c.l.b16 %v2052
      %v2713 = vunpack.c.l.b16 %v2053
      %v2714 = vunpack.c.l.b16 %v2054
      %v2715 = vunpack.c.l.b16 %v2055
      %v2716 = vunpack.c.l.b16 %v2056
      %v2717 = vunpack.c.l.b16 %v2057
      %v2718 = vunpack.c.l.b16 %v2058
      %v2719 = vunpack.c.l.b16 %v2059
      %v2720 = vunpack.c.l.b16 %v2060
      %v2721 = vunpack.c.l.b16 %v2061
      %v2722 = vunpack.c.l.b16 %v2062
      %v2723 = vunpack.c.l.b16 %v2063
      %v2724 = vunpack.c.l.b16 %v2064
      %v2725 = vunpack.c.l.b16 %v2065
      %v2726 = vunpack.c.l.b16 %v2066
      %v2727 = vunpack.c.l.b16 %v2067
      %v2728 = vunpack.c.l.b16 %v2068
      %v2729 = vunpack.c.l.b16 %v2069
      %v2730 = vunpack.c.l.b16 %v2070
      %v2731 = vunpack.c.l.b16 %v2071
      %v2732 = vunpack.c.l.b16 %v2072
      %v2733 = vunpack.c.l.b16 %v2073
      %v2734 = vunpack.c.l.b16 %v2074
      %v2735 = vunpack.c.l.b16 %v2075
      %v2736 = vunpack.c.l.b16 %v2076
      %v2737 = vunpack.c.l.b16 %v2077
      %v2738 = vunpack.c.l.b16 %v2078
      %v2739 = vunpack.c.l.b16 %v2079
      %v2740 = vunpack.c.l.b16 %v2080
      %v2741 = vunpack.c.l.b16 %v2081
      %v2742 = vunpack.c.l.b16 %v2082
      %v2743 = vunpack.c.l.b16 %v2083
      %v2744 = vunpack.c.l.b16 %v2084
      %v2745 = vunpack.c.l.b16 %v2085
      %v2746 = vunpack.c.l.b16 %v2086
      %v2747 = vunpack.c.l.b16 %v2087
      %v2748 = vunpack.c.l.b16 %v2088
      %v2749 = vunpack.c.l.b16 %v2089
      %v2750 = vpack.c.b16 %v2703, %v2702
      %v2751 = vpack.c.b16 %v2705, %v2704
      %v2752 = vpack.c.b16 %v2707, %v2706
      %v2753 = vpack.c.b16 %v2709, %v2708
      %v2754 = vpack.c.b16 %v2711, %v2710
      %v2755 = vpack.c.b16 %v2713, %v2712
      %v2756 = vpack.c.b16 %v2715, %v2714
      %v2757 = vpack.c.b16 %v2717, %v2716
      %v2758 = vpack.c.b16 %v2719, %v2718
      %v2759 = vpack.c.b16 %v2721, %v2720
      %v2760 = vpack.c.b16 %v2723, %v2722
      %v2761 = vpack.c.b16 %v2725, %v2724
      %v2762 = vpack.c.b16 %v2727, %v2726
      %v2763 = vpack.c.b16 %v2729, %v2728
      %v2764 = vpack.c.b16 %v2731, %v2730
      %v2765 = vpack.c.b16 %v2733, %v2732
      %v2766 = vpack.c.b16 %v2735, %v2734
      %v2767 = vpack.c.b16 %v2737, %v2736
      %v2768 = vpack.c.b16 %v2739, %v2738
      %v2769 = vpack.c.b16 %v2741, %v2740
      %v2770 = vpack.c.b16 %v2743, %v2742
      %v2771 = vpack.c.b16 %v2745, %v2744
      %v2772 = vpack.c.b16 %v2747, %v2746
      %v2773 = vpack.c.b16 %v2749, %v2748
      %2798 = vmatprep.subr.bf16.mxu0 0
      %2799 = vmatpush1.bf16.msra.mxu0 %v2750
      %2800 = vmatprep.subr.bf16.mxu0 0
      %2801 = vmatpush1.bf16.msra.mxu0 %v2751
      %2802 = vmatprep.subr.bf16.mxu0 0
      %2803 = vmatpush1.bf16.msra.mxu0 %v2752
      %2804 = vmatprep.subr.bf16.mxu0 0
      %2805 = vmatpush1.bf16.msra.mxu0 %v2753
      %2806 = vmatprep.subr.bf16.mxu0 0
      %2807 = vmatpush1.bf16.msra.mxu0 %v2754
      %2808 = vmatprep.subr.bf16.mxu0 0
      %2809 = vmatpush1.bf16.msra.mxu0 %v2755
      %2810 = vmatprep.subr.bf16.mxu0 0
      %2811 = vmatpush1.bf16.msra.mxu0 %v2756
      %2812 = vmatprep.subr.bf16.mxu0 0
      %2813 = vmatpush1.bf16.msra.mxu0 %v2757
      %2814 = vmatprep.subr.bf16.mxu0 0
      %2815 = vmatpush1.bf16.msra.mxu0 %v2758
      %2816 = vmatprep.subr.bf16.mxu0 0
      %2817 = vmatpush1.bf16.msra.mxu0 %v2759
      %2818 = vmatprep.subr.bf16.mxu0 0
      %2819 = vmatpush1.bf16.msra.mxu0 %v2760
      %2820 = vmatprep.subr.bf16.mxu0 0
      %2821 = vmatpush1.bf16.msra.mxu0 %v2761
      %2822 = vmatprep.subr.bf16.mxu0 0
      %2823 = vmatpush1.bf16.msra.mxu0 %v2762
      %2824 = vmatprep.subr.bf16.mxu0 0
      %2825 = vmatpush1.bf16.msra.mxu0 %v2763
      %2826 = vmatprep.subr.bf16.mxu0 0
      %2827 = vmatpush1.bf16.msra.mxu0 %v2764
      %2828 = vmatprep.subr.bf16.mxu0 0
      %2829 = vmatpush1.bf16.msra.mxu0 %v2765
      %2830 = vmatprep.mubr.bf16.mxu0 %v1995
      %2831 = vmatmul.mubr.bf16.gmra.mrb[0].mxu0 %v1994
      %v2832 = vpop.f32.mrb[0].mxu0
      %v2833 = vadd.f32 %v2528, %v2832
      %v2834 = vpop.f32.mrb[0].mxu0
      %v2835 = vpop.f32.mrb[0].mxu0
      %v2836 = vadd.f32 %v2531, %v2835
      %v2837 = vpop.f32.mrb[0].mxu0
      %2838 = vmatprep.mubr.bf16.mxu0 %v1998
      %2839 = vmatmul.mubr.bf16.gmra.mrb[0].mxu0 %v1997
      %v2840 = vpop.f32.mrb[0].mxu0
      %v2841 = vadd.f32 %v2536, %v2840
      %v2842 = vpop.f32.mrb[0].mxu0
      %v2843 = vpop.f32.mrb[0].mxu0
      %v2844 = vadd.f32 %v2539, %v2843
      %v2845 = vpop.f32.mrb[0].mxu0
      %2846 = vmatprep.mubr.bf16.mxu0 %v2001
      %2847 = vmatmul.mubr.bf16.gmra.mrb[0].mxu0 %v2000
      %v2848 = vpop.f32.mrb[0].mxu0
      %v2849 = vadd.f32 %v2544, %v2848
      %v2850 = vpop.f32.mrb[0].mxu0
      %v2851 = vpop.f32.mrb[0].mxu0
      %v2852 = vadd.f32 %v2547, %v2851
      %v2853 = vpop.f32.mrb[0].mxu0
      %2854 = vmatprep.mubr.bf16.mxu0 %v2004
      %2855 = vmatmul.mubr.bf16.gmra.mrb[0].mxu0 %v2003
      %v2856 = vpop.f32.mrb[0].mxu0
      %v2857 = vadd.f32 %v2552, %v2856
      %v2858 = vpop.f32.mrb[0].mxu0
      %v2859 = vpop.f32.mrb[0].mxu0
      %v2860 = vadd.f32 %v2555, %v2859
      %v2861 = vpop.f32.mrb[0].mxu0
      %2862 = vmatprep.mubr.bf16.mxu0 %v2007
      %2863 = vmatmul.mubr.bf16.gmra.mrb[0].mxu0 %v2006
      %v2864 = vpop.f32.mrb[0].mxu0
      %v2865 = vadd.f32 %v2560, %v2864
      %v2866 = vpop.f32.mrb[0].mxu0
      %v2867 = vpop.f32.mrb[0].mxu0
      %v2868 = vadd.f32 %v2563, %v2867
      %v2869 = vpop.f32.mrb[0].mxu0
      %2870 = vmatprep.mubr.bf16.mxu0 %v2010
      %2871 = vmatmul.mubr.bf16.gmra.mrb[0].mxu0 %v2009
      %v2872 = vpop.f32.mrb[0].mxu0
      %v2873 = vadd.f32 %v2568, %v2872
      %v2874 = vpop.f32.mrb[0].mxu0
      %v2875 = vpop.f32.mrb[0].mxu0
      %v2876 = vadd.f32 %v2571, %v2875
      %v2877 = vpop.f32.mrb[0].mxu0
      %2878 = vmatprep.mubr.bf16.mxu0 %v2013
      %2879 = vmatmul.mubr.bf16.gmra.mrb[0].mxu0 %v2012
      %v2880 = vpop.f32.mrb[0].mxu0
      %v2881 = vadd.f32 %v2576, %v2880
      %v2882 = vpop.f32.mrb[0].mxu0
      %v2883 = vpop.f32.mrb[0].mxu0
      %v2884 = vadd.f32 %v2579, %v2883
      %v2885 = vpop.f32.mrb[0].mxu0
      %2886 = vmatprep.mubr.bf16.mxu0 %v2016
      %2887 = vmatmul.mubr.bf16.gmra.mrb[0].mxu0 %v2015
      %v2888 = vpop.f32.mrb[0].mxu0
      %v2889 = vadd.f32 %v2584, %v2888
      %v2890 = vpop.f32.mrb[0].mxu0
      %v2891 = vpop.f32.mrb[0].mxu0
      %v2892 = vadd.f32 %v2587, %v2891
      %v2893 = vpop.f32.mrb[0].mxu0
      %2894 = vmatprep.mubr.bf16.mxu0 %v2019
      %2895 = vmatmul.mubr.bf16.gmra.mrb[0].mxu0 %v2018
      %v2896 = vpop.f32.mrb[0].mxu0
      %v2897 = vadd.f32 %v2592, %v2896
      %v2898 = vpop.f32.mrb[0].mxu0
      %v2899 = vpop.f32.mrb[0].mxu0
      %v2900 = vadd.f32 %v2595, %v2899
      %v2901 = vpop.f32.mrb[0].mxu0
      %2902 = vmatprep.mubr.bf16.mxu0 %v2022
      %2903 = vmatmul.mubr.bf16.gmra.mrb[0].mxu0 %v2021
      %v2904 = vpop.f32.mrb[0].mxu0
      %v2905 = vadd.f32 %v2600, %v2904
      %v2906 = vpop.f32.mrb[0].mxu0
      %v2907 = vpop.f32.mrb[0].mxu0
      %v2908 = vadd.f32 %v2603, %v2907
      %v2909 = vpop.f32.mrb[0].mxu0
      %2910 = vmatprep.mubr.bf16.mxu0 %v2025
      %2911 = vmatmul.mubr.bf16.gmra.mrb[0].mxu0 %v2024
      %v2912 = vpop.f32.mrb[0].mxu0
      %v2913 = vadd.f32 %v2608, %v2912
      %v2914 = vpop.f32.mrb[0].mxu0
      %v2915 = vpop.f32.mrb[0].mxu0
      %v2916 = vadd.f32 %v2611, %v2915
      %v2917 = vpop.f32.mrb[0].mxu0
      %2918 = vmatprep.mubr.bf16.mxu0 %v2028
      %2919 = vmatmul.mubr.bf16.gmra.mrb[0].mxu0 %v2027
      %v2920 = vpop.f32.mrb[0].mxu0
      %v2921 = vadd.f32 %v2616, %v2920
      %v2922 = vpop.f32.mrb[0].mxu0
      %v2923 = vpop.f32.mrb[0].mxu0
      %v2924 = vadd.f32 %v2619, %v2923
      %v2925 = vpop.f32.mrb[0].mxu0
      %2926 = vmatprep.mubr.bf16.mxu0 %v2031
      %2927 = vmatmul.mubr.bf16.gmra.mrb[0].mxu0 %v2030
      %v2928 = vpop.f32.mrb[0].mxu0
      %v2929 = vadd.f32 %v2624, %v2928
      %v2930 = vpop.f32.mrb[0].mxu0
      %v2931 = vpop.f32.mrb[0].mxu0
      %v2932 = vadd.f32 %v2627, %v2931
      %v2933 = vpop.f32.mrb[0].mxu0
      %2934 = vmatprep.mubr.bf16.mxu0 %v2034
      %2935 = vmatmul.mubr.bf16.gmra.mrb[0].mxu0 %v2033
      %v2936 = vpop.f32.mrb[0].mxu0
      %v2937 = vadd.f32 %v2632, %v2936
      %v2938 = vpop.f32.mrb[0].mxu0
      %v2939 = vpop.f32.mrb[0].mxu0
      %v2940 = vadd.f32 %v2635, %v2939
      %v2941 = vpop.f32.mrb[0].mxu0
      %2942 = vmatprep.mubr.bf16.mxu0 %v2037
      %2943 = vmatmul.mubr.bf16.gmra.mrb[0].mxu0 %v2036
      %v2944 = vpop.f32.mrb[0].mxu0
      %v2945 = vadd.f32 %v2640, %v2944
      %v2946 = vpop.f32.mrb[0].mxu0
      %v2947 = vpop.f32.mrb[0].mxu0
      %v2948 = vadd.f32 %v2643, %v2947
      %v2949 = vpop.f32.mrb[0].mxu0
      %2950 = vmatprep.mubr.bf16.mxu0 %v2040
      %2951 = vmatmul.mubr.bf16.gmra.mrb[0].mxu0 %v2039
      %v2952 = vpop.f32.mrb[0].mxu0
      %v2953 = vadd.f32 %v2648, %v2952
      %v2954 = vpop.f32.mrb[0].mxu0
      %v2955 = vpop.f32.mrb[0].mxu0
      %v2956 = vadd.f32 %v2651, %v2955
      %v2957 = vpop.f32.mrb[0].mxu0
      %2958 = vdwg.mxu0
      %2959 = vmatprep.subr.bf16.mxu0 0
      %2960 = vmatpush1.bf16.msra.mxu0 %v2766
      %2961 = vmatprep.subr.bf16.mxu0 0
      %2962 = vmatpush1.bf16.msra.mxu0 %v2767
      %2963 = vmatprep.subr.bf16.mxu0 0
      %2964 = vmatpush1.bf16.msra.mxu0 %v2768
      %2965 = vmatprep.subr.bf16.mxu0 0
      %2966 = vmatpush1.bf16.msra.mxu0 %v2769
      %2967 = vmatprep.subr.bf16.mxu0 0
      %2968 = vmatpush1.bf16.msra.mxu0 %v2770
      %2969 = vmatprep.subr.bf16.mxu0 0
      %2970 = vmatpush1.bf16.msra.mxu0 %v2771
      %2971 = vmatprep.subr.bf16.mxu0 0
      %2972 = vmatpush1.bf16.msra.mxu0 %v2772
      %2973 = vmatprep.subr.bf16.mxu0 0
      %2974 = vmatpush1.bf16.msra.mxu0 %v2773
      %2975 = vmatprep.subr.bf16.mxu0 0
      %2976 = vmatpush1.bf16.msra.mxu0 0
      %2977 = vmatprep.subr.bf16.mxu0 0
      %2978 = vmatpush1.bf16.msra.mxu0 0
      %2979 = vmatprep.subr.bf16.mxu0 0
      %2980 = vmatpush1.bf16.msra.mxu0 0
      %2981 = vmatprep.subr.bf16.mxu0 0
      %2982 = vmatpush1.bf16.msra.mxu0 0
      %2983 = vmatprep.subr.bf16.mxu0 0
      %2984 = vmatpush1.bf16.msra.mxu0 0
      %2985 = vmatprep.subr.bf16.mxu0 0
      %2986 = vmatpush1.bf16.msra.mxu0 0
      %2987 = vmatprep.subr.bf16.mxu0 0
      %2988 = vmatpush1.bf16.msra.mxu0 0
      %2989 = vmatprep.subr.bf16.mxu0 0
      %2990 = vmatpush1.bf16.msra.mxu0 0
      %2991 = vmatprep.mubr.bf16.mxu0 0
      %2992 = vmatmul.mubr.bf16.gmra.mrb[0].mxu0 %v1996
      %v2993 = vpop.f32.mrb[0].mxu0
      %v2994 = vadd.f32 %v2833, %v2993
      %v2995 = vpop.f32.mrb[0].mxu0
      %v2996 = vpop.f32.mrb[0].mxu0
      %v2997 = vadd.f32 %v2836, %v2996
      %v2998 = vpop.f32.mrb[0].mxu0
      %2999 = vmatprep.mubr.bf16.mxu0 0
      %3000 = vmatmul.mubr.bf16.gmra.mrb[0].mxu0 %v1999
      %v3001 = vpop.f32.mrb[0].mxu0
      %v3002 = vadd.f32 %v2841, %v3001
      %v3003 = vpop.f32.mrb[0].mxu0
      %v3004 = vpop.f32.mrb[0].mxu0
      %v3005 = vadd.f32 %v2844, %v3004
      %v3006 = vpop.f32.mrb[0].mxu0
      %3007 = vmatprep.mubr.bf16.mxu0 0
      %3008 = vmatmul.mubr.bf16.gmra.mrb[0].mxu0 %v2002
      %v3009 = vpop.f32.mrb[0].mxu0
      %v3010 = vadd.f32 %v2849, %v3009
      %v3011 = vpop.f32.mrb[0].mxu0
      %v3012 = vpop.f32.mrb[0].mxu0
      %v3013 = vadd.f32 %v2852, %v3012
      %v3014 = vpop.f32.mrb[0].mxu0
      %3015 = vmatprep.mubr.bf16.mxu0 0
      %3016 = vmatmul.mubr.bf16.gmra.mrb[0].mxu0 %v2005
      %v3017 = vpop.f32.mrb[0].mxu0
      %v3018 = vadd.f32 %v2857, %v3017
      %v3019 = vpop.f32.mrb[0].mxu0
      %v3020 = vpop.f32.mrb[0].mxu0
      %v3021 = vadd.f32 %v2860, %v3020
      %v3022 = vpop.f32.mrb[0].mxu0
      %3023 = vmatprep.mubr.bf16.mxu0 0
      %3024 = vmatmul.mubr.bf16.gmra.mrb[0].mxu0 %v2008
      %v3025 = vpop.f32.mrb[0].mxu0
      %v3026 = vadd.f32 %v2865, %v3025
      %v3027 = vpop.f32.mrb[0].mxu0
      %v3028 = vpop.f32.mrb[0].mxu0
      %v3029 = vadd.f32 %v2868, %v3028
      %v3030 = vpop.f32.mrb[0].mxu0
      %3031 = vmatprep.mubr.bf16.mxu0 0
      %3032 = vmatmul.mubr.bf16.gmra.mrb[0].mxu0 %v2011
      %v3033 = vpop.f32.mrb[0].mxu0
      %v3034 = vadd.f32 %v2873, %v3033
      %v3035 = vpop.f32.mrb[0].mxu0
      %v3036 = vpop.f32.mrb[0].mxu0
      %v3037 = vadd.f32 %v2876, %v3036
      %v3038 = vpop.f32.mrb[0].mxu0
      %3039 = vmatprep.mubr.bf16.mxu0 0
      %3040 = vmatmul.mubr.bf16.gmra.mrb[0].mxu0 %v2014
      %v3041 = vpop.f32.mrb[0].mxu0
      %v3042 = vadd.f32 %v2881, %v3041
      %v3043 = vpop.f32.mrb[0].mxu0
      %v3044 = vpop.f32.mrb[0].mxu0
      %v3045 = vadd.f32 %v2884, %v3044
      %v3046 = vpop.f32.mrb[0].mxu0
      %3047 = vmatprep.mubr.bf16.mxu0 0
      %3048 = vmatmul.mubr.bf16.gmra.mrb[0].mxu0 %v2017
      %v3049 = vpop.f32.mrb[0].mxu0
      %v3050 = vadd.f32 %v2889, %v3049
      %v3051 = vpop.f32.mrb[0].mxu0
      %v3052 = vpop.f32.mrb[0].mxu0
      %v3053 = vadd.f32 %v2892, %v3052
      %v3054 = vpop.f32.mrb[0].mxu0
      %3055 = vmatprep.mubr.bf16.mxu0 0
      %3056 = vmatmul.mubr.bf16.gmra.mrb[0].mxu0 %v2020
      %v3057 = vpop.f32.mrb[0].mxu0
      %v3058 = vadd.f32 %v2897, %v3057
      %v3059 = vpop.f32.mrb[0].mxu0
      %v3060 = vpop.f32.mrb[0].mxu0
      %v3061 = vadd.f32 %v2900, %v3060
      %v3062 = vpop.f32.mrb[0].mxu0
      %3063 = vmatprep.mubr.bf16.mxu0 0
      %3064 = vmatmul.mubr.bf16.gmra.mrb[0].mxu0 %v2023
      %v3065 = vpop.f32.mrb[0].mxu0
      %v3066 = vadd.f32 %v2905, %v3065
      %v3067 = vpop.f32.mrb[0].mxu0
      %v3068 = vpop.f32.mrb[0].mxu0
      %v3069 = vadd.f32 %v2908, %v3068
      %v3070 = vpop.f32.mrb[0].mxu0
      %3071 = vmatprep.mubr.bf16.mxu0 0
      %3072 = vmatmul.mubr.bf16.gmra.mrb[0].mxu0 %v2026
      %v3073 = vpop.f32.mrb[0].mxu0
      %v3074 = vadd.f32 %v2913, %v3073
      %v3075 = vpop.f32.mrb[0].mxu0
      %v3076 = vpop.f32.mrb[0].mxu0
      %v3077 = vadd.f32 %v2916, %v3076
      %v3078 = vpop.f32.mrb[0].mxu0
      %3079 = vmatprep.mubr.bf16.mxu0 0
      %3080 = vmatmul.mubr.bf16.gmra.mrb[0].mxu0 %v2029
      %v3081 = vpop.f32.mrb[0].mxu0
      %v3082 = vadd.f32 %v2921, %v3081
      %v3083 = vpop.f32.mrb[0].mxu0
      %v3084 = vpop.f32.mrb[0].mxu0
      %v3085 = vadd.f32 %v2924, %v3084
      %v3086 = vpop.f32.mrb[0].mxu0
      %3087 = vmatprep.mubr.bf16.mxu0 0
      %3088 = vmatmul.mubr.bf16.gmra.mrb[0].mxu0 %v2032
      %v3089 = vpop.f32.mrb[0].mxu0
      %v3090 = vadd.f32 %v2929, %v3089
      %v3091 = vpop.f32.mrb[0].mxu0
      %v3092 = vpop.f32.mrb[0].mxu0
      %v3093 = vadd.f32 %v2932, %v3092
      %v3094 = vpop.f32.mrb[0].mxu0
      %3095 = vmatprep.mubr.bf16.mxu0 0
      %3096 = vmatmul.mubr.bf16.gmra.mrb[0].mxu0 %v2035
      %v3097 = vpop.f32.mrb[0].mxu0
      %v3098 = vadd.f32 %v2937, %v3097
      %v3099 = vpop.f32.mrb[0].mxu0
      %v3100 = vpop.f32.mrb[0].mxu0
      %v3101 = vadd.f32 %v2940, %v3100
      %v3102 = vpop.f32.mrb[0].mxu0
      %3103 = vmatprep.mubr.bf16.mxu0 0
      %3104 = vmatmul.mubr.bf16.gmra.mrb[0].mxu0 %v2038
      %v3105 = vpop.f32.mrb[0].mxu0
      %v3106 = vadd.f32 %v2945, %v3105
      %v3107 = vpop.f32.mrb[0].mxu0
      %v3108 = vpop.f32.mrb[0].mxu0
      %v3109 = vadd.f32 %v2948, %v3108
      %v3110 = vpop.f32.mrb[0].mxu0
      %3111 = vmatprep.mubr.bf16.mxu0 0
      %3112 = vmatmul.mubr.bf16.gmra.mrb[0].mxu0 %v2041
      %v3113 = vpop.f32.mrb[0].mxu0
      %v3114 = vadd.f32 %v2953, %v3113
      %v3115 = vpop.f32.mrb[0].mxu0
      %v3116 = vpop.f32.mrb[0].mxu0
      %v3117 = vadd.f32 %v2956, %v3116
      %v3118 = vpop.f32.mrb[0].mxu0
      %3119 = vdwg.mxu0
      %s3120 = scalar_lea.vmem [#allocation3], 48
      %v3121 = vld [vmem:[%s3120] sm:$0xff]
      %v3122 = vld [vmem:[%s3120 + $0x8] sm:$0xff]
      %v3123 = vld [vmem:[%s3120 + $0x10] sm:$0xff]
      %v3124 = vld [vmem:[%s3120 + $0x18] sm:$0xff]
      %v3125 = vld [vmem:[%s3120 + $0x20] sm:$0xff]
      %v3126 = vld [vmem:[%s3120 + $0x28] sm:$0xff]
      %v3127 = vld [vmem:[%s3120 + $0x30] sm:$0xff]
      %v3128 = vld [vmem:[%s3120 + $0x38] sm:$0xff]
      %v3129 = vld [vmem:[%s3120 + $0x40] sm:$0xff]
      %v3130 = vld [vmem:[%s3120 + $0x48] sm:$0xff]
      %v3131 = vld [vmem:[%s3120 + $0x50] sm:$0xff]
      %v3132 = vld [vmem:[%s3120 + $0x58] sm:$0xff]
      %v3133 = vld [vmem:[%s3120 + $0x60] sm:$0xff]
      %v3134 = vld [vmem:[%s3120 + $0x68] sm:$0xff]
      %v3135 = vld [vmem:[%s3120 + $0x70] sm:$0xff]
      %v3136 = vld [vmem:[%s3120 + $0x78] sm:$0xff]
      %v3137 = vld [vmem:[%s3120 + $0x80] sm:$0xff]
      %v3138 = vld [vmem:[%s3120 + $0x88] sm:$0xff]
      %v3139 = vld [vmem:[%s3120 + $0x90] sm:$0xff]
      %v3140 = vld [vmem:[%s3120 + $0x98] sm:$0xff]
      %v3141 = vld [vmem:[%s3120 + $0xa0] sm:$0xff]
      %v3142 = vld [vmem:[%s3120 + $0xa8] sm:$0xff]
      %v3143 = vld [vmem:[%s3120 + $0xb0] sm:$0xff]
      %v3144 = vld [vmem:[%s3120 + $0xb8] sm:$0xff]
      %v3145 = vld [vmem:[%s3120 + $0xc0] sm:$0xff]
      %v3146 = vld [vmem:[%s3120 + $0xc8] sm:$0xff]
      %v3147 = vld [vmem:[%s3120 + $0xd0] sm:$0xff]
      %v3148 = vld [vmem:[%s3120 + $0xd8] sm:$0xff]
      %v3149 = vld [vmem:[%s3120 + $0xe0] sm:$0xff]
      %v3150 = vld [vmem:[%s3120 + $0xe8] sm:$0xff]
      %v3151 = vld [vmem:[%s3120 + $0xf0] sm:$0xff]
      %v3152 = vld [vmem:[%s3120 + $0xf8] sm:$0xff]
      %v3153 = vld [vmem:[%s3120 + $0x100] sm:$0xff]
      %v3154 = vld [vmem:[%s3120 + $0x108] sm:$0xff]
      %v3155 = vld [vmem:[%s3120 + $0x110] sm:$0xff]
      %v3156 = vld [vmem:[%s3120 + $0x118] sm:$0xff]
      %v3157 = vld [vmem:[%s3120 + $0x120] sm:$0xff]
      %v3158 = vld [vmem:[%s3120 + $0x128] sm:$0xff]
      %v3159 = vld [vmem:[%s3120 + $0x130] sm:$0xff]
      %v3160 = vld [vmem:[%s3120 + $0x138] sm:$0xff]
      %v3161 = vld [vmem:[%s3120 + $0x140] sm:$0xff]
      %v3162 = vld [vmem:[%s3120 + $0x148] sm:$0xff]
      %v3163 = vld [vmem:[%s3120 + $0x150] sm:$0xff]
      %v3164 = vld [vmem:[%s3120 + $0x158] sm:$0xff]
      %v3165 = vld [vmem:[%s3120 + $0x160] sm:$0xff]
      %v3166 = vld [vmem:[%s3120 + $0x168] sm:$0xff]
      %v3167 = vld [vmem:[%s3120 + $0x170] sm:$0xff]
      %v3168 = vld [vmem:[%s3120 + $0x178] sm:$0xff]
      %s3169 = scalar_lea.vmem %s1, 384
      %v3170 = vld [vmem:[%s3169] sm:$0xf]
      %v3171 = vld [vmem:[%s3169 + $0x4] sm:$0xf]
      %v3172 = vld [vmem:[%s3169 + $0x8] sm:$0xf]
      %v3173 = vld [vmem:[%s3169 + $0xc] sm:$0xf]
      %v3174 = vld [vmem:[%s3169 + $0x10] sm:$0xf]
      %v3175 = vld [vmem:[%s3169 + $0x14] sm:$0xf]
      %v3176 = vld [vmem:[%s3169 + $0x18] sm:$0xf]
      %v3177 = vld [vmem:[%s3169 + $0x1c] sm:$0xf]
      %v3178 = vld [vmem:[%s3169 + $0x20] sm:$0xf]
      %v3179 = vld [vmem:[%s3169 + $0x24] sm:$0xf]
      %v3180 = vld [vmem:[%s3169 + $0x28] sm:$0xf]
      %v3181 = vld [vmem:[%s3169 + $0x2c] sm:$0xf]
      %v3182 = vld [vmem:[%s3169 + $0x30] sm:$0xf]
      %v3183 = vld [vmem:[%s3169 + $0x34] sm:$0xf]
      %v3184 = vld [vmem:[%s3169 + $0x38] sm:$0xf]
      %v3185 = vld [vmem:[%s3169 + $0x3c] sm:$0xf]
      %v3186 = vld [vmem:[%s3169 + $0x40] sm:$0xf]
      %v3187 = vld [vmem:[%s3169 + $0x44] sm:$0xf]
      %v3188 = vld [vmem:[%s3169 + $0x48] sm:$0xf]
      %v3189 = vld [vmem:[%s3169 + $0x4c] sm:$0xf]
      %v3190 = vld [vmem:[%s3169 + $0x50] sm:$0xf]
      %v3191 = vld [vmem:[%s3169 + $0x54] sm:$0xf]
      %v3192 = vld [vmem:[%s3169 + $0x58] sm:$0xf]
      %v3193 = vld [vmem:[%s3169 + $0x5c] sm:$0xf]
      %v3194 = vld [vmem:[%s3169 + $0x60] sm:$0xf]
      %v3195 = vld [vmem:[%s3169 + $0x64] sm:$0xf]
      %v3196 = vld [vmem:[%s3169 + $0x68] sm:$0xf]
      %v3197 = vld [vmem:[%s3169 + $0x6c] sm:$0xf]
      %v3198 = vld [vmem:[%s3169 + $0x70] sm:$0xf]
      %v3199 = vld [vmem:[%s3169 + $0x74] sm:$0xf]
      %v3200 = vld [vmem:[%s3169 + $0x78] sm:$0xf]
      %v3201 = vld [vmem:[%s3169 + $0x7c] sm:$0xf]
      %v3202 = vld [vmem:[%s3169 + $0x80] sm:$0xf]
      %v3203 = vld [vmem:[%s3169 + $0x84] sm:$0xf]
      %v3204 = vld [vmem:[%s3169 + $0x88] sm:$0xf]
      %v3205 = vld [vmem:[%s3169 + $0x8c] sm:$0xf]
      %v3206 = vld [vmem:[%s3169 + $0x90] sm:$0xf]
      %v3207 = vld [vmem:[%s3169 + $0x94] sm:$0xf]
      %v3208 = vld [vmem:[%s3169 + $0x98] sm:$0xf]
      %v3209 = vld [vmem:[%s3169 + $0x9c] sm:$0xf]
      %v3210 = vld [vmem:[%s3169 + $0xa0] sm:$0xf]
      %v3211 = vld [vmem:[%s3169 + $0xa4] sm:$0xf]
      %v3212 = vld [vmem:[%s3169 + $0xa8] sm:$0xf]
      %v3213 = vld [vmem:[%s3169 + $0xac] sm:$0xf]
      %v3214 = vld [vmem:[%s3169 + $0xb0] sm:$0xf]
      %v3215 = vld [vmem:[%s3169 + $0xb4] sm:$0xf]
      %v3216 = vld [vmem:[%s3169 + $0xb8] sm:$0xf]
      %v3217 = vld [vmem:[%s3169 + $0xbc] sm:$0xf]
      %v3266 = vunpack.c.l.b16 %v3170
      %v3267 = vunpack.c.l.b16 %v3171
      %v3268 = vunpack.c.l.b16 %v3172
      %v3269 = vunpack.c.l.b16 %v3173
      %v3270 = vunpack.c.l.b16 %v3174
      %v3271 = vunpack.c.l.b16 %v3175
      %v3272 = vunpack.c.l.b16 %v3176
      %v3273 = vunpack.c.l.b16 %v3177
      %v3274 = vunpack.c.l.b16 %v3178
      %v3275 = vunpack.c.l.b16 %v3179
      %v3276 = vunpack.c.l.b16 %v3180
      %v3277 = vunpack.c.l.b16 %v3181
      %v3278 = vunpack.c.l.b16 %v3182
      %v3279 = vunpack.c.l.b16 %v3183
      %v3280 = vunpack.c.l.b16 %v3184
      %v3281 = vunpack.c.l.b16 %v3185
      %v3282 = vunpack.c.l.b16 %v3186
      %v3283 = vunpack.c.l.b16 %v3187
      %v3284 = vunpack.c.l.b16 %v3188
      %v3285 = vunpack.c.l.b16 %v3189
      %v3286 = vunpack.c.l.b16 %v3190
      %v3287 = vunpack.c.l.b16 %v3191
      %v3288 = vunpack.c.l.b16 %v3192
      %v3289 = vunpack.c.l.b16 %v3193
      %v3290 = vunpack.c.l.b16 %v3194
      %v3291 = vunpack.c.l.b16 %v3195
      %v3292 = vunpack.c.l.b16 %v3196
      %v3293 = vunpack.c.l.b16 %v3197
      %v3294 = vunpack.c.l.b16 %v3198
      %v3295 = vunpack.c.l.b16 %v3199
      %v3296 = vunpack.c.l.b16 %v3200
      %v3297 = vunpack.c.l.b16 %v3201
      %v3298 = vunpack.c.l.b16 %v3202
      %v3299 = vunpack.c.l.b16 %v3203
      %v3300 = vunpack.c.l.b16 %v3204
      %v3301 = vunpack.c.l.b16 %v3205
      %v3302 = vunpack.c.l.b16 %v3206
      %v3303 = vunpack.c.l.b16 %v3207
      %v3304 = vunpack.c.l.b16 %v3208
      %v3305 = vunpack.c.l.b16 %v3209
      %v3306 = vunpack.c.l.b16 %v3210
      %v3307 = vunpack.c.l.b16 %v3211
      %v3308 = vunpack.c.l.b16 %v3212
      %v3309 = vunpack.c.l.b16 %v3213
      %v3310 = vunpack.c.l.b16 %v3214
      %v3311 = vunpack.c.l.b16 %v3215
      %v3312 = vunpack.c.l.b16 %v3216
      %v3313 = vunpack.c.l.b16 %v3217
      %v3314 = vpack.c.b16 %v3267, %v3266
      %v3315 = vpack.c.b16 %v3269, %v3268
      %v3316 = vpack.c.b16 %v3271, %v3270
      %v3317 = vpack.c.b16 %v3273, %v3272
      %v3318 = vpack.c.b16 %v3275, %v3274
      %v3319 = vpack.c.b16 %v3277, %v3276
      %v3320 = vpack.c.b16 %v3279, %v3278
      %v3321 = vpack.c.b16 %v3281, %v3280
      %v3322 = vpack.c.b16 %v3283, %v3282
      %v3323 = vpack.c.b16 %v3285, %v3284
      %v3324 = vpack.c.b16 %v3287, %v3286
      %v3325 = vpack.c.b16 %v3289, %v3288
      %v3326 = vpack.c.b16 %v3291, %v3290
      %v3327 = vpack.c.b16 %v3293, %v3292
      %v3328 = vpack.c.b16 %v3295, %v3294
      %v3329 = vpack.c.b16 %v3297, %v3296
      %v3330 = vpack.c.b16 %v3299, %v3298
      %v3331 = vpack.c.b16 %v3301, %v3300
      %v3332 = vpack.c.b16 %v3303, %v3302
      %v3333 = vpack.c.b16 %v3305, %v3304
      %v3334 = vpack.c.b16 %v3307, %v3306
      %v3335 = vpack.c.b16 %v3309, %v3308
      %v3336 = vpack.c.b16 %v3311, %v3310
      %v3337 = vpack.c.b16 %v3313, %v3312
      %3362 = vmatprep.subr.bf16.mxu0 0
      %3363 = vmatpush1.bf16.msra.mxu0 %v3314
      %3364 = vmatprep.subr.bf16.mxu0 0
      %3365 = vmatpush1.bf16.msra.mxu0 %v3315
      %3366 = vmatprep.subr.bf16.mxu0 0
      %3367 = vmatpush1.bf16.msra.mxu0 %v3316
      %3368 = vmatprep.subr.bf16.mxu0 0
      %3369 = vmatpush1.bf16.msra.mxu0 %v3317
      %3370 = vmatprep.subr.bf16.mxu0 0
      %3371 = vmatpush1.bf16.msra.mxu0 %v3318
      %3372 = vmatprep.subr.bf16.mxu0 0
      %3373 = vmatpush1.bf16.msra.mxu0 %v3319
      %3374 = vmatprep.subr.bf16.mxu0 0
      %3375 = vmatpush1.bf16.msra.mxu0 %v3320
      %3376 = vmatprep.subr.bf16.mxu0 0
      %3377 = vmatpush1.bf16.msra.mxu0 %v3321
      %3378 = vmatprep.subr.bf16.mxu0 0
      %3379 = vmatpush1.bf16.msra.mxu0 %v3322
      %3380 = vmatprep.subr.bf16.mxu0 0
      %3381 = vmatpush1.bf16.msra.mxu0 %v3323
      %3382 = vmatprep.subr.bf16.mxu0 0
      %3383 = vmatpush1.bf16.msra.mxu0 %v3324
      %3384 = vmatprep.subr.bf16.mxu0 0
      %3385 = vmatpush1.bf16.msra.mxu0 %v3325
      %3386 = vmatprep.subr.bf16.mxu0 0
      %3387 = vmatpush1.bf16.msra.mxu0 %v3326
      %3388 = vmatprep.subr.bf16.mxu0 0
      %3389 = vmatpush1.bf16.msra.mxu0 %v3327
      %3390 = vmatprep.subr.bf16.mxu0 0
      %3391 = vmatpush1.bf16.msra.mxu0 %v3328
      %3392 = vmatprep.subr.bf16.mxu0 0
      %3393 = vmatpush1.bf16.msra.mxu0 %v3329
      %3394 = vmatprep.mubr.bf16.mxu0 %v3122
      %3395 = vmatmul.mubr.bf16.gmra.mrb[0].mxu0 %v3121
      %v3396 = vpop.f32.mrb[0].mxu0
      %v3397 = vadd.f32 0.0, %v3396
      %v3398 = vpop.f32.mrb[0].mxu0
      %v3399 = vpop.f32.mrb[0].mxu0
      %v3400 = vadd.f32 0.0, %v3399
      %v3401 = vpop.f32.mrb[0].mxu0
      %3402 = vmatprep.mubr.bf16.mxu0 %v3125
      %3403 = vmatmul.mubr.bf16.gmra.mrb[0].mxu0 %v3124
      %v3404 = vpop.f32.mrb[0].mxu0
      %v3405 = vadd.f32 0.0, %v3404
      %v3406 = vpop.f32.mrb[0].mxu0
      %v3407 = vpop.f32.mrb[0].mxu0
      %v3408 = vadd.f32 0.0, %v3407
      %v3409 = vpop.f32.mrb[0].mxu0
      %3410 = vmatprep.mubr.bf16.mxu0 %v3128
      %3411 = vmatmul.mubr.bf16.gmra.mrb[0].mxu0 %v3127
      %v3412 = vpop.f32.mrb[0].mxu0
      %v3413 = vadd.f32 0.0, %v3412
      %v3414 = vpop.f32.mrb[0].mxu0
      %v3415 = vpop.f32.mrb[0].mxu0
      %v3416 = vadd.f32 0.0, %v3415
      %v3417 = vpop.f32.mrb[0].mxu0
      %3418 = vmatprep.mubr.bf16.mxu0 %v3131
      %3419 = vmatmul.mubr.bf16.gmra.mrb[0].mxu0 %v3130
      %v3420 = vpop.f32.mrb[0].mxu0
      %v3421 = vadd.f32 0.0, %v3420
      %v3422 = vpop.f32.mrb[0].mxu0
      %v3423 = vpop.f32.mrb[0].mxu0
      %v3424 = vadd.f32 0.0, %v3423
      %v3425 = vpop.f32.mrb[0].mxu0
      %3426 = vmatprep.mubr.bf16.mxu0 %v3134
      %3427 = vmatmul.mubr.bf16.gmra.mrb[0].mxu0 %v3133
      %v3428 = vpop.f32.mrb[0].mxu0
      %v3429 = vadd.f32 0.0, %v3428
      %v3430 = vpop.f32.mrb[0].mxu0
      %v3431 = vpop.f32.mrb[0].mxu0
      %v3432 = vadd.f32 0.0, %v3431
      %v3433 = vpop.f32.mrb[0].mxu0
      %3434 = vmatprep.mubr.bf16.mxu0 %v3137
      %3435 = vmatmul.mubr.bf16.gmra.mrb[0].mxu0 %v3136
      %v3436 = vpop.f32.mrb[0].mxu0
      %v3437 = vadd.f32 0.0, %v3436
      %v3438 = vpop.f32.mrb[0].mxu0
      %v3439 = vpop.f32.mrb[0].mxu0
      %v3440 = vadd.f32 0.0, %v3439
      %v3441 = vpop.f32.mrb[0].mxu0
      %3442 = vmatprep.mubr.bf16.mxu0 %v3140
      %3443 = vmatmul.mubr.bf16.gmra.mrb[0].mxu0 %v3139
      %v3444 = vpop.f32.mrb[0].mxu0
      %v3445 = vadd.f32 0.0, %v3444
      %v3446 = vpop.f32.mrb[0].mxu0
      %v3447 = vpop.f32.mrb[0].mxu0
      %v3448 = vadd.f32 0.0, %v3447
      %v3449 = vpop.f32.mrb[0].mxu0
      %3450 = vmatprep.mubr.bf16.mxu0 %v3143
      %3451 = vmatmul.mubr.bf16.gmra.mrb[0].mxu0 %v3142
      %v3452 = vpop.f32.mrb[0].mxu0
      %v3453 = vadd.f32 0.0, %v3452
      %v3454 = vpop.f32.mrb[0].mxu0
      %v3455 = vpop.f32.mrb[0].mxu0
      %v3456 = vadd.f32 0.0, %v3455
      %v3457 = vpop.f32.mrb[0].mxu0
      %3458 = vmatprep.mubr.bf16.mxu0 %v3146
      %3459 = vmatmul.mubr.bf16.gmra.mrb[0].mxu0 %v3145
      %v3460 = vpop.f32.mrb[0].mxu0
      %v3461 = vadd.f32 0.0, %v3460
      %v3462 = vpop.f32.mrb[0].mxu0
      %v3463 = vpop.f32.mrb[0].mxu0
      %v3464 = vadd.f32 0.0, %v3463
      %v3465 = vpop.f32.mrb[0].mxu0
      %3466 = vmatprep.mubr.bf16.mxu0 %v3149
      %3467 = vmatmul.mubr.bf16.gmra.mrb[0].mxu0 %v3148
      %v3468 = vpop.f32.mrb[0].mxu0
      %v3469 = vadd.f32 0.0, %v3468
      %v3470 = vpop.f32.mrb[0].mxu0
      %v3471 = vpop.f32.mrb[0].mxu0
      %v3472 = vadd.f32 0.0, %v3471
      %v3473 = vpop.f32.mrb[0].mxu0
      %3474 = vmatprep.mubr.bf16.mxu0 %v3152
      %3475 = vmatmul.mubr.bf16.gmra.mrb[0].mxu0 %v3151
      %v3476 = vpop.f32.mrb[0].mxu0
      %v3477 = vadd.f32 0.0, %v3476
      %v3478 = vpop.f32.mrb[0].mxu0
      %v3479 = vpop.f32.mrb[0].mxu0
      %v3480 = vadd.f32 0.0, %v3479
      %v3481 = vpop.f32.mrb[0].mxu0
      %3482 = vmatprep.mubr.bf16.mxu0 %v3155
      %3483 = vmatmul.mubr.bf16.gmra.mrb[0].mxu0 %v3154
      %v3484 = vpop.f32.mrb[0].mxu0
      %v3485 = vadd.f32 0.0, %v3484
      %v3486 = vpop.f32.mrb[0].mxu0
      %v3487 = vpop.f32.mrb[0].mxu0
      %v3488 = vadd.f32 0.0, %v3487
      %v3489 = vpop.f32.mrb[0].mxu0
      %3490 = vmatprep.mubr.bf16.mxu0 %v3158
      %3491 = vmatmul.mubr.bf16.gmra.mrb[0].mxu0 %v3157
      %v3492 = vpop.f32.mrb[0].mxu0
      %v3493 = vadd.f32 0.0, %v3492
      %v3494 = vpop.f32.mrb[0].mxu0
      %v3495 = vpop.f32.mrb[0].mxu0
      %v3496 = vadd.f32 0.0, %v3495
      %v3497 = vpop.f32.mrb[0].mxu0
      %3498 = vmatprep.mubr.bf16.mxu0 %v3161
      %3499 = vmatmul.mubr.bf16.gmra.mrb[0].mxu0 %v3160
      %v3500 = vpop.f32.mrb[0].mxu0
      %v3501 = vadd.f32 0.0, %v3500
      %v3502 = vpop.f32.mrb[0].mxu0
      %v3503 = vpop.f32.mrb[0].mxu0
      %v3504 = vadd.f32 0.0, %v3503
      %v3505 = vpop.f32.mrb[0].mxu0
      %3506 = vmatprep.mubr.bf16.mxu0 %v3164
      %3507 = vmatmul.mubr.bf16.gmra.mrb[0].mxu0 %v3163
      %v3508 = vpop.f32.mrb[0].mxu0
      %v3509 = vadd.f32 0.0, %v3508
      %v3510 = vpop.f32.mrb[0].mxu0
      %v3511 = vpop.f32.mrb[0].mxu0
      %v3512 = vadd.f32 0.0, %v3511
      %v3513 = vpop.f32.mrb[0].mxu0
      %3514 = vmatprep.mubr.bf16.mxu0 %v3167
      %3515 = vmatmul.mubr.bf16.gmra.mrb[0].mxu0 %v3166
      %v3516 = vpop.f32.mrb[0].mxu0
      %v3517 = vadd.f32 0.0, %v3516
      %v3518 = vpop.f32.mrb[0].mxu0
      %v3519 = vpop.f32.mrb[0].mxu0
      %v3520 = vadd.f32 0.0, %v3519
      %v3521 = vpop.f32.mrb[0].mxu0
      %3522 = vdwg.mxu0
      %3523 = vmatprep.subr.bf16.mxu0 0
      %3524 = vmatpush1.bf16.msra.mxu0 %v3330
      %3525 = vmatprep.subr.bf16.mxu0 0
      %3526 = vmatpush1.bf16.msra.mxu0 %v3331
      %3527 = vmatprep.subr.bf16.mxu0 0
      %3528 = vmatpush1.bf16.msra.mxu0 %v3332
      %3529 = vmatprep.subr.bf16.mxu0 0
      %3530 = vmatpush1.bf16.msra.mxu0 %v3333
      %3531 = vmatprep.subr.bf16.mxu0 0
      %3532 = vmatpush1.bf16.msra.mxu0 %v3334
      %3533 = vmatprep.subr.bf16.mxu0 0
      %3534 = vmatpush1.bf16.msra.mxu0 %v3335
      %3535 = vmatprep.subr.bf16.mxu0 0
      %3536 = vmatpush1.bf16.msra.mxu0 %v3336
      %3537 = vmatprep.subr.bf16.mxu0 0
      %3538 = vmatpush1.bf16.msra.mxu0 %v3337
      %3539 = vmatprep.subr.bf16.mxu0 0
      %3540 = vmatpush1.bf16.msra.mxu0 0
      %3541 = vmatprep.subr.bf16.mxu0 0
      %3542 = vmatpush1.bf16.msra.mxu0 0
      %3543 = vmatprep.subr.bf16.mxu0 0
      %3544 = vmatpush1.bf16.msra.mxu0 0
      %3545 = vmatprep.subr.bf16.mxu0 0
      %3546 = vmatpush1.bf16.msra.mxu0 0
      %3547 = vmatprep.subr.bf16.mxu0 0
      %3548 = vmatpush1.bf16.msra.mxu0 0
      %3549 = vmatprep.subr.bf16.mxu0 0
      %3550 = vmatpush1.bf16.msra.mxu0 0
      %3551 = vmatprep.subr.bf16.mxu0 0
      %3552 = vmatpush1.bf16.msra.mxu0 0
      %3553 = vmatprep.subr.bf16.mxu0 0
      %3554 = vmatpush1.bf16.msra.mxu0 0
      %3555 = vmatprep.mubr.bf16.mxu0 0
      %3556 = vmatmul.mubr.bf16.gmra.mrb[0].mxu0 %v3123
      %v3557 = vpop.f32.mrb[0].mxu0
      %v3558 = vadd.f32 %v3397, %v3557
      %v3559 = vpop.f32.mrb[0].mxu0
      %v3560 = vpop.f32.mrb[0].mxu0
      %v3561 = vadd.f32 %v3400, %v3560
      %v3562 = vpop.f32.mrb[0].mxu0
      %3563 = vmatprep.mubr.bf16.mxu0 0
      %3564 = vmatmul.mubr.bf16.gmra.mrb[0].mxu0 %v3126
      %v3565 = vpop.f32.mrb[0].mxu0
      %v3566 = vadd.f32 %v3405, %v3565
      %v3567 = vpop.f32.mrb[0].mxu0
      %v3568 = vpop.f32.mrb[0].mxu0
      %v3569 = vadd.f32 %v3408, %v3568
      %v3570 = vpop.f32.mrb[0].mxu0
      %3571 = vmatprep.mubr.bf16.mxu0 0
      %3572 = vmatmul.mubr.bf16.gmra.mrb[0].mxu0 %v3129
      %v3573 = vpop.f32.mrb[0].mxu0
      %v3574 = vadd.f32 %v3413, %v3573
      %v3575 = vpop.f32.mrb[0].mxu0
      %v3576 = vpop.f32.mrb[0].mxu0
      %v3577 = vadd.f32 %v3416, %v3576
      %v3578 = vpop.f32.mrb[0].mxu0
      %3579 = vmatprep.mubr.bf16.mxu0 0
      %3580 = vmatmul.mubr.bf16.gmra.mrb[0].mxu0 %v3132
      %v3581 = vpop.f32.mrb[0].mxu0
      %v3582 = vadd.f32 %v3421, %v3581
      %v3583 = vpop.f32.mrb[0].mxu0
      %v3584 = vpop.f32.mrb[0].mxu0
      %v3585 = vadd.f32 %v3424, %v3584
      %v3586 = vpop.f32.mrb[0].mxu0
      %3587 = vmatprep.mubr.bf16.mxu0 0
      %3588 = vmatmul.mubr.bf16.gmra.mrb[0].mxu0 %v3135
      %v3589 = vpop.f32.mrb[0].mxu0
      %v3590 = vadd.f32 %v3429, %v3589
      %v3591 = vpop.f32.mrb[0].mxu0
      %v3592 = vpop.f32.mrb[0].mxu0
      %v3593 = vadd.f32 %v3432, %v3592
      %v3594 = vpop.f32.mrb[0].mxu0
      %3595 = vmatprep.mubr.bf16.mxu0 0
      %3596 = vmatmul.mubr.bf16.gmra.mrb[0].mxu0 %v3138
      %v3597 = vpop.f32.mrb[0].mxu0
      %v3598 = vadd.f32 %v3437, %v3597
      %v3599 = vpop.f32.mrb[0].mxu0
      %v3600 = vpop.f32.mrb[0].mxu0
      %v3601 = vadd.f32 %v3440, %v3600
      %v3602 = vpop.f32.mrb[0].mxu0
      %3603 = vmatprep.mubr.bf16.mxu0 0
      %3604 = vmatmul.mubr.bf16.gmra.mrb[0].mxu0 %v3141
      %v3605 = vpop.f32.mrb[0].mxu0
      %v3606 = vadd.f32 %v3445, %v3605
      %v3607 = vpop.f32.mrb[0].mxu0
      %v3608 = vpop.f32.mrb[0].mxu0
      %v3609 = vadd.f32 %v3448, %v3608
      %v3610 = vpop.f32.mrb[0].mxu0
      %3611 = vmatprep.mubr.bf16.mxu0 0
      %3612 = vmatmul.mubr.bf16.gmra.mrb[0].mxu0 %v3144
      %v3613 = vpop.f32.mrb[0].mxu0
      %v3614 = vadd.f32 %v3453, %v3613
      %v3615 = vpop.f32.mrb[0].mxu0
      %v3616 = vpop.f32.mrb[0].mxu0
      %v3617 = vadd.f32 %v3456, %v3616
      %v3618 = vpop.f32.mrb[0].mxu0
      %3619 = vmatprep.mubr.bf16.mxu0 0
      %3620 = vmatmul.mubr.bf16.gmra.mrb[0].mxu0 %v3147
      %v3621 = vpop.f32.mrb[0].mxu0
      %v3622 = vadd.f32 %v3461, %v3621
      %v3623 = vpop.f32.mrb[0].mxu0
      %v3624 = vpop.f32.mrb[0].mxu0
      %v3625 = vadd.f32 %v3464, %v3624
      %v3626 = vpop.f32.mrb[0].mxu0
      %3627 = vmatprep.mubr.bf16.mxu0 0
      %3628 = vmatmul.mubr.bf16.gmra.mrb[0].mxu0 %v3150
      %v3629 = vpop.f32.mrb[0].mxu0
      %v3630 = vadd.f32 %v3469, %v3629
      %v3631 = vpop.f32.mrb[0].mxu0
      %v3632 = vpop.f32.mrb[0].mxu0
      %v3633 = vadd.f32 %v3472, %v3632
      %v3634 = vpop.f32.mrb[0].mxu0
      %3635 = vmatprep.mubr.bf16.mxu0 0
      %3636 = vmatmul.mubr.bf16.gmra.mrb[0].mxu0 %v3153
      %v3637 = vpop.f32.mrb[0].mxu0
      %v3638 = vadd.f32 %v3477, %v3637
      %v3639 = vpop.f32.mrb[0].mxu0
      %v3640 = vpop.f32.mrb[0].mxu0
      %v3641 = vadd.f32 %v3480, %v3640
      %v3642 = vpop.f32.mrb[0].mxu0
      %3643 = vmatprep.mubr.bf16.mxu0 0
      %3644 = vmatmul.mubr.bf16.gmra.mrb[0].mxu0 %v3156
      %v3645 = vpop.f32.mrb[0].mxu0
      %v3646 = vadd.f32 %v3485, %v3645
      %v3647 = vpop.f32.mrb[0].mxu0
      %v3648 = vpop.f32.mrb[0].mxu0
      %v3649 = vadd.f32 %v3488, %v3648
      %v3650 = vpop.f32.mrb[0].mxu0
      %3651 = vmatprep.mubr.bf16.mxu0 0
      %3652 = vmatmul.mubr.bf16.gmra.mrb[0].mxu0 %v3159
      %v3653 = vpop.f32.mrb[0].mxu0
      %v3654 = vadd.f32 %v3493, %v3653
      %v3655 = vpop.f32.mrb[0].mxu0
      %v3656 = vpop.f32.mrb[0].mxu0
      %v3657 = vadd.f32 %v3496, %v3656
      %v3658 = vpop.f32.mrb[0].mxu0
      %3659 = vmatprep.mubr.bf16.mxu0 0
      %3660 = vmatmul.mubr.bf16.gmra.mrb[0].mxu0 %v3162
      %v3661 = vpop.f32.mrb[0].mxu0
      %v3662 = vadd.f32 %v3501, %v3661
      %v3663 = vpop.f32.mrb[0].mxu0
      %v3664 = vpop.f32.mrb[0].mxu0
      %v3665 = vadd.f32 %v3504, %v3664
      %v3666 = vpop.f32.mrb[0].mxu0
      %3667 = vmatprep.mubr.bf16.mxu0 0
      %3668 = vmatmul.mubr.bf16.gmra.mrb[0].mxu0 %v3165
      %v3669 = vpop.f32.mrb[0].mxu0
      %v3670 = vadd.f32 %v3509, %v3669
      %v3671 = vpop.f32.mrb[0].mxu0
      %v3672 = vpop.f32.mrb[0].mxu0
      %v3673 = vadd.f32 %v3512, %v3672
      %v3674 = vpop.f32.mrb[0].mxu0
      %3675 = vmatprep.mubr.bf16.mxu0 0
      %3676 = vmatmul.mubr.bf16.gmra.mrb[0].mxu0 %v3168
      %v3677 = vpop.f32.mrb[0].mxu0
      %v3678 = vadd.f32 %v3517, %v3677
      %v3679 = vpop.f32.mrb[0].mxu0
      %v3680 = vpop.f32.mrb[0].mxu0
      %v3681 = vadd.f32 %v3520, %v3680
      %v3682 = vpop.f32.mrb[0].mxu0
      %3683 = vdwg.mxu0
      %v3684 = vadd.f32 %v2994, %v3558
      %v3685 = vadd.f32 %v2997, %v3561
      %v3686 = vadd.f32 %v3002, %v3566
      %v3687 = vadd.f32 %v3005, %v3569
      %v3688 = vadd.f32 %v3010, %v3574
      %v3689 = vadd.f32 %v3013, %v3577
      %v3690 = vadd.f32 %v3018, %v3582
      %v3691 = vadd.f32 %v3021, %v3585
      %v3692 = vadd.f32 %v3026, %v3590
      %v3693 = vadd.f32 %v3029, %v3593
      %v3694 = vadd.f32 %v3034, %v3598
      %v3695 = vadd.f32 %v3037, %v3601
      %v3696 = vadd.f32 %v3042, %v3606
      %v3697 = vadd.f32 %v3045, %v3609
      %v3698 = vadd.f32 %v3050, %v3614
      %v3699 = vadd.f32 %v3053, %v3617
      %v3700 = vadd.f32 %v3058, %v3622
      %v3701 = vadd.f32 %v3061, %v3625
      %v3702 = vadd.f32 %v3066, %v3630
      %v3703 = vadd.f32 %v3069, %v3633
      %v3704 = vadd.f32 %v3074, %v3638
      %v3705 = vadd.f32 %v3077, %v3641
      %v3706 = vadd.f32 %v3082, %v3646
      %v3707 = vadd.f32 %v3085, %v3649
      %v3708 = vadd.f32 %v3090, %v3654
      %v3709 = vadd.f32 %v3093, %v3657
      %v3710 = vadd.f32 %v3098, %v3662
      %v3711 = vadd.f32 %v3101, %v3665
      %v3712 = vadd.f32 %v3106, %v3670
      %v3713 = vadd.f32 %v3109, %v3673
      %v3714 = vadd.f32 %v3114, %v3678
      %v3715 = vadd.f32 %v3117, %v3681
      %v3716 = vld [vmem:[%s4] sm:$0x1]
      %v3718 = vlaneseq
      %v3719 = vshrl.u32 %v3718, 7
      %v3720 = vsub.s32 0, %v3719
      %v3721 = vrot.slane %v3716, %v3720
      %v3723 = vadd.f32 %v3684, %v3721
      %v3724 = vadd.f32 %v3685, %v3721
      %v3725 = vadd.f32 %v3686, %v3721
      %v3726 = vadd.f32 %v3687, %v3721
      %v3727 = vadd.f32 %v3688, %v3721
      %v3728 = vadd.f32 %v3689, %v3721
      %v3729 = vadd.f32 %v3690, %v3721
      %v3730 = vadd.f32 %v3691, %v3721
      %v3731 = vadd.f32 %v3692, %v3721
      %v3732 = vadd.f32 %v3693, %v3721
      %v3733 = vadd.f32 %v3694, %v3721
      %v3734 = vadd.f32 %v3695, %v3721
      %v3735 = vadd.f32 %v3696, %v3721
      %v3736 = vadd.f32 %v3697, %v3721
      %v3737 = vadd.f32 %v3698, %v3721
      %v3738 = vadd.f32 %v3699, %v3721
      %v3739 = vadd.f32 %v3700, %v3721
      %v3740 = vadd.f32 %v3701, %v3721
      %v3741 = vadd.f32 %v3702, %v3721
      %v3742 = vadd.f32 %v3703, %v3721
      %v3743 = vadd.f32 %v3704, %v3721
      %v3744 = vadd.f32 %v3705, %v3721
      %v3745 = vadd.f32 %v3706, %v3721
      %v3746 = vadd.f32 %v3707, %v3721
      %v3747 = vadd.f32 %v3708, %v3721
      %v3748 = vadd.f32 %v3709, %v3721
      %v3749 = vadd.f32 %v3710, %v3721
      %v3750 = vadd.f32 %v3711, %v3721
      %v3751 = vadd.f32 %v3712, %v3721
      %v3752 = vadd.f32 %v3713, %v3721
      %v3753 = vadd.f32 %v3714, %v3721
      %v3754 = vadd.f32 %v3715, %v3721
      %v3755 = vmax.f32 %v3723, 0.0
      %v3756 = vmax.f32 %v3724, 0.0
      %v3757 = vmax.f32 %v3725, 0.0
      %v3758 = vmax.f32 %v3726, 0.0
      %v3759 = vmax.f32 %v3727, 0.0
      %v3760 = vmax.f32 %v3728, 0.0
      %v3761 = vmax.f32 %v3729, 0.0
      %v3762 = vmax.f32 %v3730, 0.0
      %v3763 = vmax.f32 %v3731, 0.0
      %v3764 = vmax.f32 %v3732, 0.0
      %v3765 = vmax.f32 %v3733, 0.0
      %v3766 = vmax.f32 %v3734, 0.0
      %v3767 = vmax.f32 %v3735, 0.0
      %v3768 = vmax.f32 %v3736, 0.0
      %v3769 = vmax.f32 %v3737, 0.0
      %v3770 = vmax.f32 %v3738, 0.0
      %v3771 = vmax.f32 %v3739, 0.0
      %v3772 = vmax.f32 %v3740, 0.0
      %v3773 = vmax.f32 %v3741, 0.0
      %v3774 = vmax.f32 %v3742, 0.0
      %v3775 = vmax.f32 %v3743, 0.0
      %v3776 = vmax.f32 %v3744, 0.0
      %v3777 = vmax.f32 %v3745, 0.0
      %v3778 = vmax.f32 %v3746, 0.0
      %v3779 = vmax.f32 %v3747, 0.0
      %v3780 = vmax.f32 %v3748, 0.0
      %v3781 = vmax.f32 %v3749, 0.0
      %v3782 = vmax.f32 %v3750, 0.0
      %v3783 = vmax.f32 %v3751, 0.0
      %v3784 = vmax.f32 %v3752, 0.0
      %v3785 = vmax.f32 %v3753, 0.0
      %v3786 = vmax.f32 %v3754, 0.0
      %v3787 = vpack.c.bf16 %v3756, %v3755
      %v3788 = vpack.c.bf16 %v3758, %v3757
      %v3789 = vpack.c.bf16 %v3760, %v3759
      %v3790 = vpack.c.bf16 %v3762, %v3761
      %v3791 = vpack.c.bf16 %v3764, %v3763
      %v3792 = vpack.c.bf16 %v3766, %v3765
      %v3793 = vpack.c.bf16 %v3768, %v3767
      %v3794 = vpack.c.bf16 %v3770, %v3769
      %v3795 = vpack.c.bf16 %v3772, %v3771
      %v3796 = vpack.c.bf16 %v3774, %v3773
      %v3797 = vpack.c.bf16 %v3776, %v3775
      %v3798 = vpack.c.bf16 %v3778, %v3777
      %v3799 = vpack.c.bf16 %v3780, %v3779
      %v3800 = vpack.c.bf16 %v3782, %v3781
      %v3801 = vpack.c.bf16 %v3784, %v3783
      %v3802 = vpack.c.bf16 %v3786, %v3785
      %v3819 = vunpack.c.l.b16 %v3787
      %v3820 = vunpack.c.h.b16 %v3787
      %v3821 = vunpack.c.l.b16 %v3788
      %v3822 = vunpack.c.h.b16 %v3788
      %v3823 = vunpack.c.l.b16 %v3789
      %v3824 = vunpack.c.h.b16 %v3789
      %v3825 = vunpack.c.l.b16 %v3790
      %v3826 = vunpack.c.h.b16 %v3790
      %v3827 = vunpack.c.l.b16 %v3791
      %v3828 = vunpack.c.h.b16 %v3791
      %v3829 = vunpack.c.l.b16 %v3792
      %v3830 = vunpack.c.h.b16 %v3792
      %v3831 = vunpack.c.l.b16 %v3793
      %v3832 = vunpack.c.h.b16 %v3793
      %v3833 = vunpack.c.l.b16 %v3794
      %v3834 = vunpack.c.h.b16 %v3794
      %v3835 = vunpack.c.l.b16 %v3795
      %v3836 = vunpack.c.h.b16 %v3795
      %v3837 = vunpack.c.l.b16 %v3796
      %v3838 = vunpack.c.h.b16 %v3796
      %v3839 = vunpack.c.l.b16 %v3797
      %v3840 = vunpack.c.h.b16 %v3797
      %v3841 = vunpack.c.l.b16 %v3798
      %v3842 = vunpack.c.h.b16 %v3798
      %v3843 = vunpack.c.l.b16 %v3799
      %v3844 = vunpack.c.h.b16 %v3799
      %v3845 = vunpack.c.l.b16 %v3800
      %v3846 = vunpack.c.h.b16 %v3800
      %v3847 = vunpack.c.l.b16 %v3801
      %v3848 = vunpack.c.h.b16 %v3801
      %v3849 = vunpack.c.l.b16 %v3802
      %v3850 = vunpack.c.h.b16 %v3802
      %v3851 = vpack.c.b16 %v3819, %v3819
      %v3852 = vpack.c.b16 %v3820, %v3820
      %v3853 = vpack.c.b16 %v3821, %v3821
      %v3854 = vpack.c.b16 %v3822, %v3822
      %v3855 = vpack.c.b16 %v3823, %v3823
      %v3856 = vpack.c.b16 %v3824, %v3824
      %v3857 = vpack.c.b16 %v3825, %v3825
      %v3858 = vpack.c.b16 %v3826, %v3826
      %v3859 = vpack.c.b16 %v3827, %v3827
      %v3860 = vpack.c.b16 %v3828, %v3828
      %v3861 = vpack.c.b16 %v3829, %v3829
      %v3862 = vpack.c.b16 %v3830, %v3830
      %v3863 = vpack.c.b16 %v3831, %v3831
      %v3864 = vpack.c.b16 %v3832, %v3832
      %v3865 = vpack.c.b16 %v3833, %v3833
      %v3866 = vpack.c.b16 %v3834, %v3834
      %v3867 = vpack.c.b16 %v3835, %v3835
      %v3868 = vpack.c.b16 %v3836, %v3836
      %v3869 = vpack.c.b16 %v3837, %v3837
      %v3870 = vpack.c.b16 %v3838, %v3838
      %v3871 = vpack.c.b16 %v3839, %v3839
      %v3872 = vpack.c.b16 %v3840, %v3840
      %v3873 = vpack.c.b16 %v3841, %v3841
      %v3874 = vpack.c.b16 %v3842, %v3842
      %v3875 = vpack.c.b16 %v3843, %v3843
      %v3876 = vpack.c.b16 %v3844, %v3844
      %v3877 = vpack.c.b16 %v3845, %v3845
      %v3878 = vpack.c.b16 %v3846, %v3846
      %v3879 = vpack.c.b16 %v3847, %v3847
      %v3880 = vpack.c.b16 %v3848, %v3848
      %v3881 = vpack.c.b16 %v3849, %v3849
      %v3882 = vpack.c.b16 %v3850, %v3850
      %v3884 = vshrl.u32 %v3851, 16
      %v3886 = vrot.slane %v3884, 7
      %v3887 = vshll.u32 %v3851, 16
      %v3889 = vor.u32 %v3886, %v3887
      %v3890 = vrot.slane %v3886, 4
      %v3892 = vshrl.u32 %v3852, 16
      %v3894 = vrot.slane %v3892, 7
      %v3895 = vshll.u32 %v3852, 16
      %v3897 = vor.u32 %v3894, %v3895
      %v3898 = vsel %vm656, %v3890, %v3897
      %v3899 = vrot.slane %v3894, 4
      %v3901 = vshrl.u32 %v3853, 16
      %v3903 = vrot.slane %v3901, 7
      %v3904 = vshll.u32 %v3853, 16
      %v3906 = vor.u32 %v3903, %v3904
      %v3907 = vrot.slane %v3903, 4
      %v3909 = vshrl.u32 %v3854, 16
      %v3911 = vrot.slane %v3909, 7
      %v3912 = vshll.u32 %v3854, 16
      %v3914 = vor.u32 %v3911, %v3912
      %v3915 = vsel %vm656, %v3907, %v3914
      %v3916 = vrot.slane %v3911, 4
      %v3918 = vshrl.u32 %v3855, 16
      %v3920 = vrot.slane %v3918, 7
      %v3921 = vshll.u32 %v3855, 16
      %v3923 = vor.u32 %v3920, %v3921
      %v3924 = vrot.slane %v3920, 4
      %v3926 = vshrl.u32 %v3856, 16
      %v3928 = vrot.slane %v3926, 7
      %v3929 = vshll.u32 %v3856, 16
      %v3931 = vor.u32 %v3928, %v3929
      %v3932 = vsel %vm656, %v3924, %v3931
      %v3933 = vrot.slane %v3928, 4
      %v3935 = vshrl.u32 %v3857, 16
      %v3937 = vrot.slane %v3935, 7
      %v3938 = vshll.u32 %v3857, 16
      %v3940 = vor.u32 %v3937, %v3938
      %v3941 = vrot.slane %v3937, 4
      %v3943 = vshrl.u32 %v3858, 16
      %v3945 = vrot.slane %v3943, 7
      %v3946 = vshll.u32 %v3858, 16
      %v3948 = vor.u32 %v3945, %v3946
      %v3949 = vsel %vm656, %v3941, %v3948
      %v3950 = vrot.slane %v3945, 4
      %v3952 = vshrl.u32 %v3859, 16
      %v3954 = vrot.slane %v3952, 7
      %v3955 = vshll.u32 %v3859, 16
      %v3957 = vor.u32 %v3954, %v3955
      %v3958 = vrot.slane %v3954, 4
      %v3960 = vshrl.u32 %v3860, 16
      %v3962 = vrot.slane %v3960, 7
      %v3963 = vshll.u32 %v3860, 16
      %v3965 = vor.u32 %v3962, %v3963
      %v3966 = vsel %vm656, %v3958, %v3965
      %v3967 = vrot.slane %v3962, 4
      %v3969 = vshrl.u32 %v3861, 16
      %v3971 = vrot.slane %v3969, 7
      %v3972 = vshll.u32 %v3861, 16
      %v3974 = vor.u32 %v3971, %v3972
      %v3975 = vrot.slane %v3971, 4
      %v3977 = vshrl.u32 %v3862, 16
      %v3979 = vrot.slane %v3977, 7
      %v3980 = vshll.u32 %v3862, 16
      %v3982 = vor.u32 %v3979, %v3980
      %v3983 = vsel %vm656, %v3975, %v3982
      %v3984 = vrot.slane %v3979, 4
      %v3986 = vshrl.u32 %v3863, 16
      %v3988 = vrot.slane %v3986, 7
      %v3989 = vshll.u32 %v3863, 16
      %v3991 = vor.u32 %v3988, %v3989
      %v3992 = vrot.slane %v3988, 4
      %v3994 = vshrl.u32 %v3864, 16
      %v3996 = vrot.slane %v3994, 7
      %v3997 = vshll.u32 %v3864, 16
      %v3999 = vor.u32 %v3996, %v3997
      %v4000 = vsel %vm656, %v3992, %v3999
      %v4001 = vrot.slane %v3996, 4
      %v4003 = vshrl.u32 %v3865, 16
      %v4005 = vrot.slane %v4003, 7
      %v4006 = vshll.u32 %v3865, 16
      %v4008 = vor.u32 %v4005, %v4006
      %v4009 = vrot.slane %v4005, 4
      %v4011 = vshrl.u32 %v3866, 16
      %v4013 = vrot.slane %v4011, 7
      %v4014 = vshll.u32 %v3866, 16
      %v4016 = vor.u32 %v4013, %v4014
      %v4017 = vsel %vm656, %v4009, %v4016
      %v4018 = vrot.slane %v4013, 4
      %v4020 = vshrl.u32 %v3867, 16
      %v4022 = vrot.slane %v4020, 7
      %v4023 = vshll.u32 %v3867, 16
      %v4025 = vor.u32 %v4022, %v4023
      %v4026 = vrot.slane %v4022, 4
      %v4028 = vshrl.u32 %v3868, 16
      %v4030 = vrot.slane %v4028, 7
      %v4031 = vshll.u32 %v3868, 16
      %v4033 = vor.u32 %v4030, %v4031
      %v4034 = vsel %vm656, %v4026, %v4033
      %v4035 = vrot.slane %v4030, 4
      %v4037 = vshrl.u32 %v3869, 16
      %v4039 = vrot.slane %v4037, 7
      %v4040 = vshll.u32 %v3869, 16
      %v4042 = vor.u32 %v4039, %v4040
      %v4043 = vrot.slane %v4039, 4
      %v4045 = vshrl.u32 %v3870, 16
      %v4047 = vrot.slane %v4045, 7
      %v4048 = vshll.u32 %v3870, 16
      %v4050 = vor.u32 %v4047, %v4048
      %v4051 = vsel %vm656, %v4043, %v4050
      %v4052 = vrot.slane %v4047, 4
      %v4054 = vshrl.u32 %v3871, 16
      %v4056 = vrot.slane %v4054, 7
      %v4057 = vshll.u32 %v3871, 16
      %v4059 = vor.u32 %v4056, %v4057
      %v4060 = vrot.slane %v4056, 4
      %v4062 = vshrl.u32 %v3872, 16
      %v4064 = vrot.slane %v4062, 7
      %v4065 = vshll.u32 %v3872, 16
      %v4067 = vor.u32 %v4064, %v4065
      %v4068 = vsel %vm656, %v4060, %v4067
      %v4069 = vrot.slane %v4064, 4
      %v4071 = vshrl.u32 %v3873, 16
      %v4073 = vrot.slane %v4071, 7
      %v4074 = vshll.u32 %v3873, 16
      %v4076 = vor.u32 %v4073, %v4074
      %v4077 = vrot.slane %v4073, 4
      %v4079 = vshrl.u32 %v3874, 16
      %v4081 = vrot.slane %v4079, 7
      %v4082 = vshll.u32 %v3874, 16
      %v4084 = vor.u32 %v4081, %v4082
      %v4085 = vsel %vm656, %v4077, %v4084
      %v4086 = vrot.slane %v4081, 4
      %v4088 = vshrl.u32 %v3875, 16
      %v4090 = vrot.slane %v4088, 7
      %v4091 = vshll.u32 %v3875, 16
      %v4093 = vor.u32 %v4090, %v4091
      %v4094 = vrot.slane %v4090, 4
      %v4096 = vshrl.u32 %v3876, 16
      %v4098 = vrot.slane %v4096, 7
      %v4099 = vshll.u32 %v3876, 16
      %v4101 = vor.u32 %v4098, %v4099
      %v4102 = vsel %vm656, %v4094, %v4101
      %v4103 = vrot.slane %v4098, 4
      %v4105 = vshrl.u32 %v3877, 16
      %v4107 = vrot.slane %v4105, 7
      %v4108 = vshll.u32 %v3877, 16
      %v4110 = vor.u32 %v4107, %v4108
      %v4111 = vrot.slane %v4107, 4
      %v4113 = vshrl.u32 %v3878, 16
      %v4115 = vrot.slane %v4113, 7
      %v4116 = vshll.u32 %v3878, 16
      %v4118 = vor.u32 %v4115, %v4116
      %v4119 = vsel %vm656, %v4111, %v4118
      %v4120 = vrot.slane %v4115, 4
      %v4122 = vshrl.u32 %v3879, 16
      %v4124 = vrot.slane %v4122, 7
      %v4125 = vshll.u32 %v3879, 16
      %v4127 = vor.u32 %v4124, %v4125
      %v4128 = vrot.slane %v4124, 4
      %v4130 = vshrl.u32 %v3880, 16
      %v4132 = vrot.slane %v4130, 7
      %v4133 = vshll.u32 %v3880, 16
      %v4135 = vor.u32 %v4132, %v4133
      %v4136 = vsel %vm656, %v4128, %v4135
      %v4137 = vrot.slane %v4132, 4
      %v4139 = vshrl.u32 %v3881, 16
      %v4141 = vrot.slane %v4139, 7
      %v4142 = vshll.u32 %v3881, 16
      %v4144 = vor.u32 %v4141, %v4142
      %v4145 = vrot.slane %v4141, 4
      %v4147 = vshrl.u32 %v3882, 16
      %v4149 = vrot.slane %v4147, 7
      %v4150 = vshll.u32 %v3882, 16
      %v4152 = vor.u32 %v4149, %v4150
      %v4153 = vsel %vm656, %v4145, %v4152
      %v4154 = vrot.slane %v4149, 4
      %s4203 = scalar_lea.vmem [#allocation4], 12
      %v4204 = vld [vmem:[%s4203] sm:$0xf]
      %v4205 = vsel %vm979, %v3889, %v4204
      %4206 = vst [vmem:[%s4203] sm:$0xf] %v4205
      %4207 = vst [vmem:[%s4203 + $0x4] sm:$0xf] %v3898
      %v4208 = vld [vmem:[%s4203 + $0x8] sm:$0x1]
      %v4209 = vsel %vm262, %v3899, %v4208
      %4210 = vst [vmem:[%s4203 + $0x8] sm:$0x1] %v4209
      %v4211 = vld [vmem:[%s4203 + $0xc] sm:$0xf]
      %v4212 = vsel %vm979, %v3906, %v4211
      %4213 = vst [vmem:[%s4203 + $0xc] sm:$0xf] %v4212
      %4214 = vst [vmem:[%s4203 + $0x10] sm:$0xf] %v3915
      %v4215 = vld [vmem:[%s4203 + $0x14] sm:$0x1]
      %v4216 = vsel %vm262, %v3916, %v4215
      %4217 = vst [vmem:[%s4203 + $0x14] sm:$0x1] %v4216
      %v4218 = vld [vmem:[%s4203 + $0x18] sm:$0xf]
      %v4219 = vsel %vm979, %v3923, %v4218
      %4220 = vst [vmem:[%s4203 + $0x18] sm:$0xf] %v4219
      %4221 = vst [vmem:[%s4203 + $0x1c] sm:$0xf] %v3932
      %v4222 = vld [vmem:[%s4203 + $0x20] sm:$0x1]
      %v4223 = vsel %vm262, %v3933, %v4222
      %4224 = vst [vmem:[%s4203 + $0x20] sm:$0x1] %v4223
      %v4225 = vld [vmem:[%s4203 + $0x24] sm:$0xf]
      %v4226 = vsel %vm979, %v3940, %v4225
      %4227 = vst [vmem:[%s4203 + $0x24] sm:$0xf] %v4226
      %4228 = vst [vmem:[%s4203 + $0x28] sm:$0xf] %v3949
      %v4229 = vld [vmem:[%s4203 + $0x2c] sm:$0x1]
      %v4230 = vsel %vm262, %v3950, %v4229
      %4231 = vst [vmem:[%s4203 + $0x2c] sm:$0x1] %v4230
      %v4232 = vld [vmem:[%s4203 + $0x30] sm:$0xf]
      %v4233 = vsel %vm979, %v3957, %v4232
      %4234 = vst [vmem:[%s4203 + $0x30] sm:$0xf] %v4233
      %4235 = vst [vmem:[%s4203 + $0x34] sm:$0xf] %v3966
      %v4236 = vld [vmem:[%s4203 + $0x38] sm:$0x1]
      %v4237 = vsel %vm262, %v3967, %v4236
      %4238 = vst [vmem:[%s4203 + $0x38] sm:$0x1] %v4237
      %v4239 = vld [vmem:[%s4203 + $0x3c] sm:$0xf]
      %v4240 = vsel %vm979, %v3974, %v4239
      %4241 = vst [vmem:[%s4203 + $0x3c] sm:$0xf] %v4240
      %4242 = vst [vmem:[%s4203 + $0x40] sm:$0xf] %v3983
      %v4243 = vld [vmem:[%s4203 + $0x44] sm:$0x1]
      %v4244 = vsel %vm262, %v3984, %v4243
      %4245 = vst [vmem:[%s4203 + $0x44] sm:$0x1] %v4244
      %v4246 = vld [vmem:[%s4203 + $0x48] sm:$0xf]
      %v4247 = vsel %vm979, %v3991, %v4246
      %4248 = vst [vmem:[%s4203 + $0x48] sm:$0xf] %v4247
      %4249 = vst [vmem:[%s4203 + $0x4c] sm:$0xf] %v4000
      %v4250 = vld [vmem:[%s4203 + $0x50] sm:$0x1]
      %v4251 = vsel %vm262, %v4001, %v4250
      %4252 = vst [vmem:[%s4203 + $0x50] sm:$0x1] %v4251
      %v4253 = vld [vmem:[%s4203 + $0x54] sm:$0xf]
      %v4254 = vsel %vm979, %v4008, %v4253
      %4255 = vst [vmem:[%s4203 + $0x54] sm:$0xf] %v4254
      %4256 = vst [vmem:[%s4203 + $0x58] sm:$0xf] %v4017
      %v4257 = vld [vmem:[%s4203 + $0x5c] sm:$0x1]
      %v4258 = vsel %vm262, %v4018, %v4257
      %4259 = vst [vmem:[%s4203 + $0x5c] sm:$0x1] %v4258
      %v4260 = vld [vmem:[%s4203 + $0x60] sm:$0xf]
      %v4261 = vsel %vm979, %v4025, %v4260
      %4262 = vst [vmem:[%s4203 + $0x60] sm:$0xf] %v4261
      %4263 = vst [vmem:[%s4203 + $0x64] sm:$0xf] %v4034
      %v4264 = vld [vmem:[%s4203 + $0x68] sm:$0x1]
      %v4265 = vsel %vm262, %v4035, %v4264
      %4266 = vst [vmem:[%s4203 + $0x68] sm:$0x1] %v4265
      %v4267 = vld [vmem:[%s4203 + $0x6c] sm:$0xf]
      %v4268 = vsel %vm979, %v4042, %v4267
      %4269 = vst [vmem:[%s4203 + $0x6c] sm:$0xf] %v4268
      %4270 = vst [vmem:[%s4203 + $0x70] sm:$0xf] %v4051
      %v4271 = vld [vmem:[%s4203 + $0x74] sm:$0x1]
      %v4272 = vsel %vm262, %v4052, %v4271
      %4273 = vst [vmem:[%s4203 + $0x74] sm:$0x1] %v4272
      %v4274 = vld [vmem:[%s4203 + $0x78] sm:$0xf]
      %v4275 = vsel %vm979, %v4059, %v4274
      %4276 = vst [vmem:[%s4203 + $0x78] sm:$0xf] %v4275
      %4277 = vst [vmem:[%s4203 + $0x7c] sm:$0xf] %v4068
      %v4278 = vld [vmem:[%s4203 + $0x80] sm:$0x1]
      %v4279 = vsel %vm262, %v4069, %v4278
      %4280 = vst [vmem:[%s4203 + $0x80] sm:$0x1] %v4279
      %v4281 = vld [vmem:[%s4203 + $0x84] sm:$0xf]
      %v4282 = vsel %vm979, %v4076, %v4281
      %4283 = vst [vmem:[%s4203 + $0x84] sm:$0xf] %v4282
      %4284 = vst [vmem:[%s4203 + $0x88] sm:$0xf] %v4085
      %v4285 = vld [vmem:[%s4203 + $0x8c] sm:$0x1]
      %v4286 = vsel %vm262, %v4086, %v4285
      %4287 = vst [vmem:[%s4203 + $0x8c] sm:$0x1] %v4286
      %v4288 = vld [vmem:[%s4203 + $0x90] sm:$0xf]
      %v4289 = vsel %vm979, %v4093, %v4288
      %4290 = vst [vmem:[%s4203 + $0x90] sm:$0xf] %v4289
      %4291 = vst [vmem:[%s4203 + $0x94] sm:$0xf] %v4102
      %v4292 = vld [vmem:[%s4203 + $0x98] sm:$0x1]
      %v4293 = vsel %vm262, %v4103, %v4292
      %4294 = vst [vmem:[%s4203 + $0x98] sm:$0x1] %v4293
      %v4295 = vld [vmem:[%s4203 + $0x9c] sm:$0xf]
      %v4296 = vsel %vm979, %v4110, %v4295
      %4297 = vst [vmem:[%s4203 + $0x9c] sm:$0xf] %v4296
      %4298 = vst [vmem:[%s4203 + $0xa0] sm:$0xf] %v4119
      %v4299 = vld [vmem:[%s4203 + $0xa4] sm:$0x1]
      %v4300 = vsel %vm262, %v4120, %v4299
      %4301 = vst [vmem:[%s4203 + $0xa4] sm:$0x1] %v4300
      %v4302 = vld [vmem:[%s4203 + $0xa8] sm:$0xf]
      %v4303 = vsel %vm979, %v4127, %v4302
      %4304 = vst [vmem:[%s4203 + $0xa8] sm:$0xf] %v4303
      %4305 = vst [vmem:[%s4203 + $0xac] sm:$0xf] %v4136
      %v4306 = vld [vmem:[%s4203 + $0xb0] sm:$0x1]
      %v4307 = vsel %vm262, %v4137, %v4306
      %4308 = vst [vmem:[%s4203 + $0xb0] sm:$0x1] %v4307
      %v4309 = vld [vmem:[%s4203 + $0xb4] sm:$0xf]
      %v4310 = vsel %vm979, %v4144, %v4309
      %4311 = vst [vmem:[%s4203 + $0xb4] sm:$0xf] %v4310
      %4312 = vst [vmem:[%s4203 + $0xb8] sm:$0xf] %v4153
      %v4313 = vld [vmem:[%s4203 + $0xbc] sm:$0x1]
      %v4314 = vsel %vm262, %v4154, %v4313
      %4315 = vst [vmem:[%s4203 + $0xbc] sm:$0x1] %v4314
      %v4316 = vld [vmem:[#allocation4] sm:$0xf]
      %v4317 = vld [vmem:[#allocation4 + $0x4] sm:$0xf]
      %v4318 = vld [vmem:[#allocation4 + $0xc] sm:$0xf]
      %v4319 = vld [vmem:[#allocation4 + $0x10] sm:$0xf]
      %v4320 = vld [vmem:[#allocation4 + $0x18] sm:$0xf]
      %v4321 = vld [vmem:[#allocation4 + $0x1c] sm:$0xf]
      %v4322 = vld [vmem:[#allocation4 + $0x24] sm:$0xf]
      %v4323 = vld [vmem:[#allocation4 + $0x28] sm:$0xf]
      %v4324 = vld [vmem:[#allocation4 + $0x30] sm:$0xf]
      %v4325 = vld [vmem:[#allocation4 + $0x34] sm:$0xf]
      %v4326 = vld [vmem:[#allocation4 + $0x3c] sm:$0xf]
      %v4327 = vld [vmem:[#allocation4 + $0x40] sm:$0xf]
      %v4328 = vld [vmem:[#allocation4 + $0x48] sm:$0xf]
      %v4329 = vld [vmem:[#allocation4 + $0x4c] sm:$0xf]
      %v4330 = vld [vmem:[#allocation4 + $0x54] sm:$0xf]
      %v4331 = vld [vmem:[#allocation4 + $0x58] sm:$0xf]
      %v4332 = vld [vmem:[#allocation4 + $0x60] sm:$0xf]
      %v4333 = vld [vmem:[#allocation4 + $0x64] sm:$0xf]
      %v4334 = vld [vmem:[#allocation4 + $0x6c] sm:$0xf]
      %v4335 = vld [vmem:[#allocation4 + $0x70] sm:$0xf]
      %v4336 = vld [vmem:[#allocation4 + $0x78] sm:$0xf]
      %v4337 = vld [vmem:[#allocation4 + $0x7c] sm:$0xf]
      %v4338 = vld [vmem:[#allocation4 + $0x84] sm:$0xf]
      %v4339 = vld [vmem:[#allocation4 + $0x88] sm:$0xf]
      %v4340 = vld [vmem:[#allocation4 + $0x90] sm:$0xf]
      %v4341 = vld [vmem:[#allocation4 + $0x94] sm:$0xf]
      %v4342 = vld [vmem:[#allocation4 + $0x9c] sm:$0xf]
      %v4343 = vld [vmem:[#allocation4 + $0xa0] sm:$0xf]
      %v4344 = vld [vmem:[#allocation4 + $0xa8] sm:$0xf]
      %v4345 = vld [vmem:[#allocation4 + $0xac] sm:$0xf]
      %v4346 = vld [vmem:[#allocation4 + $0xb4] sm:$0xf]
      %v4347 = vld [vmem:[#allocation4 + $0xb8] sm:$0xf]
      %v4348 = vld [vmem:[#allocation4 + $0xc0] sm:$0xf]
      %v4349 = vld [vmem:[#allocation4 + $0xc4] sm:$0xf]
      %v4350 = vld [vmem:[#allocation4 + $0xcc] sm:$0xf]
      %v4351 = vld [vmem:[#allocation4 + $0xd0] sm:$0xf]
      %v4388 = vunpack.c.l.b16 %v4316
      %v4389 = vunpack.c.l.b16 %v4317
      %v4390 = vunpack.c.l.b16 %v4318
      %v4391 = vunpack.c.l.b16 %v4319
      %v4392 = vunpack.c.l.b16 %v4320
      %v4393 = vunpack.c.l.b16 %v4321
      %v4394 = vunpack.c.l.b16 %v4322
      %v4395 = vunpack.c.l.b16 %v4323
      %v4396 = vunpack.c.l.b16 %v4324
      %v4397 = vunpack.c.l.b16 %v4325
      %v4398 = vunpack.c.l.b16 %v4326
      %v4399 = vunpack.c.l.b16 %v4327
      %v4400 = vunpack.c.l.b16 %v4328
      %v4401 = vunpack.c.l.b16 %v4329
      %v4402 = vunpack.c.l.b16 %v4330
      %v4403 = vunpack.c.l.b16 %v4331
      %v4404 = vunpack.c.l.b16 %v4332
      %v4405 = vunpack.c.l.b16 %v4333
      %v4406 = vunpack.c.l.b16 %v4334
      %v4407 = vunpack.c.l.b16 %v4335
      %v4408 = vunpack.c.l.b16 %v4336
      %v4409 = vunpack.c.l.b16 %v4337
      %v4410 = vunpack.c.l.b16 %v4338
      %v4411 = vunpack.c.l.b16 %v4339
      %v4412 = vunpack.c.l.b16 %v4340
      %v4413 = vunpack.c.l.b16 %v4341
      %v4414 = vunpack.c.l.b16 %v4342
      %v4415 = vunpack.c.l.b16 %v4343
      %v4416 = vunpack.c.l.b16 %v4344
      %v4417 = vunpack.c.l.b16 %v4345
      %v4418 = vunpack.c.l.b16 %v4346
      %v4419 = vunpack.c.l.b16 %v4347
      %v4420 = vunpack.c.l.b16 %v4348
      %v4421 = vunpack.c.l.b16 %v4349
      %v4422 = vunpack.c.l.b16 %v4350
      %v4423 = vunpack.c.l.b16 %v4351
      %v4424 = vpack.c.b16 %v4389, %v4388
      %v4425 = vpack.c.b16 %v4391, %v4390
      %v4426 = vpack.c.b16 %v4393, %v4392
      %v4427 = vpack.c.b16 %v4395, %v4394
      %v4428 = vpack.c.b16 %v4397, %v4396
      %v4429 = vpack.c.b16 %v4399, %v4398
      %v4430 = vpack.c.b16 %v4401, %v4400
      %v4431 = vpack.c.b16 %v4403, %v4402
      %v4432 = vpack.c.b16 %v4405, %v4404
      %v4433 = vpack.c.b16 %v4407, %v4406
      %v4434 = vpack.c.b16 %v4409, %v4408
      %v4435 = vpack.c.b16 %v4411, %v4410
      %v4436 = vpack.c.b16 %v4413, %v4412
      %v4437 = vpack.c.b16 %v4415, %v4414
      %v4438 = vpack.c.b16 %v4417, %v4416
      %v4439 = vpack.c.b16 %v4419, %v4418
      %v4440 = vpack.c.b16 %v4421, %v4420
      %v4441 = vpack.c.b16 %v4423, %v4422
      %4460 = vst [vmem:[#allocation5] sm:$0xff] %v4424
      %4461 = vst [vmem:[#allocation5 + $0x18] sm:$0xff] %v4425
      %4462 = vst [vmem:[#allocation5 + $0x30] sm:$0xff] %v4426
      %4463 = vst [vmem:[#allocation5 + $0x48] sm:$0xff] %v4427
      %4464 = vst [vmem:[#allocation5 + $0x60] sm:$0xff] %v4428
      %4465 = vst [vmem:[#allocation5 + $0x78] sm:$0xff] %v4429
      %4466 = vst [vmem:[#allocation5 + $0x90] sm:$0xff] %v4430
      %4467 = vst [vmem:[#allocation5 + $0xa8] sm:$0xff] %v4431
      %4468 = vst [vmem:[#allocation5 + $0xc0] sm:$0xff] %v4432
      %4469 = vst [vmem:[#allocation5 + $0xd8] sm:$0xff] %v4433
      %4470 = vst [vmem:[#allocation5 + $0xf0] sm:$0xff] %v4434
      %4471 = vst [vmem:[#allocation5 + $0x108] sm:$0xff] %v4435
      %4472 = vst [vmem:[#allocation5 + $0x120] sm:$0xff] %v4436
      %4473 = vst [vmem:[#allocation5 + $0x138] sm:$0xff] %v4437
      %4474 = vst [vmem:[#allocation5 + $0x150] sm:$0xff] %v4438
      %4475 = vst [vmem:[#allocation5 + $0x168] sm:$0xff] %v4439
      %4476 = vst [vmem:[#allocation5 + $0x180] sm:$0xff] %v4440
      %4477 = vst [vmem:[#allocation5 + $0x198] sm:$0xff] %v4441
      %v4478 = vld [vmem:[#allocation4] sm:$0xf]
      %v4479 = vld [vmem:[#allocation4 + $0x4] sm:$0xf]
      %v4480 = vld [vmem:[#allocation4 + $0x8] sm:$0x1]
      %v4481 = vld [vmem:[#allocation4 + $0xc] sm:$0xf]
      %v4482 = vld [vmem:[#allocation4 + $0x10] sm:$0xf]
      %v4483 = vld [vmem:[#allocation4 + $0x14] sm:$0x1]
      %v4484 = vld [vmem:[#allocation4 + $0x18] sm:$0xf]
      %v4485 = vld [vmem:[#allocation4 + $0x1c] sm:$0xf]
      %v4486 = vld [vmem:[#allocation4 + $0x20] sm:$0x1]
      %v4487 = vld [vmem:[#allocation4 + $0x24] sm:$0xf]
      %v4488 = vld [vmem:[#allocation4 + $0x28] sm:$0xf]
      %v4489 = vld [vmem:[#allocation4 + $0x2c] sm:$0x1]
      %v4490 = vld [vmem:[#allocation4 + $0x30] sm:$0xf]
      %v4491 = vld [vmem:[#allocation4 + $0x34] sm:$0xf]
      %v4492 = vld [vmem:[#allocation4 + $0x38] sm:$0x1]
      %v4493 = vld [vmem:[#allocation4 + $0x3c] sm:$0xf]
      %v4494 = vld [vmem:[#allocation4 + $0x40] sm:$0xf]
      %v4495 = vld [vmem:[#allocation4 + $0x44] sm:$0x1]
      %v4496 = vld [vmem:[#allocation4 + $0x48] sm:$0xf]
      %v4497 = vld [vmem:[#allocation4 + $0x4c] sm:$0xf]
      %v4498 = vld [vmem:[#allocation4 + $0x50] sm:$0x1]
      %v4499 = vld [vmem:[#allocation4 + $0x54] sm:$0xf]
      %v4500 = vld [vmem:[#allocation4 + $0x58] sm:$0xf]
      %v4501 = vld [vmem:[#allocation4 + $0x5c] sm:$0x1]
      %v4502 = vld [vmem:[#allocation4 + $0x60] sm:$0xf]
      %v4503 = vld [vmem:[#allocation4 + $0x64] sm:$0xf]
      %v4504 = vld [vmem:[#allocation4 + $0x68] sm:$0x1]
      %v4505 = vld [vmem:[#allocation4 + $0x6c] sm:$0xf]
      %v4506 = vld [vmem:[#allocation4 + $0x70] sm:$0xf]
      %v4507 = vld [vmem:[#allocation4 + $0x74] sm:$0x1]
      %v4508 = vld [vmem:[#allocation4 + $0x78] sm:$0xf]
      %v4509 = vld [vmem:[#allocation4 + $0x7c] sm:$0xf]
      %v4510 = vld [vmem:[#allocation4 + $0x80] sm:$0x1]
      %v4511 = vld [vmem:[#allocation4 + $0x84] sm:$0xf]
      %v4512 = vld [vmem:[#allocation4 + $0x88] sm:$0xf]
      %v4513 = vld [vmem:[#allocation4 + $0x8c] sm:$0x1]
      %v4514 = vld [vmem:[#allocation4 + $0x90] sm:$0xf]
      %v4515 = vld [vmem:[#allocation4 + $0x94] sm:$0xf]
      %v4516 = vld [vmem:[#allocation4 + $0x98] sm:$0x1]
      %v4517 = vld [vmem:[#allocation4 + $0x9c] sm:$0xf]
      %v4518 = vld [vmem:[#allocation4 + $0xa0] sm:$0xf]
      %v4519 = vld [vmem:[#allocation4 + $0xa4] sm:$0x1]
      %v4520 = vld [vmem:[#allocation4 + $0xa8] sm:$0xf]
      %v4521 = vld [vmem:[#allocation4 + $0xac] sm:$0xf]
      %v4522 = vld [vmem:[#allocation4 + $0xb0] sm:$0x1]
      %v4523 = vld [vmem:[#allocation4 + $0xb4] sm:$0xf]
      %v4524 = vld [vmem:[#allocation4 + $0xb8] sm:$0xf]
      %v4525 = vld [vmem:[#allocation4 + $0xbc] sm:$0x1]
      %v4526 = vld [vmem:[#allocation4 + $0xc0] sm:$0xf]
      %v4527 = vld [vmem:[#allocation4 + $0xc4] sm:$0xf]
      %v4528 = vld [vmem:[#allocation4 + $0xc8] sm:$0x1]
      %v4529 = vld [vmem:[#allocation4 + $0xcc] sm:$0xf]
      %v4530 = vld [vmem:[#allocation4 + $0xd0] sm:$0xf]
      %v4531 = vld [vmem:[#allocation4 + $0xd4] sm:$0x1]
      %v4586 = vunpack.c.l.b16 %v4478
      %v4587 = vunpack.c.l.b16 %v4479
      %v4588 = vunpack.c.l.b16 %v4480
      %v4589 = vunpack.c.l.b16 %v4481
      %v4590 = vunpack.c.l.b16 %v4482
      %v4591 = vunpack.c.l.b16 %v4483
      %v4592 = vunpack.c.l.b16 %v4484
      %v4593 = vunpack.c.l.b16 %v4485
      %v4594 = vunpack.c.l.b16 %v4486
      %v4595 = vunpack.c.l.b16 %v4487
      %v4596 = vunpack.c.l.b16 %v4488
      %v4597 = vunpack.c.l.b16 %v4489
      %v4598 = vunpack.c.l.b16 %v4490
      %v4599 = vunpack.c.l.b16 %v4491
      %v4600 = vunpack.c.l.b16 %v4492
      %v4601 = vunpack.c.l.b16 %v4493
      %v4602 = vunpack.c.l.b16 %v4494
      %v4603 = vunpack.c.l.b16 %v4495
      %v4604 = vunpack.c.l.b16 %v4496
      %v4605 = vunpack.c.l.b16 %v4497
      %v4606 = vunpack.c.l.b16 %v4498
      %v4607 = vunpack.c.l.b16 %v4499
      %v4608 = vunpack.c.l.b16 %v4500
      %v4609 = vunpack.c.l.b16 %v4501
      %v4610 = vunpack.c.l.b16 %v4502
      %v4611 = vunpack.c.l.b16 %v4503
      %v4612 = vunpack.c.l.b16 %v4504
      %v4613 = vunpack.c.l.b16 %v4505
      %v4614 = vunpack.c.l.b16 %v4506
      %v4615 = vunpack.c.l.b16 %v4507
      %v4616 = vunpack.c.l.b16 %v4508
      %v4617 = vunpack.c.l.b16 %v4509
      %v4618 = vunpack.c.l.b16 %v4510
      %v4619 = vunpack.c.l.b16 %v4511
      %v4620 = vunpack.c.l.b16 %v4512
      %v4621 = vunpack.c.l.b16 %v4513
      %v4622 = vunpack.c.l.b16 %v4514
      %v4623 = vunpack.c.l.b16 %v4515
      %v4624 = vunpack.c.l.b16 %v4516
      %v4625 = vunpack.c.l.b16 %v4517
      %v4626 = vunpack.c.l.b16 %v4518
      %v4627 = vunpack.c.l.b16 %v4519
      %v4628 = vunpack.c.l.b16 %v4520
      %v4629 = vunpack.c.l.b16 %v4521
      %v4630 = vunpack.c.l.b16 %v4522
      %v4631 = vunpack.c.l.b16 %v4523
      %v4632 = vunpack.c.l.b16 %v4524
      %v4633 = vunpack.c.l.b16 %v4525
      %v4634 = vunpack.c.l.b16 %v4526
      %v4635 = vunpack.c.l.b16 %v4527
      %v4636 = vunpack.c.l.b16 %v4528
      %v4637 = vunpack.c.l.b16 %v4529
      %v4638 = vunpack.c.l.b16 %v4530
      %v4639 = vunpack.c.l.b16 %v4531
      %v4640 = vpack.c.b16 %v4587, %v4586
      %v4641 = vpack.c.b16 %v4588, %v4588
      %v4642 = vpack.c.b16 %v4590, %v4589
      %v4643 = vpack.c.b16 %v4591, %v4591
      %v4644 = vpack.c.b16 %v4593, %v4592
      %v4645 = vpack.c.b16 %v4594, %v4594
      %v4646 = vpack.c.b16 %v4596, %v4595
      %v4647 = vpack.c.b16 %v4597, %v4597
      %v4648 = vpack.c.b16 %v4599, %v4598
      %v4649 = vpack.c.b16 %v4600, %v4600
      %v4650 = vpack.c.b16 %v4602, %v4601
      %v4651 = vpack.c.b16 %v4603, %v4603
      %v4652 = vpack.c.b16 %v4605, %v4604
      %v4653 = vpack.c.b16 %v4606, %v4606
      %v4654 = vpack.c.b16 %v4608, %v4607
      %v4655 = vpack.c.b16 %v4609, %v4609
      %v4656 = vpack.c.b16 %v4611, %v4610
      %v4657 = vpack.c.b16 %v4612, %v4612
      %v4658 = vpack.c.b16 %v4614, %v4613
      %v4659 = vpack.c.b16 %v4615, %v4615
      %v4660 = vpack.c.b16 %v4617, %v4616
      %v4661 = vpack.c.b16 %v4618, %v4618
      %v4662 = vpack.c.b16 %v4620, %v4619
      %v4663 = vpack.c.b16 %v4621, %v4621
      %v4664 = vpack.c.b16 %v4623, %v4622
      %v4665 = vpack.c.b16 %v4624, %v4624
      %v4666 = vpack.c.b16 %v4626, %v4625
      %v4667 = vpack.c.b16 %v4627, %v4627
      %v4668 = vpack.c.b16 %v4629, %v4628
      %v4669 = vpack.c.b16 %v4630, %v4630
      %v4670 = vpack.c.b16 %v4632, %v4631
      %v4671 = vpack.c.b16 %v4633, %v4633
      %v4672 = vpack.c.b16 %v4635, %v4634
      %v4673 = vpack.c.b16 %v4636, %v4636
      %v4674 = vpack.c.b16 %v4638, %v4637
      %v4675 = vpack.c.b16 %v4639, %v4639
      %v4677 = vshrl.u32 %v4640, 16
      %v4679 = vshll.u32 %v4640, 16
      %v4681 = vrot.slane %v4679, 1
      %v4682 = vor.u32 %v4677, %v4681
      %v4684 = vshll.u32 %v4641, 16
      %v4686 = vrot.slane %v4684, 1
      %v4687 = vsel %vm1452, %v4682, %v4686
      %v4689 = vshrl.u32 %v4642, 16
      %v4691 = vshll.u32 %v4642, 16
      %v4693 = vrot.slane %v4691, 1
      %v4694 = vor.u32 %v4689, %v4693
      %v4696 = vshll.u32 %v4643, 16
      %v4698 = vrot.slane %v4696, 1
      %v4699 = vsel %vm1452, %v4694, %v4698
      %v4701 = vshrl.u32 %v4644, 16
      %v4703 = vshll.u32 %v4644, 16
      %v4705 = vrot.slane %v4703, 1
      %v4706 = vor.u32 %v4701, %v4705
      %v4708 = vshll.u32 %v4645, 16
      %v4710 = vrot.slane %v4708, 1
      %v4711 = vsel %vm1452, %v4706, %v4710
      %v4713 = vshrl.u32 %v4646, 16
      %v4715 = vshll.u32 %v4646, 16
      %v4717 = vrot.slane %v4715, 1
      %v4718 = vor.u32 %v4713, %v4717
      %v4720 = vshll.u32 %v4647, 16
      %v4722 = vrot.slane %v4720, 1
      %v4723 = vsel %vm1452, %v4718, %v4722
      %v4725 = vshrl.u32 %v4648, 16
      %v4727 = vshll.u32 %v4648, 16
      %v4729 = vrot.slane %v4727, 1
      %v4730 = vor.u32 %v4725, %v4729
      %v4732 = vshll.u32 %v4649, 16
      %v4734 = vrot.slane %v4732, 1
      %v4735 = vsel %vm1452, %v4730, %v4734
      %v4737 = vshrl.u32 %v4650, 16
      %v4739 = vshll.u32 %v4650, 16
      %v4741 = vrot.slane %v4739, 1
      %v4742 = vor.u32 %v4737, %v4741
      %v4744 = vshll.u32 %v4651, 16
      %v4746 = vrot.slane %v4744, 1
      %v4747 = vsel %vm1452, %v4742, %v4746
      %v4749 = vshrl.u32 %v4652, 16
      %v4751 = vshll.u32 %v4652, 16
      %v4753 = vrot.slane %v4751, 1
      %v4754 = vor.u32 %v4749, %v4753
      %v4756 = vshll.u32 %v4653, 16
      %v4758 = vrot.slane %v4756, 1
      %v4759 = vsel %vm1452, %v4754, %v4758
      %v4761 = vshrl.u32 %v4654, 16
      %v4763 = vshll.u32 %v4654, 16
      %v4765 = vrot.slane %v4763, 1
      %v4766 = vor.u32 %v4761, %v4765
      %v4768 = vshll.u32 %v4655, 16
      %v4770 = vrot.slane %v4768, 1
      %v4771 = vsel %vm1452, %v4766, %v4770
      %v4773 = vshrl.u32 %v4656, 16
      %v4775 = vshll.u32 %v4656, 16
      %v4777 = vrot.slane %v4775, 1
      %v4778 = vor.u32 %v4773, %v4777
      %v4780 = vshll.u32 %v4657, 16
      %v4782 = vrot.slane %v4780, 1
      %v4783 = vsel %vm1452, %v4778, %v4782
      %v4785 = vshrl.u32 %v4658, 16
      %v4787 = vshll.u32 %v4658, 16
      %v4789 = vrot.slane %v4787, 1
      %v4790 = vor.u32 %v4785, %v4789
      %v4792 = vshll.u32 %v4659, 16
      %v4794 = vrot.slane %v4792, 1
      %v4795 = vsel %vm1452, %v4790, %v4794
      %v4797 = vshrl.u32 %v4660, 16
      %v4799 = vshll.u32 %v4660, 16
      %v4801 = vrot.slane %v4799, 1
      %v4802 = vor.u32 %v4797, %v4801
      %v4804 = vshll.u32 %v4661, 16
      %v4806 = vrot.slane %v4804, 1
      %v4807 = vsel %vm1452, %v4802, %v4806
      %v4809 = vshrl.u32 %v4662, 16
      %v4811 = vshll.u32 %v4662, 16
      %v4813 = vrot.slane %v4811, 1
      %v4814 = vor.u32 %v4809, %v4813
      %v4816 = vshll.u32 %v4663, 16
      %v4818 = vrot.slane %v4816, 1
      %v4819 = vsel %vm1452, %v4814, %v4818
      %v4821 = vshrl.u32 %v4664, 16
      %v4823 = vshll.u32 %v4664, 16
      %v4825 = vrot.slane %v4823, 1
      %v4826 = vor.u32 %v4821, %v4825
      %v4828 = vshll.u32 %v4665, 16
      %v4830 = vrot.slane %v4828, 1
      %v4831 = vsel %vm1452, %v4826, %v4830
      %v4833 = vshrl.u32 %v4666, 16
      %v4835 = vshll.u32 %v4666, 16
      %v4837 = vrot.slane %v4835, 1
      %v4838 = vor.u32 %v4833, %v4837
      %v4840 = vshll.u32 %v4667, 16
      %v4842 = vrot.slane %v4840, 1
      %v4843 = vsel %vm1452, %v4838, %v4842
      %v4845 = vshrl.u32 %v4668, 16
      %v4847 = vshll.u32 %v4668, 16
      %v4849 = vrot.slane %v4847, 1
      %v4850 = vor.u32 %v4845, %v4849
      %v4852 = vshll.u32 %v4669, 16
      %v4854 = vrot.slane %v4852, 1
      %v4855 = vsel %vm1452, %v4850, %v4854
      %v4857 = vshrl.u32 %v4670, 16
      %v4859 = vshll.u32 %v4670, 16
      %v4861 = vrot.slane %v4859, 1
      %v4862 = vor.u32 %v4857, %v4861
      %v4864 = vshll.u32 %v4671, 16
      %v4866 = vrot.slane %v4864, 1
      %v4867 = vsel %vm1452, %v4862, %v4866
      %v4869 = vshrl.u32 %v4672, 16
      %v4871 = vshll.u32 %v4672, 16
      %v4873 = vrot.slane %v4871, 1
      %v4874 = vor.u32 %v4869, %v4873
      %v4876 = vshll.u32 %v4673, 16
      %v4878 = vrot.slane %v4876, 1
      %v4879 = vsel %vm1452, %v4874, %v4878
      %v4881 = vshrl.u32 %v4674, 16
      %v4883 = vshll.u32 %v4674, 16
      %v4885 = vrot.slane %v4883, 1
      %v4886 = vor.u32 %v4881, %v4885
      %v4888 = vshll.u32 %v4675, 16
      %v4890 = vrot.slane %v4888, 1
      %v4891 = vsel %vm1452, %v4886, %v4890
      %4910 = vst [vmem:[#allocation5 + $0x8] sm:$0xff] %v4687
      %4911 = vst [vmem:[#allocation5 + $0x20] sm:$0xff] %v4699
      %4912 = vst [vmem:[#allocation5 + $0x38] sm:$0xff] %v4711
      %4913 = vst [vmem:[#allocation5 + $0x50] sm:$0xff] %v4723
      %4914 = vst [vmem:[#allocation5 + $0x68] sm:$0xff] %v4735
      %4915 = vst [vmem:[#allocation5 + $0x80] sm:$0xff] %v4747
      %4916 = vst [vmem:[#allocation5 + $0x98] sm:$0xff] %v4759
      %4917 = vst [vmem:[#allocation5 + $0xb0] sm:$0xff] %v4771
      %4918 = vst [vmem:[#allocation5 + $0xc8] sm:$0xff] %v4783
      %4919 = vst [vmem:[#allocation5 + $0xe0] sm:$0xff] %v4795
      %4920 = vst [vmem:[#allocation5 + $0xf8] sm:$0xff] %v4807
      %4921 = vst [vmem:[#allocation5 + $0x110] sm:$0xff] %v4819
      %4922 = vst [vmem:[#allocation5 + $0x128] sm:$0xff] %v4831
      %4923 = vst [vmem:[#allocation5 + $0x140] sm:$0xff] %v4843
      %4924 = vst [vmem:[#allocation5 + $0x158] sm:$0xff] %v4855
      %4925 = vst [vmem:[#allocation5 + $0x170] sm:$0xff] %v4867
      %4926 = vst [vmem:[#allocation5 + $0x188] sm:$0xff] %v4879
      %4927 = vst [vmem:[#allocation5 + $0x1a0] sm:$0xff] %v4891
      %v4928 = vld [vmem:[#allocation4] sm:$0xe]
      %v4929 = vld [vmem:[#allocation4 + $0x4] sm:$0xf]
      %v4930 = vld [vmem:[#allocation4 + $0x8] sm:$0x1]
      %v4931 = vld [vmem:[#allocation4 + $0xc] sm:$0xe]
      %v4932 = vld [vmem:[#allocation4 + $0x10] sm:$0xf]
      %v4933 = vld [vmem:[#allocation4 + $0x14] sm:$0x1]
      %v4934 = vld [vmem:[#allocation4 + $0x18] sm:$0xe]
      %v4935 = vld [vmem:[#allocation4 + $0x1c] sm:$0xf]
      %v4936 = vld [vmem:[#allocation4 + $0x20] sm:$0x1]
      %v4937 = vld [vmem:[#allocation4 + $0x24] sm:$0xe]
      %v4938 = vld [vmem:[#allocation4 + $0x28] sm:$0xf]
      %v4939 = vld [vmem:[#allocation4 + $0x2c] sm:$0x1]
      %v4940 = vld [vmem:[#allocation4 + $0x30] sm:$0xe]
      %v4941 = vld [vmem:[#allocation4 + $0x34] sm:$0xf]
      %v4942 = vld [vmem:[#allocation4 + $0x38] sm:$0x1]
      %v4943 = vld [vmem:[#allocation4 + $0x3c] sm:$0xe]
      %v4944 = vld [vmem:[#allocation4 + $0x40] sm:$0xf]
      %v4945 = vld [vmem:[#allocation4 + $0x44] sm:$0x1]
      %v4946 = vld [vmem:[#allocation4 + $0x48] sm:$0xe]
      %v4947 = vld [vmem:[#allocation4 + $0x4c] sm:$0xf]
      %v4948 = vld [vmem:[#allocation4 + $0x50] sm:$0x1]
      %v4949 = vld [vmem:[#allocation4 + $0x54] sm:$0xe]
      %v4950 = vld [vmem:[#allocation4 + $0x58] sm:$0xf]
      %v4951 = vld [vmem:[#allocation4 + $0x5c] sm:$0x1]
      %v4952 = vld [vmem:[#allocation4 + $0x60] sm:$0xe]
      %v4953 = vld [vmem:[#allocation4 + $0x64] sm:$0xf]
      %v4954 = vld [vmem:[#allocation4 + $0x68] sm:$0x1]
      %v4955 = vld [vmem:[#allocation4 + $0x6c] sm:$0xe]
      %v4956 = vld [vmem:[#allocation4 + $0x70] sm:$0xf]
      %v4957 = vld [vmem:[#allocation4 + $0x74] sm:$0x1]
      %v4958 = vld [vmem:[#allocation4 + $0x78] sm:$0xe]
      %v4959 = vld [vmem:[#allocation4 + $0x7c] sm:$0xf]
      %v4960 = vld [vmem:[#allocation4 + $0x80] sm:$0x1]
      %v4961 = vld [vmem:[#allocation4 + $0x84] sm:$0xe]
      %v4962 = vld [vmem:[#allocation4 + $0x88] sm:$0xf]
      %v4963 = vld [vmem:[#allocation4 + $0x8c] sm:$0x1]
      %v4964 = vld [vmem:[#allocation4 + $0x90] sm:$0xe]
      %v4965 = vld [vmem:[#allocation4 + $0x94] sm:$0xf]
      %v4966 = vld [vmem:[#allocation4 + $0x98] sm:$0x1]
      %v4967 = vld [vmem:[#allocation4 + $0x9c] sm:$0xe]
      %v4968 = vld [vmem:[#allocation4 + $0xa0] sm:$0xf]
      %v4969 = vld [vmem:[#allocation4 + $0xa4] sm:$0x1]
      %v4970 = vld [vmem:[#allocation4 + $0xa8] sm:$0xe]
      %v4971 = vld [vmem:[#allocation4 + $0xac] sm:$0xf]
      %v4972 = vld [vmem:[#allocation4 + $0xb0] sm:$0x1]
      %v4973 = vld [vmem:[#allocation4 + $0xb4] sm:$0xe]
      %v4974 = vld [vmem:[#allocation4 + $0xb8] sm:$0xf]
      %v4975 = vld [vmem:[#allocation4 + $0xbc] sm:$0x1]
      %v4976 = vld [vmem:[#allocation4 + $0xc0] sm:$0xe]
      %v4977 = vld [vmem:[#allocation4 + $0xc4] sm:$0xf]
      %v4978 = vld [vmem:[#allocation4 + $0xc8] sm:$0x1]
      %v4979 = vld [vmem:[#allocation4 + $0xcc] sm:$0xe]
      %v4980 = vld [vmem:[#allocation4 + $0xd0] sm:$0xf]
      %v4981 = vld [vmem:[#allocation4 + $0xd4] sm:$0x1]
      %v5036 = vunpack.c.l.b16 %v4928
      %v5037 = vunpack.c.l.b16 %v4929
      %v5038 = vunpack.c.l.b16 %v4930
      %v5039 = vunpack.c.l.b16 %v4931
      %v5040 = vunpack.c.l.b16 %v4932
      %v5041 = vunpack.c.l.b16 %v4933
      %v5042 = vunpack.c.l.b16 %v4934
      %v5043 = vunpack.c.l.b16 %v4935
      %v5044 = vunpack.c.l.b16 %v4936
      %v5045 = vunpack.c.l.b16 %v4937
      %v5046 = vunpack.c.l.b16 %v4938
      %v5047 = vunpack.c.l.b16 %v4939
      %v5048 = vunpack.c.l.b16 %v4940
      %v5049 = vunpack.c.l.b16 %v4941
      %v5050 = vunpack.c.l.b16 %v4942
      %v5051 = vunpack.c.l.b16 %v4943
      %v5052 = vunpack.c.l.b16 %v4944
      %v5053 = vunpack.c.l.b16 %v4945
      %v5054 = vunpack.c.l.b16 %v4946
      %v5055 = vunpack.c.l.b16 %v4947
      %v5056 = vunpack.c.l.b16 %v4948
      %v5057 = vunpack.c.l.b16 %v4949
      %v5058 = vunpack.c.l.b16 %v4950
      %v5059 = vunpack.c.l.b16 %v4951
      %v5060 = vunpack.c.l.b16 %v4952
      %v5061 = vunpack.c.l.b16 %v4953
      %v5062 = vunpack.c.l.b16 %v4954
      %v5063 = vunpack.c.l.b16 %v4955
      %v5064 = vunpack.c.l.b16 %v4956
      %v5065 = vunpack.c.l.b16 %v4957
      %v5066 = vunpack.c.l.b16 %v4958
      %v5067 = vunpack.c.l.b16 %v4959
      %v5068 = vunpack.c.l.b16 %v4960
      %v5069 = vunpack.c.l.b16 %v4961
      %v5070 = vunpack.c.l.b16 %v4962
      %v5071 = vunpack.c.l.b16 %v4963
      %v5072 = vunpack.c.l.b16 %v4964
      %v5073 = vunpack.c.l.b16 %v4965
      %v5074 = vunpack.c.l.b16 %v4966
      %v5075 = vunpack.c.l.b16 %v4967
      %v5076 = vunpack.c.l.b16 %v4968
      %v5077 = vunpack.c.l.b16 %v4969
      %v5078 = vunpack.c.l.b16 %v4970
      %v5079 = vunpack.c.l.b16 %v4971
      %v5080 = vunpack.c.l.b16 %v4972
      %v5081 = vunpack.c.l.b16 %v4973
      %v5082 = vunpack.c.l.b16 %v4974
      %v5083 = vunpack.c.l.b16 %v4975
      %v5084 = vunpack.c.l.b16 %v4976
      %v5085 = vunpack.c.l.b16 %v4977
      %v5086 = vunpack.c.l.b16 %v4978
      %v5087 = vunpack.c.l.b16 %v4979
      %v5088 = vunpack.c.l.b16 %v4980
      %v5089 = vunpack.c.l.b16 %v4981
      %v5090 = vpack.c.b16 %v5037, %v5036
      %v5091 = vpack.c.b16 %v5038, %v5038
      %v5092 = vpack.c.b16 %v5040, %v5039
      %v5093 = vpack.c.b16 %v5041, %v5041
      %v5094 = vpack.c.b16 %v5043, %v5042
      %v5095 = vpack.c.b16 %v5044, %v5044
      %v5096 = vpack.c.b16 %v5046, %v5045
      %v5097 = vpack.c.b16 %v5047, %v5047
      %v5098 = vpack.c.b16 %v5049, %v5048
      %v5099 = vpack.c.b16 %v5050, %v5050
      %v5100 = vpack.c.b16 %v5052, %v5051
      %v5101 = vpack.c.b16 %v5053, %v5053
      %v5102 = vpack.c.b16 %v5055, %v5054
      %v5103 = vpack.c.b16 %v5056, %v5056
      %v5104 = vpack.c.b16 %v5058, %v5057
      %v5105 = vpack.c.b16 %v5059, %v5059
      %v5106 = vpack.c.b16 %v5061, %v5060
      %v5107 = vpack.c.b16 %v5062, %v5062
      %v5108 = vpack.c.b16 %v5064, %v5063
      %v5109 = vpack.c.b16 %v5065, %v5065
      %v5110 = vpack.c.b16 %v5067, %v5066
      %v5111 = vpack.c.b16 %v5068, %v5068
      %v5112 = vpack.c.b16 %v5070, %v5069
      %v5113 = vpack.c.b16 %v5071, %v5071
      %v5114 = vpack.c.b16 %v5073, %v5072
      %v5115 = vpack.c.b16 %v5074, %v5074
      %v5116 = vpack.c.b16 %v5076, %v5075
      %v5117 = vpack.c.b16 %v5077, %v5077
      %v5118 = vpack.c.b16 %v5079, %v5078
      %v5119 = vpack.c.b16 %v5080, %v5080
      %v5120 = vpack.c.b16 %v5082, %v5081
      %v5121 = vpack.c.b16 %v5083, %v5083
      %v5122 = vpack.c.b16 %v5085, %v5084
      %v5123 = vpack.c.b16 %v5086, %v5086
      %v5124 = vpack.c.b16 %v5088, %v5087
      %v5125 = vpack.c.b16 %v5089, %v5089
      %v5126 = vrot.slane %v5090, 1
      %v5127 = vrot.slane %v5091, 1
      %v5128 = vsel %vm1903, %v5126, %v5127
      %v5129 = vrot.slane %v5092, 1
      %v5130 = vrot.slane %v5093, 1
      %v5131 = vsel %vm1903, %v5129, %v5130
      %v5132 = vrot.slane %v5094, 1
      %v5133 = vrot.slane %v5095, 1
      %v5134 = vsel %vm1903, %v5132, %v5133
      %v5135 = vrot.slane %v5096, 1
      %v5136 = vrot.slane %v5097, 1
      %v5137 = vsel %vm1903, %v5135, %v5136
      %v5138 = vrot.slane %v5098, 1
      %v5139 = vrot.slane %v5099, 1
      %v5140 = vsel %vm1903, %v5138, %v5139
      %v5141 = vrot.slane %v5100, 1
      %v5142 = vrot.slane %v5101, 1
      %v5143 = vsel %vm1903, %v5141, %v5142
      %v5144 = vrot.slane %v5102, 1
      %v5145 = vrot.slane %v5103, 1
      %v5146 = vsel %vm1903, %v5144, %v5145
      %v5147 = vrot.slane %v5104, 1
      %v5148 = vrot.slane %v5105, 1
      %v5149 = vsel %vm1903, %v5147, %v5148
      %v5150 = vrot.slane %v5106, 1
      %v5151 = vrot.slane %v5107, 1
      %v5152 = vsel %vm1903, %v5150, %v5151
      %v5153 = vrot.slane %v5108, 1
      %v5154 = vrot.slane %v5109, 1
      %v5155 = vsel %vm1903, %v5153, %v5154
      %v5156 = vrot.slane %v5110, 1
      %v5157 = vrot.slane %v5111, 1
      %v5158 = vsel %vm1903, %v5156, %v5157
      %v5159 = vrot.slane %v5112, 1
      %v5160 = vrot.slane %v5113, 1
      %v5161 = vsel %vm1903, %v5159, %v5160
      %v5162 = vrot.slane %v5114, 1
      %v5163 = vrot.slane %v5115, 1
      %v5164 = vsel %vm1903, %v5162, %v5163
      %v5165 = vrot.slane %v5116, 1
      %v5166 = vrot.slane %v5117, 1
      %v5167 = vsel %vm1903, %v5165, %v5166
      %v5168 = vrot.slane %v5118, 1
      %v5169 = vrot.slane %v5119, 1
      %v5170 = vsel %vm1903, %v5168, %v5169
      %v5171 = vrot.slane %v5120, 1
      %v5172 = vrot.slane %v5121, 1
      %v5173 = vsel %vm1903, %v5171, %v5172
      %v5174 = vrot.slane %v5122, 1
      %v5175 = vrot.slane %v5123, 1
      %v5176 = vsel %vm1903, %v5174, %v5175
      %v5177 = vrot.slane %v5124, 1
      %v5178 = vrot.slane %v5125, 1
      %v5179 = vsel %vm1903, %v5177, %v5178
      %5198 = vst [vmem:[#allocation5 + $0x10] sm:$0xff] %v5128
      %5199 = vst [vmem:[#allocation5 + $0x28] sm:$0xff] %v5131
      %5200 = vst [vmem:[#allocation5 + $0x40] sm:$0xff] %v5134
      %5201 = vst [vmem:[#allocation5 + $0x58] sm:$0xff] %v5137
      %5202 = vst [vmem:[#allocation5 + $0x70] sm:$0xff] %v5140
      %5203 = vst [vmem:[#allocation5 + $0x88] sm:$0xff] %v5143
      %5204 = vst [vmem:[#allocation5 + $0xa0] sm:$0xff] %v5146
      %5205 = vst [vmem:[#allocation5 + $0xb8] sm:$0xff] %v5149
      %5206 = vst [vmem:[#allocation5 + $0xd0] sm:$0xff] %v5152
      %5207 = vst [vmem:[#allocation5 + $0xe8] sm:$0xff] %v5155
      %5208 = vst [vmem:[#allocation5 + $0x100] sm:$0xff] %v5158
      %5209 = vst [vmem:[#allocation5 + $0x118] sm:$0xff] %v5161
      %5210 = vst [vmem:[#allocation5 + $0x130] sm:$0xff] %v5164
      %5211 = vst [vmem:[#allocation5 + $0x148] sm:$0xff] %v5167
      %5212 = vst [vmem:[#allocation5 + $0x160] sm:$0xff] %v5170
      %5213 = vst [vmem:[#allocation5 + $0x178] sm:$0xff] %v5173
      %5214 = vst [vmem:[#allocation5 + $0x190] sm:$0xff] %v5176
      %5215 = vst [vmem:[#allocation5 + $0x1a8] sm:$0xff] %v5179
      %v5216 = vld [vmem:[#allocation5] sm:$0xff]
      %v5217 = vld [vmem:[#allocation5 + $0x8] sm:$0xff]
      %v5218 = vld [vmem:[#allocation5 + $0x10] sm:$0xff]
      %v5219 = vld [vmem:[#allocation5 + $0x18] sm:$0xff]
      %v5220 = vld [vmem:[#allocation5 + $0x20] sm:$0xff]
      %v5221 = vld [vmem:[#allocation5 + $0x28] sm:$0xff]
      %v5222 = vld [vmem:[#allocation5 + $0x30] sm:$0xff]
      %v5223 = vld [vmem:[#allocation5 + $0x38] sm:$0xff]
      %v5224 = vld [vmem:[#allocation5 + $0x40] sm:$0xff]
      %v5225 = vld [vmem:[#allocation5 + $0x48] sm:$0xff]
      %v5226 = vld [vmem:[#allocation5 + $0x50] sm:$0xff]
      %v5227 = vld [vmem:[#allocation5 + $0x58] sm:$0xff]
      %v5228 = vld [vmem:[#allocation5 + $0x60] sm:$0xff]
      %v5229 = vld [vmem:[#allocation5 + $0x68] sm:$0xff]
      %v5230 = vld [vmem:[#allocation5 + $0x70] sm:$0xff]
      %v5231 = vld [vmem:[#allocation5 + $0x78] sm:$0xff]
      %v5232 = vld [vmem:[#allocation5 + $0x80] sm:$0xff]
      %v5233 = vld [vmem:[#allocation5 + $0x88] sm:$0xff]
      %v5234 = vld [vmem:[#allocation5 + $0x90] sm:$0xff]
      %v5235 = vld [vmem:[#allocation5 + $0x98] sm:$0xff]
      %v5236 = vld [vmem:[#allocation5 + $0xa0] sm:$0xff]
      %v5237 = vld [vmem:[#allocation5 + $0xa8] sm:$0xff]
      %v5238 = vld [vmem:[#allocation5 + $0xb0] sm:$0xff]
      %v5239 = vld [vmem:[#allocation5 + $0xb8] sm:$0xff]
      %v5240 = vld [vmem:[#allocation5 + $0xc0] sm:$0xff]
      %v5241 = vld [vmem:[#allocation5 + $0xc8] sm:$0xff]
      %v5242 = vld [vmem:[#allocation5 + $0xd0] sm:$0xff]
      %v5243 = vld [vmem:[#allocation5 + $0xd8] sm:$0xff]
      %v5244 = vld [vmem:[#allocation5 + $0xe0] sm:$0xff]
      %v5245 = vld [vmem:[#allocation5 + $0xe8] sm:$0xff]
      %v5246 = vld [vmem:[#allocation5 + $0xf0] sm:$0xff]
      %v5247 = vld [vmem:[#allocation5 + $0xf8] sm:$0xff]
      %v5248 = vld [vmem:[#allocation5 + $0x100] sm:$0xff]
      %v5249 = vld [vmem:[#allocation5 + $0x108] sm:$0xff]
      %v5250 = vld [vmem:[#allocation5 + $0x110] sm:$0xff]
      %v5251 = vld [vmem:[#allocation5 + $0x118] sm:$0xff]
      %v5252 = vld [vmem:[#allocation5 + $0x120] sm:$0xff]
      %v5253 = vld [vmem:[#allocation5 + $0x128] sm:$0xff]
      %v5254 = vld [vmem:[#allocation5 + $0x130] sm:$0xff]
      %v5255 = vld [vmem:[#allocation5 + $0x138] sm:$0xff]
      %v5256 = vld [vmem:[#allocation5 + $0x140] sm:$0xff]
      %v5257 = vld [vmem:[#allocation5 + $0x148] sm:$0xff]
      %v5258 = vld [vmem:[#allocation5 + $0x150] sm:$0xff]
      %v5259 = vld [vmem:[#allocation5 + $0x158] sm:$0xff]
      %v5260 = vld [vmem:[#allocation5 + $0x160] sm:$0xff]
      %v5261 = vld [vmem:[#allocation5 + $0x168] sm:$0xff]
      %v5262 = vld [vmem:[#allocation5 + $0x170] sm:$0xff]
      %v5263 = vld [vmem:[#allocation5 + $0x178] sm:$0xff]
      %v5264 = vld [vmem:[%s2] sm:$0xf]
      %v5265 = vld [vmem:[%s2 + $0x4] sm:$0xf]
      %v5266 = vld [vmem:[%s2 + $0x8] sm:$0xf]
      %v5267 = vld [vmem:[%s2 + $0xc] sm:$0xf]
      %v5268 = vld [vmem:[%s2 + $0x10] sm:$0xf]
      %v5269 = vld [vmem:[%s2 + $0x14] sm:$0xf]
      %v5270 = vld [vmem:[%s2 + $0x18] sm:$0xf]
      %v5271 = vld [vmem:[%s2 + $0x1c] sm:$0xf]
      %v5272 = vld [vmem:[%s2 + $0x20] sm:$0xf]
      %v5273 = vld [vmem:[%s2 + $0x24] sm:$0xf]
      %v5274 = vld [vmem:[%s2 + $0x28] sm:$0xf]
      %v5275 = vld [vmem:[%s2 + $0x2c] sm:$0xf]
      %v5276 = vld [vmem:[%s2 + $0x30] sm:$0xf]
      %v5277 = vld [vmem:[%s2 + $0x34] sm:$0xf]
      %v5278 = vld [vmem:[%s2 + $0x38] sm:$0xf]
      %v5279 = vld [vmem:[%s2 + $0x3c] sm:$0xf]
      %v5280 = vld [vmem:[%s2 + $0x40] sm:$0xf]
      %v5281 = vld [vmem:[%s2 + $0x44] sm:$0xf]
      %v5282 = vld [vmem:[%s2 + $0x48] sm:$0xf]
      %v5283 = vld [vmem:[%s2 + $0x4c] sm:$0xf]
      %v5284 = vld [vmem:[%s2 + $0x50] sm:$0xf]
      %v5285 = vld [vmem:[%s2 + $0x54] sm:$0xf]
      %v5286 = vld [vmem:[%s2 + $0x58] sm:$0xf]
      %v5287 = vld [vmem:[%s2 + $0x5c] sm:$0xf]
      %v5288 = vld [vmem:[%s2 + $0x60] sm:$0xf]
      %v5289 = vld [vmem:[%s2 + $0x64] sm:$0xf]
      %v5290 = vld [vmem:[%s2 + $0x68] sm:$0xf]
      %v5291 = vld [vmem:[%s2 + $0x6c] sm:$0xf]
      %v5292 = vld [vmem:[%s2 + $0x70] sm:$0xf]
      %v5293 = vld [vmem:[%s2 + $0x74] sm:$0xf]
      %v5294 = vld [vmem:[%s2 + $0x78] sm:$0xf]
      %v5295 = vld [vmem:[%s2 + $0x7c] sm:$0xf]
      %v5296 = vld [vmem:[%s2 + $0x80] sm:$0xf]
      %v5297 = vld [vmem:[%s2 + $0x84] sm:$0xf]
      %v5298 = vld [vmem:[%s2 + $0x88] sm:$0xf]
      %v5299 = vld [vmem:[%s2 + $0x8c] sm:$0xf]
      %v5300 = vld [vmem:[%s2 + $0x90] sm:$0xf]
      %v5301 = vld [vmem:[%s2 + $0x94] sm:$0xf]
      %v5302 = vld [vmem:[%s2 + $0x98] sm:$0xf]
      %v5303 = vld [vmem:[%s2 + $0x9c] sm:$0xf]
      %v5304 = vld [vmem:[%s2 + $0xa0] sm:$0xf]
      %v5305 = vld [vmem:[%s2 + $0xa4] sm:$0xf]
      %v5306 = vld [vmem:[%s2 + $0xa8] sm:$0xf]
      %v5307 = vld [vmem:[%s2 + $0xac] sm:$0xf]
      %v5308 = vld [vmem:[%s2 + $0xb0] sm:$0xf]
      %v5309 = vld [vmem:[%s2 + $0xb4] sm:$0xf]
      %v5310 = vld [vmem:[%s2 + $0xb8] sm:$0xf]
      %v5311 = vld [vmem:[%s2 + $0xbc] sm:$0xf]
      %s5312 = scalar_lea.vmem [#allocation5], 24
      %v5313 = vld [vmem:[%s5312] sm:$0xff]
      %v5314 = vld [vmem:[%s5312 + $0x8] sm:$0xff]
      %v5315 = vld [vmem:[%s5312 + $0x10] sm:$0xff]
      %v5316 = vld [vmem:[%s5312 + $0x18] sm:$0xff]
      %v5317 = vld [vmem:[%s5312 + $0x20] sm:$0xff]
      %v5318 = vld [vmem:[%s5312 + $0x28] sm:$0xff]
      %v5319 = vld [vmem:[%s5312 + $0x30] sm:$0xff]
      %v5320 = vld [vmem:[%s5312 + $0x38] sm:$0xff]
      %v5321 = vld [vmem:[%s5312 + $0x40] sm:$0xff]
      %v5322 = vld [vmem:[%s5312 + $0x48] sm:$0xff]
      %v5323 = vld [vmem:[%s5312 + $0x50] sm:$0xff]
      %v5324 = vld [vmem:[%s5312 + $0x58] sm:$0xff]
      %v5325 = vld [vmem:[%s5312 + $0x60] sm:$0xff]
      %v5326 = vld [vmem:[%s5312 + $0x68] sm:$0xff]
      %v5327 = vld [vmem:[%s5312 + $0x70] sm:$0xff]
      %v5328 = vld [vmem:[%s5312 + $0x78] sm:$0xff]
      %v5329 = vld [vmem:[%s5312 + $0x80] sm:$0xff]
      %v5330 = vld [vmem:[%s5312 + $0x88] sm:$0xff]
      %v5331 = vld [vmem:[%s5312 + $0x90] sm:$0xff]
      %v5332 = vld [vmem:[%s5312 + $0x98] sm:$0xff]
      %v5333 = vld [vmem:[%s5312 + $0xa0] sm:$0xff]
      %v5334 = vld [vmem:[%s5312 + $0xa8] sm:$0xff]
      %v5335 = vld [vmem:[%s5312 + $0xb0] sm:$0xff]
      %v5336 = vld [vmem:[%s5312 + $0xb8] sm:$0xff]
      %v5337 = vld [vmem:[%s5312 + $0xc0] sm:$0xff]
      %v5338 = vld [vmem:[%s5312 + $0xc8] sm:$0xff]
      %v5339 = vld [vmem:[%s5312 + $0xd0] sm:$0xff]
      %v5340 = vld [vmem:[%s5312 + $0xd8] sm:$0xff]
      %v5341 = vld [vmem:[%s5312 + $0xe0] sm:$0xff]
      %v5342 = vld [vmem:[%s5312 + $0xe8] sm:$0xff]
      %v5343 = vld [vmem:[%s5312 + $0xf0] sm:$0xff]
      %v5344 = vld [vmem:[%s5312 + $0xf8] sm:$0xff]
      %v5345 = vld [vmem:[%s5312 + $0x100] sm:$0xff]
      %v5346 = vld [vmem:[%s5312 + $0x108] sm:$0xff]
      %v5347 = vld [vmem:[%s5312 + $0x110] sm:$0xff]
      %v5348 = vld [vmem:[%s5312 + $0x118] sm:$0xff]
      %v5349 = vld [vmem:[%s5312 + $0x120] sm:$0xff]
      %v5350 = vld [vmem:[%s5312 + $0x128] sm:$0xff]
      %v5351 = vld [vmem:[%s5312 + $0x130] sm:$0xff]
      %v5352 = vld [vmem:[%s5312 + $0x138] sm:$0xff]
      %v5353 = vld [vmem:[%s5312 + $0x140] sm:$0xff]
      %v5354 = vld [vmem:[%s5312 + $0x148] sm:$0xff]
      %v5355 = vld [vmem:[%s5312 + $0x150] sm:$0xff]
      %v5356 = vld [vmem:[%s5312 + $0x158] sm:$0xff]
      %v5357 = vld [vmem:[%s5312 + $0x160] sm:$0xff]
      %v5358 = vld [vmem:[%s5312 + $0x168] sm:$0xff]
      %v5359 = vld [vmem:[%s5312 + $0x170] sm:$0xff]
      %v5360 = vld [vmem:[%s5312 + $0x178] sm:$0xff]
      %s5361 = scalar_lea.vmem %s2, 192
      %v5362 = vld [vmem:[%s5361] sm:$0xf]
      %v5363 = vld [vmem:[%s5361 + $0x4] sm:$0xf]
      %v5364 = vld [vmem:[%s5361 + $0x8] sm:$0xf]
      %v5365 = vld [vmem:[%s5361 + $0xc] sm:$0xf]
      %v5366 = vld [vmem:[%s5361 + $0x10] sm:$0xf]
      %v5367 = vld [vmem:[%s5361 + $0x14] sm:$0xf]
      %v5368 = vld [vmem:[%s5361 + $0x18] sm:$0xf]
      %v5369 = vld [vmem:[%s5361 + $0x1c] sm:$0xf]
      %v5370 = vld [vmem:[%s5361 + $0x20] sm:$0xf]
      %v5371 = vld [vmem:[%s5361 + $0x24] sm:$0xf]
      %v5372 = vld [vmem:[%s5361 + $0x28] sm:$0xf]
      %v5373 = vld [vmem:[%s5361 + $0x2c] sm:$0xf]
      %v5374 = vld [vmem:[%s5361 + $0x30] sm:$0xf]
      %v5375 = vld [vmem:[%s5361 + $0x34] sm:$0xf]
      %v5376 = vld [vmem:[%s5361 + $0x38] sm:$0xf]
      %v5377 = vld [vmem:[%s5361 + $0x3c] sm:$0xf]
      %v5378 = vld [vmem:[%s5361 + $0x40] sm:$0xf]
      %v5379 = vld [vmem:[%s5361 + $0x44] sm:$0xf]
      %v5380 = vld [vmem:[%s5361 + $0x48] sm:$0xf]
      %v5381 = vld [vmem:[%s5361 + $0x4c] sm:$0xf]
      %v5382 = vld [vmem:[%s5361 + $0x50] sm:$0xf]
      %v5383 = vld [vmem:[%s5361 + $0x54] sm:$0xf]
      %v5384 = vld [vmem:[%s5361 + $0x58] sm:$0xf]
      %v5385 = vld [vmem:[%s5361 + $0x5c] sm:$0xf]
      %v5386 = vld [vmem:[%s5361 + $0x60] sm:$0xf]
      %v5387 = vld [vmem:[%s5361 + $0x64] sm:$0xf]
      %v5388 = vld [vmem:[%s5361 + $0x68] sm:$0xf]
      %v5389 = vld [vmem:[%s5361 + $0x6c] sm:$0xf]
      %v5390 = vld [vmem:[%s5361 + $0x70] sm:$0xf]
      %v5391 = vld [vmem:[%s5361 + $0x74] sm:$0xf]
      %v5392 = vld [vmem:[%s5361 + $0x78] sm:$0xf]
      %v5393 = vld [vmem:[%s5361 + $0x7c] sm:$0xf]
      %v5394 = vld [vmem:[%s5361 + $0x80] sm:$0xf]
      %v5395 = vld [vmem:[%s5361 + $0x84] sm:$0xf]
      %v5396 = vld [vmem:[%s5361 + $0x88] sm:$0xf]
      %v5397 = vld [vmem:[%s5361 + $0x8c] sm:$0xf]
      %v5398 = vld [vmem:[%s5361 + $0x90] sm:$0xf]
      %v5399 = vld [vmem:[%s5361 + $0x94] sm:$0xf]
      %v5400 = vld [vmem:[%s5361 + $0x98] sm:$0xf]
      %v5401 = vld [vmem:[%s5361 + $0x9c] sm:$0xf]
      %v5402 = vld [vmem:[%s5361 + $0xa0] sm:$0xf]
      %v5403 = vld [vmem:[%s5361 + $0xa4] sm:$0xf]
      %v5404 = vld [vmem:[%s5361 + $0xa8] sm:$0xf]
      %v5405 = vld [vmem:[%s5361 + $0xac] sm:$0xf]
      %v5406 = vld [vmem:[%s5361 + $0xb0] sm:$0xf]
      %v5407 = vld [vmem:[%s5361 + $0xb4] sm:$0xf]
      %v5408 = vld [vmem:[%s5361 + $0xb8] sm:$0xf]
      %v5409 = vld [vmem:[%s5361 + $0xbc] sm:$0xf]
      %v5458 = vunpack.c.l.b16 %v5362
      %v5459 = vunpack.c.l.b16 %v5363
      %v5460 = vunpack.c.l.b16 %v5364
      %v5461 = vunpack.c.l.b16 %v5365
      %v5462 = vunpack.c.l.b16 %v5366
      %v5463 = vunpack.c.l.b16 %v5367
      %v5464 = vunpack.c.l.b16 %v5368
      %v5465 = vunpack.c.l.b16 %v5369
      %v5466 = vunpack.c.l.b16 %v5370
      %v5467 = vunpack.c.l.b16 %v5371
      %v5468 = vunpack.c.l.b16 %v5372
      %v5469 = vunpack.c.l.b16 %v5373
      %v5470 = vunpack.c.l.b16 %v5374
      %v5471 = vunpack.c.l.b16 %v5375
      %v5472 = vunpack.c.l.b16 %v5376
      %v5473 = vunpack.c.l.b16 %v5377
      %v5474 = vunpack.c.l.b16 %v5378
      %v5475 = vunpack.c.l.b16 %v5379
      %v5476 = vunpack.c.l.b16 %v5380
      %v5477 = vunpack.c.l.b16 %v5381
      %v5478 = vunpack.c.l.b16 %v5382
      %v5479 = vunpack.c.l.b16 %v5383
      %v5480 = vunpack.c.l.b16 %v5384
      %v5481 = vunpack.c.l.b16 %v5385
      %v5482 = vunpack.c.l.b16 %v5386
      %v5483 = vunpack.c.l.b16 %v5387
      %v5484 = vunpack.c.l.b16 %v5388
      %v5485 = vunpack.c.l.b16 %v5389
      %v5486 = vunpack.c.l.b16 %v5390
      %v5487 = vunpack.c.l.b16 %v5391
      %v5488 = vunpack.c.l.b16 %v5392
      %v5489 = vunpack.c.l.b16 %v5393
      %v5490 = vunpack.c.l.b16 %v5394
      %v5491 = vunpack.c.l.b16 %v5395
      %v5492 = vunpack.c.l.b16 %v5396
      %v5493 = vunpack.c.l.b16 %v5397
      %v5494 = vunpack.c.l.b16 %v5398
      %v5495 = vunpack.c.l.b16 %v5399
      %v5496 = vunpack.c.l.b16 %v5400
      %v5497 = vunpack.c.l.b16 %v5401
      %v5498 = vunpack.c.l.b16 %v5402
      %v5499 = vunpack.c.l.b16 %v5403
      %v5500 = vunpack.c.l.b16 %v5404
      %v5501 = vunpack.c.l.b16 %v5405
      %v5502 = vunpack.c.l.b16 %v5406
      %v5503 = vunpack.c.l.b16 %v5407
      %v5504 = vunpack.c.l.b16 %v5408
      %v5505 = vunpack.c.l.b16 %v5409
      %v5506 = vpack.c.b16 %v5459, %v5458
      %v5507 = vpack.c.b16 %v5461, %v5460
      %v5508 = vpack.c.b16 %v5463, %v5462
      %v5509 = vpack.c.b16 %v5465, %v5464
      %v5510 = vpack.c.b16 %v5467, %v5466
      %v5511 = vpack.c.b16 %v5469, %v5468
      %v5512 = vpack.c.b16 %v5471, %v5470
      %v5513 = vpack.c.b16 %v5473, %v5472
      %v5514 = vpack.c.b16 %v5475, %v5474
      %v5515 = vpack.c.b16 %v5477, %v5476
      %v5516 = vpack.c.b16 %v5479, %v5478
      %v5517 = vpack.c.b16 %v5481, %v5480
      %v5518 = vpack.c.b16 %v5483, %v5482
      %v5519 = vpack.c.b16 %v5485, %v5484
      %v5520 = vpack.c.b16 %v5487, %v5486
      %v5521 = vpack.c.b16 %v5489, %v5488
      %v5522 = vpack.c.b16 %v5491, %v5490
      %v5523 = vpack.c.b16 %v5493, %v5492
      %v5524 = vpack.c.b16 %v5495, %v5494
      %v5525 = vpack.c.b16 %v5497, %v5496
      %v5526 = vpack.c.b16 %v5499, %v5498
      %v5527 = vpack.c.b16 %v5501, %v5500
      %v5528 = vpack.c.b16 %v5503, %v5502
      %v5529 = vpack.c.b16 %v5505, %v5504
      %5554 = vmatprep.subr.bf16.mxu0 0
      %5555 = vmatpush1.bf16.msra.mxu0 %v5506
      %5556 = vmatprep.subr.bf16.mxu0 0
      %5557 = vmatpush1.bf16.msra.mxu0 %v5507
      %5558 = vmatprep.subr.bf16.mxu0 0
      %5559 = vmatpush1.bf16.msra.mxu0 %v5508
      %5560 = vmatprep.subr.bf16.mxu0 0
      %5561 = vmatpush1.bf16.msra.mxu0 %v5509
      %5562 = vmatprep.subr.bf16.mxu0 0
      %5563 = vmatpush1.bf16.msra.mxu0 %v5510
      %5564 = vmatprep.subr.bf16.mxu0 0
      %5565 = vmatpush1.bf16.msra.mxu0 %v5511
      %5566 = vmatprep.subr.bf16.mxu0 0
      %5567 = vmatpush1.bf16.msra.mxu0 %v5512
      %5568 = vmatprep.subr.bf16.mxu0 0
      %5569 = vmatpush1.bf16.msra.mxu0 %v5513
      %5570 = vmatprep.subr.bf16.mxu0 0
      %5571 = vmatpush1.bf16.msra.mxu0 %v5514
      %5572 = vmatprep.subr.bf16.mxu0 0
      %5573 = vmatpush1.bf16.msra.mxu0 %v5515
      %5574 = vmatprep.subr.bf16.mxu0 0
      %5575 = vmatpush1.bf16.msra.mxu0 %v5516
      %5576 = vmatprep.subr.bf16.mxu0 0
      %5577 = vmatpush1.bf16.msra.mxu0 %v5517
      %5578 = vmatprep.subr.bf16.mxu0 0
      %5579 = vmatpush1.bf16.msra.mxu0 %v5518
      %5580 = vmatprep.subr.bf16.mxu0 0
      %5581 = vmatpush1.bf16.msra.mxu0 %v5519
      %5582 = vmatprep.subr.bf16.mxu0 0
      %5583 = vmatpush1.bf16.msra.mxu0 %v5520
      %5584 = vmatprep.subr.bf16.mxu0 0
      %5585 = vmatpush1.bf16.msra.mxu0 %v5521
      %5586 = vmatprep.mubr.bf16.mxu0 %v5314
      %5587 = vmatmul.mubr.bf16.gmra.mrb[0].mxu0 %v5313
      %v5588 = vpop.f32.mrb[0].mxu0
      %v5589 = vadd.f32 0.0, %v5588
      %v5590 = vpop.f32.mrb[0].mxu0
      %v5591 = vpop.f32.mrb[0].mxu0
      %v5592 = vadd.f32 0.0, %v5591
      %v5593 = vpop.f32.mrb[0].mxu0
      %5594 = vmatprep.mubr.bf16.mxu0 %v5317
      %5595 = vmatmul.mubr.bf16.gmra.mrb[0].mxu0 %v5316
      %v5596 = vpop.f32.mrb[0].mxu0
      %v5597 = vadd.f32 0.0, %v5596
      %v5598 = vpop.f32.mrb[0].mxu0
      %v5599 = vpop.f32.mrb[0].mxu0
      %v5600 = vadd.f32 0.0, %v5599
      %v5601 = vpop.f32.mrb[0].mxu0
      %5602 = vmatprep.mubr.bf16.mxu0 %v5320
      %5603 = vmatmul.mubr.bf16.gmra.mrb[0].mxu0 %v5319
      %v5604 = vpop.f32.mrb[0].mxu0
      %v5605 = vadd.f32 0.0, %v5604
      %v5606 = vpop.f32.mrb[0].mxu0
      %v5607 = vpop.f32.mrb[0].mxu0
      %v5608 = vadd.f32 0.0, %v5607
      %v5609 = vpop.f32.mrb[0].mxu0
      %5610 = vmatprep.mubr.bf16.mxu0 %v5323
      %5611 = vmatmul.mubr.bf16.gmra.mrb[0].mxu0 %v5322
      %v5612 = vpop.f32.mrb[0].mxu0
      %v5613 = vadd.f32 0.0, %v5612
      %v5614 = vpop.f32.mrb[0].mxu0
      %v5615 = vpop.f32.mrb[0].mxu0
      %v5616 = vadd.f32 0.0, %v5615
      %v5617 = vpop.f32.mrb[0].mxu0
      %5618 = vmatprep.mubr.bf16.mxu0 %v5326
      %5619 = vmatmul.mubr.bf16.gmra.mrb[0].mxu0 %v5325
      %v5620 = vpop.f32.mrb[0].mxu0
      %v5621 = vadd.f32 0.0, %v5620
      %v5622 = vpop.f32.mrb[0].mxu0
      %v5623 = vpop.f32.mrb[0].mxu0
      %v5624 = vadd.f32 0.0, %v5623
      %v5625 = vpop.f32.mrb[0].mxu0
      %5626 = vmatprep.mubr.bf16.mxu0 %v5329
      %5627 = vmatmul.mubr.bf16.gmra.mrb[0].mxu0 %v5328
      %v5628 = vpop.f32.mrb[0].mxu0
      %v5629 = vadd.f32 0.0, %v5628
      %v5630 = vpop.f32.mrb[0].mxu0
      %v5631 = vpop.f32.mrb[0].mxu0
      %v5632 = vadd.f32 0.0, %v5631
      %v5633 = vpop.f32.mrb[0].mxu0
      %5634 = vmatprep.mubr.bf16.mxu0 %v5332
      %5635 = vmatmul.mubr.bf16.gmra.mrb[0].mxu0 %v5331
      %v5636 = vpop.f32.mrb[0].mxu0
      %v5637 = vadd.f32 0.0, %v5636
      %v5638 = vpop.f32.mrb[0].mxu0
      %v5639 = vpop.f32.mrb[0].mxu0
      %v5640 = vadd.f32 0.0, %v5639
      %v5641 = vpop.f32.mrb[0].mxu0
      %5642 = vmatprep.mubr.bf16.mxu0 %v5335
      %5643 = vmatmul.mubr.bf16.gmra.mrb[0].mxu0 %v5334
      %v5644 = vpop.f32.mrb[0].mxu0
      %v5645 = vadd.f32 0.0, %v5644
      %v5646 = vpop.f32.mrb[0].mxu0
      %v5647 = vpop.f32.mrb[0].mxu0
      %v5648 = vadd.f32 0.0, %v5647
      %v5649 = vpop.f32.mrb[0].mxu0
      %5650 = vmatprep.mubr.bf16.mxu0 %v5338
      %5651 = vmatmul.mubr.bf16.gmra.mrb[0].mxu0 %v5337
      %v5652 = vpop.f32.mrb[0].mxu0
      %v5653 = vadd.f32 0.0, %v5652
      %v5654 = vpop.f32.mrb[0].mxu0
      %v5655 = vpop.f32.mrb[0].mxu0
      %v5656 = vadd.f32 0.0, %v5655
      %v5657 = vpop.f32.mrb[0].mxu0
      %5658 = vmatprep.mubr.bf16.mxu0 %v5341
      %5659 = vmatmul.mubr.bf16.gmra.mrb[0].mxu0 %v5340
      %v5660 = vpop.f32.mrb[0].mxu0
      %v5661 = vadd.f32 0.0, %v5660
      %v5662 = vpop.f32.mrb[0].mxu0
      %v5663 = vpop.f32.mrb[0].mxu0
      %v5664 = vadd.f32 0.0, %v5663
      %v5665 = vpop.f32.mrb[0].mxu0
      %5666 = vmatprep.mubr.bf16.mxu0 %v5344
      %5667 = vmatmul.mubr.bf16.gmra.mrb[0].mxu0 %v5343
      %v5668 = vpop.f32.mrb[0].mxu0
      %v5669 = vadd.f32 0.0, %v5668
      %v5670 = vpop.f32.mrb[0].mxu0
      %v5671 = vpop.f32.mrb[0].mxu0
      %v5672 = vadd.f32 0.0, %v5671
      %v5673 = vpop.f32.mrb[0].mxu0
      %5674 = vmatprep.mubr.bf16.mxu0 %v5347
      %5675 = vmatmul.mubr.bf16.gmra.mrb[0].mxu0 %v5346
      %v5676 = vpop.f32.mrb[0].mxu0
      %v5677 = vadd.f32 0.0, %v5676
      %v5678 = vpop.f32.mrb[0].mxu0
      %v5679 = vpop.f32.mrb[0].mxu0
      %v5680 = vadd.f32 0.0, %v5679
      %v5681 = vpop.f32.mrb[0].mxu0
      %5682 = vmatprep.mubr.bf16.mxu0 %v5350
      %5683 = vmatmul.mubr.bf16.gmra.mrb[0].mxu0 %v5349
      %v5684 = vpop.f32.mrb[0].mxu0
      %v5685 = vadd.f32 0.0, %v5684
      %v5686 = vpop.f32.mrb[0].mxu0
      %v5687 = vpop.f32.mrb[0].mxu0
      %v5688 = vadd.f32 0.0, %v5687
      %v5689 = vpop.f32.mrb[0].mxu0
      %5690 = vmatprep.mubr.bf16.mxu0 %v5353
      %5691 = vmatmul.mubr.bf16.gmra.mrb[0].mxu0 %v5352
      %v5692 = vpop.f32.mrb[0].mxu0
      %v5693 = vadd.f32 0.0, %v5692
      %v5694 = vpop.f32.mrb[0].mxu0
      %v5695 = vpop.f32.mrb[0].mxu0
      %v5696 = vadd.f32 0.0, %v5695
      %v5697 = vpop.f32.mrb[0].mxu0
      %5698 = vmatprep.mubr.bf16.mxu0 %v5356
      %5699 = vmatmul.mubr.bf16.gmra.mrb[0].mxu0 %v5355
      %v5700 = vpop.f32.mrb[0].mxu0
      %v5701 = vadd.f32 0.0, %v5700
      %v5702 = vpop.f32.mrb[0].mxu0
      %v5703 = vpop.f32.mrb[0].mxu0
      %v5704 = vadd.f32 0.0, %v5703
      %v5705 = vpop.f32.mrb[0].mxu0
      %5706 = vmatprep.mubr.bf16.mxu0 %v5359
      %5707 = vmatmul.mubr.bf16.gmra.mrb[0].mxu0 %v5358
      %v5708 = vpop.f32.mrb[0].mxu0
      %v5709 = vadd.f32 0.0, %v5708
      %v5710 = vpop.f32.mrb[0].mxu0
      %v5711 = vpop.f32.mrb[0].mxu0
      %v5712 = vadd.f32 0.0, %v5711
      %v5713 = vpop.f32.mrb[0].mxu0
      %5714 = vdwg.mxu0
      %5715 = vmatprep.subr.bf16.mxu0 0
      %5716 = vmatpush1.bf16.msra.mxu0 %v5522
      %5717 = vmatprep.subr.bf16.mxu0 0
      %5718 = vmatpush1.bf16.msra.mxu0 %v5523
      %5719 = vmatprep.subr.bf16.mxu0 0
      %5720 = vmatpush1.bf16.msra.mxu0 %v5524
      %5721 = vmatprep.subr.bf16.mxu0 0
      %5722 = vmatpush1.bf16.msra.mxu0 %v5525
      %5723 = vmatprep.subr.bf16.mxu0 0
      %5724 = vmatpush1.bf16.msra.mxu0 %v5526
      %5725 = vmatprep.subr.bf16.mxu0 0
      %5726 = vmatpush1.bf16.msra.mxu0 %v5527
      %5727 = vmatprep.subr.bf16.mxu0 0
      %5728 = vmatpush1.bf16.msra.mxu0 %v5528
      %5729 = vmatprep.subr.bf16.mxu0 0
      %5730 = vmatpush1.bf16.msra.mxu0 %v5529
      %5731 = vmatprep.subr.bf16.mxu0 0
      %5732 = vmatpush1.bf16.msra.mxu0 0
      %5733 = vmatprep.subr.bf16.mxu0 0
      %5734 = vmatpush1.bf16.msra.mxu0 0
      %5735 = vmatprep.subr.bf16.mxu0 0
      %5736 = vmatpush1.bf16.msra.mxu0 0
      %5737 = vmatprep.subr.bf16.mxu0 0
      %5738 = vmatpush1.bf16.msra.mxu0 0
      %5739 = vmatprep.subr.bf16.mxu0 0
      %5740 = vmatpush1.bf16.msra.mxu0 0
      %5741 = vmatprep.subr.bf16.mxu0 0
      %5742 = vmatpush1.bf16.msra.mxu0 0
      %5743 = vmatprep.subr.bf16.mxu0 0
      %5744 = vmatpush1.bf16.msra.mxu0 0
      %5745 = vmatprep.subr.bf16.mxu0 0
      %5746 = vmatpush1.bf16.msra.mxu0 0
      %5747 = vmatprep.mubr.bf16.mxu0 0
      %5748 = vmatmul.mubr.bf16.gmra.mrb[0].mxu0 %v5315
      %v5749 = vpop.f32.mrb[0].mxu0
      %v5750 = vadd.f32 %v5589, %v5749
      %v5751 = vpop.f32.mrb[0].mxu0
      %v5752 = vpop.f32.mrb[0].mxu0
      %v5753 = vadd.f32 %v5592, %v5752
      %v5754 = vpop.f32.mrb[0].mxu0
      %5755 = vmatprep.mubr.bf16.mxu0 0
      %5756 = vmatmul.mubr.bf16.gmra.mrb[0].mxu0 %v5318
      %v5757 = vpop.f32.mrb[0].mxu0
      %v5758 = vadd.f32 %v5597, %v5757
      %v5759 = vpop.f32.mrb[0].mxu0
      %v5760 = vpop.f32.mrb[0].mxu0
      %v5761 = vadd.f32 %v5600, %v5760
      %v5762 = vpop.f32.mrb[0].mxu0
      %5763 = vmatprep.mubr.bf16.mxu0 0
      %5764 = vmatmul.mubr.bf16.gmra.mrb[0].mxu0 %v5321
      %v5765 = vpop.f32.mrb[0].mxu0
      %v5766 = vadd.f32 %v5605, %v5765
      %v5767 = vpop.f32.mrb[0].mxu0
      %v5768 = vpop.f32.mrb[0].mxu0
      %v5769 = vadd.f32 %v5608, %v5768
      %v5770 = vpop.f32.mrb[0].mxu0
      %5771 = vmatprep.mubr.bf16.mxu0 0
      %5772 = vmatmul.mubr.bf16.gmra.mrb[0].mxu0 %v5324
      %v5773 = vpop.f32.mrb[0].mxu0
      %v5774 = vadd.f32 %v5613, %v5773
      %v5775 = vpop.f32.mrb[0].mxu0
      %v5776 = vpop.f32.mrb[0].mxu0
      %v5777 = vadd.f32 %v5616, %v5776
      %v5778 = vpop.f32.mrb[0].mxu0
      %5779 = vmatprep.mubr.bf16.mxu0 0
      %5780 = vmatmul.mubr.bf16.gmra.mrb[0].mxu0 %v5327
      %v5781 = vpop.f32.mrb[0].mxu0
      %v5782 = vadd.f32 %v5621, %v5781
      %v5783 = vpop.f32.mrb[0].mxu0
      %v5784 = vpop.f32.mrb[0].mxu0
      %v5785 = vadd.f32 %v5624, %v5784
      %v5786 = vpop.f32.mrb[0].mxu0
      %5787 = vmatprep.mubr.bf16.mxu0 0
      %5788 = vmatmul.mubr.bf16.gmra.mrb[0].mxu0 %v5330
      %v5789 = vpop.f32.mrb[0].mxu0
      %v5790 = vadd.f32 %v5629, %v5789
      %v5791 = vpop.f32.mrb[0].mxu0
      %v5792 = vpop.f32.mrb[0].mxu0
      %v5793 = vadd.f32 %v5632, %v5792
      %v5794 = vpop.f32.mrb[0].mxu0
      %5795 = vmatprep.mubr.bf16.mxu0 0
      %5796 = vmatmul.mubr.bf16.gmra.mrb[0].mxu0 %v5333
      %v5797 = vpop.f32.mrb[0].mxu0
      %v5798 = vadd.f32 %v5637, %v5797
      %v5799 = vpop.f32.mrb[0].mxu0
      %v5800 = vpop.f32.mrb[0].mxu0
      %v5801 = vadd.f32 %v5640, %v5800
      %v5802 = vpop.f32.mrb[0].mxu0
      %5803 = vmatprep.mubr.bf16.mxu0 0
      %5804 = vmatmul.mubr.bf16.gmra.mrb[0].mxu0 %v5336
      %v5805 = vpop.f32.mrb[0].mxu0
      %v5806 = vadd.f32 %v5645, %v5805
      %v5807 = vpop.f32.mrb[0].mxu0
      %v5808 = vpop.f32.mrb[0].mxu0
      %v5809 = vadd.f32 %v5648, %v5808
      %v5810 = vpop.f32.mrb[0].mxu0
      %5811 = vmatprep.mubr.bf16.mxu0 0
      %5812 = vmatmul.mubr.bf16.gmra.mrb[0].mxu0 %v5339
      %v5813 = vpop.f32.mrb[0].mxu0
      %v5814 = vadd.f32 %v5653, %v5813
      %v5815 = vpop.f32.mrb[0].mxu0
      %v5816 = vpop.f32.mrb[0].mxu0
      %v5817 = vadd.f32 %v5656, %v5816
      %v5818 = vpop.f32.mrb[0].mxu0
      %5819 = vmatprep.mubr.bf16.mxu0 0
      %5820 = vmatmul.mubr.bf16.gmra.mrb[0].mxu0 %v5342
      %v5821 = vpop.f32.mrb[0].mxu0
      %v5822 = vadd.f32 %v5661, %v5821
      %v5823 = vpop.f32.mrb[0].mxu0
      %v5824 = vpop.f32.mrb[0].mxu0
      %v5825 = vadd.f32 %v5664, %v5824
      %v5826 = vpop.f32.mrb[0].mxu0
      %5827 = vmatprep.mubr.bf16.mxu0 0
      %5828 = vmatmul.mubr.bf16.gmra.mrb[0].mxu0 %v5345
      %v5829 = vpop.f32.mrb[0].mxu0
      %v5830 = vadd.f32 %v5669, %v5829
      %v5831 = vpop.f32.mrb[0].mxu0
      %v5832 = vpop.f32.mrb[0].mxu0
      %v5833 = vadd.f32 %v5672, %v5832
      %v5834 = vpop.f32.mrb[0].mxu0
      %5835 = vmatprep.mubr.bf16.mxu0 0
      %5836 = vmatmul.mubr.bf16.gmra.mrb[0].mxu0 %v5348
      %v5837 = vpop.f32.mrb[0].mxu0
      %v5838 = vadd.f32 %v5677, %v5837
      %v5839 = vpop.f32.mrb[0].mxu0
      %v5840 = vpop.f32.mrb[0].mxu0
      %v5841 = vadd.f32 %v5680, %v5840
      %v5842 = vpop.f32.mrb[0].mxu0
      %5843 = vmatprep.mubr.bf16.mxu0 0
      %5844 = vmatmul.mubr.bf16.gmra.mrb[0].mxu0 %v5351
      %v5845 = vpop.f32.mrb[0].mxu0
      %v5846 = vadd.f32 %v5685, %v5845
      %v5847 = vpop.f32.mrb[0].mxu0
      %v5848 = vpop.f32.mrb[0].mxu0
      %v5849 = vadd.f32 %v5688, %v5848
      %v5850 = vpop.f32.mrb[0].mxu0
      %5851 = vmatprep.mubr.bf16.mxu0 0
      %5852 = vmatmul.mubr.bf16.gmra.mrb[0].mxu0 %v5354
      %v5853 = vpop.f32.mrb[0].mxu0
      %v5854 = vadd.f32 %v5693, %v5853
      %v5855 = vpop.f32.mrb[0].mxu0
      %v5856 = vpop.f32.mrb[0].mxu0
      %v5857 = vadd.f32 %v5696, %v5856
      %v5858 = vpop.f32.mrb[0].mxu0
      %5859 = vmatprep.mubr.bf16.mxu0 0
      %5860 = vmatmul.mubr.bf16.gmra.mrb[0].mxu0 %v5357
      %v5861 = vpop.f32.mrb[0].mxu0
      %v5862 = vadd.f32 %v5701, %v5861
      %v5863 = vpop.f32.mrb[0].mxu0
      %v5864 = vpop.f32.mrb[0].mxu0
      %v5865 = vadd.f32 %v5704, %v5864
      %v5866 = vpop.f32.mrb[0].mxu0
      %5867 = vmatprep.mubr.bf16.mxu0 0
      %5868 = vmatmul.mubr.bf16.gmra.mrb[0].mxu0 %v5360
      %v5869 = vpop.f32.mrb[0].mxu0
      %v5870 = vadd.f32 %v5709, %v5869
      %v5871 = vpop.f32.mrb[0].mxu0
      %v5872 = vpop.f32.mrb[0].mxu0
      %v5873 = vadd.f32 %v5712, %v5872
      %v5874 = vpop.f32.mrb[0].mxu0
      %5875 = vdwg.mxu0
      %v5924 = vunpack.c.l.b16 %v5264
      %v5925 = vunpack.c.l.b16 %v5265
      %v5926 = vunpack.c.l.b16 %v5266
      %v5927 = vunpack.c.l.b16 %v5267
      %v5928 = vunpack.c.l.b16 %v5268
      %v5929 = vunpack.c.l.b16 %v5269
      %v5930 = vunpack.c.l.b16 %v5270
      %v5931 = vunpack.c.l.b16 %v5271
      %v5932 = vunpack.c.l.b16 %v5272
      %v5933 = vunpack.c.l.b16 %v5273
      %v5934 = vunpack.c.l.b16 %v5274
      %v5935 = vunpack.c.l.b16 %v5275
      %v5936 = vunpack.c.l.b16 %v5276
      %v5937 = vunpack.c.l.b16 %v5277
      %v5938 = vunpack.c.l.b16 %v5278
      %v5939 = vunpack.c.l.b16 %v5279
      %v5940 = vunpack.c.l.b16 %v5280
      %v5941 = vunpack.c.l.b16 %v5281
      %v5942 = vunpack.c.l.b16 %v5282
      %v5943 = vunpack.c.l.b16 %v5283
      %v5944 = vunpack.c.l.b16 %v5284
      %v5945 = vunpack.c.l.b16 %v5285
      %v5946 = vunpack.c.l.b16 %v5286
      %v5947 = vunpack.c.l.b16 %v5287
      %v5948 = vunpack.c.l.b16 %v5288
      %v5949 = vunpack.c.l.b16 %v5289
      %v5950 = vunpack.c.l.b16 %v5290
      %v5951 = vunpack.c.l.b16 %v5291
      %v5952 = vunpack.c.l.b16 %v5292
      %v5953 = vunpack.c.l.b16 %v5293
      %v5954 = vunpack.c.l.b16 %v5294
      %v5955 = vunpack.c.l.b16 %v5295
      %v5956 = vunpack.c.l.b16 %v5296
      %v5957 = vunpack.c.l.b16 %v5297
      %v5958 = vunpack.c.l.b16 %v5298
      %v5959 = vunpack.c.l.b16 %v5299
      %v5960 = vunpack.c.l.b16 %v5300
      %v5961 = vunpack.c.l.b16 %v5301
      %v5962 = vunpack.c.l.b16 %v5302
      %v5963 = vunpack.c.l.b16 %v5303
      %v5964 = vunpack.c.l.b16 %v5304
      %v5965 = vunpack.c.l.b16 %v5305
      %v5966 = vunpack.c.l.b16 %v5306
      %v5967 = vunpack.c.l.b16 %v5307
      %v5968 = vunpack.c.l.b16 %v5308
      %v5969 = vunpack.c.l.b16 %v5309
      %v5970 = vunpack.c.l.b16 %v5310
      %v5971 = vunpack.c.l.b16 %v5311
      %v5972 = vpack.c.b16 %v5925, %v5924
      %v5973 = vpack.c.b16 %v5927, %v5926
      %v5974 = vpack.c.b16 %v5929, %v5928
      %v5975 = vpack.c.b16 %v5931, %v5930
      %v5976 = vpack.c.b16 %v5933, %v5932
      %v5977 = vpack.c.b16 %v5935, %v5934
      %v5978 = vpack.c.b16 %v5937, %v5936
      %v5979 = vpack.c.b16 %v5939, %v5938
      %v5980 = vpack.c.b16 %v5941, %v5940
      %v5981 = vpack.c.b16 %v5943, %v5942
      %v5982 = vpack.c.b16 %v5945, %v5944
      %v5983 = vpack.c.b16 %v5947, %v5946
      %v5984 = vpack.c.b16 %v5949, %v5948
      %v5985 = vpack.c.b16 %v5951, %v5950
      %v5986 = vpack.c.b16 %v5953, %v5952
      %v5987 = vpack.c.b16 %v5955, %v5954
      %v5988 = vpack.c.b16 %v5957, %v5956
      %v5989 = vpack.c.b16 %v5959, %v5958
      %v5990 = vpack.c.b16 %v5961, %v5960
      %v5991 = vpack.c.b16 %v5963, %v5962
      %v5992 = vpack.c.b16 %v5965, %v5964
      %v5993 = vpack.c.b16 %v5967, %v5966
      %v5994 = vpack.c.b16 %v5969, %v5968
      %v5995 = vpack.c.b16 %v5971, %v5970
      %6020 = vmatprep.subr.bf16.mxu0 0
      %6021 = vmatpush1.bf16.msra.mxu0 %v5972
      %6022 = vmatprep.subr.bf16.mxu0 0
      %6023 = vmatpush1.bf16.msra.mxu0 %v5973
      %6024 = vmatprep.subr.bf16.mxu0 0
      %6025 = vmatpush1.bf16.msra.mxu0 %v5974
      %6026 = vmatprep.subr.bf16.mxu0 0
      %6027 = vmatpush1.bf16.msra.mxu0 %v5975
      %6028 = vmatprep.subr.bf16.mxu0 0
      %6029 = vmatpush1.bf16.msra.mxu0 %v5976
      %6030 = vmatprep.subr.bf16.mxu0 0
      %6031 = vmatpush1.bf16.msra.mxu0 %v5977
      %6032 = vmatprep.subr.bf16.mxu0 0
      %6033 = vmatpush1.bf16.msra.mxu0 %v5978
      %6034 = vmatprep.subr.bf16.mxu0 0
      %6035 = vmatpush1.bf16.msra.mxu0 %v5979
      %6036 = vmatprep.subr.bf16.mxu0 0
      %6037 = vmatpush1.bf16.msra.mxu0 %v5980
      %6038 = vmatprep.subr.bf16.mxu0 0
      %6039 = vmatpush1.bf16.msra.mxu0 %v5981
      %6040 = vmatprep.subr.bf16.mxu0 0
      %6041 = vmatpush1.bf16.msra.mxu0 %v5982
      %6042 = vmatprep.subr.bf16.mxu0 0
      %6043 = vmatpush1.bf16.msra.mxu0 %v5983
      %6044 = vmatprep.subr.bf16.mxu0 0
      %6045 = vmatpush1.bf16.msra.mxu0 %v5984
      %6046 = vmatprep.subr.bf16.mxu0 0
      %6047 = vmatpush1.bf16.msra.mxu0 %v5985
      %6048 = vmatprep.subr.bf16.mxu0 0
      %6049 = vmatpush1.bf16.msra.mxu0 %v5986
      %6050 = vmatprep.subr.bf16.mxu0 0
      %6051 = vmatpush1.bf16.msra.mxu0 %v5987
      %6052 = vmatprep.mubr.bf16.mxu0 %v5217
      %6053 = vmatmul.mubr.bf16.gmra.mrb[0].mxu0 %v5216
      %v6054 = vpop.f32.mrb[0].mxu0
      %v6055 = vadd.f32 %v5750, %v6054
      %v6056 = vpop.f32.mrb[0].mxu0
      %v6057 = vpop.f32.mrb[0].mxu0
      %v6058 = vadd.f32 %v5753, %v6057
      %v6059 = vpop.f32.mrb[0].mxu0
      %6060 = vmatprep.mubr.bf16.mxu0 %v5220
      %6061 = vmatmul.mubr.bf16.gmra.mrb[0].mxu0 %v5219
      %v6062 = vpop.f32.mrb[0].mxu0
      %v6063 = vadd.f32 %v5758, %v6062
      %v6064 = vpop.f32.mrb[0].mxu0
      %v6065 = vpop.f32.mrb[0].mxu0
      %v6066 = vadd.f32 %v5761, %v6065
      %v6067 = vpop.f32.mrb[0].mxu0
      %6068 = vmatprep.mubr.bf16.mxu0 %v5223
      %6069 = vmatmul.mubr.bf16.gmra.mrb[0].mxu0 %v5222
      %v6070 = vpop.f32.mrb[0].mxu0
      %v6071 = vadd.f32 %v5766, %v6070
      %v6072 = vpop.f32.mrb[0].mxu0
      %v6073 = vpop.f32.mrb[0].mxu0
      %v6074 = vadd.f32 %v5769, %v6073
      %v6075 = vpop.f32.mrb[0].mxu0
      %6076 = vmatprep.mubr.bf16.mxu0 %v5226
      %6077 = vmatmul.mubr.bf16.gmra.mrb[0].mxu0 %v5225
      %v6078 = vpop.f32.mrb[0].mxu0
      %v6079 = vadd.f32 %v5774, %v6078
      %v6080 = vpop.f32.mrb[0].mxu0
      %v6081 = vpop.f32.mrb[0].mxu0
      %v6082 = vadd.f32 %v5777, %v6081
      %v6083 = vpop.f32.mrb[0].mxu0
      %6084 = vmatprep.mubr.bf16.mxu0 %v5229
      %6085 = vmatmul.mubr.bf16.gmra.mrb[0].mxu0 %v5228
      %v6086 = vpop.f32.mrb[0].mxu0
      %v6087 = vadd.f32 %v5782, %v6086
      %v6088 = vpop.f32.mrb[0].mxu0
      %v6089 = vpop.f32.mrb[0].mxu0
      %v6090 = vadd.f32 %v5785, %v6089
      %v6091 = vpop.f32.mrb[0].mxu0
      %6092 = vmatprep.mubr.bf16.mxu0 %v5232
      %6093 = vmatmul.mubr.bf16.gmra.mrb[0].mxu0 %v5231
      %v6094 = vpop.f32.mrb[0].mxu0
      %v6095 = vadd.f32 %v5790, %v6094
      %v6096 = vpop.f32.mrb[0].mxu0
      %v6097 = vpop.f32.mrb[0].mxu0
      %v6098 = vadd.f32 %v5793, %v6097
      %v6099 = vpop.f32.mrb[0].mxu0
      %6100 = vmatprep.mubr.bf16.mxu0 %v5235
      %6101 = vmatmul.mubr.bf16.gmra.mrb[0].mxu0 %v5234
      %v6102 = vpop.f32.mrb[0].mxu0
      %v6103 = vadd.f32 %v5798, %v6102
      %v6104 = vpop.f32.mrb[0].mxu0
      %v6105 = vpop.f32.mrb[0].mxu0
      %v6106 = vadd.f32 %v5801, %v6105
      %v6107 = vpop.f32.mrb[0].mxu0
      %6108 = vmatprep.mubr.bf16.mxu0 %v5238
      %6109 = vmatmul.mubr.bf16.gmra.mrb[0].mxu0 %v5237
      %v6110 = vpop.f32.mrb[0].mxu0
      %v6111 = vadd.f32 %v5806, %v6110
      %v6112 = vpop.f32.mrb[0].mxu0
      %v6113 = vpop.f32.mrb[0].mxu0
      %v6114 = vadd.f32 %v5809, %v6113
      %v6115 = vpop.f32.mrb[0].mxu0
      %6116 = vmatprep.mubr.bf16.mxu0 %v5241
      %6117 = vmatmul.mubr.bf16.gmra.mrb[0].mxu0 %v5240
      %v6118 = vpop.f32.mrb[0].mxu0
      %v6119 = vadd.f32 %v5814, %v6118
      %v6120 = vpop.f32.mrb[0].mxu0
      %v6121 = vpop.f32.mrb[0].mxu0
      %v6122 = vadd.f32 %v5817, %v6121
      %v6123 = vpop.f32.mrb[0].mxu0
      %6124 = vmatprep.mubr.bf16.mxu0 %v5244
      %6125 = vmatmul.mubr.bf16.gmra.mrb[0].mxu0 %v5243
      %v6126 = vpop.f32.mrb[0].mxu0
      %v6127 = vadd.f32 %v5822, %v6126
      %v6128 = vpop.f32.mrb[0].mxu0
      %v6129 = vpop.f32.mrb[0].mxu0
      %v6130 = vadd.f32 %v5825, %v6129
      %v6131 = vpop.f32.mrb[0].mxu0
      %6132 = vmatprep.mubr.bf16.mxu0 %v5247
      %6133 = vmatmul.mubr.bf16.gmra.mrb[0].mxu0 %v5246
      %v6134 = vpop.f32.mrb[0].mxu0
      %v6135 = vadd.f32 %v5830, %v6134
      %v6136 = vpop.f32.mrb[0].mxu0
      %v6137 = vpop.f32.mrb[0].mxu0
      %v6138 = vadd.f32 %v5833, %v6137
      %v6139 = vpop.f32.mrb[0].mxu0
      %6140 = vmatprep.mubr.bf16.mxu0 %v5250
      %6141 = vmatmul.mubr.bf16.gmra.mrb[0].mxu0 %v5249
      %v6142 = vpop.f32.mrb[0].mxu0
      %v6143 = vadd.f32 %v5838, %v6142
      %v6144 = vpop.f32.mrb[0].mxu0
      %v6145 = vpop.f32.mrb[0].mxu0
      %v6146 = vadd.f32 %v5841, %v6145
      %v6147 = vpop.f32.mrb[0].mxu0
      %6148 = vmatprep.mubr.bf16.mxu0 %v5253
      %6149 = vmatmul.mubr.bf16.gmra.mrb[0].mxu0 %v5252
      %v6150 = vpop.f32.mrb[0].mxu0
      %v6151 = vadd.f32 %v5846, %v6150
      %v6152 = vpop.f32.mrb[0].mxu0
      %v6153 = vpop.f32.mrb[0].mxu0
      %v6154 = vadd.f32 %v5849, %v6153
      %v6155 = vpop.f32.mrb[0].mxu0
      %6156 = vmatprep.mubr.bf16.mxu0 %v5256
      %6157 = vmatmul.mubr.bf16.gmra.mrb[0].mxu0 %v5255
      %v6158 = vpop.f32.mrb[0].mxu0
      %v6159 = vadd.f32 %v5854, %v6158
      %v6160 = vpop.f32.mrb[0].mxu0
      %v6161 = vpop.f32.mrb[0].mxu0
      %v6162 = vadd.f32 %v5857, %v6161
      %v6163 = vpop.f32.mrb[0].mxu0
      %6164 = vmatprep.mubr.bf16.mxu0 %v5259
      %6165 = vmatmul.mubr.bf16.gmra.mrb[0].mxu0 %v5258
      %v6166 = vpop.f32.mrb[0].mxu0
      %v6167 = vadd.f32 %v5862, %v6166
      %v6168 = vpop.f32.mrb[0].mxu0
      %v6169 = vpop.f32.mrb[0].mxu0
      %v6170 = vadd.f32 %v5865, %v6169
      %v6171 = vpop.f32.mrb[0].mxu0
      %6172 = vmatprep.mubr.bf16.mxu0 %v5262
      %6173 = vmatmul.mubr.bf16.gmra.mrb[0].mxu0 %v5261
      %v6174 = vpop.f32.mrb[0].mxu0
      %v6175 = vadd.f32 %v5870, %v6174
      %v6176 = vpop.f32.mrb[0].mxu0
      %v6177 = vpop.f32.mrb[0].mxu0
      %v6178 = vadd.f32 %v5873, %v6177
      %v6179 = vpop.f32.mrb[0].mxu0
      %6180 = vdwg.mxu0
      %6181 = vmatprep.subr.bf16.mxu0 0
      %6182 = vmatpush1.bf16.msra.mxu0 %v5988
      %6183 = vmatprep.subr.bf16.mxu0 0
      %6184 = vmatpush1.bf16.msra.mxu0 %v5989
      %6185 = vmatprep.subr.bf16.mxu0 0
      %6186 = vmatpush1.bf16.msra.mxu0 %v5990
      %6187 = vmatprep.subr.bf16.mxu0 0
      %6188 = vmatpush1.bf16.msra.mxu0 %v5991
      %6189 = vmatprep.subr.bf16.mxu0 0
      %6190 = vmatpush1.bf16.msra.mxu0 %v5992
      %6191 = vmatprep.subr.bf16.mxu0 0
      %6192 = vmatpush1.bf16.msra.mxu0 %v5993
      %6193 = vmatprep.subr.bf16.mxu0 0
      %6194 = vmatpush1.bf16.msra.mxu0 %v5994
      %6195 = vmatprep.subr.bf16.mxu0 0
      %6196 = vmatpush1.bf16.msra.mxu0 %v5995
      %6197 = vmatprep.subr.bf16.mxu0 0
      %6198 = vmatpush1.bf16.msra.mxu0 0
      %6199 = vmatprep.subr.bf16.mxu0 0
      %6200 = vmatpush1.bf16.msra.mxu0 0
      %6201 = vmatprep.subr.bf16.mxu0 0
      %6202 = vmatpush1.bf16.msra.mxu0 0
      %6203 = vmatprep.subr.bf16.mxu0 0
      %6204 = vmatpush1.bf16.msra.mxu0 0
      %6205 = vmatprep.subr.bf16.mxu0 0
      %6206 = vmatpush1.bf16.msra.mxu0 0
      %6207 = vmatprep.subr.bf16.mxu0 0
      %6208 = vmatpush1.bf16.msra.mxu0 0
      %6209 = vmatprep.subr.bf16.mxu0 0
      %6210 = vmatpush1.bf16.msra.mxu0 0
      %6211 = vmatprep.subr.bf16.mxu0 0
      %6212 = vmatpush1.bf16.msra.mxu0 0
      %6213 = vmatprep.mubr.bf16.mxu0 0
      %6214 = vmatmul.mubr.bf16.gmra.mrb[0].mxu0 %v5218
      %v6215 = vpop.f32.mrb[0].mxu0
      %v6216 = vadd.f32 %v6055, %v6215
      %v6217 = vpop.f32.mrb[0].mxu0
      %v6218 = vpop.f32.mrb[0].mxu0
      %v6219 = vadd.f32 %v6058, %v6218
      %v6220 = vpop.f32.mrb[0].mxu0
      %6221 = vmatprep.mubr.bf16.mxu0 0
      %6222 = vmatmul.mubr.bf16.gmra.mrb[0].mxu0 %v5221
      %v6223 = vpop.f32.mrb[0].mxu0
      %v6224 = vadd.f32 %v6063, %v6223
      %v6225 = vpop.f32.mrb[0].mxu0
      %v6226 = vpop.f32.mrb[0].mxu0
      %v6227 = vadd.f32 %v6066, %v6226
      %v6228 = vpop.f32.mrb[0].mxu0
      %6229 = vmatprep.mubr.bf16.mxu0 0
      %6230 = vmatmul.mubr.bf16.gmra.mrb[0].mxu0 %v5224
      %v6231 = vpop.f32.mrb[0].mxu0
      %v6232 = vadd.f32 %v6071, %v6231
      %v6233 = vpop.f32.mrb[0].mxu0
      %v6234 = vpop.f32.mrb[0].mxu0
      %v6235 = vadd.f32 %v6074, %v6234
      %v6236 = vpop.f32.mrb[0].mxu0
      %6237 = vmatprep.mubr.bf16.mxu0 0
      %6238 = vmatmul.mubr.bf16.gmra.mrb[0].mxu0 %v5227
      %v6239 = vpop.f32.mrb[0].mxu0
      %v6240 = vadd.f32 %v6079, %v6239
      %v6241 = vpop.f32.mrb[0].mxu0
      %v6242 = vpop.f32.mrb[0].mxu0
      %v6243 = vadd.f32 %v6082, %v6242
      %v6244 = vpop.f32.mrb[0].mxu0
      %6245 = vmatprep.mubr.bf16.mxu0 0
      %6246 = vmatmul.mubr.bf16.gmra.mrb[0].mxu0 %v5230
      %v6247 = vpop.f32.mrb[0].mxu0
      %v6248 = vadd.f32 %v6087, %v6247
      %v6249 = vpop.f32.mrb[0].mxu0
      %v6250 = vpop.f32.mrb[0].mxu0
      %v6251 = vadd.f32 %v6090, %v6250
      %v6252 = vpop.f32.mrb[0].mxu0
      %6253 = vmatprep.mubr.bf16.mxu0 0
      %6254 = vmatmul.mubr.bf16.gmra.mrb[0].mxu0 %v5233
      %v6255 = vpop.f32.mrb[0].mxu0
      %v6256 = vadd.f32 %v6095, %v6255
      %v6257 = vpop.f32.mrb[0].mxu0
      %v6258 = vpop.f32.mrb[0].mxu0
      %v6259 = vadd.f32 %v6098, %v6258
      %v6260 = vpop.f32.mrb[0].mxu0
      %6261 = vmatprep.mubr.bf16.mxu0 0
      %6262 = vmatmul.mubr.bf16.gmra.mrb[0].mxu0 %v5236
      %v6263 = vpop.f32.mrb[0].mxu0
      %v6264 = vadd.f32 %v6103, %v6263
      %v6265 = vpop.f32.mrb[0].mxu0
      %v6266 = vpop.f32.mrb[0].mxu0
      %v6267 = vadd.f32 %v6106, %v6266
      %v6268 = vpop.f32.mrb[0].mxu0
      %6269 = vmatprep.mubr.bf16.mxu0 0
      %6270 = vmatmul.mubr.bf16.gmra.mrb[0].mxu0 %v5239
      %v6271 = vpop.f32.mrb[0].mxu0
      %v6272 = vadd.f32 %v6111, %v6271
      %v6273 = vpop.f32.mrb[0].mxu0
      %v6274 = vpop.f32.mrb[0].mxu0
      %v6275 = vadd.f32 %v6114, %v6274
      %v6276 = vpop.f32.mrb[0].mxu0
      %6277 = vmatprep.mubr.bf16.mxu0 0
      %6278 = vmatmul.mubr.bf16.gmra.mrb[0].mxu0 %v5242
      %v6279 = vpop.f32.mrb[0].mxu0
      %v6280 = vadd.f32 %v6119, %v6279
      %v6281 = vpop.f32.mrb[0].mxu0
      %v6282 = vpop.f32.mrb[0].mxu0
      %v6283 = vadd.f32 %v6122, %v6282
      %v6284 = vpop.f32.mrb[0].mxu0
      %6285 = vmatprep.mubr.bf16.mxu0 0
      %6286 = vmatmul.mubr.bf16.gmra.mrb[0].mxu0 %v5245
      %v6287 = vpop.f32.mrb[0].mxu0
      %v6288 = vadd.f32 %v6127, %v6287
      %v6289 = vpop.f32.mrb[0].mxu0
      %v6290 = vpop.f32.mrb[0].mxu0
      %v6291 = vadd.f32 %v6130, %v6290
      %v6292 = vpop.f32.mrb[0].mxu0
      %6293 = vmatprep.mubr.bf16.mxu0 0
      %6294 = vmatmul.mubr.bf16.gmra.mrb[0].mxu0 %v5248
      %v6295 = vpop.f32.mrb[0].mxu0
      %v6296 = vadd.f32 %v6135, %v6295
      %v6297 = vpop.f32.mrb[0].mxu0
      %v6298 = vpop.f32.mrb[0].mxu0
      %v6299 = vadd.f32 %v6138, %v6298
      %v6300 = vpop.f32.mrb[0].mxu0
      %6301 = vmatprep.mubr.bf16.mxu0 0
      %6302 = vmatmul.mubr.bf16.gmra.mrb[0].mxu0 %v5251
      %v6303 = vpop.f32.mrb[0].mxu0
      %v6304 = vadd.f32 %v6143, %v6303
      %v6305 = vpop.f32.mrb[0].mxu0
      %v6306 = vpop.f32.mrb[0].mxu0
      %v6307 = vadd.f32 %v6146, %v6306
      %v6308 = vpop.f32.mrb[0].mxu0
      %6309 = vmatprep.mubr.bf16.mxu0 0
      %6310 = vmatmul.mubr.bf16.gmra.mrb[0].mxu0 %v5254
      %v6311 = vpop.f32.mrb[0].mxu0
      %v6312 = vadd.f32 %v6151, %v6311
      %v6313 = vpop.f32.mrb[0].mxu0
      %v6314 = vpop.f32.mrb[0].mxu0
      %v6315 = vadd.f32 %v6154, %v6314
      %v6316 = vpop.f32.mrb[0].mxu0
      %6317 = vmatprep.mubr.bf16.mxu0 0
      %6318 = vmatmul.mubr.bf16.gmra.mrb[0].mxu0 %v5257
      %v6319 = vpop.f32.mrb[0].mxu0
      %v6320 = vadd.f32 %v6159, %v6319
      %v6321 = vpop.f32.mrb[0].mxu0
      %v6322 = vpop.f32.mrb[0].mxu0
      %v6323 = vadd.f32 %v6162, %v6322
      %v6324 = vpop.f32.mrb[0].mxu0
      %6325 = vmatprep.mubr.bf16.mxu0 0
      %6326 = vmatmul.mubr.bf16.gmra.mrb[0].mxu0 %v5260
      %v6327 = vpop.f32.mrb[0].mxu0
      %v6328 = vadd.f32 %v6167, %v6327
      %v6329 = vpop.f32.mrb[0].mxu0
      %v6330 = vpop.f32.mrb[0].mxu0
      %v6331 = vadd.f32 %v6170, %v6330
      %v6332 = vpop.f32.mrb[0].mxu0
      %6333 = vmatprep.mubr.bf16.mxu0 0
      %6334 = vmatmul.mubr.bf16.gmra.mrb[0].mxu0 %v5263
      %v6335 = vpop.f32.mrb[0].mxu0
      %v6336 = vadd.f32 %v6175, %v6335
      %v6337 = vpop.f32.mrb[0].mxu0
      %v6338 = vpop.f32.mrb[0].mxu0
      %v6339 = vadd.f32 %v6178, %v6338
      %v6340 = vpop.f32.mrb[0].mxu0
      %6341 = vdwg.mxu0
      %s6342 = scalar_lea.vmem [#allocation5], 48
      %v6343 = vld [vmem:[%s6342] sm:$0xff]
      %v6344 = vld [vmem:[%s6342 + $0x8] sm:$0xff]
      %v6345 = vld [vmem:[%s6342 + $0x10] sm:$0xff]
      %v6346 = vld [vmem:[%s6342 + $0x18] sm:$0xff]
      %v6347 = vld [vmem:[%s6342 + $0x20] sm:$0xff]
      %v6348 = vld [vmem:[%s6342 + $0x28] sm:$0xff]
      %v6349 = vld [vmem:[%s6342 + $0x30] sm:$0xff]
      %v6350 = vld [vmem:[%s6342 + $0x38] sm:$0xff]
      %v6351 = vld [vmem:[%s6342 + $0x40] sm:$0xff]
      %v6352 = vld [vmem:[%s6342 + $0x48] sm:$0xff]
      %v6353 = vld [vmem:[%s6342 + $0x50] sm:$0xff]
      %v6354 = vld [vmem:[%s6342 + $0x58] sm:$0xff]
      %v6355 = vld [vmem:[%s6342 + $0x60] sm:$0xff]
      %v6356 = vld [vmem:[%s6342 + $0x68] sm:$0xff]
      %v6357 = vld [vmem:[%s6342 + $0x70] sm:$0xff]
      %v6358 = vld [vmem:[%s6342 + $0x78] sm:$0xff]
      %v6359 = vld [vmem:[%s6342 + $0x80] sm:$0xff]
      %v6360 = vld [vmem:[%s6342 + $0x88] sm:$0xff]
      %v6361 = vld [vmem:[%s6342 + $0x90] sm:$0xff]
      %v6362 = vld [vmem:[%s6342 + $0x98] sm:$0xff]
      %v6363 = vld [vmem:[%s6342 + $0xa0] sm:$0xff]
      %v6364 = vld [vmem:[%s6342 + $0xa8] sm:$0xff]
      %v6365 = vld [vmem:[%s6342 + $0xb0] sm:$0xff]
      %v6366 = vld [vmem:[%s6342 + $0xb8] sm:$0xff]
      %v6367 = vld [vmem:[%s6342 + $0xc0] sm:$0xff]
      %v6368 = vld [vmem:[%s6342 + $0xc8] sm:$0xff]
      %v6369 = vld [vmem:[%s6342 + $0xd0] sm:$0xff]
      %v6370 = vld [vmem:[%s6342 + $0xd8] sm:$0xff]
      %v6371 = vld [vmem:[%s6342 + $0xe0] sm:$0xff]
      %v6372 = vld [vmem:[%s6342 + $0xe8] sm:$0xff]
      %v6373 = vld [vmem:[%s6342 + $0xf0] sm:$0xff]
      %v6374 = vld [vmem:[%s6342 + $0xf8] sm:$0xff]
      %v6375 = vld [vmem:[%s6342 + $0x100] sm:$0xff]
      %v6376 = vld [vmem:[%s6342 + $0x108] sm:$0xff]
      %v6377 = vld [vmem:[%s6342 + $0x110] sm:$0xff]
      %v6378 = vld [vmem:[%s6342 + $0x118] sm:$0xff]
      %v6379 = vld [vmem:[%s6342 + $0x120] sm:$0xff]
      %v6380 = vld [vmem:[%s6342 + $0x128] sm:$0xff]
      %v6381 = vld [vmem:[%s6342 + $0x130] sm:$0xff]
      %v6382 = vld [vmem:[%s6342 + $0x138] sm:$0xff]
      %v6383 = vld [vmem:[%s6342 + $0x140] sm:$0xff]
      %v6384 = vld [vmem:[%s6342 + $0x148] sm:$0xff]
      %v6385 = vld [vmem:[%s6342 + $0x150] sm:$0xff]
      %v6386 = vld [vmem:[%s6342 + $0x158] sm:$0xff]
      %v6387 = vld [vmem:[%s6342 + $0x160] sm:$0xff]
      %v6388 = vld [vmem:[%s6342 + $0x168] sm:$0xff]
      %v6389 = vld [vmem:[%s6342 + $0x170] sm:$0xff]
      %v6390 = vld [vmem:[%s6342 + $0x178] sm:$0xff]
      %s6391 = scalar_lea.vmem %s2, 384
      %v6392 = vld [vmem:[%s6391] sm:$0xf]
      %v6393 = vld [vmem:[%s6391 + $0x4] sm:$0xf]
      %v6394 = vld [vmem:[%s6391 + $0x8] sm:$0xf]
      %v6395 = vld [vmem:[%s6391 + $0xc] sm:$0xf]
      %v6396 = vld [vmem:[%s6391 + $0x10] sm:$0xf]
      %v6397 = vld [vmem:[%s6391 + $0x14] sm:$0xf]
      %v6398 = vld [vmem:[%s6391 + $0x18] sm:$0xf]
      %v6399 = vld [vmem:[%s6391 + $0x1c] sm:$0xf]
      %v6400 = vld [vmem:[%s6391 + $0x20] sm:$0xf]
      %v6401 = vld [vmem:[%s6391 + $0x24] sm:$0xf]
      %v6402 = vld [vmem:[%s6391 + $0x28] sm:$0xf]
      %v6403 = vld [vmem:[%s6391 + $0x2c] sm:$0xf]
      %v6404 = vld [vmem:[%s6391 + $0x30] sm:$0xf]
      %v6405 = vld [vmem:[%s6391 + $0x34] sm:$0xf]
      %v6406 = vld [vmem:[%s6391 + $0x38] sm:$0xf]
      %v6407 = vld [vmem:[%s6391 + $0x3c] sm:$0xf]
      %v6408 = vld [vmem:[%s6391 + $0x40] sm:$0xf]
      %v6409 = vld [vmem:[%s6391 + $0x44] sm:$0xf]
      %v6410 = vld [vmem:[%s6391 + $0x48] sm:$0xf]
      %v6411 = vld [vmem:[%s6391 + $0x4c] sm:$0xf]
      %v6412 = vld [vmem:[%s6391 + $0x50] sm:$0xf]
      %v6413 = vld [vmem:[%s6391 + $0x54] sm:$0xf]
      %v6414 = vld [vmem:[%s6391 + $0x58] sm:$0xf]
      %v6415 = vld [vmem:[%s6391 + $0x5c] sm:$0xf]
      %v6416 = vld [vmem:[%s6391 + $0x60] sm:$0xf]
      %v6417 = vld [vmem:[%s6391 + $0x64] sm:$0xf]
      %v6418 = vld [vmem:[%s6391 + $0x68] sm:$0xf]
      %v6419 = vld [vmem:[%s6391 + $0x6c] sm:$0xf]
      %v6420 = vld [vmem:[%s6391 + $0x70] sm:$0xf]
      %v6421 = vld [vmem:[%s6391 + $0x74] sm:$0xf]
      %v6422 = vld [vmem:[%s6391 + $0x78] sm:$0xf]
      %v6423 = vld [vmem:[%s6391 + $0x7c] sm:$0xf]
      %v6424 = vld [vmem:[%s6391 + $0x80] sm:$0xf]
      %v6425 = vld [vmem:[%s6391 + $0x84] sm:$0xf]
      %v6426 = vld [vmem:[%s6391 + $0x88] sm:$0xf]
      %v6427 = vld [vmem:[%s6391 + $0x8c] sm:$0xf]
      %v6428 = vld [vmem:[%s6391 + $0x90] sm:$0xf]
      %v6429 = vld [vmem:[%s6391 + $0x94] sm:$0xf]
      %v6430 = vld [vmem:[%s6391 + $0x98] sm:$0xf]
      %v6431 = vld [vmem:[%s6391 + $0x9c] sm:$0xf]
      %v6432 = vld [vmem:[%s6391 + $0xa0] sm:$0xf]
      %v6433 = vld [vmem:[%s6391 + $0xa4] sm:$0xf]
      %v6434 = vld [vmem:[%s6391 + $0xa8] sm:$0xf]
      %v6435 = vld [vmem:[%s6391 + $0xac] sm:$0xf]
      %v6436 = vld [vmem:[%s6391 + $0xb0] sm:$0xf]
      %v6437 = vld [vmem:[%s6391 + $0xb4] sm:$0xf]
      %v6438 = vld [vmem:[%s6391 + $0xb8] sm:$0xf]
      %v6439 = vld [vmem:[%s6391 + $0xbc] sm:$0xf]
      %v6488 = vunpack.c.l.b16 %v6392
      %v6489 = vunpack.c.l.b16 %v6393
      %v6490 = vunpack.c.l.b16 %v6394
      %v6491 = vunpack.c.l.b16 %v6395
      %v6492 = vunpack.c.l.b16 %v6396
      %v6493 = vunpack.c.l.b16 %v6397
      %v6494 = vunpack.c.l.b16 %v6398
      %v6495 = vunpack.c.l.b16 %v6399
      %v6496 = vunpack.c.l.b16 %v6400
      %v6497 = vunpack.c.l.b16 %v6401
      %v6498 = vunpack.c.l.b16 %v6402
      %v6499 = vunpack.c.l.b16 %v6403
      %v6500 = vunpack.c.l.b16 %v6404
      %v6501 = vunpack.c.l.b16 %v6405
      %v6502 = vunpack.c.l.b16 %v6406
      %v6503 = vunpack.c.l.b16 %v6407
      %v6504 = vunpack.c.l.b16 %v6408
      %v6505 = vunpack.c.l.b16 %v6409
      %v6506 = vunpack.c.l.b16 %v6410
      %v6507 = vunpack.c.l.b16 %v6411
      %v6508 = vunpack.c.l.b16 %v6412
      %v6509 = vunpack.c.l.b16 %v6413
      %v6510 = vunpack.c.l.b16 %v6414
      %v6511 = vunpack.c.l.b16 %v6415
      %v6512 = vunpack.c.l.b16 %v6416
      %v6513 = vunpack.c.l.b16 %v6417
      %v6514 = vunpack.c.l.b16 %v6418
      %v6515 = vunpack.c.l.b16 %v6419
      %v6516 = vunpack.c.l.b16 %v6420
      %v6517 = vunpack.c.l.b16 %v6421
      %v6518 = vunpack.c.l.b16 %v6422
      %v6519 = vunpack.c.l.b16 %v6423
      %v6520 = vunpack.c.l.b16 %v6424
      %v6521 = vunpack.c.l.b16 %v6425
      %v6522 = vunpack.c.l.b16 %v6426
      %v6523 = vunpack.c.l.b16 %v6427
      %v6524 = vunpack.c.l.b16 %v6428
      %v6525 = vunpack.c.l.b16 %v6429
      %v6526 = vunpack.c.l.b16 %v6430
      %v6527 = vunpack.c.l.b16 %v6431
      %v6528 = vunpack.c.l.b16 %v6432
      %v6529 = vunpack.c.l.b16 %v6433
      %v6530 = vunpack.c.l.b16 %v6434
      %v6531 = vunpack.c.l.b16 %v6435
      %v6532 = vunpack.c.l.b16 %v6436
      %v6533 = vunpack.c.l.b16 %v6437
      %v6534 = vunpack.c.l.b16 %v6438
      %v6535 = vunpack.c.l.b16 %v6439
      %v6536 = vpack.c.b16 %v6489, %v6488
      %v6537 = vpack.c.b16 %v6491, %v6490
      %v6538 = vpack.c.b16 %v6493, %v6492
      %v6539 = vpack.c.b16 %v6495, %v6494
      %v6540 = vpack.c.b16 %v6497, %v6496
      %v6541 = vpack.c.b16 %v6499, %v6498
      %v6542 = vpack.c.b16 %v6501, %v6500
      %v6543 = vpack.c.b16 %v6503, %v6502
      %v6544 = vpack.c.b16 %v6505, %v6504
      %v6545 = vpack.c.b16 %v6507, %v6506
      %v6546 = vpack.c.b16 %v6509, %v6508
      %v6547 = vpack.c.b16 %v6511, %v6510
      %v6548 = vpack.c.b16 %v6513, %v6512
      %v6549 = vpack.c.b16 %v6515, %v6514
      %v6550 = vpack.c.b16 %v6517, %v6516
      %v6551 = vpack.c.b16 %v6519, %v6518
      %v6552 = vpack.c.b16 %v6521, %v6520
      %v6553 = vpack.c.b16 %v6523, %v6522
      %v6554 = vpack.c.b16 %v6525, %v6524
      %v6555 = vpack.c.b16 %v6527, %v6526
      %v6556 = vpack.c.b16 %v6529, %v6528
      %v6557 = vpack.c.b16 %v6531, %v6530
      %v6558 = vpack.c.b16 %v6533, %v6532
      %v6559 = vpack.c.b16 %v6535, %v6534
      %6584 = vmatprep.subr.bf16.mxu0 0
      %6585 = vmatpush1.bf16.msra.mxu0 %v6536
      %6586 = vmatprep.subr.bf16.mxu0 0
      %6587 = vmatpush1.bf16.msra.mxu0 %v6537
      %6588 = vmatprep.subr.bf16.mxu0 0
      %6589 = vmatpush1.bf16.msra.mxu0 %v6538
      %6590 = vmatprep.subr.bf16.mxu0 0
      %6591 = vmatpush1.bf16.msra.mxu0 %v6539
      %6592 = vmatprep.subr.bf16.mxu0 0
      %6593 = vmatpush1.bf16.msra.mxu0 %v6540
      %6594 = vmatprep.subr.bf16.mxu0 0
      %6595 = vmatpush1.bf16.msra.mxu0 %v6541
      %6596 = vmatprep.subr.bf16.mxu0 0
      %6597 = vmatpush1.bf16.msra.mxu0 %v6542
      %6598 = vmatprep.subr.bf16.mxu0 0
      %6599 = vmatpush1.bf16.msra.mxu0 %v6543
      %6600 = vmatprep.subr.bf16.mxu0 0
      %6601 = vmatpush1.bf16.msra.mxu0 %v6544
      %6602 = vmatprep.subr.bf16.mxu0 0
      %6603 = vmatpush1.bf16.msra.mxu0 %v6545
      %6604 = vmatprep.subr.bf16.mxu0 0
      %6605 = vmatpush1.bf16.msra.mxu0 %v6546
      %6606 = vmatprep.subr.bf16.mxu0 0
      %6607 = vmatpush1.bf16.msra.mxu0 %v6547
      %6608 = vmatprep.subr.bf16.mxu0 0
      %6609 = vmatpush1.bf16.msra.mxu0 %v6548
      %6610 = vmatprep.subr.bf16.mxu0 0
      %6611 = vmatpush1.bf16.msra.mxu0 %v6549
      %6612 = vmatprep.subr.bf16.mxu0 0
      %6613 = vmatpush1.bf16.msra.mxu0 %v6550
      %6614 = vmatprep.subr.bf16.mxu0 0
      %6615 = vmatpush1.bf16.msra.mxu0 %v6551
      %6616 = vmatprep.mubr.bf16.mxu0 %v6344
      %6617 = vmatmul.mubr.bf16.gmra.mrb[0].mxu0 %v6343
      %v6618 = vpop.f32.mrb[0].mxu0
      %v6619 = vadd.f32 0.0, %v6618
      %v6620 = vpop.f32.mrb[0].mxu0
      %v6621 = vpop.f32.mrb[0].mxu0
      %v6622 = vadd.f32 0.0, %v6621
      %v6623 = vpop.f32.mrb[0].mxu0
      %6624 = vmatprep.mubr.bf16.mxu0 %v6347
      %6625 = vmatmul.mubr.bf16.gmra.mrb[0].mxu0 %v6346
      %v6626 = vpop.f32.mrb[0].mxu0
      %v6627 = vadd.f32 0.0, %v6626
      %v6628 = vpop.f32.mrb[0].mxu0
      %v6629 = vpop.f32.mrb[0].mxu0
      %v6630 = vadd.f32 0.0, %v6629
      %v6631 = vpop.f32.mrb[0].mxu0
      %6632 = vmatprep.mubr.bf16.mxu0 %v6350
      %6633 = vmatmul.mubr.bf16.gmra.mrb[0].mxu0 %v6349
      %v6634 = vpop.f32.mrb[0].mxu0
      %v6635 = vadd.f32 0.0, %v6634
      %v6636 = vpop.f32.mrb[0].mxu0
      %v6637 = vpop.f32.mrb[0].mxu0
      %v6638 = vadd.f32 0.0, %v6637
      %v6639 = vpop.f32.mrb[0].mxu0
      %6640 = vmatprep.mubr.bf16.mxu0 %v6353
      %6641 = vmatmul.mubr.bf16.gmra.mrb[0].mxu0 %v6352
      %v6642 = vpop.f32.mrb[0].mxu0
      %v6643 = vadd.f32 0.0, %v6642
      %v6644 = vpop.f32.mrb[0].mxu0
      %v6645 = vpop.f32.mrb[0].mxu0
      %v6646 = vadd.f32 0.0, %v6645
      %v6647 = vpop.f32.mrb[0].mxu0
      %6648 = vmatprep.mubr.bf16.mxu0 %v6356
      %6649 = vmatmul.mubr.bf16.gmra.mrb[0].mxu0 %v6355
      %v6650 = vpop.f32.mrb[0].mxu0
      %v6651 = vadd.f32 0.0, %v6650
      %v6652 = vpop.f32.mrb[0].mxu0
      %v6653 = vpop.f32.mrb[0].mxu0
      %v6654 = vadd.f32 0.0, %v6653
      %v6655 = vpop.f32.mrb[0].mxu0
      %6656 = vmatprep.mubr.bf16.mxu0 %v6359
      %6657 = vmatmul.mubr.bf16.gmra.mrb[0].mxu0 %v6358
      %v6658 = vpop.f32.mrb[0].mxu0
      %v6659 = vadd.f32 0.0, %v6658
      %v6660 = vpop.f32.mrb[0].mxu0
      %v6661 = vpop.f32.mrb[0].mxu0
      %v6662 = vadd.f32 0.0, %v6661
      %v6663 = vpop.f32.mrb[0].mxu0
      %6664 = vmatprep.mubr.bf16.mxu0 %v6362
      %6665 = vmatmul.mubr.bf16.gmra.mrb[0].mxu0 %v6361
      %v6666 = vpop.f32.mrb[0].mxu0
      %v6667 = vadd.f32 0.0, %v6666
      %v6668 = vpop.f32.mrb[0].mxu0
      %v6669 = vpop.f32.mrb[0].mxu0
      %v6670 = vadd.f32 0.0, %v6669
      %v6671 = vpop.f32.mrb[0].mxu0
      %6672 = vmatprep.mubr.bf16.mxu0 %v6365
      %6673 = vmatmul.mubr.bf16.gmra.mrb[0].mxu0 %v6364
      %v6674 = vpop.f32.mrb[0].mxu0
      %v6675 = vadd.f32 0.0, %v6674
      %v6676 = vpop.f32.mrb[0].mxu0
      %v6677 = vpop.f32.mrb[0].mxu0
      %v6678 = vadd.f32 0.0, %v6677
      %v6679 = vpop.f32.mrb[0].mxu0
      %6680 = vmatprep.mubr.bf16.mxu0 %v6368
      %6681 = vmatmul.mubr.bf16.gmra.mrb[0].mxu0 %v6367
      %v6682 = vpop.f32.mrb[0].mxu0
      %v6683 = vadd.f32 0.0, %v6682
      %v6684 = vpop.f32.mrb[0].mxu0
      %v6685 = vpop.f32.mrb[0].mxu0
      %v6686 = vadd.f32 0.0, %v6685
      %v6687 = vpop.f32.mrb[0].mxu0
      %6688 = vmatprep.mubr.bf16.mxu0 %v6371
      %6689 = vmatmul.mubr.bf16.gmra.mrb[0].mxu0 %v6370
      %v6690 = vpop.f32.mrb[0].mxu0
      %v6691 = vadd.f32 0.0, %v6690
      %v6692 = vpop.f32.mrb[0].mxu0
      %v6693 = vpop.f32.mrb[0].mxu0
      %v6694 = vadd.f32 0.0, %v6693
      %v6695 = vpop.f32.mrb[0].mxu0
      %6696 = vmatprep.mubr.bf16.mxu0 %v6374
      %6697 = vmatmul.mubr.bf16.gmra.mrb[0].mxu0 %v6373
      %v6698 = vpop.f32.mrb[0].mxu0
      %v6699 = vadd.f32 0.0, %v6698
      %v6700 = vpop.f32.mrb[0].mxu0
      %v6701 = vpop.f32.mrb[0].mxu0
      %v6702 = vadd.f32 0.0, %v6701
      %v6703 = vpop.f32.mrb[0].mxu0
      %6704 = vmatprep.mubr.bf16.mxu0 %v6377
      %6705 = vmatmul.mubr.bf16.gmra.mrb[0].mxu0 %v6376
      %v6706 = vpop.f32.mrb[0].mxu0
      %v6707 = vadd.f32 0.0, %v6706
      %v6708 = vpop.f32.mrb[0].mxu0
      %v6709 = vpop.f32.mrb[0].mxu0
      %v6710 = vadd.f32 0.0, %v6709
      %v6711 = vpop.f32.mrb[0].mxu0
      %6712 = vmatprep.mubr.bf16.mxu0 %v6380
      %6713 = vmatmul.mubr.bf16.gmra.mrb[0].mxu0 %v6379
      %v6714 = vpop.f32.mrb[0].mxu0
      %v6715 = vadd.f32 0.0, %v6714
      %v6716 = vpop.f32.mrb[0].mxu0
      %v6717 = vpop.f32.mrb[0].mxu0
      %v6718 = vadd.f32 0.0, %v6717
      %v6719 = vpop.f32.mrb[0].mxu0
      %6720 = vmatprep.mubr.bf16.mxu0 %v6383
      %6721 = vmatmul.mubr.bf16.gmra.mrb[0].mxu0 %v6382
      %v6722 = vpop.f32.mrb[0].mxu0
      %v6723 = vadd.f32 0.0, %v6722
      %v6724 = vpop.f32.mrb[0].mxu0
      %v6725 = vpop.f32.mrb[0].mxu0
      %v6726 = vadd.f32 0.0, %v6725
      %v6727 = vpop.f32.mrb[0].mxu0
      %6728 = vmatprep.mubr.bf16.mxu0 %v6386
      %6729 = vmatmul.mubr.bf16.gmra.mrb[0].mxu0 %v6385
      %v6730 = vpop.f32.mrb[0].mxu0
      %v6731 = vadd.f32 0.0, %v6730
      %v6732 = vpop.f32.mrb[0].mxu0
      %v6733 = vpop.f32.mrb[0].mxu0
      %v6734 = vadd.f32 0.0, %v6733
      %v6735 = vpop.f32.mrb[0].mxu0
      %6736 = vmatprep.mubr.bf16.mxu0 %v6389
      %6737 = vmatmul.mubr.bf16.gmra.mrb[0].mxu0 %v6388
      %v6738 = vpop.f32.mrb[0].mxu0
      %v6739 = vadd.f32 0.0, %v6738
      %v6740 = vpop.f32.mrb[0].mxu0
      %v6741 = vpop.f32.mrb[0].mxu0
      %v6742 = vadd.f32 0.0, %v6741
      %v6743 = vpop.f32.mrb[0].mxu0
      %6744 = vdwg.mxu0
      %6745 = vmatprep.subr.bf16.mxu0 0
      %6746 = vmatpush1.bf16.msra.mxu0 %v6552
      %6747 = vmatprep.subr.bf16.mxu0 0
      %6748 = vmatpush1.bf16.msra.mxu0 %v6553
      %6749 = vmatprep.subr.bf16.mxu0 0
      %6750 = vmatpush1.bf16.msra.mxu0 %v6554
      %6751 = vmatprep.subr.bf16.mxu0 0
      %6752 = vmatpush1.bf16.msra.mxu0 %v6555
      %6753 = vmatprep.subr.bf16.mxu0 0
      %6754 = vmatpush1.bf16.msra.mxu0 %v6556
      %6755 = vmatprep.subr.bf16.mxu0 0
      %6756 = vmatpush1.bf16.msra.mxu0 %v6557
      %6757 = vmatprep.subr.bf16.mxu0 0
      %6758 = vmatpush1.bf16.msra.mxu0 %v6558
      %6759 = vmatprep.subr.bf16.mxu0 0
      %6760 = vmatpush1.bf16.msra.mxu0 %v6559
      %6761 = vmatprep.subr.bf16.mxu0 0
      %6762 = vmatpush1.bf16.msra.mxu0 0
      %6763 = vmatprep.subr.bf16.mxu0 0
      %6764 = vmatpush1.bf16.msra.mxu0 0
      %6765 = vmatprep.subr.bf16.mxu0 0
      %6766 = vmatpush1.bf16.msra.mxu0 0
      %6767 = vmatprep.subr.bf16.mxu0 0
      %6768 = vmatpush1.bf16.msra.mxu0 0
      %6769 = vmatprep.subr.bf16.mxu0 0
      %6770 = vmatpush1.bf16.msra.mxu0 0
      %6771 = vmatprep.subr.bf16.mxu0 0
      %6772 = vmatpush1.bf16.msra.mxu0 0
      %6773 = vmatprep.subr.bf16.mxu0 0
      %6774 = vmatpush1.bf16.msra.mxu0 0
      %6775 = vmatprep.subr.bf16.mxu0 0
      %6776 = vmatpush1.bf16.msra.mxu0 0
      %6777 = vmatprep.mubr.bf16.mxu0 0
      %6778 = vmatmul.mubr.bf16.gmra.mrb[0].mxu0 %v6345
      %v6779 = vpop.f32.mrb[0].mxu0
      %v6780 = vadd.f32 %v6619, %v6779
      %v6781 = vpop.f32.mrb[0].mxu0
      %v6782 = vpop.f32.mrb[0].mxu0
      %v6783 = vadd.f32 %v6622, %v6782
      %v6784 = vpop.f32.mrb[0].mxu0
      %6785 = vmatprep.mubr.bf16.mxu0 0
      %6786 = vmatmul.mubr.bf16.gmra.mrb[0].mxu0 %v6348
      %v6787 = vpop.f32.mrb[0].mxu0
      %v6788 = vadd.f32 %v6627, %v6787
      %v6789 = vpop.f32.mrb[0].mxu0
      %v6790 = vpop.f32.mrb[0].mxu0
      %v6791 = vadd.f32 %v6630, %v6790
      %v6792 = vpop.f32.mrb[0].mxu0
      %6793 = vmatprep.mubr.bf16.mxu0 0
      %6794 = vmatmul.mubr.bf16.gmra.mrb[0].mxu0 %v6351
      %v6795 = vpop.f32.mrb[0].mxu0
      %v6796 = vadd.f32 %v6635, %v6795
      %v6797 = vpop.f32.mrb[0].mxu0
      %v6798 = vpop.f32.mrb[0].mxu0
      %v6799 = vadd.f32 %v6638, %v6798
      %v6800 = vpop.f32.mrb[0].mxu0
      %6801 = vmatprep.mubr.bf16.mxu0 0
      %6802 = vmatmul.mubr.bf16.gmra.mrb[0].mxu0 %v6354
      %v6803 = vpop.f32.mrb[0].mxu0
      %v6804 = vadd.f32 %v6643, %v6803
      %v6805 = vpop.f32.mrb[0].mxu0
      %v6806 = vpop.f32.mrb[0].mxu0
      %v6807 = vadd.f32 %v6646, %v6806
      %v6808 = vpop.f32.mrb[0].mxu0
      %6809 = vmatprep.mubr.bf16.mxu0 0
      %6810 = vmatmul.mubr.bf16.gmra.mrb[0].mxu0 %v6357
      %v6811 = vpop.f32.mrb[0].mxu0
      %v6812 = vadd.f32 %v6651, %v6811
      %v6813 = vpop.f32.mrb[0].mxu0
      %v6814 = vpop.f32.mrb[0].mxu0
      %v6815 = vadd.f32 %v6654, %v6814
      %v6816 = vpop.f32.mrb[0].mxu0
      %6817 = vmatprep.mubr.bf16.mxu0 0
      %6818 = vmatmul.mubr.bf16.gmra.mrb[0].mxu0 %v6360
      %v6819 = vpop.f32.mrb[0].mxu0
      %v6820 = vadd.f32 %v6659, %v6819
      %v6821 = vpop.f32.mrb[0].mxu0
      %v6822 = vpop.f32.mrb[0].mxu0
      %v6823 = vadd.f32 %v6662, %v6822
      %v6824 = vpop.f32.mrb[0].mxu0
      %6825 = vmatprep.mubr.bf16.mxu0 0
      %6826 = vmatmul.mubr.bf16.gmra.mrb[0].mxu0 %v6363
      %v6827 = vpop.f32.mrb[0].mxu0
      %v6828 = vadd.f32 %v6667, %v6827
      %v6829 = vpop.f32.mrb[0].mxu0
      %v6830 = vpop.f32.mrb[0].mxu0
      %v6831 = vadd.f32 %v6670, %v6830
      %v6832 = vpop.f32.mrb[0].mxu0
      %6833 = vmatprep.mubr.bf16.mxu0 0
      %6834 = vmatmul.mubr.bf16.gmra.mrb[0].mxu0 %v6366
      %v6835 = vpop.f32.mrb[0].mxu0
      %v6836 = vadd.f32 %v6675, %v6835
      %v6837 = vpop.f32.mrb[0].mxu0
      %v6838 = vpop.f32.mrb[0].mxu0
      %v6839 = vadd.f32 %v6678, %v6838
      %v6840 = vpop.f32.mrb[0].mxu0
      %6841 = vmatprep.mubr.bf16.mxu0 0
      %6842 = vmatmul.mubr.bf16.gmra.mrb[0].mxu0 %v6369
      %v6843 = vpop.f32.mrb[0].mxu0
      %v6844 = vadd.f32 %v6683, %v6843
      %v6845 = vpop.f32.mrb[0].mxu0
      %v6846 = vpop.f32.mrb[0].mxu0
      %v6847 = vadd.f32 %v6686, %v6846
      %v6848 = vpop.f32.mrb[0].mxu0
      %6849 = vmatprep.mubr.bf16.mxu0 0
      %6850 = vmatmul.mubr.bf16.gmra.mrb[0].mxu0 %v6372
      %v6851 = vpop.f32.mrb[0].mxu0
      %v6852 = vadd.f32 %v6691, %v6851
      %v6853 = vpop.f32.mrb[0].mxu0
      %v6854 = vpop.f32.mrb[0].mxu0
      %v6855 = vadd.f32 %v6694, %v6854
      %v6856 = vpop.f32.mrb[0].mxu0
      %6857 = vmatprep.mubr.bf16.mxu0 0
      %6858 = vmatmul.mubr.bf16.gmra.mrb[0].mxu0 %v6375
      %v6859 = vpop.f32.mrb[0].mxu0
      %v6860 = vadd.f32 %v6699, %v6859
      %v6861 = vpop.f32.mrb[0].mxu0
      %v6862 = vpop.f32.mrb[0].mxu0
      %v6863 = vadd.f32 %v6702, %v6862
      %v6864 = vpop.f32.mrb[0].mxu0
      %6865 = vmatprep.mubr.bf16.mxu0 0
      %6866 = vmatmul.mubr.bf16.gmra.mrb[0].mxu0 %v6378
      %v6867 = vpop.f32.mrb[0].mxu0
      %v6868 = vadd.f32 %v6707, %v6867
      %v6869 = vpop.f32.mrb[0].mxu0
      %v6870 = vpop.f32.mrb[0].mxu0
      %v6871 = vadd.f32 %v6710, %v6870
      %v6872 = vpop.f32.mrb[0].mxu0
      %6873 = vmatprep.mubr.bf16.mxu0 0
      %6874 = vmatmul.mubr.bf16.gmra.mrb[0].mxu0 %v6381
      %v6875 = vpop.f32.mrb[0].mxu0
      %v6876 = vadd.f32 %v6715, %v6875
      %v6877 = vpop.f32.mrb[0].mxu0
      %v6878 = vpop.f32.mrb[0].mxu0
      %v6879 = vadd.f32 %v6718, %v6878
      %v6880 = vpop.f32.mrb[0].mxu0
      %6881 = vmatprep.mubr.bf16.mxu0 0
      %6882 = vmatmul.mubr.bf16.gmra.mrb[0].mxu0 %v6384
      %v6883 = vpop.f32.mrb[0].mxu0
      %v6884 = vadd.f32 %v6723, %v6883
      %v6885 = vpop.f32.mrb[0].mxu0
      %v6886 = vpop.f32.mrb[0].mxu0
      %v6887 = vadd.f32 %v6726, %v6886
      %v6888 = vpop.f32.mrb[0].mxu0
      %6889 = vmatprep.mubr.bf16.mxu0 0
      %6890 = vmatmul.mubr.bf16.gmra.mrb[0].mxu0 %v6387
      %v6891 = vpop.f32.mrb[0].mxu0
      %v6892 = vadd.f32 %v6731, %v6891
      %v6893 = vpop.f32.mrb[0].mxu0
      %v6894 = vpop.f32.mrb[0].mxu0
      %v6895 = vadd.f32 %v6734, %v6894
      %v6896 = vpop.f32.mrb[0].mxu0
      %6897 = vmatprep.mubr.bf16.mxu0 0
      %6898 = vmatmul.mubr.bf16.gmra.mrb[0].mxu0 %v6390
      %v6899 = vpop.f32.mrb[0].mxu0
      %v6900 = vadd.f32 %v6739, %v6899
      %v6901 = vpop.f32.mrb[0].mxu0
      %v6902 = vpop.f32.mrb[0].mxu0
      %v6903 = vadd.f32 %v6742, %v6902
      %v6904 = vpop.f32.mrb[0].mxu0
      %6905 = vdwg.mxu0
      %v6906 = vadd.f32 %v6216, %v6780
      %v6907 = vadd.f32 %v6219, %v6783
      %v6908 = vadd.f32 %v6224, %v6788
      %v6909 = vadd.f32 %v6227, %v6791
      %v6910 = vadd.f32 %v6232, %v6796
      %v6911 = vadd.f32 %v6235, %v6799
      %v6912 = vadd.f32 %v6240, %v6804
      %v6913 = vadd.f32 %v6243, %v6807
      %v6914 = vadd.f32 %v6248, %v6812
      %v6915 = vadd.f32 %v6251, %v6815
      %v6916 = vadd.f32 %v6256, %v6820
      %v6917 = vadd.f32 %v6259, %v6823
      %v6918 = vadd.f32 %v6264, %v6828
      %v6919 = vadd.f32 %v6267, %v6831
      %v6920 = vadd.f32 %v6272, %v6836
      %v6921 = vadd.f32 %v6275, %v6839
      %v6922 = vadd.f32 %v6280, %v6844
      %v6923 = vadd.f32 %v6283, %v6847
      %v6924 = vadd.f32 %v6288, %v6852
      %v6925 = vadd.f32 %v6291, %v6855
      %v6926 = vadd.f32 %v6296, %v6860
      %v6927 = vadd.f32 %v6299, %v6863
      %v6928 = vadd.f32 %v6304, %v6868
      %v6929 = vadd.f32 %v6307, %v6871
      %v6930 = vadd.f32 %v6312, %v6876
      %v6931 = vadd.f32 %v6315, %v6879
      %v6932 = vadd.f32 %v6320, %v6884
      %v6933 = vadd.f32 %v6323, %v6887
      %v6934 = vadd.f32 %v6328, %v6892
      %v6935 = vadd.f32 %v6331, %v6895
      %v6936 = vadd.f32 %v6336, %v6900
      %v6937 = vadd.f32 %v6339, %v6903
      %v6938 = vld [vmem:[%s5] sm:$0x1]
      %v6940 = vlaneseq
      %v6941 = vshrl.u32 %v6940, 7
      %v6942 = vsub.s32 0, %v6941
      %v6943 = vrot.slane %v6938, %v6942
      %v6945 = vadd.f32 %v6906, %v6943
      %v6946 = vadd.f32 %v6907, %v6943
      %v6947 = vadd.f32 %v6908, %v6943
      %v6948 = vadd.f32 %v6909, %v6943
      %v6949 = vadd.f32 %v6910, %v6943
      %v6950 = vadd.f32 %v6911, %v6943
      %v6951 = vadd.f32 %v6912, %v6943
      %v6952 = vadd.f32 %v6913, %v6943
      %v6953 = vadd.f32 %v6914, %v6943
      %v6954 = vadd.f32 %v6915, %v6943
      %v6955 = vadd.f32 %v6916, %v6943
      %v6956 = vadd.f32 %v6917, %v6943
      %v6957 = vadd.f32 %v6918, %v6943
      %v6958 = vadd.f32 %v6919, %v6943
      %v6959 = vadd.f32 %v6920, %v6943
      %v6960 = vadd.f32 %v6921, %v6943
      %v6961 = vadd.f32 %v6922, %v6943
      %v6962 = vadd.f32 %v6923, %v6943
      %v6963 = vadd.f32 %v6924, %v6943
      %v6964 = vadd.f32 %v6925, %v6943
      %v6965 = vadd.f32 %v6926, %v6943
      %v6966 = vadd.f32 %v6927, %v6943
      %v6967 = vadd.f32 %v6928, %v6943
      %v6968 = vadd.f32 %v6929, %v6943
      %v6969 = vadd.f32 %v6930, %v6943
      %v6970 = vadd.f32 %v6931, %v6943
      %v6971 = vadd.f32 %v6932, %v6943
      %v6972 = vadd.f32 %v6933, %v6943
      %v6973 = vadd.f32 %v6934, %v6943
      %v6974 = vadd.f32 %v6935, %v6943
      %v6975 = vadd.f32 %v6936, %v6943
      %v6976 = vadd.f32 %v6937, %v6943
      %6977 = vst [vmem:[%s251] sm:$0xff] %v6945
      %6978 = vst [vmem:[%s251 + $0x8] sm:$0xff] %v6946
      %6979 = vst [vmem:[%s251 + $0x10] sm:$0xff] %v6947
      %6980 = vst [vmem:[%s251 + $0x18] sm:$0xff] %v6948
      %6981 = vst [vmem:[%s251 + $0x20] sm:$0xff] %v6949
      %6982 = vst [vmem:[%s251 + $0x28] sm:$0xff] %v6950
      %6983 = vst [vmem:[%s251 + $0x30] sm:$0xff] %v6951
      %6984 = vst [vmem:[%s251 + $0x38] sm:$0xff] %v6952
      %6985 = vst [vmem:[%s251 + $0x40] sm:$0xff] %v6953
      %6986 = vst [vmem:[%s251 + $0x48] sm:$0xff] %v6954
      %6987 = vst [vmem:[%s251 + $0x50] sm:$0xff] %v6955
      %6988 = vst [vmem:[%s251 + $0x58] sm:$0xff] %v6956
      %6989 = vst [vmem:[%s251 + $0x60] sm:$0xff] %v6957
      %6990 = vst [vmem:[%s251 + $0x68] sm:$0xff] %v6958
      %6991 = vst [vmem:[%s251 + $0x70] sm:$0xff] %v6959
      %6992 = vst [vmem:[%s251 + $0x78] sm:$0xff] %v6960
      %6993 = vst [vmem:[%s251 + $0x80] sm:$0xff] %v6961
      %6994 = vst [vmem:[%s251 + $0x88] sm:$0xff] %v6962
      %6995 = vst [vmem:[%s251 + $0x90] sm:$0xff] %v6963
      %6996 = vst [vmem:[%s251 + $0x98] sm:$0xff] %v6964
      %6997 = vst [vmem:[%s251 + $0xa0] sm:$0xff] %v6965
      %6998 = vst [vmem:[%s251 + $0xa8] sm:$0xff] %v6966
      %6999 = vst [vmem:[%s251 + $0xb0] sm:$0xff] %v6967
      %7000 = vst [vmem:[%s251 + $0xb8] sm:$0xff] %v6968
      %7001 = vst [vmem:[%s251 + $0xc0] sm:$0xff] %v6969
      %7002 = vst [vmem:[%s251 + $0xc8] sm:$0xff] %v6970
      %7003 = vst [vmem:[%s251 + $0xd0] sm:$0xff] %v6971
      %7004 = vst [vmem:[%s251 + $0xd8] sm:$0xff] %v6972
      %7005 = vst [vmem:[%s251 + $0xe0] sm:$0xff] %v6973
      %7006 = vst [vmem:[%s251 + $0xe8] sm:$0xff] %v6974
      %7007 = vst [vmem:[%s251 + $0xf0] sm:$0xff] %v6975
      %7008 = vst [vmem:[%s251 + $0xf8] sm:$0xff] %v6976
      %p7009 = scmp.lt.s32.totalorder %s17, 1
      %s7010 = scalar_select %p7009, %s17, 1
      %s7011 = smul.addr %s7010, 32
      %s7012 = smul.addr %s7011, 8
      %s7013 = scalar_lea.vmem %s6, %s7012
      // Predicated region
      $region45: #{_lambda_.1} parent=43 // pred_check
        %p7014 = pneg %p166
      $region46: #{_lambda_.1} parent=43 // pred_check_branch
        %7016 = sbr.rel (%p7014) target = $region48
      $region47: #{_lambda_.1} parent=43 // pred_region
        _
      $region48: #{_lambda_.1} parent=43 // pred_fallthru
        _
    $region44: #{_lambda_.1} parent=5 // pred_fallthru
      _
    %p7017 = scmp.le.s32.totalorder 2, %s12
    // Predicated region
    $region49: #{_lambda_.1} parent=5 // pred_check
      %p7018 = pneg %p7017
    $region50: #{_lambda_.1} parent=5 // pred_check_branch
      %7020 = sbr.rel (%p7018) target = $region52
    $region51: #{_lambda_.1} parent=5 // pred_region
      %s7021 = ssub.s32 %s12, 2
      // Predicated region
      $region53: #{_lambda_.1} parent=51 // pred_check
        %p7022 = pneg %p172
      $region54: #{_lambda_.1} parent=51 // pred_check_branch
        %7024 = sbr.rel (%p7022) target = $region56
      $region55: #{_lambda_.1} parent=51 // pred_region
        %p7025 = scmp.lt.s32.totalorder %s18, 1
        %s7026 = scalar_select %p7025, %s18, 1
        %s7027 = smul.addr %s7026, 32
        %s7028 = smul.addr %s7027, 8
        %s7029 = scalar_lea.vmem %s6, %s7028
      $region56: #{_lambda_.1} parent=51 // pred_fallthru
        _
    $region52: #{_lambda_.1} parent=5 // pred_fallthru
      _
  $region6: #{_lambda_.1} parent=0 // loop_footer
    %s16 = sadd.s32 1, %s12
  $region7: #{_lambda_.1} parent=0 // loop_footer_branch
    %11 = sbr.rel target = $region3
  $region8: #{_lambda_.1} parent=0 // loop_exit
    _

</llo_original>
